<compile_context>
chip_gen: v5e
topology: v5e:2x2
jax: 0.10.0
libtpu: 0.0.40
codegen_flags: <defaults>
</compile_context>

<pallas_src>
import jax
import jax.numpy as jnp
from jax import lax
from jax.experimental import pallas as pl
from jax.experimental.pallas import tpu as pltpu

BN_EPS = 1e-5


def _default_vmem_limit():
    # v5e/v6e have 128 MiB physical VMEM, v7x only 64 MiB -> derive per chip.
    try:
        cap = pltpu.get_tpu_info().vmem_capacity_bytes
        return int(min(cap // 2, 64 * 1024 * 1024))
    except Exception:
        return 32 * 1024 * 1024


VMEM_LIMIT = _default_vmem_limit()


# ------------------------------ host-side setup ------------------------------

def _interp_matrix(out_size, in_size):
    # PyTorch Upsample(bilinear, align_corners=True): src = dst*(in-1)/(out-1)
    if in_size == 1:
        return jnp.ones((out_size, 1), jnp.float32)
    src = jnp.arange(out_size, dtype=jnp.float32) * (in_size - 1) / (out_size - 1)
    i0 = jnp.clip(jnp.floor(src).astype(jnp.int32), 0, in_size - 2)
    frac = src - i0.astype(jnp.float32)
    rows = jnp.arange(out_size)
    m = jnp.zeros((out_size, in_size), jnp.float32)
    m = m.at[rows, i0].add(1.0 - frac)
    m = m.at[rows, i0 + 1].add(frac)
    return m


def _conv_band(w_oihw, base, in_rows, kx):
    """Banded block matrix B with
         B[co*R + o, ci*in_rows + r] = w[co, ci, r - base[o], kx]
       for 0 <= r - base[o] <= 2 and base[o] >= 0, else 0.
    Left-multiplying a channel-row-major (Cin*in_rows, Wp) slab by B performs
    the ky part of a 3x3 conv; the kx part is a +/-1 lane shift of the slab."""
    co, ci = w_oihw.shape[0], w_oihw.shape[1]
    out_rows = base.shape[0]
    r = jnp.arange(in_rows)
    ky = r[None, :] - base[:, None]                      # (out_rows, in_rows)
    valid = (base[:, None] >= 0) & (ky >= 0) & (ky <= 2)
    kyc = jnp.clip(ky, 0, 2)
    wk = w_oihw[:, :, :, kx]                             # (co, ci, 3)
    band = jnp.where(valid[None, None], wk[:, :, kyc], 0.0)   # (co, ci, o, r)
    return band.transpose(0, 2, 1, 3).reshape(co * out_rows, ci * in_rows)


def _fold_bn(ps, gamma, beta, count):
    # Fold train-mode BN (biased variance over all N*Ho*Wo pixels) into a
    # per-channel scale/shift: y = z*scale + shift.
    mean = ps[:, 0] / count
    var = ps[:, 1] / count - mean * mean
    scale = gamma * lax.rsqrt(var + BN_EPS)
    shift = beta - mean * scale
    return scale, shift


# ------------------------------ kernel helpers -------------------------------

def _shift_right(a):
    # column x of the result holds a[:, x-1]; column 0 is zero-filled.
    return jnp.concatenate([jnp.zeros_like(a[:, :1]), a[:, :-1]], axis=1)


def _shift_left(a):
    # column x of the result holds a[:, x+1]; the last column is zero-filled.
    return jnp.concatenate([a[:, 1:], jnp.zeros_like(a[:, :1])], axis=1)


def _channel_stats(z, sel_ref):
    # per-channel [sum, sum_sq] of the masked f32 accumulator (BN partials).
    rs = jnp.sum(z, axis=1, keepdims=True)
    rss = jnp.sum(z * z, axis=1, keepdims=True)
    return jnp.dot(sel_ref[...], jnp.concatenate([rs, rss], axis=1),
                   preferred_element_type=jnp.float32,
                   precision=lax.Precision.HIGHEST)


# -------------------------------- kernel bodies -------------------------------

def upconv1_kernel(x_ref, awt_ref, c1_ref, sel_ref, cm_ref, z_ref, ps_ref):
    # Width interp + width padding of the ORIGINAL-resolution rows; the height
    # interp is folded into the c1 band matrices, so the upsampled image is
    # never materialized (fused upsample -> conv1).
    t = jnp.dot(x_ref[...], awt_ref[...],
                preferred_element_type=jnp.float32,
                precision=lax.Precision.HIGHEST).astype(jnp.bfloat16)
    # 3x3 conv: ky taps live in the banded c1 matrices, kx taps are +/-1 lane
    # shifts of t (zero-filled -> they double as the conv's W padding).
    acc = jnp.dot(c1_ref[0], _shift_right(t), preferred_element_type=jnp.float32)
    acc = acc + jnp.dot(c1_ref[1], t, preferred_element_type=jnp.float32)
    acc = acc + jnp.dot(c1_ref[2], _shift_left(t), preferred_element_type=jnp.float32)
    z = acc * cm_ref[...]                 # zero W-pad columns (conv2's padding)
    ps_ref[...] = _channel_stats(z, sel_ref)   # per-image BN1 partials (f32)
    z_ref[...] = z.astype(z_ref.dtype)         # bf16, padded layout for conv2


def conv2_kernel(z1_ref, sc_ref, sh_ref, c2_ref, sel_ref, cm_ref, z2_ref, ps_ref):
    # BN1 (global batch stats folded into per-row scale/shift) + ReLU applied
    # on the fly to conv2's input; pad rows/cols are forced back to zero
    # (scale/shift are zero on pad rows, colmask zeroes pad columns).
    a = z1_ref[...].astype(jnp.float32) * sc_ref[...] + sh_ref[...]
    a = (jnp.maximum(a, 0.0) * cm_ref[...]).astype(jnp.bfloat16)
    acc = jnp.dot(c2_ref[0], _shift_right(a), preferred_element_type=jnp.float32)
    acc = acc + jnp.dot(c2_ref[1], a, preferred_element_type=jnp.float32)
    acc = acc + jnp.dot(c2_ref[2], _shift_left(a), preferred_element_type=jnp.float32)
    z = acc * cm_ref[...]
    ps_ref[...] = _channel_stats(z, sel_ref)   # per-image BN2 partials
    z2_ref[...] = z.astype(z2_ref.dtype)       # bf16


def bn_relu_out_kernel(z2_ref, sc_ref, sh_ref, o_ref):
    # Tiny BN2 + ReLU epilogue; drops the W-pad columns and writes bytes that
    # are already in NCHW order (a free metadata reshape outside finishes it).
    y = jnp.maximum(z2_ref[...].astype(jnp.float32) * sc_ref[...] + sh_ref[...], 0.0)
    o_ref[...] = y[:, 1:1 + o_ref.shape[1]]


# -------------------------------- forward pass --------------------------------

def init_params(key, in_ch, out_ch):
    k1, k2 = jax.random.split(key)
    # Conv2d weights: Normal(std=0.01) (OIHW, like PyTorch), bias = 0.
    w1 = 0.01 * jax.random.normal(k1, (out_ch, in_ch, 3, 3), jnp.float32)
    w2 = 0.01 * jax.random.normal(k2, (out_ch, out_ch, 3, 3), jnp.float32)
    zeros = jnp.zeros((out_ch,), jnp.float32)
    ones = jnp.ones((out_ch,), jnp.float32)
    # Conv biases are zero-init AND exactly cancelled by train-mode BN mean
    # subtraction, so the kernels intentionally do not consume them.
    return dict(w1=w1, w2=w2, b1=zeros, b2=zeros,
                g1=ones, beta1=zeros, g2=ones, beta2=zeros)


def up_forward(x_nchw, params):
    """Pallas implementation of `up.forward(x1)` (x2 unused, bilinear=True)."""
    n, cin, h, w = x_nchw.shape
    cout = params["w1"].shape[0]
    ho, wo = 2 * h, 2 * w
    hp, wp = ho + 2, wo + 2
    count = n * ho * wo                                   # valid pixels per channel

    # ---- tiny matrix setup (built once per jit; O(C^2 * Hp^2) elements) ----
    aw_t = _interp_matrix(wo, w).T                        # (W, Wo)
    awt_pad = jnp.zeros((w, wp), jnp.float32).at[:, 1:wo + 1].set(aw_t)
    ah_pad = jnp.zeros((hp, h), jnp.float32).at[1:ho + 1, :].set(_interp_matrix(ho, h))
    ahk = jnp.kron(jnp.eye(cin, dtype=jnp.float32), ah_pad)      # (Cin*Hp, Cin*H)

    yp = jnp.arange(hp)
    base1 = jnp.where((yp >= 1) & (yp <= ho), yp - 1, -1)        # padded output rows
    base2 = jnp.arange(ho)                                       # unpadded output rows
    # conv1 band matrices with the H-interp pre-composed (fused upsample):
    c1 = jnp.stack([_conv_band(params["w1"], base1, hp, kx) @ ahk
                    for kx in range(3)]).astype(jnp.bfloat16)    # (3, Cout*Hp, Cin*H)
    c2 = jnp.stack([_conv_band(params["w2"], base2, hp, kx)
                    for kx in range(3)]).astype(jnp.bfloat16)    # (3, Cout*Ho, Cout*Hp)

    sel1 = jnp.kron(jnp.eye(cout, dtype=jnp.float32), jnp.ones((1, hp), jnp.float32))
    sel2 = jnp.kron(jnp.eye(cout, dtype=jnp.float32), jnp.ones((1, ho), jnp.float32))
    colmask = jnp.zeros((1, wp), jnp.float32).at[:, 1:wo + 1].set(1.0)
    rowmask = jnp.zeros((hp,), jnp.float32).at[1:ho + 1].set(1.0)

    cparams = pltpu.CompilerParams(dimension_semantics=("parallel",),
                                   vmem_limit_bytes=VMEM_LIMIT)

    # ---- stage 1: fused upsample + conv1 + BN1 partial sums ----
    x2d = x_nchw.reshape(n, cin * h, w)                   # metadata-only reshape
    z1, ps1 = pl.pallas_call(
        upconv1_kernel,
        grid=(n,),
        in_specs=[
            pl.BlockSpec((None, cin * h, w), lambda i: (i, 0, 0)),
            pl.BlockSpec((w, wp), lambda i: (0, 0)),                      # resident
            pl.BlockSpec((3, cout * hp, cin * h), lambda i: (0, 0, 0)),   # resident
            pl.BlockSpec((cout, cout * hp), lambda i: (0, 0)),            # resident
            pl.BlockSpec((1, wp), lambda i: (0, 0)),                      # resident
        ],
        out_specs=(
            pl.BlockSpec((None, cout * hp, wp), lambda i: (i, 0, 0)),
            pl.BlockSpec((None, cout, 2), lambda i: (i, 0, 0)),
        ),
        out_shape=(
            jax.ShapeDtypeStruct((n, cout * hp, wp), jnp.bfloat16),
            jax.ShapeDtypeStruct((n, cout, 2), jnp.float32),
        ),
        compiler_params=cparams,
    )(x2d, awt_pad, c1, sel1, colmask)

    scale1, shift1 = _fold_bn(jnp.sum(ps1, axis=0), params["g1"], params["beta1"], count)
    # Per-row scale/shift vectors for the padded channel-row-major layout; the
    # spatial pad rows get scale = shift = 0 so they stay exactly zero.
    sc1_row = (scale1[:, None] * rowmask[None, :]).reshape(cout * hp, 1)
    sh1_row = (shift1[:, None] * rowmask[None, :]).reshape(cout * hp, 1)

    # ---- stage 2: BN1+ReLU applied on the fly, conv2, BN2 partial sums ----
    z2, ps2 = pl.pallas_call(
        conv2_kernel,
        grid=(n,),
        in_specs=[
            pl.BlockSpec((None, cout * hp, wp), lambda i: (i, 0, 0)),
            pl.BlockSpec((cout * hp, 1), lambda i: (0, 0)),
            pl.BlockSpec((cout * hp, 1), lambda i: (0, 0)),
            pl.BlockSpec((3, cout * ho, cout * hp), lambda i: (0, 0, 0)),
            pl.BlockSpec((cout, cout * ho), lambda i: (0, 0)),
            pl.BlockSpec((1, wp), lambda i: (0, 0)),
        ],
        out_specs=(
            pl.BlockSpec((None, cout * ho, wp), lambda i: (i, 0, 0)),
            pl.BlockSpec((None, cout, 2), lambda i: (i, 0, 0)),
        ),
        out_shape=(
            jax.ShapeDtypeStruct((n, cout * ho, wp), jnp.bfloat16),
            jax.ShapeDtypeStruct((n, cout, 2), jnp.float32),
        ),
        compiler_params=cparams,
    )(z1, sc1_row, sh1_row, c2, sel2, colmask)

    scale2, shift2 = _fold_bn(jnp.sum(ps2, axis=0), params["g2"], params["beta2"], count)
    sc2_row = jnp.repeat(scale2, ho).reshape(cout * ho, 1)
    sh2_row = jnp.repeat(shift2, ho).reshape(cout * ho, 1)

    # ---- stage 3: tiny BN2 + ReLU epilogue, bytes written in NCHW order ----
    y = pl.pallas_call(
        bn_relu_out_kernel,
        grid=(n,),
        in_specs=[
            pl.BlockSpec((None, cout * ho, wp), lambda i: (i, 0, 0)),
            pl.BlockSpec((cout * ho, 1), lambda i: (0, 0)),
            pl.BlockSpec((cout * ho, 1), lambda i: (0, 0)),
        ],
        out_specs=pl.BlockSpec((None, cout * ho, wo), lambda i: (i, 0, 0)),
        out_shape=jax.ShapeDtypeStruct((n, cout * ho, wo), jnp.float32),
        compiler_params=cparams,
    )(z2, sc2_row, sh2_row)

    return y.reshape(n, cout, ho, wo)                     # metadata-only reshape


# ----------------------------- pure-JAX reference ------------------------------

def ref_forward(x_nchw, params):
    """Pure-JAX f32 reference (NCHW), matching the PyTorch module semantics."""
    h, w = x_nchw.shape[2], x_nchw.shape[3]
    ho, wo = 2 * h, 2 * w
    ah = _interp_matrix(ho, h)
    aw = _interp_matrix(wo, w)
    u = jnp.einsum("oh,nchw->ncow", ah, x_nchw, precision=lax.Precision.HIGHEST)
    u = jnp.einsum("pw,ncow->ncop", aw, u, precision=lax.Precision.HIGHEST)

    def conv_bn_relu(a, wk, g, b):
        y = lax.conv_general_dilated(
            a, wk, window_strides=(1, 1), padding=((1, 1), (1, 1)),
            dimension_numbers=("NCHW", "OIHW", "NCHW"),
            precision=lax.Precision.HIGHEST,
            preferred_element_type=jnp.float32)
        mean = jnp.mean(y, axis=(0, 2, 3), keepdims=True)
        var = jnp.mean(jnp.square(y - mean), axis=(0, 2, 3), keepdims=True)
        y = (y - mean) * lax.rsqrt(var + BN_EPS)
        y = y * g.reshape(1, -1, 1, 1) + b.reshape(1, -1, 1, 1)
        return jnp.maximum(y, 0.0)

    y = conv_bn_relu(u, params["w1"], params["g1"], params["beta1"])
    y = conv_bn_relu(y, params["w2"], params["g2"], params["beta2"])
    return y


# ------------------------------------ main -------------------------------------

if __name__ == "__main__":
    key = jax.random.PRNGKey(0)
    kx_, kp = jax.random.split(key)

    N, IN_CH, OUT_CH, H, W = 2, 4, 8, 16, 16
    x = jax.random.normal(kx_, (N, IN_CH, H, W), jnp.float32)   # NCHW, like PyTorch
    params = init_params(kp, IN_CH, OUT_CH)

    fwd = jax.jit(up_forward)
    out = jax.block_until_ready(fwd(x, params))
    assert out.shape == (N, OUT_CH, 2 * H, 2 * W), out.shape

    ref = jax.block_until_ready(ref_forward(x, params))
    max_err = float(jnp.max(jnp.abs(out - ref)))
    # bf16 MXU operands / bf16 z storage vs f32 reference -> loose tolerance.
    assert jnp.allclose(out, ref, atol=8e-2, rtol=8e-2), max_err

    print("KERNEL_OK")
</pallas_src>

<mosaic_0001>
module attributes {stable_mosaic.version = 11 : i64} {
  func.func @upconv1_kernel(%arg0: i32, %arg1: memref<1x64x16xf32, #tpu.memory_space<vmem>>, %arg2: memref<16x34xf32, #tpu.memory_space<vmem>>, %arg3: memref<3x272x64xbf16, #tpu.memory_space<vmem>>, %arg4: memref<8x272xf32, #tpu.memory_space<vmem>>, %arg5: memref<1x34xf32, #tpu.memory_space<vmem>>, %arg6: memref<1x272x34xbf16, #tpu.memory_space<vmem>>, %arg7: memref<1x8x2xf32, #tpu.memory_space<vmem>>) attributes {dimension_semantics = [#tpu.dimension_semantics<parallel>], iteration_bounds = array<i64: 2>, scalar_prefetch = 0 : i64, scratch_operands = 0 : i64, tpu.core_type = #tpu.core_type<tc>, window_params = [{transform_indices = @transform_0, window_bounds = array<i64: 1, 64, 16>}, {pipeline_mode = #tpu.pipeline_mode<synchronous>, transform_indices = @transform_1, window_bounds = array<i64: 16, 34>}, {pipeline_mode = #tpu.pipeline_mode<synchronous>, transform_indices = @transform_2, window_bounds = array<i64: 3, 272, 64>}, {pipeline_mode = #tpu.pipeline_mode<synchronous>, transform_indices = @transform_3, window_bounds = array<i64: 8, 272>}, {pipeline_mode = #tpu.pipeline_mode<synchronous>, transform_indices = @transform_4, window_bounds = array<i64: 1, 34>}, {transform_indices = @transform_5, window_bounds = array<i64: 1, 272, 34>}, {transform_indices = @transform_6, window_bounds = array<i64: 1, 8, 2>}]} {
    %c0 = arith.constant 0 : index
    %c0_0 = arith.constant 0 : index
    %c0_1 = arith.constant 0 : index
    %0 = vector.load %arg1[%c0, %c0_0, %c0_1] : memref<1x64x16xf32, #tpu.memory_space<vmem>>, vector<1x64x16xf32>
    %1 = vector.shape_cast %0 : vector<1x64x16xf32> to vector<64x16xf32>
    %c0_2 = arith.constant 0 : index
    %c0_3 = arith.constant 0 : index
    %2 = vector.load %arg2[%c0_2, %c0_3] : memref<16x34xf32, #tpu.memory_space<vmem>>, vector<16x34xf32>
    %cst = arith.constant dense<0.000000e+00> : vector<64x34xf32>
    %3 = tpu.matmul %1, %2, %cst {dimension_numbers = #tpu.dot_dimension_numbers<[1], [0], [0], [1], [0, 0, 1, 1], [], []>, precision = #tpu.contract_precision<fp32>} : vector<64x16xf32>, vector<16x34xf32>, vector<64x34xf32> -> vector<64x34xf32>
    %4 = arith.truncf %3 : vector<64x34xf32> to vector<64x34xbf16>
    %c0_4 = arith.constant 0 : index
    %c0_5 = arith.constant 0 : index
    %c0_6 = arith.constant 0 : index
    %5 = vector.load %arg3[%c0_4, %c0_5, %c0_6] : memref<3x272x64xbf16, #tpu.memory_space<vmem>>, vector<1x272x64xbf16>
    %6 = vector.shape_cast %5 : vector<1x272x64xbf16> to vector<272x64xbf16>
    %cst_7 = arith.constant 0.000000e+00 : bf16
    %7 = vector.broadcast %cst_7 : bf16 to vector<64x1xbf16>
    %8 = vector.extract_strided_slice %4 {offsets = [0, 0], sizes = [64, 33], strides = [1, 1]} : vector<64x34xbf16> to vector<64x33xbf16>
    %9 = tpu.concatenate %7, %8 in 1 : vector<64x1xbf16>, vector<64x33xbf16> -> vector<64x34xbf16>
    %cst_8 = arith.constant dense<0.000000e+00> : vector<272x34xf32>
    %10 = tpu.matmul %6, %9, %cst_8 {dimension_numbers = #tpu.dot_dimension_numbers<[1], [0], [0], [1], [0, 0, 1, 1], [], []>} : vector<272x64xbf16>, vector<64x34xbf16>, vector<272x34xf32> -> vector<272x34xf32>
    %c1 = arith.constant 1 : index
    %c0_9 = arith.constant 0 : index
    %c0_10 = arith.constant 0 : index
    %11 = vector.load %arg3[%c1, %c0_9, %c0_10] : memref<3x272x64xbf16, #tpu.memory_space<vmem>>, vector<1x272x64xbf16>
    %12 = vector.shape_cast %11 : vector<1x272x64xbf16> to vector<272x64xbf16>
    %cst_11 = arith.constant dense<0.000000e+00> : vector<272x34xf32>
    %13 = tpu.matmul %12, %4, %cst_11 {dimension_numbers = #tpu.dot_dimension_numbers<[1], [0], [0], [1], [0, 0, 1, 1], [], []>} : vector<272x64xbf16>, vector<64x34xbf16>, vector<272x34xf32> -> vector<272x34xf32>
    %14 = arith.addf %10, %13 : vector<272x34xf32>
    %c2 = arith.constant 2 : index
    %c0_12 = arith.constant 0 : index
    %c0_13 = arith.constant 0 : index
    %15 = vector.load %arg3[%c2, %c0_12, %c0_13] : memref<3x272x64xbf16, #tpu.memory_space<vmem>>, vector<1x272x64xbf16>
    %16 = vector.shape_cast %15 : vector<1x272x64xbf16> to vector<272x64xbf16>
    %17 = vector.extract_strided_slice %4 {offsets = [0, 1], sizes = [64, 33], strides = [1, 1]} : vector<64x34xbf16> to vector<64x33xbf16>
    %cst_14 = arith.constant 0.000000e+00 : bf16
    %18 = vector.broadcast %cst_14 : bf16 to vector<64x1xbf16>
    %19 = tpu.concatenate %17, %18 in 1 : vector<64x33xbf16>, vector<64x1xbf16> -> vector<64x34xbf16>
    %cst_15 = arith.constant dense<0.000000e+00> : vector<272x34xf32>
    %20 = tpu.matmul %16, %19, %cst_15 {dimension_numbers = #tpu.dot_dimension_numbers<[1], [0], [0], [1], [0, 0, 1, 1], [], []>} : vector<272x64xbf16>, vector<64x34xbf16>, vector<272x34xf32> -> vector<272x34xf32>
    %21 = arith.addf %14, %20 : vector<272x34xf32>
    %c0_16 = arith.constant 0 : index
    %c0_17 = arith.constant 0 : index
    %22 = vector.load %arg5[%c0_16, %c0_17] : memref<1x34xf32, #tpu.memory_space<vmem>>, vector<1x34xf32>
    %23 = vector.broadcast %22 : vector<1x34xf32> to vector<272x34xf32>
    %24 = arith.mulf %21, %23 : vector<272x34xf32>
    %cst_18 = arith.constant dense<0.000000e+00> : vector<272xf32>
    %25 = vector.multi_reduction <add>, %24, %cst_18 [1] : vector<272x34xf32> to vector<272xf32>
    %26 = vector.shape_cast %25 : vector<272xf32> to vector<272x1xf32>
    %27 = arith.mulf %24, %24 : vector<272x34xf32>
    %cst_19 = arith.constant dense<0.000000e+00> : vector<272xf32>
    %28 = vector.multi_reduction <add>, %27, %cst_19 [1] : vector<272x34xf32> to vector<272xf32>
    %29 = vector.shape_cast %28 : vector<272xf32> to vector<272x1xf32>
    %c0_20 = arith.constant 0 : index
    %c0_21 = arith.constant 0 : index
    %30 = vector.load %arg4[%c0_20, %c0_21] : memref<8x272xf32, #tpu.memory_space<vmem>>, vector<8x272xf32>
    %31 = tpu.concatenate %26, %29 in 1 : vector<272x1xf32>, vector<272x1xf32> -> vector<272x2xf32>
    %cst_22 = arith.constant dense<0.000000e+00> : vector<8x2xf32>
    %32 = tpu.matmul %30, %31, %cst_22 {dimension_numbers = #tpu.dot_dimension_numbers<[1], [0], [0], [1], [0, 0, 1, 1], [], []>, precision = #tpu.contract_precision<fp32>} : vector<8x272xf32>, vector<272x2xf32>, vector<8x2xf32> -> vector<8x2xf32>
    %c0_23 = arith.constant 0 : index
    %c0_24 = arith.constant 0 : index
    %c0_25 = arith.constant 0 : index
    %33 = vector.load %arg7[%c0_23, %c0_24, %c0_25] : memref<1x8x2xf32, #tpu.memory_space<vmem>>, vector<1x8x2xf32>
    %34 = vector.shape_cast %33 : vector<1x8x2xf32> to vector<8x2xf32>
    %35 = vector.shape_cast %32 : vector<8x2xf32> to vector<1x8x2xf32>
    tpu.vector_store %arg7[%c0_23, %c0_24, %c0_25], %35 {strides = array<i32>} : memref<1x8x2xf32, #tpu.memory_space<vmem>>, vector<1x8x2xf32>,
    %36 = arith.truncf %24 : vector<272x34xf32> to vector<272x34xbf16>
    %c0_26 = arith.constant 0 : index
    %c0_27 = arith.constant 0 : index
    %c0_28 = arith.constant 0 : index
    %37 = vector.load %arg6[%c0_26, %c0_27, %c0_28] : memref<1x272x34xbf16, #tpu.memory_space<vmem>>, vector<1x272x34xbf16>
    %38 = vector.shape_cast %37 : vector<1x272x34xbf16> to vector<272x34xbf16>
    %39 = vector.shape_cast %36 : vector<272x34xbf16> to vector<1x272x34xbf16>
    tpu.vector_store %arg6[%c0_26, %c0_27, %c0_28], %39 {strides = array<i32>} : memref<1x272x34xbf16, #tpu.memory_space<vmem>>, vector<1x272x34xbf16>,
    return
  }
  func.func @transform_0(%arg0: i32) -> (i32, i32, i32) {
    %c0_i32 = arith.constant 0 : i32
    %c0_i32_0 = arith.constant 0 : i32
    %c0_i32_1 = arith.constant 0 : i32
    return %arg0, %c0_i32, %c0_i32_0 : i32, i32, i32
  }
  func.func @transform_1(%arg0: i32) -> (i32, i32) {
    %c0_i32 = arith.constant 0 : i32
    %c0_i32_0 = arith.constant 0 : i32
    %c0_i32_1 = arith.constant 0 : i32
    return %c0_i32, %c0_i32_0 : i32, i32
  }
  func.func @transform_2(%arg0: i32) -> (i32, i32, i32) {
    %c0_i32 = arith.constant 0 : i32
    %c0_i32_0 = arith.constant 0 : i32
    %c0_i32_1 = arith.constant 0 : i32
    %c0_i32_2 = arith.constant 0 : i32
    return %c0_i32, %c0_i32_0, %c0_i32_1 : i32, i32, i32
  }
  func.func @transform_3(%arg0: i32) -> (i32, i32) {
    %c0_i32 = arith.constant 0 : i32
    %c0_i32_0 = arith.constant 0 : i32
    %c0_i32_1 = arith.constant 0 : i32
    return %c0_i32, %c0_i32_0 : i32, i32
  }
  func.func @transform_4(%arg0: i32) -> (i32, i32) {
    %c0_i32 = arith.constant 0 : i32
    %c0_i32_0 = arith.constant 0 : i32
    %c0_i32_1 = arith.constant 0 : i32
    return %c0_i32, %c0_i32_0 : i32, i32
  }
  func.func @transform_5(%arg0: i32) -> (i32, i32, i32) {
    %c0_i32 = arith.constant 0 : i32
    %c0_i32_0 = arith.constant 0 : i32
    %c0_i32_1 = arith.constant 0 : i32
    return %arg0, %c0_i32, %c0_i32_0 : i32, i32, i32
  }
  func.func @transform_6(%arg0: i32) -> (i32, i32, i32) {
    %c0_i32 = arith.constant 0 : i32
    %c0_i32_0 = arith.constant 0 : i32
    %c0_i32_1 = arith.constant 0 : i32
    return %arg0, %c0_i32, %c0_i32_0 : i32, i32, i32
  }
}

module attributes {stable_mosaic.version = 11 : i64} {
  func.func @conv2_kernel(%arg0: i32, %arg1: memref<1x272x34xbf16, #tpu.memory_space<vmem>>, %arg2: memref<272x1xf32, #tpu.memory_space<vmem>>, %arg3: memref<272x1xf32, #tpu.memory_space<vmem>>, %arg4: memref<3x256x272xbf16, #tpu.memory_space<vmem>>, %arg5: memref<8x256xf32, #tpu.memory_space<vmem>>, %arg6: memref<1x34xf32, #tpu.memory_space<vmem>>, %arg7: memref<1x256x34xbf16, #tpu.memory_space<vmem>>, %arg8: memref<1x8x2xf32, #tpu.memory_space<vmem>>) attributes {dimension_semantics = [#tpu.dimension_semantics<parallel>], iteration_bounds = array<i64: 2>, scalar_prefetch = 0 : i64, scratch_operands = 0 : i64, tpu.core_type = #tpu.core_type<tc>, window_params = [{transform_indices = @transform_0, window_bounds = array<i64: 1, 272, 34>}, {pipeline_mode = #tpu.pipeline_mode<synchronous>, transform_indices = @transform_1, window_bounds = array<i64: 272, 1>}, {pipeline_mode = #tpu.pipeline_mode<synchronous>, transform_indices = @transform_2, window_bounds = array<i64: 272, 1>}, {pipeline_mode = #tpu.pipeline_mode<synchronous>, transform_indices = @transform_3, window_bounds = array<i64: 3, 256, 272>}, {pipeline_mode = #tpu.pipeline_mode<synchronous>, transform_indices = @transform_4, window_bounds = array<i64: 8, 256>}, {pipeline_mode = #tpu.pipeline_mode<synchronous>, transform_indices = @transform_5, window_bounds = array<i64: 1, 34>}, {transform_indices = @transform_6, window_bounds = array<i64: 1, 256, 34>}, {transform_indices = @transform_7, window_bounds = array<i64: 1, 8, 2>}]} {
    %c0 = arith.constant 0 : index
    %c0_0 = arith.constant 0 : index
    %c0_1 = arith.constant 0 : index
    %0 = vector.load %arg1[%c0, %c0_0, %c0_1] : memref<1x272x34xbf16, #tpu.memory_space<vmem>>, vector<1x272x34xbf16>
    %1 = vector.shape_cast %0 : vector<1x272x34xbf16> to vector<272x34xbf16>
    %2 = arith.extf %1 : vector<272x34xbf16> to vector<272x34xf32>
    %c0_2 = arith.constant 0 : index
    %c0_3 = arith.constant 0 : index
    %3 = vector.load %arg2[%c0_2, %c0_3] : memref<272x1xf32, #tpu.memory_space<vmem>>, vector<272x1xf32>
    %4 = vector.broadcast %3 : vector<272x1xf32> to vector<272x34xf32>
    %5 = arith.mulf %2, %4 : vector<272x34xf32>
    %c0_4 = arith.constant 0 : index
    %c0_5 = arith.constant 0 : index
    %6 = vector.load %arg3[%c0_4, %c0_5] : memref<272x1xf32, #tpu.memory_space<vmem>>, vector<272x1xf32>
    %7 = vector.broadcast %6 : vector<272x1xf32> to vector<272x34xf32>
    %8 = arith.addf %5, %7 : vector<272x34xf32>
    %cst = arith.constant 0.000000e+00 : f32
    %9 = vector.broadcast %cst : f32 to vector<272x34xf32>
    %10 = arith.maximumf %8, %9 : vector<272x34xf32>
    %c0_6 = arith.constant 0 : index
    %c0_7 = arith.constant 0 : index
    %11 = vector.load %arg6[%c0_6, %c0_7] : memref<1x34xf32, #tpu.memory_space<vmem>>, vector<1x34xf32>
    %12 = vector.broadcast %11 : vector<1x34xf32> to vector<272x34xf32>
    %13 = arith.mulf %10, %12 : vector<272x34xf32>
    %14 = arith.truncf %13 : vector<272x34xf32> to vector<272x34xbf16>
    %c0_8 = arith.constant 0 : index
    %c0_9 = arith.constant 0 : index
    %c0_10 = arith.constant 0 : index
    %15 = vector.load %arg4[%c0_8, %c0_9, %c0_10] : memref<3x256x272xbf16, #tpu.memory_space<vmem>>, vector<1x256x272xbf16>
    %16 = vector.shape_cast %15 : vector<1x256x272xbf16> to vector<256x272xbf16>
    %cst_11 = arith.constant 0.000000e+00 : bf16
    %17 = vector.broadcast %cst_11 : bf16 to vector<272x1xbf16>
    %18 = vector.extract_strided_slice %14 {offsets = [0, 0], sizes = [272, 33], strides = [1, 1]} : vector<272x34xbf16> to vector<272x33xbf16>
    %19 = tpu.concatenate %17, %18 in 1 : vector<272x1xbf16>, vector<272x33xbf16> -> vector<272x34xbf16>
    %cst_12 = arith.constant dense<0.000000e+00> : vector<256x34xf32>
    %20 = tpu.matmul %16, %19, %cst_12 {dimension_numbers = #tpu.dot_dimension_numbers<[1], [0], [0], [1], [0, 0, 1, 1], [], []>} : vector<256x272xbf16>, vector<272x34xbf16>, vector<256x34xf32> -> vector<256x34xf32>
    %c1 = arith.constant 1 : index
    %c0_13 = arith.constant 0 : index
    %c0_14 = arith.constant 0 : index
    %21 = vector.load %arg4[%c1, %c0_13, %c0_14] : memref<3x256x272xbf16, #tpu.memory_space<vmem>>, vector<1x256x272xbf16>
    %22 = vector.shape_cast %21 : vector<1x256x272xbf16> to vector<256x272xbf16>
    %cst_15 = arith.constant dense<0.000000e+00> : vector<256x34xf32>
    %23 = tpu.matmul %22, %14, %cst_15 {dimension_numbers = #tpu.dot_dimension_numbers<[1], [0], [0], [1], [0, 0, 1, 1], [], []>} : vector<256x272xbf16>, vector<272x34xbf16>, vector<256x34xf32> -> vector<256x34xf32>
    %24 = arith.addf %20, %23 : vector<256x34xf32>
    %c2 = arith.constant 2 : index
    %c0_16 = arith.constant 0 : index
    %c0_17 = arith.constant 0 : index
    %25 = vector.load %arg4[%c2, %c0_16, %c0_17] : memref<3x256x272xbf16, #tpu.memory_space<vmem>>, vector<1x256x272xbf16>
    %26 = vector.shape_cast %25 : vector<1x256x272xbf16> to vector<256x272xbf16>
    %27 = vector.extract_strided_slice %14 {offsets = [0, 1], sizes = [272, 33], strides = [1, 1]} : vector<272x34xbf16> to vector<272x33xbf16>
    %cst_18 = arith.constant 0.000000e+00 : bf16
    %28 = vector.broadcast %cst_18 : bf16 to vector<272x1xbf16>
    %29 = tpu.concatenate %27, %28 in 1 : vector<272x33xbf16>, vector<272x1xbf16> -> vector<272x34xbf16>
    %cst_19 = arith.constant dense<0.000000e+00> : vector<256x34xf32>
    %30 = tpu.matmul %26, %29, %cst_19 {dimension_numbers = #tpu.dot_dimension_numbers<[1], [0], [0], [1], [0, 0, 1, 1], [], []>} : vector<256x272xbf16>, vector<272x34xbf16>, vector<256x34xf32> -> vector<256x34xf32>
    %31 = arith.addf %24, %30 : vector<256x34xf32>
    %c0_20 = arith.constant 0 : index
    %c0_21 = arith.constant 0 : index
    %32 = vector.load %arg6[%c0_20, %c0_21] : memref<1x34xf32, #tpu.memory_space<vmem>>, vector<1x34xf32>
    %33 = vector.broadcast %32 : vector<1x34xf32> to vector<256x34xf32>
    %34 = arith.mulf %31, %33 : vector<256x34xf32>
    %cst_22 = arith.constant dense<0.000000e+00> : vector<256xf32>
    %35 = vector.multi_reduction <add>, %34, %cst_22 [1] : vector<256x34xf32> to vector<256xf32>
    %36 = vector.shape_cast %35 : vector<256xf32> to vector<256x1xf32>
    %37 = arith.mulf %34, %34 : vector<256x34xf32>
    %cst_23 = arith.constant dense<0.000000e+00> : vector<256xf32>
    %38 = vector.multi_reduction <add>, %37, %cst_23 [1] : vector<256x34xf32> to vector<256xf32>
    %39 = vector.shape_cast %38 : vector<256xf32> to vector<256x1xf32>
    %c0_24 = arith.constant 0 : index
    %c0_25 = arith.constant 0 : index
    %40 = vector.load %arg5[%c0_24, %c0_25] : memref<8x256xf32, #tpu.memory_space<vmem>>, vector<8x256xf32>
    %41 = tpu.concatenate %36, %39 in 1 : vector<256x1xf32>, vector<256x1xf32> -> vector<256x2xf32>
    %cst_26 = arith.constant dense<0.000000e+00> : vector<8x2xf32>
    %42 = tpu.matmul %40, %41, %cst_26 {dimension_numbers = #tpu.dot_dimension_numbers<[1], [0], [0], [1], [0, 0, 1, 1], [], []>, precision = #tpu.contract_precision<fp32>} : vector<8x256xf32>, vector<256x2xf32>, vector<8x2xf32> -> vector<8x2xf32>
    %c0_27 = arith.constant 0 : index
    %c0_28 = arith.constant 0 : index
    %c0_29 = arith.constant 0 : index
    %43 = vector.load %arg8[%c0_27, %c0_28, %c0_29] : memref<1x8x2xf32, #tpu.memory_space<vmem>>, vector<1x8x2xf32>
    %44 = vector.shape_cast %43 : vector<1x8x2xf32> to vector<8x2xf32>
    %45 = vector.shape_cast %42 : vector<8x2xf32> to vector<1x8x2xf32>
    tpu.vector_store %arg8[%c0_27, %c0_28, %c0_29], %45 {strides = array<i32>} : memref<1x8x2xf32, #tpu.memory_space<vmem>>, vector<1x8x2xf32>,
    %46 = arith.truncf %34 : vector<256x34xf32> to vector<256x34xbf16>
    %c0_30 = arith.constant 0 : index
    %c0_31 = arith.constant 0 : index
    %c0_32 = arith.constant 0 : index
    %47 = vector.load %arg7[%c0_30, %c0_31, %c0_32] : memref<1x256x34xbf16, #tpu.memory_space<vmem>>, vector<1x256x34xbf16>
    %48 = vector.shape_cast %47 : vector<1x256x34xbf16> to vector<256x34xbf16>
    %49 = vector.shape_cast %46 : vector<256x34xbf16> to vector<1x256x34xbf16>
    tpu.vector_store %arg7[%c0_30, %c0_31, %c0_32], %49 {strides = array<i32>} : memref<1x256x34xbf16, #tpu.memory_space<vmem>>, vector<1x256x34xbf16>,
    return
  }
  func.func @transform_0(%arg0: i32) -> (i32, i32, i32) {
    %c0_i32 = arith.constant 0 : i32
    %c0_i32_0 = arith.constant 0 : i32
    %c0_i32_1 = arith.constant 0 : i32
    return %arg0, %c0_i32, %c0_i32_0 : i32, i32, i32
  }
  func.func @transform_1(%arg0: i32) -> (i32, i32) {
    %c0_i32 = arith.constant 0 : i32
    %c0_i32_0 = arith.constant 0 : i32
    %c0_i32_1 = arith.constant 0 : i32
    return %c0_i32, %c0_i32_0 : i32, i32
  }
  func.func @transform_2(%arg0: i32) -> (i32, i32) {
    %c0_i32 = arith.constant 0 : i32
    %c0_i32_0 = arith.constant 0 : i32
    %c0_i32_1 = arith.constant 0 : i32
    return %c0_i32, %c0_i32_0 : i32, i32
  }
  func.func @transform_3(%arg0: i32) -> (i32, i32, i32) {
    %c0_i32 = arith.constant 0 : i32
    %c0_i32_0 = arith.constant 0 : i32
    %c0_i32_1 = arith.constant 0 : i32
    %c0_i32_2 = arith.constant 0 : i32
    return %c0_i32, %c0_i32_0, %c0_i32_1 : i32, i32, i32
  }
  func.func @transform_4(%arg0: i32) -> (i32, i32) {
    %c0_i32 = arith.constant 0 : i32
    %c0_i32_0 = arith.constant 0 : i32
    %c0_i32_1 = arith.constant 0 : i32
    return %c0_i32, %c0_i32_0 : i32, i32
  }
  func.func @transform_5(%arg0: i32) -> (i32, i32) {
    %c0_i32 = arith.constant 0 : i32
    %c0_i32_0 = arith.constant 0 : i32
    %c0_i32_1 = arith.constant 0 : i32
    return %c0_i32, %c0_i32_0 : i32, i32
  }
  func.func @transform_6(%arg0: i32) -> (i32, i32, i32) {
    %c0_i32 = arith.constant 0 : i32
    %c0_i32_0 = arith.constant 0 : i32
    %c0_i32_1 = arith.constant 0 : i32
    return %arg0, %c0_i32, %c0_i32_0 : i32, i32, i32
  }
  func.func @transform_7(%arg0: i32) -> (i32, i32, i32) {
    %c0_i32 = arith.constant 0 : i32
    %c0_i32_0 = arith.constant 0 : i32
    %c0_i32_1 = arith.constant 0 : i32
    return %arg0, %c0_i32, %c0_i32_0 : i32, i32, i32
  }
}

module attributes {stable_mosaic.version = 11 : i64} {
  func.func @bn_relu_out_kernel(%arg0: i32, %arg1: memref<1x256x34xbf16, #tpu.memory_space<vmem>>, %arg2: memref<256x1xf32, #tpu.memory_space<vmem>>, %arg3: memref<256x1xf32, #tpu.memory_space<vmem>>, %arg4: memref<1x256x32xf32, #tpu.memory_space<vmem>>) attributes {dimension_semantics = [#tpu.dimension_semantics<parallel>], iteration_bounds = array<i64: 2>, scalar_prefetch = 0 : i64, scratch_operands = 0 : i64, tpu.core_type = #tpu.core_type<tc>, window_params = [{transform_indices = @transform_0, window_bounds = array<i64: 1, 256, 34>}, {pipeline_mode = #tpu.pipeline_mode<synchronous>, transform_indices = @transform_1, window_bounds = array<i64: 256, 1>}, {pipeline_mode = #tpu.pipeline_mode<synchronous>, transform_indices = @transform_2, window_bounds = array<i64: 256, 1>}, {transform_indices = @transform_3, window_bounds = array<i64: 1, 256, 32>}]} {
    %c0 = arith.constant 0 : index
    %c0_0 = arith.constant 0 : index
    %c0_1 = arith.constant 0 : index
    %0 = vector.load %arg1[%c0, %c0_0, %c0_1] : memref<1x256x34xbf16, #tpu.memory_space<vmem>>, vector<1x256x34xbf16>
    %1 = vector.shape_cast %0 : vector<1x256x34xbf16> to vector<256x34xbf16>
    %2 = arith.extf %1 : vector<256x34xbf16> to vector<256x34xf32>
    %c0_2 = arith.constant 0 : index
    %c0_3 = arith.constant 0 : index
    %3 = vector.load %arg2[%c0_2, %c0_3] : memref<256x1xf32, #tpu.memory_space<vmem>>, vector<256x1xf32>
    %4 = vector.broadcast %3 : vector<256x1xf32> to vector<256x34xf32>
    %5 = arith.mulf %2, %4 : vector<256x34xf32>
    %c0_4 = arith.constant 0 : index
    %c0_5 = arith.constant 0 : index
    %6 = vector.load %arg3[%c0_4, %c0_5] : memref<256x1xf32, #tpu.memory_space<vmem>>, vector<256x1xf32>
    %7 = vector.broadcast %6 : vector<256x1xf32> to vector<256x34xf32>
    %8 = arith.addf %5, %7 : vector<256x34xf32>
    %cst = arith.constant 0.000000e+00 : f32
    %9 = vector.broadcast %cst : f32 to vector<256x34xf32>
    %10 = arith.maximumf %8, %9 : vector<256x34xf32>
    %11 = vector.extract_strided_slice %10 {offsets = [0, 1], sizes = [256, 32], strides = [1, 1]} : vector<256x34xf32> to vector<256x32xf32>
    %c0_6 = arith.constant 0 : index
    %c0_7 = arith.constant 0 : index
    %c0_8 = arith.constant 0 : index
    %12 = vector.load %arg4[%c0_6, %c0_7, %c0_8] : memref<1x256x32xf32, #tpu.memory_space<vmem>>, vector<1x256x32xf32>
    %13 = vector.shape_cast %12 : vector<1x256x32xf32> to vector<256x32xf32>
    %14 = vector.shape_cast %11 : vector<256x32xf32> to vector<1x256x32xf32>
    tpu.vector_store %arg4[%c0_6, %c0_7, %c0_8], %14 {strides = array<i32>} : memref<1x256x32xf32, #tpu.memory_space<vmem>>, vector<1x256x32xf32>,
    return
  }
  func.func @transform_0(%arg0: i32) -> (i32, i32, i32) {
    %c0_i32 = arith.constant 0 : i32
    %c0_i32_0 = arith.constant 0 : i32
    %c0_i32_1 = arith.constant 0 : i32
    return %arg0, %c0_i32, %c0_i32_0 : i32, i32, i32
  }
  func.func @transform_1(%arg0: i32) -> (i32, i32) {
    %c0_i32 = arith.constant 0 : i32
    %c0_i32_0 = arith.constant 0 : i32
    %c0_i32_1 = arith.constant 0 : i32
    return %c0_i32, %c0_i32_0 : i32, i32
  }
  func.func @transform_2(%arg0: i32) -> (i32, i32) {
    %c0_i32 = arith.constant 0 : i32
    %c0_i32_0 = arith.constant 0 : i32
    %c0_i32_1 = arith.constant 0 : i32
    return %c0_i32, %c0_i32_0 : i32, i32
  }
  func.func @transform_3(%arg0: i32) -> (i32, i32, i32) {
    %c0_i32 = arith.constant 0 : i32
    %c0_i32_0 = arith.constant 0 : i32
    %c0_i32_1 = arith.constant 0 : i32
    return %arg0, %c0_i32, %c0_i32_0 : i32, i32, i32
  }
}

</mosaic_0001>

<llo_original>
// kernel: up_forward.3
$region0: #{up_forward.3}
  #allocation0 [shape = 'u32[]', space=smem, size = 0x4, offset = 0x4, fixed_abs, tag = 'smem constant byte address 0x4 - core index']
  #allocation1 [shape = 'u32[72,128]{1,0:T(1,128)}', space=vmem, size = 0x9000, scoped, tag = 'internal scratch']
  %s0 = inlined_call_operand.vmem [shape: f32[2,64,16], index: 0, kind: input, shape index: {}]
  %s1 = inlined_call_operand.vmem [shape: f32[16,34], index: 1, kind: input, shape index: {}]
  %s2 = inlined_call_operand.vmem [shape: bf16[3,272,64], index: 2, kind: input, shape index: {}]
  %s3 = inlined_call_operand.vmem [shape: f32[8,272], index: 3, kind: input, shape index: {}]
  %s4 = inlined_call_operand.vmem [shape: f32[1,34], index: 4, kind: input, shape index: {}]
  %s5 = inlined_call_operand.vmem [shape: bf16[2,272,34], index: 5, kind: output, shape index: {0}]
  %s6 = inlined_call_operand.vmem [shape: f32[2,8,2], index: 6, kind: output, shape index: {1}]
  %7 = xla_tuple %s5, %s6
  %s8 = sld [smem:[#allocation0]]
  $region61: #{up_forward.3} parent=0
    _
  %s10 = ssub.s32 1, %s8
  %s11 = scalar_select 0, %s10, %s8
  loop: start=0, step=1, limit=4
  $region2: #{up_forward.3} parent=0 // loop_pre_header
    _
  $region3: #{up_forward.3} parent=0 // loop_header
    %s13 = sphi 0, %s17
    %p14 = scmp.ge.s32.totalorder %s13, 4
    %s23 = sphi 0, %s25
    %s26 = sphi 0, %s23
    %s27 = sphi 0, %s26
    %s43 = sphi 0, %s27
    %s47 = sphi 0, %s47
    %s49 = sphi 0, %s47
    %s50 = sphi 0, %s49
    %s64 = sphi 0, %s50
    %s68 = sphi 0, %s68
    %s70 = sphi 0, %s68
    %s71 = sphi 0, %s70
    %s85 = sphi 0, %s71
    %s89 = sphi 0, %s89
    %s91 = sphi 0, %s89
    %s92 = sphi 0, %s91
    %s106 = sphi 0, %s92
    %s110 = sphi 0, %s110
    %s112 = sphi 0, %s110
    %s113 = sphi 0, %s112
    %s127 = sphi 0, %s113
    %s133 = sphi 0, %s135
    %s136 = sphi 0, %s133
    %s137 = sphi 0, %s136
    %s153 = sphi 0, %s137
    %s159 = sphi 0, %s161
    %s162 = sphi 0, %s159
    %s163 = sphi 0, %s162
    %s179 = sphi 0, %s163
  $region4: #{up_forward.3} parent=0 // loop_header_branch
    %16 = sbr.rel (%p14) target = $region8
  $region5: #{up_forward.3} parent=0 // loop_body
    %s18 = ssub.s32 %s13, 1
    %s19 = ssub.s32 %s13, 2
    %s20 = sadd.s32 %s13, 1
    %s21 = ssub.s32 %s13, %s20
    %p22 = scmp.eq.s32.totalorder %s21, 0
    %s24 = sadd.s32 %s23, 1
    %s25 = scalar_select %p22, %s23, %s24
    %p28 = pneg %p22
    %p29 = scmp.eq.s32.totalorder %s13, 1
    %p30 = por %p28, %p29
    %p31 = scmp.ne.s32.totalorder %s23, %s26
    %p32 = scmp.eq.s32.totalorder %s13, 0
    %p33 = por %p31, %p32
    %p34 = scmp.ne.s32.totalorder %s23, %s26
    %p35 = scmp.eq.s32.totalorder %s18, 1
    %p36 = por %p34, %p35
    %p37 = scmp.ne.s32.totalorder %s26, %s27
    %p38 = scmp.eq.s32.totalorder %s18, 0
    %p39 = por %p37, %p38
    %p40 = scmp.ne.s32.totalorder %s26, %s27
    %p41 = scmp.eq.s32.totalorder %s19, 1
    %p42 = por %p40, %p41
    %p44 = scmp.ne.s32.totalorder %s27, %s43
    %p45 = scmp.eq.s32.totalorder %s19, 0
    %p46 = por %p44, %p45
    %s48 = sadd.s32 %s47, 1
    %p51 = scmp.eq.s32.totalorder %s13, 1
    %p52 = scmp.ne.s32.totalorder %s47, %s49
    %p53 = scmp.eq.s32.totalorder %s13, 0
    %p54 = por %p52, %p53
    %p55 = scmp.ne.s32.totalorder %s47, %s49
    %p56 = scmp.eq.s32.totalorder %s18, 1
    %p57 = por %p55, %p56
    %p58 = scmp.ne.s32.totalorder %s49, %s50
    %p59 = scmp.eq.s32.totalorder %s18, 0
    %p60 = por %p58, %p59
    %p61 = scmp.ne.s32.totalorder %s49, %s50
    %p62 = scmp.eq.s32.totalorder %s19, 1
    %p63 = por %p61, %p62
    %p65 = scmp.ne.s32.totalorder %s50, %s64
    %p66 = scmp.eq.s32.totalorder %s19, 0
    %p67 = por %p65, %p66
    %s69 = sadd.s32 %s68, 1
    %p72 = scmp.eq.s32.totalorder %s13, 1
    %p73 = scmp.ne.s32.totalorder %s68, %s70
    %p74 = scmp.eq.s32.totalorder %s13, 0
    %p75 = por %p73, %p74
    %p76 = scmp.ne.s32.totalorder %s68, %s70
    %p77 = scmp.eq.s32.totalorder %s18, 1
    %p78 = por %p76, %p77
    %p79 = scmp.ne.s32.totalorder %s70, %s71
    %p80 = scmp.eq.s32.totalorder %s18, 0
    %p81 = por %p79, %p80
    %p82 = scmp.ne.s32.totalorder %s70, %s71
    %p83 = scmp.eq.s32.totalorder %s19, 1
    %p84 = por %p82, %p83
    %p86 = scmp.ne.s32.totalorder %s71, %s85
    %p87 = scmp.eq.s32.totalorder %s19, 0
    %p88 = por %p86, %p87
    %s90 = sadd.s32 %s89, 1
    %p93 = scmp.eq.s32.totalorder %s13, 1
    %p94 = scmp.ne.s32.totalorder %s89, %s91
    %p95 = scmp.eq.s32.totalorder %s13, 0
    %p96 = por %p94, %p95
    %p97 = scmp.ne.s32.totalorder %s89, %s91
    %p98 = scmp.eq.s32.totalorder %s18, 1
    %p99 = por %p97, %p98
    %p100 = scmp.ne.s32.totalorder %s91, %s92
    %p101 = scmp.eq.s32.totalorder %s18, 0
    %p102 = por %p100, %p101
    %p103 = scmp.ne.s32.totalorder %s91, %s92
    %p104 = scmp.eq.s32.totalorder %s19, 1
    %p105 = por %p103, %p104
    %p107 = scmp.ne.s32.totalorder %s92, %s106
    %p108 = scmp.eq.s32.totalorder %s19, 0
    %p109 = por %p107, %p108
    %s111 = sadd.s32 %s110, 1
    %p114 = scmp.eq.s32.totalorder %s13, 1
    %p115 = scmp.ne.s32.totalorder %s110, %s112
    %p116 = scmp.eq.s32.totalorder %s13, 0
    %p117 = por %p115, %p116
    %p118 = scmp.ne.s32.totalorder %s110, %s112
    %p119 = scmp.eq.s32.totalorder %s18, 1
    %p120 = por %p118, %p119
    %p121 = scmp.ne.s32.totalorder %s112, %s113
    %p122 = scmp.eq.s32.totalorder %s18, 0
    %p123 = por %p121, %p122
    %p124 = scmp.ne.s32.totalorder %s112, %s113
    %p125 = scmp.eq.s32.totalorder %s19, 1
    %p126 = por %p124, %p125
    %p128 = scmp.ne.s32.totalorder %s113, %s127
    %p129 = scmp.eq.s32.totalorder %s19, 0
    %p130 = por %p128, %p129
    %s131 = ssub.s32 %s13, %s20
    %p132 = scmp.eq.s32.totalorder %s131, 0
    %s134 = sadd.s32 %s133, 1
    %s135 = scalar_select %p132, %s133, %s134
    %p138 = pneg %p132
    %p139 = scmp.eq.s32.totalorder %s13, 1
    %p140 = por %p138, %p139
    %p141 = scmp.ne.s32.totalorder %s133, %s136
    %p142 = scmp.eq.s32.totalorder %s13, 0
    %p143 = por %p141, %p142
    %p144 = scmp.ne.s32.totalorder %s133, %s136
    %p145 = scmp.eq.s32.totalorder %s18, 1
    %p146 = por %p144, %p145
    %p147 = scmp.ne.s32.totalorder %s136, %s137
    %p148 = scmp.eq.s32.totalorder %s18, 0
    %p149 = por %p147, %p148
    %p150 = scmp.ne.s32.totalorder %s136, %s137
    %p151 = scmp.eq.s32.totalorder %s19, 1
    %p152 = por %p150, %p151
    %p154 = scmp.ne.s32.totalorder %s137, %s153
    %p155 = scmp.eq.s32.totalorder %s19, 0
    %p156 = por %p154, %p155
    %s157 = ssub.s32 %s13, %s20
    %p158 = scmp.eq.s32.totalorder %s157, 0
    %s160 = sadd.s32 %s159, 1
    %s161 = scalar_select %p158, %s159, %s160
    %p164 = pneg %p158
    %p165 = scmp.eq.s32.totalorder %s13, 1
    %p166 = por %p164, %p165
    %p167 = scmp.ne.s32.totalorder %s159, %s162
    %p168 = scmp.eq.s32.totalorder %s13, 0
    %p169 = por %p167, %p168
    %p170 = scmp.ne.s32.totalorder %s159, %s162
    %p171 = scmp.eq.s32.totalorder %s18, 1
    %p172 = por %p170, %p171
    %p173 = scmp.ne.s32.totalorder %s162, %s163
    %p174 = scmp.eq.s32.totalorder %s18, 0
    %p175 = por %p173, %p174
    %p176 = scmp.ne.s32.totalorder %s162, %s163
    %p177 = scmp.eq.s32.totalorder %s19, 1
    %p178 = por %p176, %p177
    %p180 = scmp.ne.s32.totalorder %s163, %s179
    %p181 = scmp.eq.s32.totalorder %s19, 0
    %p182 = por %p180, %p181
    %p183 = scmp.le.s32.totalorder 1, %s13
    %p184 = scmp.lt.s32.totalorder %s13, 3
    %p185 = pnand %p183, %p184
    %p186 = pneg %p185
    // Predicated region
    $region9: #{up_forward.3} parent=5 // pred_check
      _
    $region10: #{up_forward.3} parent=5 // pred_check_branch
      %188 = sbr.rel (%p185) target = $region12
    $region11: #{up_forward.3} parent=5 // pred_region
      %s189 = ssub.s32 %s13, 1
      // Predicated region
      $region13: #{up_forward.3} parent=11 // pred_check
        %p190 = pneg %p60
      $region14: #{up_forward.3} parent=11 // pred_check_branch
        %192 = sbr.rel (%p190) target = $region16
      $region15: #{up_forward.3} parent=11 // pred_region
        _
      $region16: #{up_forward.3} parent=11 // pred_fallthru
        _
      // Predicated region
      $region17: #{up_forward.3} parent=11 // pred_check
        %p193 = pneg %p81
      $region18: #{up_forward.3} parent=11 // pred_check_branch
        %195 = sbr.rel (%p193) target = $region20
      $region19: #{up_forward.3} parent=11 // pred_region
        _
      $region20: #{up_forward.3} parent=11 // pred_fallthru
        _
      // Predicated region
      $region21: #{up_forward.3} parent=11 // pred_check
        %p196 = pneg %p102
      $region22: #{up_forward.3} parent=11 // pred_check_branch
        %198 = sbr.rel (%p196) target = $region24
      $region23: #{up_forward.3} parent=11 // pred_region
        _
      $region24: #{up_forward.3} parent=11 // pred_fallthru
        _
      // Predicated region
      $region25: #{up_forward.3} parent=11 // pred_check
        %p199 = pneg %p123
      $region26: #{up_forward.3} parent=11 // pred_check_branch
        %201 = sbr.rel (%p199) target = $region28
      $region27: #{up_forward.3} parent=11 // pred_region
        _
      $region28: #{up_forward.3} parent=11 // pred_fallthru
        _
    $region12: #{up_forward.3} parent=5 // pred_fallthru
      _
    %p202 = scmp.lt.s32.totalorder %s13, 2
    // Predicated region
    $region29: #{up_forward.3} parent=5 // pred_check
      %p203 = pneg %p202
    $region30: #{up_forward.3} parent=5 // pred_check_branch
      %205 = sbr.rel (%p203) target = $region32
    $region31: #{up_forward.3} parent=5 // pred_region
      // Predicated region
      $region33: #{up_forward.3} parent=31 // pred_check
        %p206 = pneg %p33
      $region34: #{up_forward.3} parent=31 // pred_check_branch
        %208 = sbr.rel (%p206) target = $region36
      $region35: #{up_forward.3} parent=31 // pred_region
        %p209 = scmp.lt.s32.totalorder %s13, 1
        %s210 = scalar_select %p209, %s13, 1
        %s211 = smul.addr %s210, 8
        %s212 = smul.addr %s211, 8
        %s213 = scalar_lea.vmem %s0, %s212
      $region36: #{up_forward.3} parent=31 // pred_fallthru
        _
    $region32: #{up_forward.3} parent=5 // pred_fallthru
      _
    %p214 = scmp.le.s32.totalorder 1, %s13
    %p215 = scmp.lt.s32.totalorder %s13, 3
    %p216 = pnand %p214, %p215
    %p217 = pneg %p216
    // Predicated region
    $region37: #{up_forward.3} parent=5 // pred_check
      _
    $region38: #{up_forward.3} parent=5 // pred_check_branch
      %219 = sbr.rel (%p216) target = $region40
    $region39: #{up_forward.3} parent=5 // pred_region
      %s220 = ssub.s32 %s13, 1
      %p221 = scmp.lt.s32.totalorder %s18, 1
      %s222 = scalar_select %p221, %s18, 1
      %s223 = smul.addr %s222, 8
      %s224 = smul.addr %s223, 8
      %s225 = scalar_lea.vmem %s0, %s224
      %p226 = pneg %p39
      %p227 = pneg %p36
      %p228 = pneg %p60
      %p229 = pneg %p57
      %p230 = pneg %p81
      %p231 = pneg %p78
      %p232 = pneg %p102
      %p233 = pneg %p99
      %p234 = pneg %p123
      %p235 = pneg %p120
      %p236 = pneg %p149
      %p237 = pneg %p146
      %p238 = scmp.lt.s32.totalorder %s18, 1
      %s239 = scalar_select %p238, %s18, 1
      %s240 = smul.addr %s239, 34
      %s241 = smul.addr %s240, 4
      %s242 = scalar_lea.vmem %s5, %s241
      %p243 = pneg %p175
      %p244 = pneg %p172
      %p245 = scmp.lt.s32.totalorder %s18, 1
      %s246 = scalar_select %p245, %s18, 1
      %s247 = smul.addr %s246, 8
      %s248 = scalar_lea.vmem %s6, %s247
      %p249 = scmp.lt.s32.totalorder %s18, 1
      %s250 = scalar_select %p249, %s18, 1
      %s251 = smul.addr %s250, 8
      %s252 = smul.addr %s251, 8
      %s253 = scalar_lea.vmem %s0, %s252
      %p254 = scmp.lt.s32.totalorder %s18, 1
      %s255 = scalar_select %p254, %s18, 1
      %s256 = smul.addr %s255, 34
      %s257 = smul.addr %s256, 4
      %s258 = scalar_lea.vmem %s5, %s257
      %p259 = scmp.lt.s32.totalorder %s18, 1
      %s260 = scalar_select %p259, %s18, 1
      %s261 = smul.addr %s260, 8
      %s262 = scalar_lea.vmem %s6, %s261
      %v264 = vld [vmem:[%s253] sm:$0xff]
      %v265 = vld [vmem:[%s253 + $0x8] sm:$0xff]
      %v266 = vld [vmem:[%s253 + $0x10] sm:$0xff]
      %v267 = vld [vmem:[%s253 + $0x18] sm:$0xff]
      %v268 = vld [vmem:[%s253 + $0x20] sm:$0xff]
      %v269 = vld [vmem:[%s253 + $0x28] sm:$0xff]
      %v270 = vld [vmem:[%s253 + $0x30] sm:$0xff]
      %v271 = vld [vmem:[%s253 + $0x38] sm:$0xff]
      %v272 = vld [vmem:[%s1] sm:$0xff]
      %v273 = vld [vmem:[%s1 + $0x8] sm:$0xff]
      %vm274 = vcmask 130048
      %v276 = vsel %vm274, %v264, 0
      %v279 = vsel %vm274, %v265, 0
      %v282 = vsel %vm274, %v266, 0
      %v285 = vsel %vm274, %v267, 0
      %v288 = vsel %vm274, %v268, 0
      %v291 = vsel %vm274, %v269, 0
      %v294 = vsel %vm274, %v270, 0
      %v297 = vsel %vm274, %v271, 0
      %299 = vmatpush.msra.mxu0 0.0
      %300 = vmatpush.msra.mxu0 0.0
      %301 = vmatpush.msra.mxu0 0.0
      %302 = vmatpush.msra.mxu0 0.0
      %303 = vmatpush.msra.mxu0 0.0
      %304 = vmatpush.msra.mxu0 0.0
      %305 = vmatpush.msra.mxu0 0.0
      %306 = vmatpush.msra.mxu0 0.0
      %307 = vmatpush.msra.mxu0 0.0
      %308 = vmatpush.msra.mxu0 0.0
      %309 = vmatpush.msra.mxu0 0.0
      %310 = vmatpush.msra.mxu0 0.0
      %311 = vmatpush.msra.mxu0 0.0
      %312 = vmatpush.msra.mxu0 0.0
      %v313 = vand.u32 %v273, 4294901760
      %314 = vmatpush.msra.mxu0 %v313
      %v315 = vand.u32 %v272, 4294901760
      %316 = vmatpush.msra.mxu0 %v315
      %v317 = vand.u32 %v276, 4294901760
      %v318 = vsub.f32 %v276, %v317
      %v319 = vand.u32 %v318, 4294901760
      %v320 = vsub.f32 %v318, %v319
      %v321 = vand.u32 %v320, 4294901760
      %322 = vmatmul.f32.gmra.mxu0 %v321
      %v323 = vpop.f32.mrf.mxu0
      %v324 = vadd.f32 0.0, %v323
      %v325 = vand.u32 %v279, 4294901760
      %v326 = vsub.f32 %v279, %v325
      %v327 = vand.u32 %v326, 4294901760
      %v328 = vsub.f32 %v326, %v327
      %v329 = vand.u32 %v328, 4294901760
      %330 = vmatmul.f32.gmra.mxu0 %v329
      %v331 = vpop.f32.mrf.mxu0
      %v332 = vadd.f32 0.0, %v331
      %v333 = vand.u32 %v282, 4294901760
      %v334 = vsub.f32 %v282, %v333
      %v335 = vand.u32 %v334, 4294901760
      %v336 = vsub.f32 %v334, %v335
      %v337 = vand.u32 %v336, 4294901760
      %338 = vmatmul.f32.gmra.mxu0 %v337
      %v339 = vpop.f32.mrf.mxu0
      %v340 = vadd.f32 0.0, %v339
      %v341 = vand.u32 %v285, 4294901760
      %v342 = vsub.f32 %v285, %v341
      %v343 = vand.u32 %v342, 4294901760
      %v344 = vsub.f32 %v342, %v343
      %v345 = vand.u32 %v344, 4294901760
      %346 = vmatmul.f32.gmra.mxu0 %v345
      %v347 = vpop.f32.mrf.mxu0
      %v348 = vadd.f32 0.0, %v347
      %v349 = vand.u32 %v288, 4294901760
      %v350 = vsub.f32 %v288, %v349
      %v351 = vand.u32 %v350, 4294901760
      %v352 = vsub.f32 %v350, %v351
      %v353 = vand.u32 %v352, 4294901760
      %354 = vmatmul.f32.gmra.mxu0 %v353
      %v355 = vpop.f32.mrf.mxu0
      %v356 = vadd.f32 0.0, %v355
      %v357 = vand.u32 %v291, 4294901760
      %v358 = vsub.f32 %v291, %v357
      %v359 = vand.u32 %v358, 4294901760
      %v360 = vsub.f32 %v358, %v359
      %v361 = vand.u32 %v360, 4294901760
      %362 = vmatmul.f32.gmra.mxu0 %v361
      %v363 = vpop.f32.mrf.mxu0
      %v364 = vadd.f32 0.0, %v363
      %v365 = vand.u32 %v294, 4294901760
      %v366 = vsub.f32 %v294, %v365
      %v367 = vand.u32 %v366, 4294901760
      %v368 = vsub.f32 %v366, %v367
      %v369 = vand.u32 %v368, 4294901760
      %370 = vmatmul.f32.gmra.mxu0 %v369
      %v371 = vpop.f32.mrf.mxu0
      %v372 = vadd.f32 0.0, %v371
      %v373 = vand.u32 %v297, 4294901760
      %v374 = vsub.f32 %v297, %v373
      %v375 = vand.u32 %v374, 4294901760
      %v376 = vsub.f32 %v374, %v375
      %v377 = vand.u32 %v376, 4294901760
      %378 = vmatmul.f32.gmra.mxu0 %v377
      %v379 = vpop.f32.mrf.mxu0
      %v380 = vadd.f32 0.0, %v379
      %381 = vdwg.mxu0
      %382 = vmatpush.msra.mxu0 0.0
      %383 = vmatpush.msra.mxu0 0.0
      %384 = vmatpush.msra.mxu0 0.0
      %385 = vmatpush.msra.mxu0 0.0
      %386 = vmatpush.msra.mxu0 0.0
      %387 = vmatpush.msra.mxu0 0.0
      %388 = vmatpush.msra.mxu0 0.0
      %389 = vmatpush.msra.mxu0 0.0
      %390 = vmatpush.msra.mxu0 0.0
      %391 = vmatpush.msra.mxu0 0.0
      %392 = vmatpush.msra.mxu0 0.0
      %393 = vmatpush.msra.mxu0 0.0
      %394 = vmatpush.msra.mxu0 0.0
      %395 = vmatpush.msra.mxu0 0.0
      %v396 = vand.u32 %v273, 4294901760
      %v397 = vsub.f32 %v273, %v396
      %v398 = vand.u32 %v397, 4294901760
      %v399 = vsub.f32 %v397, %v398
      %v400 = vand.u32 %v399, 4294901760
      %401 = vmatpush.msra.mxu0 %v400
      %v402 = vand.u32 %v272, 4294901760
      %v403 = vsub.f32 %v272, %v402
      %v404 = vand.u32 %v403, 4294901760
      %v405 = vsub.f32 %v403, %v404
      %v406 = vand.u32 %v405, 4294901760
      %407 = vmatpush.msra.mxu0 %v406
      %v408 = vand.u32 %v276, 4294901760
      %409 = vmatmul.f32.gmra.mxu0 %v408
      %v410 = vpop.f32.mrf.mxu0
      %v411 = vadd.f32 %v324, %v410
      %v412 = vand.u32 %v279, 4294901760
      %413 = vmatmul.f32.gmra.mxu0 %v412
      %v414 = vpop.f32.mrf.mxu0
      %v415 = vadd.f32 %v332, %v414
      %v416 = vand.u32 %v282, 4294901760
      %417 = vmatmul.f32.gmra.mxu0 %v416
      %v418 = vpop.f32.mrf.mxu0
      %v419 = vadd.f32 %v340, %v418
      %v420 = vand.u32 %v285, 4294901760
      %421 = vmatmul.f32.gmra.mxu0 %v420
      %v422 = vpop.f32.mrf.mxu0
      %v423 = vadd.f32 %v348, %v422
      %v424 = vand.u32 %v288, 4294901760
      %425 = vmatmul.f32.gmra.mxu0 %v424
      %v426 = vpop.f32.mrf.mxu0
      %v427 = vadd.f32 %v356, %v426
      %v428 = vand.u32 %v291, 4294901760
      %429 = vmatmul.f32.gmra.mxu0 %v428
      %v430 = vpop.f32.mrf.mxu0
      %v431 = vadd.f32 %v364, %v430
      %v432 = vand.u32 %v294, 4294901760
      %433 = vmatmul.f32.gmra.mxu0 %v432
      %v434 = vpop.f32.mrf.mxu0
      %v435 = vadd.f32 %v372, %v434
      %v436 = vand.u32 %v297, 4294901760
      %437 = vmatmul.f32.gmra.mxu0 %v436
      %v438 = vpop.f32.mrf.mxu0
      %v439 = vadd.f32 %v380, %v438
      %440 = vdwg.mxu0
      %441 = vmatpush.msra.mxu0 0.0
      %442 = vmatpush.msra.mxu0 0.0
      %443 = vmatpush.msra.mxu0 0.0
      %444 = vmatpush.msra.mxu0 0.0
      %445 = vmatpush.msra.mxu0 0.0
      %446 = vmatpush.msra.mxu0 0.0
      %447 = vmatpush.msra.mxu0 0.0
      %448 = vmatpush.msra.mxu0 0.0
      %449 = vmatpush.msra.mxu0 0.0
      %450 = vmatpush.msra.mxu0 0.0
      %451 = vmatpush.msra.mxu0 0.0
      %452 = vmatpush.msra.mxu0 0.0
      %453 = vmatpush.msra.mxu0 0.0
      %454 = vmatpush.msra.mxu0 0.0
      %v455 = vand.u32 %v273, 4294901760
      %v456 = vsub.f32 %v273, %v455
      %457 = vmatpush.msra.mxu0 %v456
      %v458 = vand.u32 %v272, 4294901760
      %v459 = vsub.f32 %v272, %v458
      %460 = vmatpush.msra.mxu0 %v459
      %v461 = vand.u32 %v276, 4294901760
      %v462 = vsub.f32 %v276, %v461
      %463 = vmatmul.f32.gmra.mxu0 %v462
      %v464 = vpop.f32.mrf.mxu0
      %v465 = vadd.f32 %v411, %v464
      %v466 = vand.u32 %v279, 4294901760
      %v467 = vsub.f32 %v279, %v466
      %468 = vmatmul.f32.gmra.mxu0 %v467
      %v469 = vpop.f32.mrf.mxu0
      %v470 = vadd.f32 %v415, %v469
      %v471 = vand.u32 %v282, 4294901760
      %v472 = vsub.f32 %v282, %v471
      %473 = vmatmul.f32.gmra.mxu0 %v472
      %v474 = vpop.f32.mrf.mxu0
      %v475 = vadd.f32 %v419, %v474
      %v476 = vand.u32 %v285, 4294901760
      %v477 = vsub.f32 %v285, %v476
      %478 = vmatmul.f32.gmra.mxu0 %v477
      %v479 = vpop.f32.mrf.mxu0
      %v480 = vadd.f32 %v423, %v479
      %v481 = vand.u32 %v288, 4294901760
      %v482 = vsub.f32 %v288, %v481
      %483 = vmatmul.f32.gmra.mxu0 %v482
      %v484 = vpop.f32.mrf.mxu0
      %v485 = vadd.f32 %v427, %v484
      %v486 = vand.u32 %v291, 4294901760
      %v487 = vsub.f32 %v291, %v486
      %488 = vmatmul.f32.gmra.mxu0 %v487
      %v489 = vpop.f32.mrf.mxu0
      %v490 = vadd.f32 %v431, %v489
      %v491 = vand.u32 %v294, 4294901760
      %v492 = vsub.f32 %v294, %v491
      %493 = vmatmul.f32.gmra.mxu0 %v492
      %v494 = vpop.f32.mrf.mxu0
      %v495 = vadd.f32 %v435, %v494
      %v496 = vand.u32 %v297, 4294901760
      %v497 = vsub.f32 %v297, %v496
      %498 = vmatmul.f32.gmra.mxu0 %v497
      %v499 = vpop.f32.mrf.mxu0
      %v500 = vadd.f32 %v439, %v499
      %501 = vdwg.mxu0
      %502 = vmatpush.msra.mxu0 0.0
      %503 = vmatpush.msra.mxu0 0.0
      %504 = vmatpush.msra.mxu0 0.0
      %505 = vmatpush.msra.mxu0 0.0
      %506 = vmatpush.msra.mxu0 0.0
      %507 = vmatpush.msra.mxu0 0.0
      %508 = vmatpush.msra.mxu0 0.0
      %509 = vmatpush.msra.mxu0 0.0
      %510 = vmatpush.msra.mxu0 0.0
      %511 = vmatpush.msra.mxu0 0.0
      %512 = vmatpush.msra.mxu0 0.0
      %513 = vmatpush.msra.mxu0 0.0
      %514 = vmatpush.msra.mxu0 0.0
      %515 = vmatpush.msra.mxu0 0.0
      %v516 = vand.u32 %v273, 4294901760
      %517 = vmatpush.msra.mxu0 %v516
      %v518 = vand.u32 %v272, 4294901760
      %519 = vmatpush.msra.mxu0 %v518
      %v520 = vand.u32 %v276, 4294901760
      %v521 = vsub.f32 %v276, %v520
      %v522 = vand.u32 %v521, 4294901760
      %523 = vmatmul.f32.gmra.mxu0 %v522
      %v524 = vpop.f32.mrf.mxu0
      %v525 = vadd.f32 %v465, %v524
      %v526 = vand.u32 %v279, 4294901760
      %v527 = vsub.f32 %v279, %v526
      %v528 = vand.u32 %v527, 4294901760
      %529 = vmatmul.f32.gmra.mxu0 %v528
      %v530 = vpop.f32.mrf.mxu0
      %v531 = vadd.f32 %v470, %v530
      %v532 = vand.u32 %v282, 4294901760
      %v533 = vsub.f32 %v282, %v532
      %v534 = vand.u32 %v533, 4294901760
      %535 = vmatmul.f32.gmra.mxu0 %v534
      %v536 = vpop.f32.mrf.mxu0
      %v537 = vadd.f32 %v475, %v536
      %v538 = vand.u32 %v285, 4294901760
      %v539 = vsub.f32 %v285, %v538
      %v540 = vand.u32 %v539, 4294901760
      %541 = vmatmul.f32.gmra.mxu0 %v540
      %v542 = vpop.f32.mrf.mxu0
      %v543 = vadd.f32 %v480, %v542
      %v544 = vand.u32 %v288, 4294901760
      %v545 = vsub.f32 %v288, %v544
      %v546 = vand.u32 %v545, 4294901760
      %547 = vmatmul.f32.gmra.mxu0 %v546
      %v548 = vpop.f32.mrf.mxu0
      %v549 = vadd.f32 %v485, %v548
      %v550 = vand.u32 %v291, 4294901760
      %v551 = vsub.f32 %v291, %v550
      %v552 = vand.u32 %v551, 4294901760
      %553 = vmatmul.f32.gmra.mxu0 %v552
      %v554 = vpop.f32.mrf.mxu0
      %v555 = vadd.f32 %v490, %v554
      %v556 = vand.u32 %v294, 4294901760
      %v557 = vsub.f32 %v294, %v556
      %v558 = vand.u32 %v557, 4294901760
      %559 = vmatmul.f32.gmra.mxu0 %v558
      %v560 = vpop.f32.mrf.mxu0
      %v561 = vadd.f32 %v495, %v560
      %v562 = vand.u32 %v297, 4294901760
      %v563 = vsub.f32 %v297, %v562
      %v564 = vand.u32 %v563, 4294901760
      %565 = vmatmul.f32.gmra.mxu0 %v564
      %v566 = vpop.f32.mrf.mxu0
      %v567 = vadd.f32 %v500, %v566
      %568 = vdwg.mxu0
      %569 = vmatpush.msra.mxu0 0.0
      %570 = vmatpush.msra.mxu0 0.0
      %571 = vmatpush.msra.mxu0 0.0
      %572 = vmatpush.msra.mxu0 0.0
      %573 = vmatpush.msra.mxu0 0.0
      %574 = vmatpush.msra.mxu0 0.0
      %575 = vmatpush.msra.mxu0 0.0
      %576 = vmatpush.msra.mxu0 0.0
      %577 = vmatpush.msra.mxu0 0.0
      %578 = vmatpush.msra.mxu0 0.0
      %579 = vmatpush.msra.mxu0 0.0
      %580 = vmatpush.msra.mxu0 0.0
      %581 = vmatpush.msra.mxu0 0.0
      %582 = vmatpush.msra.mxu0 0.0
      %v583 = vand.u32 %v273, 4294901760
      %v584 = vsub.f32 %v273, %v583
      %v585 = vand.u32 %v584, 4294901760
      %586 = vmatpush.msra.mxu0 %v585
      %v587 = vand.u32 %v272, 4294901760
      %v588 = vsub.f32 %v272, %v587
      %v589 = vand.u32 %v588, 4294901760
      %590 = vmatpush.msra.mxu0 %v589
      %v591 = vand.u32 %v276, 4294901760
      %592 = vmatmul.f32.gmra.mxu0 %v591
      %v593 = vpop.f32.mrf.mxu0
      %v594 = vadd.f32 %v525, %v593
      %v595 = vand.u32 %v279, 4294901760
      %596 = vmatmul.f32.gmra.mxu0 %v595
      %v597 = vpop.f32.mrf.mxu0
      %v598 = vadd.f32 %v531, %v597
      %v599 = vand.u32 %v282, 4294901760
      %600 = vmatmul.f32.gmra.mxu0 %v599
      %v601 = vpop.f32.mrf.mxu0
      %v602 = vadd.f32 %v537, %v601
      %v603 = vand.u32 %v285, 4294901760
      %604 = vmatmul.f32.gmra.mxu0 %v603
      %v605 = vpop.f32.mrf.mxu0
      %v606 = vadd.f32 %v543, %v605
      %v607 = vand.u32 %v288, 4294901760
      %608 = vmatmul.f32.gmra.mxu0 %v607
      %v609 = vpop.f32.mrf.mxu0
      %v610 = vadd.f32 %v549, %v609
      %v611 = vand.u32 %v291, 4294901760
      %612 = vmatmul.f32.gmra.mxu0 %v611
      %v613 = vpop.f32.mrf.mxu0
      %v614 = vadd.f32 %v555, %v613
      %v615 = vand.u32 %v294, 4294901760
      %616 = vmatmul.f32.gmra.mxu0 %v615
      %v617 = vpop.f32.mrf.mxu0
      %v618 = vadd.f32 %v561, %v617
      %v619 = vand.u32 %v297, 4294901760
      %620 = vmatmul.f32.gmra.mxu0 %v619
      %v621 = vpop.f32.mrf.mxu0
      %v622 = vadd.f32 %v567, %v621
      %623 = vdwg.mxu0
      %624 = vmatpush.msra.mxu0 0.0
      %625 = vmatpush.msra.mxu0 0.0
      %626 = vmatpush.msra.mxu0 0.0
      %627 = vmatpush.msra.mxu0 0.0
      %628 = vmatpush.msra.mxu0 0.0
      %629 = vmatpush.msra.mxu0 0.0
      %630 = vmatpush.msra.mxu0 0.0
      %631 = vmatpush.msra.mxu0 0.0
      %632 = vmatpush.msra.mxu0 0.0
      %633 = vmatpush.msra.mxu0 0.0
      %634 = vmatpush.msra.mxu0 0.0
      %635 = vmatpush.msra.mxu0 0.0
      %636 = vmatpush.msra.mxu0 0.0
      %637 = vmatpush.msra.mxu0 0.0
      %v638 = vand.u32 %v273, 4294901760
      %639 = vmatpush.msra.mxu0 %v638
      %v640 = vand.u32 %v272, 4294901760
      %641 = vmatpush.msra.mxu0 %v640
      %v642 = vand.u32 %v276, 4294901760
      %643 = vmatmul.f32.gmra.mxu0 %v642
      %v644 = vpop.f32.mrf.mxu0
      %v645 = vadd.f32 %v594, %v644
      %v646 = vand.u32 %v279, 4294901760
      %647 = vmatmul.f32.gmra.mxu0 %v646
      %v648 = vpop.f32.mrf.mxu0
      %v649 = vadd.f32 %v598, %v648
      %v650 = vand.u32 %v282, 4294901760
      %651 = vmatmul.f32.gmra.mxu0 %v650
      %v652 = vpop.f32.mrf.mxu0
      %v653 = vadd.f32 %v602, %v652
      %v654 = vand.u32 %v285, 4294901760
      %655 = vmatmul.f32.gmra.mxu0 %v654
      %v656 = vpop.f32.mrf.mxu0
      %v657 = vadd.f32 %v606, %v656
      %v658 = vand.u32 %v288, 4294901760
      %659 = vmatmul.f32.gmra.mxu0 %v658
      %v660 = vpop.f32.mrf.mxu0
      %v661 = vadd.f32 %v610, %v660
      %v662 = vand.u32 %v291, 4294901760
      %663 = vmatmul.f32.gmra.mxu0 %v662
      %v664 = vpop.f32.mrf.mxu0
      %v665 = vadd.f32 %v614, %v664
      %v666 = vand.u32 %v294, 4294901760
      %667 = vmatmul.f32.gmra.mxu0 %v666
      %v668 = vpop.f32.mrf.mxu0
      %v669 = vadd.f32 %v618, %v668
      %v670 = vand.u32 %v297, 4294901760
      %671 = vmatmul.f32.gmra.mxu0 %v670
      %v672 = vpop.f32.mrf.mxu0
      %v673 = vadd.f32 %v622, %v672
      %674 = vdwg.mxu0
      %v675 = vpack.c.bf16 %v645, %v645
      %v676 = vpack.c.bf16 %v649, %v649
      %v677 = vpack.c.bf16 %v653, %v653
      %v678 = vpack.c.bf16 %v657, %v657
      %v679 = vpack.c.bf16 %v661, %v661
      %v680 = vpack.c.bf16 %v665, %v665
      %v681 = vpack.c.bf16 %v669, %v669
      %v682 = vpack.c.bf16 %v673, %v673
      %v683 = vld [vmem:[%s2] sm:$0xf]
      %v684 = vld [vmem:[%s2 + $0x4] sm:$0xf]
      %v685 = vld [vmem:[%s2 + $0x8] sm:$0xf]
      %v686 = vld [vmem:[%s2 + $0xc] sm:$0xf]
      %v687 = vld [vmem:[%s2 + $0x10] sm:$0xf]
      %v688 = vld [vmem:[%s2 + $0x14] sm:$0xf]
      %v689 = vld [vmem:[%s2 + $0x18] sm:$0xf]
      %v690 = vld [vmem:[%s2 + $0x1c] sm:$0xf]
      %v691 = vld [vmem:[%s2 + $0x20] sm:$0xf]
      %v692 = vld [vmem:[%s2 + $0x24] sm:$0xf]
      %v693 = vld [vmem:[%s2 + $0x28] sm:$0xf]
      %v694 = vld [vmem:[%s2 + $0x2c] sm:$0xf]
      %v695 = vld [vmem:[%s2 + $0x30] sm:$0xf]
      %v696 = vld [vmem:[%s2 + $0x34] sm:$0xf]
      %v697 = vld [vmem:[%s2 + $0x38] sm:$0xf]
      %v698 = vld [vmem:[%s2 + $0x3c] sm:$0xf]
      %v699 = vld [vmem:[%s2 + $0x40] sm:$0xf]
      %v700 = vld [vmem:[%s2 + $0x44] sm:$0xf]
      %v701 = vld [vmem:[%s2 + $0x48] sm:$0xf]
      %v702 = vld [vmem:[%s2 + $0x4c] sm:$0xf]
      %v703 = vld [vmem:[%s2 + $0x50] sm:$0xf]
      %v704 = vld [vmem:[%s2 + $0x54] sm:$0xf]
      %v705 = vld [vmem:[%s2 + $0x58] sm:$0xf]
      %v706 = vld [vmem:[%s2 + $0x5c] sm:$0xf]
      %v707 = vld [vmem:[%s2 + $0x60] sm:$0xf]
      %v708 = vld [vmem:[%s2 + $0x64] sm:$0xf]
      %v709 = vld [vmem:[%s2 + $0x68] sm:$0xf]
      %v710 = vld [vmem:[%s2 + $0x6c] sm:$0xf]
      %v711 = vld [vmem:[%s2 + $0x70] sm:$0xf]
      %v712 = vld [vmem:[%s2 + $0x74] sm:$0xf]
      %v713 = vld [vmem:[%s2 + $0x78] sm:$0xf]
      %v714 = vld [vmem:[%s2 + $0x7c] sm:$0xf]
      %v715 = vld [vmem:[%s2 + $0x80] sm:$0xf]
      %v716 = vld [vmem:[%s2 + $0x84] sm:$0xf]
      %v725 = vunpack.c.l.b16 %v675
      %v726 = vunpack.c.l.b16 %v676
      %v727 = vunpack.c.l.b16 %v677
      %v728 = vunpack.c.l.b16 %v678
      %v729 = vunpack.c.l.b16 %v679
      %v730 = vunpack.c.l.b16 %v680
      %v731 = vunpack.c.l.b16 %v681
      %v732 = vunpack.c.l.b16 %v682
      %v733 = vpack.c.b16 %v726, %v725
      %v734 = vpack.c.b16 %v728, %v727
      %v735 = vpack.c.b16 %v730, %v729
      %v736 = vpack.c.b16 %v732, %v731
      %737 = vrot.lane.b32.xlu0 %v733, 1
      %v738 = vpop.permute.xlu0 %737
      %739 = vrot.lane.b32.xlu0 %v734, 1
      %v740 = vpop.permute.xlu0 %739
      %741 = vrot.lane.b32.xlu0 %v735, 1
      %v742 = vpop.permute.xlu0 %741
      %743 = vrot.lane.b32.xlu0 %v736, 1
      %v744 = vpop.permute.xlu0 %743
      %vm745 = vcmask 7168
      %v748 = vsel %vm745, 0, %v738
      %v751 = vsel %vm745, 0, %v740
      %v754 = vsel %vm745, 0, %v742
      %v757 = vsel %vm745, 0, %v744
      %s759 = scalar_lea.vmem %s2, 136
      %v760 = vld [vmem:[%s759] sm:$0xf]
      %v761 = vld [vmem:[%s759 + $0x4] sm:$0xf]
      %v762 = vld [vmem:[%s759 + $0x8] sm:$0xf]
      %v763 = vld [vmem:[%s759 + $0xc] sm:$0xf]
      %v764 = vld [vmem:[%s759 + $0x10] sm:$0xf]
      %v765 = vld [vmem:[%s759 + $0x14] sm:$0xf]
      %v766 = vld [vmem:[%s759 + $0x18] sm:$0xf]
      %v767 = vld [vmem:[%s759 + $0x1c] sm:$0xf]
      %v768 = vld [vmem:[%s759 + $0x20] sm:$0xf]
      %v769 = vld [vmem:[%s759 + $0x24] sm:$0xf]
      %v770 = vld [vmem:[%s759 + $0x28] sm:$0xf]
      %v771 = vld [vmem:[%s759 + $0x2c] sm:$0xf]
      %v772 = vld [vmem:[%s759 + $0x30] sm:$0xf]
      %v773 = vld [vmem:[%s759 + $0x34] sm:$0xf]
      %v774 = vld [vmem:[%s759 + $0x38] sm:$0xf]
      %v775 = vld [vmem:[%s759 + $0x3c] sm:$0xf]
      %v776 = vld [vmem:[%s759 + $0x40] sm:$0xf]
      %v777 = vld [vmem:[%s759 + $0x44] sm:$0xf]
      %v778 = vld [vmem:[%s759 + $0x48] sm:$0xf]
      %v779 = vld [vmem:[%s759 + $0x4c] sm:$0xf]
      %v780 = vld [vmem:[%s759 + $0x50] sm:$0xf]
      %v781 = vld [vmem:[%s759 + $0x54] sm:$0xf]
      %v782 = vld [vmem:[%s759 + $0x58] sm:$0xf]
      %v783 = vld [vmem:[%s759 + $0x5c] sm:$0xf]
      %v784 = vld [vmem:[%s759 + $0x60] sm:$0xf]
      %v785 = vld [vmem:[%s759 + $0x64] sm:$0xf]
      %v786 = vld [vmem:[%s759 + $0x68] sm:$0xf]
      %v787 = vld [vmem:[%s759 + $0x6c] sm:$0xf]
      %v788 = vld [vmem:[%s759 + $0x70] sm:$0xf]
      %v789 = vld [vmem:[%s759 + $0x74] sm:$0xf]
      %v790 = vld [vmem:[%s759 + $0x78] sm:$0xf]
      %v791 = vld [vmem:[%s759 + $0x7c] sm:$0xf]
      %v792 = vld [vmem:[%s759 + $0x80] sm:$0xf]
      %v793 = vld [vmem:[%s759 + $0x84] sm:$0xf]
      %v828 = vunpack.c.l.b16 %v760
      %v829 = vunpack.c.l.b16 %v761
      %v830 = vunpack.c.l.b16 %v762
      %v831 = vunpack.c.l.b16 %v763
      %v832 = vunpack.c.l.b16 %v764
      %v833 = vunpack.c.l.b16 %v765
      %v834 = vunpack.c.l.b16 %v766
      %v835 = vunpack.c.l.b16 %v767
      %v836 = vunpack.c.l.b16 %v768
      %v837 = vunpack.c.l.b16 %v769
      %v838 = vunpack.c.l.b16 %v770
      %v839 = vunpack.c.l.b16 %v771
      %v840 = vunpack.c.l.b16 %v772
      %v841 = vunpack.c.l.b16 %v773
      %v842 = vunpack.c.l.b16 %v774
      %v843 = vunpack.c.l.b16 %v775
      %v844 = vunpack.c.l.b16 %v776
      %v845 = vunpack.c.l.b16 %v777
      %v846 = vunpack.c.l.b16 %v778
      %v847 = vunpack.c.l.b16 %v779
      %v848 = vunpack.c.l.b16 %v780
      %v849 = vunpack.c.l.b16 %v781
      %v850 = vunpack.c.l.b16 %v782
      %v851 = vunpack.c.l.b16 %v783
      %v852 = vunpack.c.l.b16 %v784
      %v853 = vunpack.c.l.b16 %v785
      %v854 = vunpack.c.l.b16 %v786
      %v855 = vunpack.c.l.b16 %v787
      %v856 = vunpack.c.l.b16 %v788
      %v857 = vunpack.c.l.b16 %v789
      %v858 = vunpack.c.l.b16 %v790
      %v859 = vunpack.c.l.b16 %v791
      %v860 = vunpack.c.l.b16 %v792
      %v861 = vunpack.c.l.b16 %v793
      %v862 = vpack.c.b16 %v829, %v828
      %v863 = vpack.c.b16 %v831, %v830
      %v864 = vpack.c.b16 %v833, %v832
      %v865 = vpack.c.b16 %v835, %v834
      %v866 = vpack.c.b16 %v837, %v836
      %v867 = vpack.c.b16 %v839, %v838
      %v868 = vpack.c.b16 %v841, %v840
      %v869 = vpack.c.b16 %v843, %v842
      %v870 = vpack.c.b16 %v845, %v844
      %v871 = vpack.c.b16 %v847, %v846
      %v872 = vpack.c.b16 %v849, %v848
      %v873 = vpack.c.b16 %v851, %v850
      %v874 = vpack.c.b16 %v853, %v852
      %v875 = vpack.c.b16 %v855, %v854
      %v876 = vpack.c.b16 %v857, %v856
      %v877 = vpack.c.b16 %v859, %v858
      %v878 = vpack.c.b16 %v861, %v860
      %vm883 = vcmask 523264
      %v885 = vsel %vm883, %v862, 0
      %v888 = vsel %vm883, %v863, 0
      %v891 = vsel %vm883, %v864, 0
      %v894 = vsel %vm883, %v865, 0
      %v897 = vsel %vm883, %v866, 0
      %v900 = vsel %vm883, %v867, 0
      %v903 = vsel %vm883, %v868, 0
      %v906 = vsel %vm883, %v869, 0
      %v909 = vsel %vm883, %v870, 0
      %v912 = vsel %vm883, %v871, 0
      %v915 = vsel %vm883, %v872, 0
      %v918 = vsel %vm883, %v873, 0
      %v921 = vsel %vm883, %v874, 0
      %v924 = vsel %vm883, %v875, 0
      %v927 = vsel %vm883, %v876, 0
      %v930 = vsel %vm883, %v877, 0
      %v933 = vsel %vm883, %v878, 0
      %935 = vmatpush.bf16.msra.mxu0 0
      %936 = vmatpush.bf16.msra.mxu0 0
      %937 = vmatpush.bf16.msra.mxu0 0
      %938 = vmatpush.bf16.msra.mxu0 0
      %939 = vmatpush.bf16.msra.mxu0 %v736
      %940 = vmatpush.bf16.msra.mxu0 %v735
      %941 = vmatpush.bf16.msra.mxu0 %v734
      %942 = vmatpush.bf16.msra.mxu0 %v733
      %943 = vmatmul.bf16.gmra.mxu0 %v885
      %v944 = vpop.f32.mrf.mxu0
      %v945 = vadd.f32 0.0, %v944
      %v946 = vpop.f32.mrf.mxu0
      %v947 = vadd.f32 0.0, %v946
      %948 = vmatmul.bf16.gmra.mxu0 %v888
      %v949 = vpop.f32.mrf.mxu0
      %v950 = vadd.f32 0.0, %v949
      %v951 = vpop.f32.mrf.mxu0
      %v952 = vadd.f32 0.0, %v951
      %953 = vmatmul.bf16.gmra.mxu0 %v891
      %v954 = vpop.f32.mrf.mxu0
      %v955 = vadd.f32 0.0, %v954
      %v956 = vpop.f32.mrf.mxu0
      %v957 = vadd.f32 0.0, %v956
      %958 = vmatmul.bf16.gmra.mxu0 %v894
      %v959 = vpop.f32.mrf.mxu0
      %v960 = vadd.f32 0.0, %v959
      %v961 = vpop.f32.mrf.mxu0
      %v962 = vadd.f32 0.0, %v961
      %963 = vmatmul.bf16.gmra.mxu0 %v897
      %v964 = vpop.f32.mrf.mxu0
      %v965 = vadd.f32 0.0, %v964
      %v966 = vpop.f32.mrf.mxu0
      %v967 = vadd.f32 0.0, %v966
      %968 = vmatmul.bf16.gmra.mxu0 %v900
      %v969 = vpop.f32.mrf.mxu0
      %v970 = vadd.f32 0.0, %v969
      %v971 = vpop.f32.mrf.mxu0
      %v972 = vadd.f32 0.0, %v971
      %973 = vmatmul.bf16.gmra.mxu0 %v903
      %v974 = vpop.f32.mrf.mxu0
      %v975 = vadd.f32 0.0, %v974
      %v976 = vpop.f32.mrf.mxu0
      %v977 = vadd.f32 0.0, %v976
      %978 = vmatmul.bf16.gmra.mxu0 %v906
      %v979 = vpop.f32.mrf.mxu0
      %v980 = vadd.f32 0.0, %v979
      %v981 = vpop.f32.mrf.mxu0
      %v982 = vadd.f32 0.0, %v981
      %983 = vmatmul.bf16.gmra.mxu0 %v909
      %v984 = vpop.f32.mrf.mxu0
      %v985 = vadd.f32 0.0, %v984
      %v986 = vpop.f32.mrf.mxu0
      %v987 = vadd.f32 0.0, %v986
      %988 = vmatmul.bf16.gmra.mxu0 %v912
      %v989 = vpop.f32.mrf.mxu0
      %v990 = vadd.f32 0.0, %v989
      %v991 = vpop.f32.mrf.mxu0
      %v992 = vadd.f32 0.0, %v991
      %993 = vmatmul.bf16.gmra.mxu0 %v915
      %v994 = vpop.f32.mrf.mxu0
      %v995 = vadd.f32 0.0, %v994
      %v996 = vpop.f32.mrf.mxu0
      %v997 = vadd.f32 0.0, %v996
      %998 = vmatmul.bf16.gmra.mxu0 %v918
      %v999 = vpop.f32.mrf.mxu0
      %v1000 = vadd.f32 0.0, %v999
      %v1001 = vpop.f32.mrf.mxu0
      %v1002 = vadd.f32 0.0, %v1001
      %1003 = vmatmul.bf16.gmra.mxu0 %v921
      %v1004 = vpop.f32.mrf.mxu0
      %v1005 = vadd.f32 0.0, %v1004
      %v1006 = vpop.f32.mrf.mxu0
      %v1007 = vadd.f32 0.0, %v1006
      %1008 = vmatmul.bf16.gmra.mxu0 %v924
      %v1009 = vpop.f32.mrf.mxu0
      %v1010 = vadd.f32 0.0, %v1009
      %v1011 = vpop.f32.mrf.mxu0
      %v1012 = vadd.f32 0.0, %v1011
      %1013 = vmatmul.bf16.gmra.mxu0 %v927
      %v1014 = vpop.f32.mrf.mxu0
      %v1015 = vadd.f32 0.0, %v1014
      %v1016 = vpop.f32.mrf.mxu0
      %v1017 = vadd.f32 0.0, %v1016
      %1018 = vmatmul.bf16.gmra.mxu0 %v930
      %v1019 = vpop.f32.mrf.mxu0
      %v1020 = vadd.f32 0.0, %v1019
      %v1021 = vpop.f32.mrf.mxu0
      %v1022 = vadd.f32 0.0, %v1021
      %1023 = vmatmul.bf16.gmra.mxu0 %v933
      %v1024 = vpop.f32.mrf.mxu0
      %v1025 = vadd.f32 0.0, %v1024
      %v1026 = vpop.f32.mrf.mxu0
      %v1027 = vadd.f32 0.0, %v1026
      %1028 = vdwg.mxu0
      %v1063 = vunpack.c.l.b16 %v683
      %v1064 = vunpack.c.l.b16 %v684
      %v1065 = vunpack.c.l.b16 %v685
      %v1066 = vunpack.c.l.b16 %v686
      %v1067 = vunpack.c.l.b16 %v687
      %v1068 = vunpack.c.l.b16 %v688
      %v1069 = vunpack.c.l.b16 %v689
      %v1070 = vunpack.c.l.b16 %v690
      %v1071 = vunpack.c.l.b16 %v691
      %v1072 = vunpack.c.l.b16 %v692
      %v1073 = vunpack.c.l.b16 %v693
      %v1074 = vunpack.c.l.b16 %v694
      %v1075 = vunpack.c.l.b16 %v695
      %v1076 = vunpack.c.l.b16 %v696
      %v1077 = vunpack.c.l.b16 %v697
      %v1078 = vunpack.c.l.b16 %v698
      %v1079 = vunpack.c.l.b16 %v699
      %v1080 = vunpack.c.l.b16 %v700
      %v1081 = vunpack.c.l.b16 %v701
      %v1082 = vunpack.c.l.b16 %v702
      %v1083 = vunpack.c.l.b16 %v703
      %v1084 = vunpack.c.l.b16 %v704
      %v1085 = vunpack.c.l.b16 %v705
      %v1086 = vunpack.c.l.b16 %v706
      %v1087 = vunpack.c.l.b16 %v707
      %v1088 = vunpack.c.l.b16 %v708
      %v1089 = vunpack.c.l.b16 %v709
      %v1090 = vunpack.c.l.b16 %v710
      %v1091 = vunpack.c.l.b16 %v711
      %v1092 = vunpack.c.l.b16 %v712
      %v1093 = vunpack.c.l.b16 %v713
      %v1094 = vunpack.c.l.b16 %v714
      %v1095 = vunpack.c.l.b16 %v715
      %v1096 = vunpack.c.l.b16 %v716
      %v1097 = vpack.c.b16 %v1064, %v1063
      %v1098 = vpack.c.b16 %v1066, %v1065
      %v1099 = vpack.c.b16 %v1068, %v1067
      %v1100 = vpack.c.b16 %v1070, %v1069
      %v1101 = vpack.c.b16 %v1072, %v1071
      %v1102 = vpack.c.b16 %v1074, %v1073
      %v1103 = vpack.c.b16 %v1076, %v1075
      %v1104 = vpack.c.b16 %v1078, %v1077
      %v1105 = vpack.c.b16 %v1080, %v1079
      %v1106 = vpack.c.b16 %v1082, %v1081
      %v1107 = vpack.c.b16 %v1084, %v1083
      %v1108 = vpack.c.b16 %v1086, %v1085
      %v1109 = vpack.c.b16 %v1088, %v1087
      %v1110 = vpack.c.b16 %v1090, %v1089
      %v1111 = vpack.c.b16 %v1092, %v1091
      %v1112 = vpack.c.b16 %v1094, %v1093
      %v1113 = vpack.c.b16 %v1096, %v1095
      %v1115 = vsel %vm883, %v1097, 0
      %v1118 = vsel %vm883, %v1098, 0
      %v1121 = vsel %vm883, %v1099, 0
      %v1124 = vsel %vm883, %v1100, 0
      %v1127 = vsel %vm883, %v1101, 0
      %v1130 = vsel %vm883, %v1102, 0
      %v1133 = vsel %vm883, %v1103, 0
      %v1136 = vsel %vm883, %v1104, 0
      %v1139 = vsel %vm883, %v1105, 0
      %v1142 = vsel %vm883, %v1106, 0
      %v1145 = vsel %vm883, %v1107, 0
      %v1148 = vsel %vm883, %v1108, 0
      %v1151 = vsel %vm883, %v1109, 0
      %v1154 = vsel %vm883, %v1110, 0
      %v1157 = vsel %vm883, %v1111, 0
      %v1160 = vsel %vm883, %v1112, 0
      %v1163 = vsel %vm883, %v1113, 0
      %1165 = vmatpush.bf16.msra.mxu0 0
      %1166 = vmatpush.bf16.msra.mxu0 0
      %1167 = vmatpush.bf16.msra.mxu0 0
      %1168 = vmatpush.bf16.msra.mxu0 0
      %1169 = vmatpush.bf16.msra.mxu0 %v757
      %1170 = vmatpush.bf16.msra.mxu0 %v754
      %1171 = vmatpush.bf16.msra.mxu0 %v751
      %1172 = vmatpush.bf16.msra.mxu0 %v748
      %1173 = vmatmul.bf16.gmra.mxu0 %v1115
      %v1174 = vpop.f32.mrf.mxu0
      %v1175 = vadd.f32 %v945, %v1174
      %v1176 = vpop.f32.mrf.mxu0
      %v1177 = vadd.f32 %v947, %v1176
      %1178 = vmatmul.bf16.gmra.mxu0 %v1118
      %v1179 = vpop.f32.mrf.mxu0
      %v1180 = vadd.f32 %v950, %v1179
      %v1181 = vpop.f32.mrf.mxu0
      %v1182 = vadd.f32 %v952, %v1181
      %1183 = vmatmul.bf16.gmra.mxu0 %v1121
      %v1184 = vpop.f32.mrf.mxu0
      %v1185 = vadd.f32 %v955, %v1184
      %v1186 = vpop.f32.mrf.mxu0
      %v1187 = vadd.f32 %v957, %v1186
      %1188 = vmatmul.bf16.gmra.mxu0 %v1124
      %v1189 = vpop.f32.mrf.mxu0
      %v1190 = vadd.f32 %v960, %v1189
      %v1191 = vpop.f32.mrf.mxu0
      %v1192 = vadd.f32 %v962, %v1191
      %1193 = vmatmul.bf16.gmra.mxu0 %v1127
      %v1194 = vpop.f32.mrf.mxu0
      %v1195 = vadd.f32 %v965, %v1194
      %v1196 = vpop.f32.mrf.mxu0
      %v1197 = vadd.f32 %v967, %v1196
      %1198 = vmatmul.bf16.gmra.mxu0 %v1130
      %v1199 = vpop.f32.mrf.mxu0
      %v1200 = vadd.f32 %v970, %v1199
      %v1201 = vpop.f32.mrf.mxu0
      %v1202 = vadd.f32 %v972, %v1201
      %1203 = vmatmul.bf16.gmra.mxu0 %v1133
      %v1204 = vpop.f32.mrf.mxu0
      %v1205 = vadd.f32 %v975, %v1204
      %v1206 = vpop.f32.mrf.mxu0
      %v1207 = vadd.f32 %v977, %v1206
      %1208 = vmatmul.bf16.gmra.mxu0 %v1136
      %v1209 = vpop.f32.mrf.mxu0
      %v1210 = vadd.f32 %v980, %v1209
      %v1211 = vpop.f32.mrf.mxu0
      %v1212 = vadd.f32 %v982, %v1211
      %1213 = vmatmul.bf16.gmra.mxu0 %v1139
      %v1214 = vpop.f32.mrf.mxu0
      %v1215 = vadd.f32 %v985, %v1214
      %v1216 = vpop.f32.mrf.mxu0
      %v1217 = vadd.f32 %v987, %v1216
      %1218 = vmatmul.bf16.gmra.mxu0 %v1142
      %v1219 = vpop.f32.mrf.mxu0
      %v1220 = vadd.f32 %v990, %v1219
      %v1221 = vpop.f32.mrf.mxu0
      %v1222 = vadd.f32 %v992, %v1221
      %1223 = vmatmul.bf16.gmra.mxu0 %v1145
      %v1224 = vpop.f32.mrf.mxu0
      %v1225 = vadd.f32 %v995, %v1224
      %v1226 = vpop.f32.mrf.mxu0
      %v1227 = vadd.f32 %v997, %v1226
      %1228 = vmatmul.bf16.gmra.mxu0 %v1148
      %v1229 = vpop.f32.mrf.mxu0
      %v1230 = vadd.f32 %v1000, %v1229
      %v1231 = vpop.f32.mrf.mxu0
      %v1232 = vadd.f32 %v1002, %v1231
      %1233 = vmatmul.bf16.gmra.mxu0 %v1151
      %v1234 = vpop.f32.mrf.mxu0
      %v1235 = vadd.f32 %v1005, %v1234
      %v1236 = vpop.f32.mrf.mxu0
      %v1237 = vadd.f32 %v1007, %v1236
      %1238 = vmatmul.bf16.gmra.mxu0 %v1154
      %v1239 = vpop.f32.mrf.mxu0
      %v1240 = vadd.f32 %v1010, %v1239
      %v1241 = vpop.f32.mrf.mxu0
      %v1242 = vadd.f32 %v1012, %v1241
      %1243 = vmatmul.bf16.gmra.mxu0 %v1157
      %v1244 = vpop.f32.mrf.mxu0
      %v1245 = vadd.f32 %v1015, %v1244
      %v1246 = vpop.f32.mrf.mxu0
      %v1247 = vadd.f32 %v1017, %v1246
      %1248 = vmatmul.bf16.gmra.mxu0 %v1160
      %v1249 = vpop.f32.mrf.mxu0
      %v1250 = vadd.f32 %v1020, %v1249
      %v1251 = vpop.f32.mrf.mxu0
      %v1252 = vadd.f32 %v1022, %v1251
      %1253 = vmatmul.bf16.gmra.mxu0 %v1163
      %v1254 = vpop.f32.mrf.mxu0
      %v1255 = vadd.f32 %v1025, %v1254
      %v1256 = vpop.f32.mrf.mxu0
      %v1257 = vadd.f32 %v1027, %v1256
      %1258 = vdwg.mxu0
      %s1259 = scalar_lea.vmem %s2, 272
      %v1260 = vld [vmem:[%s1259] sm:$0xf]
      %v1261 = vld [vmem:[%s1259 + $0x4] sm:$0xf]
      %v1262 = vld [vmem:[%s1259 + $0x8] sm:$0xf]
      %v1263 = vld [vmem:[%s1259 + $0xc] sm:$0xf]
      %v1264 = vld [vmem:[%s1259 + $0x10] sm:$0xf]
      %v1265 = vld [vmem:[%s1259 + $0x14] sm:$0xf]
      %v1266 = vld [vmem:[%s1259 + $0x18] sm:$0xf]
      %v1267 = vld [vmem:[%s1259 + $0x1c] sm:$0xf]
      %v1268 = vld [vmem:[%s1259 + $0x20] sm:$0xf]
      %v1269 = vld [vmem:[%s1259 + $0x24] sm:$0xf]
      %v1270 = vld [vmem:[%s1259 + $0x28] sm:$0xf]
      %v1271 = vld [vmem:[%s1259 + $0x2c] sm:$0xf]
      %v1272 = vld [vmem:[%s1259 + $0x30] sm:$0xf]
      %v1273 = vld [vmem:[%s1259 + $0x34] sm:$0xf]
      %v1274 = vld [vmem:[%s1259 + $0x38] sm:$0xf]
      %v1275 = vld [vmem:[%s1259 + $0x3c] sm:$0xf]
      %v1276 = vld [vmem:[%s1259 + $0x40] sm:$0xf]
      %v1277 = vld [vmem:[%s1259 + $0x44] sm:$0xf]
      %v1278 = vld [vmem:[%s1259 + $0x48] sm:$0xf]
      %v1279 = vld [vmem:[%s1259 + $0x4c] sm:$0xf]
      %v1280 = vld [vmem:[%s1259 + $0x50] sm:$0xf]
      %v1281 = vld [vmem:[%s1259 + $0x54] sm:$0xf]
      %v1282 = vld [vmem:[%s1259 + $0x58] sm:$0xf]
      %v1283 = vld [vmem:[%s1259 + $0x5c] sm:$0xf]
      %v1284 = vld [vmem:[%s1259 + $0x60] sm:$0xf]
      %v1285 = vld [vmem:[%s1259 + $0x64] sm:$0xf]
      %v1286 = vld [vmem:[%s1259 + $0x68] sm:$0xf]
      %v1287 = vld [vmem:[%s1259 + $0x6c] sm:$0xf]
      %v1288 = vld [vmem:[%s1259 + $0x70] sm:$0xf]
      %v1289 = vld [vmem:[%s1259 + $0x74] sm:$0xf]
      %v1290 = vld [vmem:[%s1259 + $0x78] sm:$0xf]
      %v1291 = vld [vmem:[%s1259 + $0x7c] sm:$0xf]
      %v1292 = vld [vmem:[%s1259 + $0x80] sm:$0xf]
      %v1293 = vld [vmem:[%s1259 + $0x84] sm:$0xf]
      %1294 = vrot.lane.b32.xlu0 %v733, 127
      %v1295 = vpop.permute.xlu0 %1294
      %1296 = vrot.lane.b32.xlu0 %v734, 127
      %v1297 = vpop.permute.xlu0 %1296
      %1298 = vrot.lane.b32.xlu0 %v735, 127
      %v1299 = vpop.permute.xlu0 %1298
      %1300 = vrot.lane.b32.xlu0 %v736, 127
      %v1301 = vpop.permute.xlu0 %1300
      %vm1302 = vcmask 269312
      %v1304 = vsel %vm1302, %v1295, 0
      %v1307 = vsel %vm1302, %v1297, 0
      %v1310 = vsel %vm1302, %v1299, 0
      %v1313 = vsel %vm1302, %v1301, 0
      %v1349 = vunpack.c.l.b16 %v1260
      %v1350 = vunpack.c.l.b16 %v1261
      %v1351 = vunpack.c.l.b16 %v1262
      %v1352 = vunpack.c.l.b16 %v1263
      %v1353 = vunpack.c.l.b16 %v1264
      %v1354 = vunpack.c.l.b16 %v1265
      %v1355 = vunpack.c.l.b16 %v1266
      %v1356 = vunpack.c.l.b16 %v1267
      %v1357 = vunpack.c.l.b16 %v1268
      %v1358 = vunpack.c.l.b16 %v1269
      %v1359 = vunpack.c.l.b16 %v1270
      %v1360 = vunpack.c.l.b16 %v1271
      %v1361 = vunpack.c.l.b16 %v1272
      %v1362 = vunpack.c.l.b16 %v1273
      %v1363 = vunpack.c.l.b16 %v1274
      %v1364 = vunpack.c.l.b16 %v1275
      %v1365 = vunpack.c.l.b16 %v1276
      %v1366 = vunpack.c.l.b16 %v1277
      %v1367 = vunpack.c.l.b16 %v1278
      %v1368 = vunpack.c.l.b16 %v1279
      %v1369 = vunpack.c.l.b16 %v1280
      %v1370 = vunpack.c.l.b16 %v1281
      %v1371 = vunpack.c.l.b16 %v1282
      %v1372 = vunpack.c.l.b16 %v1283
      %v1373 = vunpack.c.l.b16 %v1284
      %v1374 = vunpack.c.l.b16 %v1285
      %v1375 = vunpack.c.l.b16 %v1286
      %v1376 = vunpack.c.l.b16 %v1287
      %v1377 = vunpack.c.l.b16 %v1288
      %v1378 = vunpack.c.l.b16 %v1289
      %v1379 = vunpack.c.l.b16 %v1290
      %v1380 = vunpack.c.l.b16 %v1291
      %v1381 = vunpack.c.l.b16 %v1292
      %v1382 = vunpack.c.l.b16 %v1293
      %v1383 = vpack.c.b16 %v1350, %v1349
      %v1384 = vpack.c.b16 %v1352, %v1351
      %v1385 = vpack.c.b16 %v1354, %v1353
      %v1386 = vpack.c.b16 %v1356, %v1355
      %v1387 = vpack.c.b16 %v1358, %v1357
      %v1388 = vpack.c.b16 %v1360, %v1359
      %v1389 = vpack.c.b16 %v1362, %v1361
      %v1390 = vpack.c.b16 %v1364, %v1363
      %v1391 = vpack.c.b16 %v1366, %v1365
      %v1392 = vpack.c.b16 %v1368, %v1367
      %v1393 = vpack.c.b16 %v1370, %v1369
      %v1394 = vpack.c.b16 %v1372, %v1371
      %v1395 = vpack.c.b16 %v1374, %v1373
      %v1396 = vpack.c.b16 %v1376, %v1375
      %v1397 = vpack.c.b16 %v1378, %v1377
      %v1398 = vpack.c.b16 %v1380, %v1379
      %v1399 = vpack.c.b16 %v1382, %v1381
      %v1401 = vsel %vm883, %v1383, 0
      %v1404 = vsel %vm883, %v1384, 0
      %v1407 = vsel %vm883, %v1385, 0
      %v1410 = vsel %vm883, %v1386, 0
      %v1413 = vsel %vm883, %v1387, 0
      %v1416 = vsel %vm883, %v1388, 0
      %v1419 = vsel %vm883, %v1389, 0
      %v1422 = vsel %vm883, %v1390, 0
      %v1425 = vsel %vm883, %v1391, 0
      %v1428 = vsel %vm883, %v1392, 0
      %v1431 = vsel %vm883, %v1393, 0
      %v1434 = vsel %vm883, %v1394, 0
      %v1437 = vsel %vm883, %v1395, 0
      %v1440 = vsel %vm883, %v1396, 0
      %v1443 = vsel %vm883, %v1397, 0
      %v1446 = vsel %vm883, %v1398, 0
      %v1449 = vsel %vm883, %v1399, 0
      %1451 = vmatpush.bf16.msra.mxu0 0
      %1452 = vmatpush.bf16.msra.mxu0 0
      %1453 = vmatpush.bf16.msra.mxu0 0
      %1454 = vmatpush.bf16.msra.mxu0 0
      %1455 = vmatpush.bf16.msra.mxu0 %v1313
      %1456 = vmatpush.bf16.msra.mxu0 %v1310
      %1457 = vmatpush.bf16.msra.mxu0 %v1307
      %1458 = vmatpush.bf16.msra.mxu0 %v1304
      %1459 = vmatmul.bf16.gmra.mxu0 %v1401
      %v1460 = vpop.f32.mrf.mxu0
      %v1461 = vadd.f32 0.0, %v1460
      %v1462 = vpop.f32.mrf.mxu0
      %v1463 = vadd.f32 0.0, %v1462
      %1464 = vmatmul.bf16.gmra.mxu0 %v1404
      %v1465 = vpop.f32.mrf.mxu0
      %v1466 = vadd.f32 0.0, %v1465
      %v1467 = vpop.f32.mrf.mxu0
      %v1468 = vadd.f32 0.0, %v1467
      %1469 = vmatmul.bf16.gmra.mxu0 %v1407
      %v1470 = vpop.f32.mrf.mxu0
      %v1471 = vadd.f32 0.0, %v1470
      %v1472 = vpop.f32.mrf.mxu0
      %v1473 = vadd.f32 0.0, %v1472
      %1474 = vmatmul.bf16.gmra.mxu0 %v1410
      %v1475 = vpop.f32.mrf.mxu0
      %v1476 = vadd.f32 0.0, %v1475
      %v1477 = vpop.f32.mrf.mxu0
      %v1478 = vadd.f32 0.0, %v1477
      %1479 = vmatmul.bf16.gmra.mxu0 %v1413
      %v1480 = vpop.f32.mrf.mxu0
      %v1481 = vadd.f32 0.0, %v1480
      %v1482 = vpop.f32.mrf.mxu0
      %v1483 = vadd.f32 0.0, %v1482
      %1484 = vmatmul.bf16.gmra.mxu0 %v1416
      %v1485 = vpop.f32.mrf.mxu0
      %v1486 = vadd.f32 0.0, %v1485
      %v1487 = vpop.f32.mrf.mxu0
      %v1488 = vadd.f32 0.0, %v1487
      %1489 = vmatmul.bf16.gmra.mxu0 %v1419
      %v1490 = vpop.f32.mrf.mxu0
      %v1491 = vadd.f32 0.0, %v1490
      %v1492 = vpop.f32.mrf.mxu0
      %v1493 = vadd.f32 0.0, %v1492
      %1494 = vmatmul.bf16.gmra.mxu0 %v1422
      %v1495 = vpop.f32.mrf.mxu0
      %v1496 = vadd.f32 0.0, %v1495
      %v1497 = vpop.f32.mrf.mxu0
      %v1498 = vadd.f32 0.0, %v1497
      %1499 = vmatmul.bf16.gmra.mxu0 %v1425
      %v1500 = vpop.f32.mrf.mxu0
      %v1501 = vadd.f32 0.0, %v1500
      %v1502 = vpop.f32.mrf.mxu0
      %v1503 = vadd.f32 0.0, %v1502
      %1504 = vmatmul.bf16.gmra.mxu0 %v1428
      %v1505 = vpop.f32.mrf.mxu0
      %v1506 = vadd.f32 0.0, %v1505
      %v1507 = vpop.f32.mrf.mxu0
      %v1508 = vadd.f32 0.0, %v1507
      %1509 = vmatmul.bf16.gmra.mxu0 %v1431
      %v1510 = vpop.f32.mrf.mxu0
      %v1511 = vadd.f32 0.0, %v1510
      %v1512 = vpop.f32.mrf.mxu0
      %v1513 = vadd.f32 0.0, %v1512
      %1514 = vmatmul.bf16.gmra.mxu0 %v1434
      %v1515 = vpop.f32.mrf.mxu0
      %v1516 = vadd.f32 0.0, %v1515
      %v1517 = vpop.f32.mrf.mxu0
      %v1518 = vadd.f32 0.0, %v1517
      %1519 = vmatmul.bf16.gmra.mxu0 %v1437
      %v1520 = vpop.f32.mrf.mxu0
      %v1521 = vadd.f32 0.0, %v1520
      %v1522 = vpop.f32.mrf.mxu0
      %v1523 = vadd.f32 0.0, %v1522
      %1524 = vmatmul.bf16.gmra.mxu0 %v1440
      %v1525 = vpop.f32.mrf.mxu0
      %v1526 = vadd.f32 0.0, %v1525
      %v1527 = vpop.f32.mrf.mxu0
      %v1528 = vadd.f32 0.0, %v1527
      %1529 = vmatmul.bf16.gmra.mxu0 %v1443
      %v1530 = vpop.f32.mrf.mxu0
      %v1531 = vadd.f32 0.0, %v1530
      %v1532 = vpop.f32.mrf.mxu0
      %v1533 = vadd.f32 0.0, %v1532
      %1534 = vmatmul.bf16.gmra.mxu0 %v1446
      %v1535 = vpop.f32.mrf.mxu0
      %v1536 = vadd.f32 0.0, %v1535
      %v1537 = vpop.f32.mrf.mxu0
      %v1538 = vadd.f32 0.0, %v1537
      %1539 = vmatmul.bf16.gmra.mxu0 %v1449
      %v1540 = vpop.f32.mrf.mxu0
      %v1541 = vadd.f32 0.0, %v1540
      %v1542 = vpop.f32.mrf.mxu0
      %v1543 = vadd.f32 0.0, %v1542
      %1544 = vdwg.mxu0
      %v1545 = vadd.f32 %v1175, %v1461
      %v1546 = vadd.f32 %v1177, %v1463
      %v1547 = vadd.f32 %v1180, %v1466
      %v1548 = vadd.f32 %v1182, %v1468
      %v1549 = vadd.f32 %v1185, %v1471
      %v1550 = vadd.f32 %v1187, %v1473
      %v1551 = vadd.f32 %v1190, %v1476
      %v1552 = vadd.f32 %v1192, %v1478
      %v1553 = vadd.f32 %v1195, %v1481
      %v1554 = vadd.f32 %v1197, %v1483
      %v1555 = vadd.f32 %v1200, %v1486
      %v1556 = vadd.f32 %v1202, %v1488
      %v1557 = vadd.f32 %v1205, %v1491
      %v1558 = vadd.f32 %v1207, %v1493
      %v1559 = vadd.f32 %v1210, %v1496
      %v1560 = vadd.f32 %v1212, %v1498
      %v1561 = vadd.f32 %v1215, %v1501
      %v1562 = vadd.f32 %v1217, %v1503
      %v1563 = vadd.f32 %v1220, %v1506
      %v1564 = vadd.f32 %v1222, %v1508
      %v1565 = vadd.f32 %v1225, %v1511
      %v1566 = vadd.f32 %v1227, %v1513
      %v1567 = vadd.f32 %v1230, %v1516
      %v1568 = vadd.f32 %v1232, %v1518
      %v1569 = vadd.f32 %v1235, %v1521
      %v1570 = vadd.f32 %v1237, %v1523
      %v1571 = vadd.f32 %v1240, %v1526
      %v1572 = vadd.f32 %v1242, %v1528
      %v1573 = vadd.f32 %v1245, %v1531
      %v1574 = vadd.f32 %v1247, %v1533
      %v1575 = vadd.f32 %v1250, %v1536
      %v1576 = vadd.f32 %v1252, %v1538
      %v1577 = vadd.f32 %v1255, %v1541
      %v1578 = vadd.f32 %v1257, %v1543
      %v1579 = vld [vmem:[%s4] sm:$0x1]
      %v1581 = vperm.slane %v1579, 0
      %v1583 = vmul.f32 %v1545, %v1581
      %v1584 = vmul.f32 %v1546, %v1581
      %v1585 = vmul.f32 %v1547, %v1581
      %v1586 = vmul.f32 %v1548, %v1581
      %v1587 = vmul.f32 %v1549, %v1581
      %v1588 = vmul.f32 %v1550, %v1581
      %v1589 = vmul.f32 %v1551, %v1581
      %v1590 = vmul.f32 %v1552, %v1581
      %v1591 = vmul.f32 %v1553, %v1581
      %v1592 = vmul.f32 %v1554, %v1581
      %v1593 = vmul.f32 %v1555, %v1581
      %v1594 = vmul.f32 %v1556, %v1581
      %v1595 = vmul.f32 %v1557, %v1581
      %v1596 = vmul.f32 %v1558, %v1581
      %v1597 = vmul.f32 %v1559, %v1581
      %v1598 = vmul.f32 %v1560, %v1581
      %v1599 = vmul.f32 %v1561, %v1581
      %v1600 = vmul.f32 %v1562, %v1581
      %v1601 = vmul.f32 %v1563, %v1581
      %v1602 = vmul.f32 %v1564, %v1581
      %v1603 = vmul.f32 %v1565, %v1581
      %v1604 = vmul.f32 %v1566, %v1581
      %v1605 = vmul.f32 %v1567, %v1581
      %v1606 = vmul.f32 %v1568, %v1581
      %v1607 = vmul.f32 %v1569, %v1581
      %v1608 = vmul.f32 %v1570, %v1581
      %v1609 = vmul.f32 %v1571, %v1581
      %v1610 = vmul.f32 %v1572, %v1581
      %v1611 = vmul.f32 %v1573, %v1581
      %v1612 = vmul.f32 %v1574, %v1581
      %v1613 = vmul.f32 %v1575, %v1581
      %v1614 = vmul.f32 %v1576, %v1581
      %v1615 = vmul.f32 %v1577, %v1581
      %v1616 = vmul.f32 %v1578, %v1581
      %vm1617 = vcmask 277504
      %v1618 = vsel %vm1617, %v1583, 0.0
      %1619 = vadd.xlane.f32.xlu0 %v1618
      %v1620 = vpop.xlane.xlu0 %1619
      %v1621 = vsel %vm1617, %v1584, 0.0
      %1622 = vadd.xlane.f32.xlu0 %v1621
      %v1623 = vpop.xlane.xlu0 %1622
      %v1624 = vsel %vm1617, %v1585, 0.0
      %1625 = vadd.xlane.f32.xlu0 %v1624
      %v1626 = vpop.xlane.xlu0 %1625
      %v1627 = vsel %vm1617, %v1586, 0.0
      %1628 = vadd.xlane.f32.xlu0 %v1627
      %v1629 = vpop.xlane.xlu0 %1628
      %v1630 = vsel %vm1617, %v1587, 0.0
      %1631 = vadd.xlane.f32.xlu0 %v1630
      %v1632 = vpop.xlane.xlu0 %1631
      %v1633 = vsel %vm1617, %v1588, 0.0
      %1634 = vadd.xlane.f32.xlu0 %v1633
      %v1635 = vpop.xlane.xlu0 %1634
      %v1636 = vsel %vm1617, %v1589, 0.0
      %1637 = vadd.xlane.f32.xlu0 %v1636
      %v1638 = vpop.xlane.xlu0 %1637
      %v1639 = vsel %vm1617, %v1590, 0.0
      %1640 = vadd.xlane.f32.xlu0 %v1639
      %v1641 = vpop.xlane.xlu0 %1640
      %v1642 = vsel %vm1617, %v1591, 0.0
      %1643 = vadd.xlane.f32.xlu0 %v1642
      %v1644 = vpop.xlane.xlu0 %1643
      %v1645 = vsel %vm1617, %v1592, 0.0
      %1646 = vadd.xlane.f32.xlu0 %v1645
      %v1647 = vpop.xlane.xlu0 %1646
      %v1648 = vsel %vm1617, %v1593, 0.0
      %1649 = vadd.xlane.f32.xlu0 %v1648
      %v1650 = vpop.xlane.xlu0 %1649
      %v1651 = vsel %vm1617, %v1594, 0.0
      %1652 = vadd.xlane.f32.xlu0 %v1651
      %v1653 = vpop.xlane.xlu0 %1652
      %v1654 = vsel %vm1617, %v1595, 0.0
      %1655 = vadd.xlane.f32.xlu0 %v1654
      %v1656 = vpop.xlane.xlu0 %1655
      %v1657 = vsel %vm1617, %v1596, 0.0
      %1658 = vadd.xlane.f32.xlu0 %v1657
      %v1659 = vpop.xlane.xlu0 %1658
      %v1660 = vsel %vm1617, %v1597, 0.0
      %1661 = vadd.xlane.f32.xlu0 %v1660
      %v1662 = vpop.xlane.xlu0 %1661
      %v1663 = vsel %vm1617, %v1598, 0.0
      %1664 = vadd.xlane.f32.xlu0 %v1663
      %v1665 = vpop.xlane.xlu0 %1664
      %v1666 = vsel %vm1617, %v1599, 0.0
      %1667 = vadd.xlane.f32.xlu0 %v1666
      %v1668 = vpop.xlane.xlu0 %1667
      %v1669 = vsel %vm1617, %v1600, 0.0
      %1670 = vadd.xlane.f32.xlu0 %v1669
      %v1671 = vpop.xlane.xlu0 %1670
      %v1672 = vsel %vm1617, %v1601, 0.0
      %1673 = vadd.xlane.f32.xlu0 %v1672
      %v1674 = vpop.xlane.xlu0 %1673
      %v1675 = vsel %vm1617, %v1602, 0.0
      %1676 = vadd.xlane.f32.xlu0 %v1675
      %v1677 = vpop.xlane.xlu0 %1676
      %v1678 = vsel %vm1617, %v1603, 0.0
      %1679 = vadd.xlane.f32.xlu0 %v1678
      %v1680 = vpop.xlane.xlu0 %1679
      %v1681 = vsel %vm1617, %v1604, 0.0
      %1682 = vadd.xlane.f32.xlu0 %v1681
      %v1683 = vpop.xlane.xlu0 %1682
      %v1684 = vsel %vm1617, %v1605, 0.0
      %1685 = vadd.xlane.f32.xlu0 %v1684
      %v1686 = vpop.xlane.xlu0 %1685
      %v1687 = vsel %vm1617, %v1606, 0.0
      %1688 = vadd.xlane.f32.xlu0 %v1687
      %v1689 = vpop.xlane.xlu0 %1688
      %v1690 = vsel %vm1617, %v1607, 0.0
      %1691 = vadd.xlane.f32.xlu0 %v1690
      %v1692 = vpop.xlane.xlu0 %1691
      %v1693 = vsel %vm1617, %v1608, 0.0
      %1694 = vadd.xlane.f32.xlu0 %v1693
      %v1695 = vpop.xlane.xlu0 %1694
      %v1696 = vsel %vm1617, %v1609, 0.0
      %1697 = vadd.xlane.f32.xlu0 %v1696
      %v1698 = vpop.xlane.xlu0 %1697
      %v1699 = vsel %vm1617, %v1610, 0.0
      %1700 = vadd.xlane.f32.xlu0 %v1699
      %v1701 = vpop.xlane.xlu0 %1700
      %v1702 = vsel %vm1617, %v1611, 0.0
      %1703 = vadd.xlane.f32.xlu0 %v1702
      %v1704 = vpop.xlane.xlu0 %1703
      %v1705 = vsel %vm1617, %v1612, 0.0
      %1706 = vadd.xlane.f32.xlu0 %v1705
      %v1707 = vpop.xlane.xlu0 %1706
      %v1708 = vsel %vm1617, %v1613, 0.0
      %1709 = vadd.xlane.f32.xlu0 %v1708
      %v1710 = vpop.xlane.xlu0 %1709
      %v1711 = vsel %vm1617, %v1614, 0.0
      %1712 = vadd.xlane.f32.xlu0 %v1711
      %v1713 = vpop.xlane.xlu0 %1712
      %v1714 = vsel %vm1617, %v1615, 0.0
      %1715 = vadd.xlane.f32.xlu0 %v1714
      %v1716 = vpop.xlane.xlu0 %1715
      %v1717 = vsel %vm1617, %v1616, 0.0
      %1718 = vadd.xlane.f32.xlu0 %v1717
      %v1719 = vpop.xlane.xlu0 %1718
      %v1720 = vmul.f32 %v1583, %v1583
      %v1721 = vmul.f32 %v1584, %v1584
      %v1722 = vmul.f32 %v1585, %v1585
      %v1723 = vmul.f32 %v1586, %v1586
      %v1724 = vmul.f32 %v1587, %v1587
      %v1725 = vmul.f32 %v1588, %v1588
      %v1726 = vmul.f32 %v1589, %v1589
      %v1727 = vmul.f32 %v1590, %v1590
      %v1728 = vmul.f32 %v1591, %v1591
      %v1729 = vmul.f32 %v1592, %v1592
      %v1730 = vmul.f32 %v1593, %v1593
      %v1731 = vmul.f32 %v1594, %v1594
      %v1732 = vmul.f32 %v1595, %v1595
      %v1733 = vmul.f32 %v1596, %v1596
      %v1734 = vmul.f32 %v1597, %v1597
      %v1735 = vmul.f32 %v1598, %v1598
      %v1736 = vmul.f32 %v1599, %v1599
      %v1737 = vmul.f32 %v1600, %v1600
      %v1738 = vmul.f32 %v1601, %v1601
      %v1739 = vmul.f32 %v1602, %v1602
      %v1740 = vmul.f32 %v1603, %v1603
      %v1741 = vmul.f32 %v1604, %v1604
      %v1742 = vmul.f32 %v1605, %v1605
      %v1743 = vmul.f32 %v1606, %v1606
      %v1744 = vmul.f32 %v1607, %v1607
      %v1745 = vmul.f32 %v1608, %v1608
      %v1746 = vmul.f32 %v1609, %v1609
      %v1747 = vmul.f32 %v1610, %v1610
      %v1748 = vmul.f32 %v1611, %v1611
      %v1749 = vmul.f32 %v1612, %v1612
      %v1750 = vmul.f32 %v1613, %v1613
      %v1751 = vmul.f32 %v1614, %v1614
      %v1752 = vmul.f32 %v1615, %v1615
      %v1753 = vmul.f32 %v1616, %v1616
      %v1754 = vsel %vm1617, %v1720, 0.0
      %1755 = vadd.xlane.f32.xlu0 %v1754
      %v1756 = vpop.xlane.xlu0 %1755
      %v1757 = vsel %vm1617, %v1721, 0.0
      %1758 = vadd.xlane.f32.xlu0 %v1757
      %v1759 = vpop.xlane.xlu0 %1758
      %v1760 = vsel %vm1617, %v1722, 0.0
      %1761 = vadd.xlane.f32.xlu0 %v1760
      %v1762 = vpop.xlane.xlu0 %1761
      %v1763 = vsel %vm1617, %v1723, 0.0
      %1764 = vadd.xlane.f32.xlu0 %v1763
      %v1765 = vpop.xlane.xlu0 %1764
      %v1766 = vsel %vm1617, %v1724, 0.0
      %1767 = vadd.xlane.f32.xlu0 %v1766
      %v1768 = vpop.xlane.xlu0 %1767
      %v1769 = vsel %vm1617, %v1725, 0.0
      %1770 = vadd.xlane.f32.xlu0 %v1769
      %v1771 = vpop.xlane.xlu0 %1770
      %v1772 = vsel %vm1617, %v1726, 0.0
      %1773 = vadd.xlane.f32.xlu0 %v1772
      %v1774 = vpop.xlane.xlu0 %1773
      %v1775 = vsel %vm1617, %v1727, 0.0
      %1776 = vadd.xlane.f32.xlu0 %v1775
      %v1777 = vpop.xlane.xlu0 %1776
      %v1778 = vsel %vm1617, %v1728, 0.0
      %1779 = vadd.xlane.f32.xlu0 %v1778
      %v1780 = vpop.xlane.xlu0 %1779
      %v1781 = vsel %vm1617, %v1729, 0.0
      %1782 = vadd.xlane.f32.xlu0 %v1781
      %v1783 = vpop.xlane.xlu0 %1782
      %v1784 = vsel %vm1617, %v1730, 0.0
      %1785 = vadd.xlane.f32.xlu0 %v1784
      %v1786 = vpop.xlane.xlu0 %1785
      %v1787 = vsel %vm1617, %v1731, 0.0
      %1788 = vadd.xlane.f32.xlu0 %v1787
      %v1789 = vpop.xlane.xlu0 %1788
      %v1790 = vsel %vm1617, %v1732, 0.0
      %1791 = vadd.xlane.f32.xlu0 %v1790
      %v1792 = vpop.xlane.xlu0 %1791
      %v1793 = vsel %vm1617, %v1733, 0.0
      %1794 = vadd.xlane.f32.xlu0 %v1793
      %v1795 = vpop.xlane.xlu0 %1794
      %v1796 = vsel %vm1617, %v1734, 0.0
      %1797 = vadd.xlane.f32.xlu0 %v1796
      %v1798 = vpop.xlane.xlu0 %1797
      %v1799 = vsel %vm1617, %v1735, 0.0
      %1800 = vadd.xlane.f32.xlu0 %v1799
      %v1801 = vpop.xlane.xlu0 %1800
      %v1802 = vsel %vm1617, %v1736, 0.0
      %1803 = vadd.xlane.f32.xlu0 %v1802
      %v1804 = vpop.xlane.xlu0 %1803
      %v1805 = vsel %vm1617, %v1737, 0.0
      %1806 = vadd.xlane.f32.xlu0 %v1805
      %v1807 = vpop.xlane.xlu0 %1806
      %v1808 = vsel %vm1617, %v1738, 0.0
      %1809 = vadd.xlane.f32.xlu0 %v1808
      %v1810 = vpop.xlane.xlu0 %1809
      %v1811 = vsel %vm1617, %v1739, 0.0
      %1812 = vadd.xlane.f32.xlu0 %v1811
      %v1813 = vpop.xlane.xlu0 %1812
      %v1814 = vsel %vm1617, %v1740, 0.0
      %1815 = vadd.xlane.f32.xlu0 %v1814
      %v1816 = vpop.xlane.xlu0 %1815
      %v1817 = vsel %vm1617, %v1741, 0.0
      %1818 = vadd.xlane.f32.xlu0 %v1817
      %v1819 = vpop.xlane.xlu0 %1818
      %v1820 = vsel %vm1617, %v1742, 0.0
      %1821 = vadd.xlane.f32.xlu0 %v1820
      %v1822 = vpop.xlane.xlu0 %1821
      %v1823 = vsel %vm1617, %v1743, 0.0
      %1824 = vadd.xlane.f32.xlu0 %v1823
      %v1825 = vpop.xlane.xlu0 %1824
      %v1826 = vsel %vm1617, %v1744, 0.0
      %1827 = vadd.xlane.f32.xlu0 %v1826
      %v1828 = vpop.xlane.xlu0 %1827
      %v1829 = vsel %vm1617, %v1745, 0.0
      %1830 = vadd.xlane.f32.xlu0 %v1829
      %v1831 = vpop.xlane.xlu0 %1830
      %v1832 = vsel %vm1617, %v1746, 0.0
      %1833 = vadd.xlane.f32.xlu0 %v1832
      %v1834 = vpop.xlane.xlu0 %1833
      %v1835 = vsel %vm1617, %v1747, 0.0
      %1836 = vadd.xlane.f32.xlu0 %v1835
      %v1837 = vpop.xlane.xlu0 %1836
      %v1838 = vsel %vm1617, %v1748, 0.0
      %1839 = vadd.xlane.f32.xlu0 %v1838
      %v1840 = vpop.xlane.xlu0 %1839
      %v1841 = vsel %vm1617, %v1749, 0.0
      %1842 = vadd.xlane.f32.xlu0 %v1841
      %v1843 = vpop.xlane.xlu0 %1842
      %v1844 = vsel %vm1617, %v1750, 0.0
      %1845 = vadd.xlane.f32.xlu0 %v1844
      %v1846 = vpop.xlane.xlu0 %1845
      %v1847 = vsel %vm1617, %v1751, 0.0
      %1848 = vadd.xlane.f32.xlu0 %v1847
      %v1849 = vpop.xlane.xlu0 %1848
      %v1850 = vsel %vm1617, %v1752, 0.0
      %1851 = vadd.xlane.f32.xlu0 %v1850
      %v1852 = vpop.xlane.xlu0 %1851
      %v1853 = vsel %vm1617, %v1753, 0.0
      %1854 = vadd.xlane.f32.xlu0 %v1853
      %v1855 = vpop.xlane.xlu0 %1854
      %v1856 = vld [vmem:[%s3] sm:$0xff]
      %v1857 = vld [vmem:[%s3 + $0x8] sm:$0xff]
      %v1858 = vld [vmem:[%s3 + $0x10] sm:$0xff]
      %v1859 = vsel %vm745, %v1620, %v1756
      %v1860 = vsel %vm745, %v1623, %v1759
      %v1861 = vsel %vm745, %v1626, %v1762
      %v1862 = vsel %vm745, %v1629, %v1765
      %v1863 = vsel %vm745, %v1632, %v1768
      %v1864 = vsel %vm745, %v1635, %v1771
      %v1865 = vsel %vm745, %v1638, %v1774
      %v1866 = vsel %vm745, %v1641, %v1777
      %v1867 = vsel %vm745, %v1644, %v1780
      %v1868 = vsel %vm745, %v1647, %v1783
      %v1869 = vsel %vm745, %v1650, %v1786
      %v1870 = vsel %vm745, %v1653, %v1789
      %v1871 = vsel %vm745, %v1656, %v1792
      %v1872 = vsel %vm745, %v1659, %v1795
      %v1873 = vsel %vm745, %v1662, %v1798
      %v1874 = vsel %vm745, %v1665, %v1801
      %v1875 = vsel %vm745, %v1668, %v1804
      %v1876 = vsel %vm745, %v1671, %v1807
      %v1877 = vsel %vm745, %v1674, %v1810
      %v1878 = vsel %vm745, %v1677, %v1813
      %v1879 = vsel %vm745, %v1680, %v1816
      %v1880 = vsel %vm745, %v1683, %v1819
      %v1881 = vsel %vm745, %v1686, %v1822
      %v1882 = vsel %vm745, %v1689, %v1825
      %v1883 = vsel %vm745, %v1692, %v1828
      %v1884 = vsel %vm745, %v1695, %v1831
      %v1885 = vsel %vm745, %v1698, %v1834
      %v1886 = vsel %vm745, %v1701, %v1837
      %v1887 = vsel %vm745, %v1704, %v1840
      %v1888 = vsel %vm745, %v1707, %v1843
      %v1889 = vsel %vm745, %v1710, %v1846
      %v1890 = vsel %vm745, %v1713, %v1849
      %v1891 = vsel %vm745, %v1716, %v1852
      %v1892 = vsel %vm745, %v1719, %v1855
      %v1894 = vsel %vm274, %v1858, 0
      %v1896 = vand.u32 %v1874, 4294901760
      %1897 = vmatpush.msra.mxu0 %v1896
      %v1898 = vand.u32 %v1873, 4294901760
      %1899 = vmatpush.msra.mxu0 %v1898
      %v1900 = vand.u32 %v1872, 4294901760
      %1901 = vmatpush.msra.mxu0 %v1900
      %v1902 = vand.u32 %v1871, 4294901760
      %1903 = vmatpush.msra.mxu0 %v1902
      %v1904 = vand.u32 %v1870, 4294901760
      %1905 = vmatpush.msra.mxu0 %v1904
      %v1906 = vand.u32 %v1869, 4294901760
      %1907 = vmatpush.msra.mxu0 %v1906
      %v1908 = vand.u32 %v1868, 4294901760
      %1909 = vmatpush.msra.mxu0 %v1908
      %v1910 = vand.u32 %v1867, 4294901760
      %1911 = vmatpush.msra.mxu0 %v1910
      %v1912 = vand.u32 %v1866, 4294901760
      %1913 = vmatpush.msra.mxu0 %v1912
      %v1914 = vand.u32 %v1865, 4294901760
      %1915 = vmatpush.msra.mxu0 %v1914
      %v1916 = vand.u32 %v1864, 4294901760
      %1917 = vmatpush.msra.mxu0 %v1916
      %v1918 = vand.u32 %v1863, 4294901760
      %1919 = vmatpush.msra.mxu0 %v1918
      %v1920 = vand.u32 %v1862, 4294901760
      %1921 = vmatpush.msra.mxu0 %v1920
      %v1922 = vand.u32 %v1861, 4294901760
      %1923 = vmatpush.msra.mxu0 %v1922
      %v1924 = vand.u32 %v1860, 4294901760
      %1925 = vmatpush.msra.mxu0 %v1924
      %v1926 = vand.u32 %v1859, 4294901760
      %1927 = vmatpush.msra.mxu0 %v1926
      %v1928 = vand.u32 %v1856, 4294901760
      %v1929 = vsub.f32 %v1856, %v1928
      %v1930 = vand.u32 %v1929, 4294901760
      %v1931 = vsub.f32 %v1929, %v1930
      %v1932 = vand.u32 %v1931, 4294901760
      %1933 = vmatmul.f32.gmra.mxu0 %v1932
      %v1934 = vpop.f32.mrf.mxu0
      %v1935 = vadd.f32 0.0, %v1934
      %1936 = vdwg.mxu0
      %v1937 = vand.u32 %v1874, 4294901760
      %v1938 = vsub.f32 %v1874, %v1937
      %v1939 = vand.u32 %v1938, 4294901760
      %v1940 = vsub.f32 %v1938, %v1939
      %v1941 = vand.u32 %v1940, 4294901760
      %1942 = vmatpush.msra.mxu0 %v1941
      %v1943 = vand.u32 %v1873, 4294901760
      %v1944 = vsub.f32 %v1873, %v1943
      %v1945 = vand.u32 %v1944, 4294901760
      %v1946 = vsub.f32 %v1944, %v1945
      %v1947 = vand.u32 %v1946, 4294901760
      %1948 = vmatpush.msra.mxu0 %v1947
      %v1949 = vand.u32 %v1872, 4294901760
      %v1950 = vsub.f32 %v1872, %v1949
      %v1951 = vand.u32 %v1950, 4294901760
      %v1952 = vsub.f32 %v1950, %v1951
      %v1953 = vand.u32 %v1952, 4294901760
      %1954 = vmatpush.msra.mxu0 %v1953
      %v1955 = vand.u32 %v1871, 4294901760
      %v1956 = vsub.f32 %v1871, %v1955
      %v1957 = vand.u32 %v1956, 4294901760
      %v1958 = vsub.f32 %v1956, %v1957
      %v1959 = vand.u32 %v1958, 4294901760
      %1960 = vmatpush.msra.mxu0 %v1959
      %v1961 = vand.u32 %v1870, 4294901760
      %v1962 = vsub.f32 %v1870, %v1961
      %v1963 = vand.u32 %v1962, 4294901760
      %v1964 = vsub.f32 %v1962, %v1963
      %v1965 = vand.u32 %v1964, 4294901760
      %1966 = vmatpush.msra.mxu0 %v1965
      %v1967 = vand.u32 %v1869, 4294901760
      %v1968 = vsub.f32 %v1869, %v1967
      %v1969 = vand.u32 %v1968, 4294901760
      %v1970 = vsub.f32 %v1968, %v1969
      %v1971 = vand.u32 %v1970, 4294901760
      %1972 = vmatpush.msra.mxu0 %v1971
      %v1973 = vand.u32 %v1868, 4294901760
      %v1974 = vsub.f32 %v1868, %v1973
      %v1975 = vand.u32 %v1974, 4294901760
      %v1976 = vsub.f32 %v1974, %v1975
      %v1977 = vand.u32 %v1976, 4294901760
      %1978 = vmatpush.msra.mxu0 %v1977
      %v1979 = vand.u32 %v1867, 4294901760
      %v1980 = vsub.f32 %v1867, %v1979
      %v1981 = vand.u32 %v1980, 4294901760
      %v1982 = vsub.f32 %v1980, %v1981
      %v1983 = vand.u32 %v1982, 4294901760
      %1984 = vmatpush.msra.mxu0 %v1983
      %v1985 = vand.u32 %v1866, 4294901760
      %v1986 = vsub.f32 %v1866, %v1985
      %v1987 = vand.u32 %v1986, 4294901760
      %v1988 = vsub.f32 %v1986, %v1987
      %v1989 = vand.u32 %v1988, 4294901760
      %1990 = vmatpush.msra.mxu0 %v1989
      %v1991 = vand.u32 %v1865, 4294901760
      %v1992 = vsub.f32 %v1865, %v1991
      %v1993 = vand.u32 %v1992, 4294901760
      %v1994 = vsub.f32 %v1992, %v1993
      %v1995 = vand.u32 %v1994, 4294901760
      %1996 = vmatpush.msra.mxu0 %v1995
      %v1997 = vand.u32 %v1864, 4294901760
      %v1998 = vsub.f32 %v1864, %v1997
      %v1999 = vand.u32 %v1998, 4294901760
      %v2000 = vsub.f32 %v1998, %v1999
      %v2001 = vand.u32 %v2000, 4294901760
      %2002 = vmatpush.msra.mxu0 %v2001
      %v2003 = vand.u32 %v1863, 4294901760
      %v2004 = vsub.f32 %v1863, %v2003
      %v2005 = vand.u32 %v2004, 4294901760
      %v2006 = vsub.f32 %v2004, %v2005
      %v2007 = vand.u32 %v2006, 4294901760
      %2008 = vmatpush.msra.mxu0 %v2007
      %v2009 = vand.u32 %v1862, 4294901760
      %v2010 = vsub.f32 %v1862, %v2009
      %v2011 = vand.u32 %v2010, 4294901760
      %v2012 = vsub.f32 %v2010, %v2011
      %v2013 = vand.u32 %v2012, 4294901760
      %2014 = vmatpush.msra.mxu0 %v2013
      %v2015 = vand.u32 %v1861, 4294901760
      %v2016 = vsub.f32 %v1861, %v2015
      %v2017 = vand.u32 %v2016, 4294901760
      %v2018 = vsub.f32 %v2016, %v2017
      %v2019 = vand.u32 %v2018, 4294901760
      %2020 = vmatpush.msra.mxu0 %v2019
      %v2021 = vand.u32 %v1860, 4294901760
      %v2022 = vsub.f32 %v1860, %v2021
      %v2023 = vand.u32 %v2022, 4294901760
      %v2024 = vsub.f32 %v2022, %v2023
      %v2025 = vand.u32 %v2024, 4294901760
      %2026 = vmatpush.msra.mxu0 %v2025
      %v2027 = vand.u32 %v1859, 4294901760
      %v2028 = vsub.f32 %v1859, %v2027
      %v2029 = vand.u32 %v2028, 4294901760
      %v2030 = vsub.f32 %v2028, %v2029
      %v2031 = vand.u32 %v2030, 4294901760
      %2032 = vmatpush.msra.mxu0 %v2031
      %v2033 = vand.u32 %v1856, 4294901760
      %2034 = vmatmul.f32.gmra.mxu0 %v2033
      %v2035 = vpop.f32.mrf.mxu0
      %v2036 = vadd.f32 %v1935, %v2035
      %2037 = vdwg.mxu0
      %v2038 = vand.u32 %v1874, 4294901760
      %v2039 = vsub.f32 %v1874, %v2038
      %2040 = vmatpush.msra.mxu0 %v2039
      %v2041 = vand.u32 %v1873, 4294901760
      %v2042 = vsub.f32 %v1873, %v2041
      %2043 = vmatpush.msra.mxu0 %v2042
      %v2044 = vand.u32 %v1872, 4294901760
      %v2045 = vsub.f32 %v1872, %v2044
      %2046 = vmatpush.msra.mxu0 %v2045
      %v2047 = vand.u32 %v1871, 4294901760
      %v2048 = vsub.f32 %v1871, %v2047
      %2049 = vmatpush.msra.mxu0 %v2048
      %v2050 = vand.u32 %v1870, 4294901760
      %v2051 = vsub.f32 %v1870, %v2050
      %2052 = vmatpush.msra.mxu0 %v2051
      %v2053 = vand.u32 %v1869, 4294901760
      %v2054 = vsub.f32 %v1869, %v2053
      %2055 = vmatpush.msra.mxu0 %v2054
      %v2056 = vand.u32 %v1868, 4294901760
      %v2057 = vsub.f32 %v1868, %v2056
      %2058 = vmatpush.msra.mxu0 %v2057
      %v2059 = vand.u32 %v1867, 4294901760
      %v2060 = vsub.f32 %v1867, %v2059
      %2061 = vmatpush.msra.mxu0 %v2060
      %v2062 = vand.u32 %v1866, 4294901760
      %v2063 = vsub.f32 %v1866, %v2062
      %2064 = vmatpush.msra.mxu0 %v2063
      %v2065 = vand.u32 %v1865, 4294901760
      %v2066 = vsub.f32 %v1865, %v2065
      %2067 = vmatpush.msra.mxu0 %v2066
      %v2068 = vand.u32 %v1864, 4294901760
      %v2069 = vsub.f32 %v1864, %v2068
      %2070 = vmatpush.msra.mxu0 %v2069
      %v2071 = vand.u32 %v1863, 4294901760
      %v2072 = vsub.f32 %v1863, %v2071
      %2073 = vmatpush.msra.mxu0 %v2072
      %v2074 = vand.u32 %v1862, 4294901760
      %v2075 = vsub.f32 %v1862, %v2074
      %2076 = vmatpush.msra.mxu0 %v2075
      %v2077 = vand.u32 %v1861, 4294901760
      %v2078 = vsub.f32 %v1861, %v2077
      %2079 = vmatpush.msra.mxu0 %v2078
      %v2080 = vand.u32 %v1860, 4294901760
      %v2081 = vsub.f32 %v1860, %v2080
      %2082 = vmatpush.msra.mxu0 %v2081
      %v2083 = vand.u32 %v1859, 4294901760
      %v2084 = vsub.f32 %v1859, %v2083
      %2085 = vmatpush.msra.mxu0 %v2084
      %v2086 = vand.u32 %v1856, 4294901760
      %v2087 = vsub.f32 %v1856, %v2086
      %2088 = vmatmul.f32.gmra.mxu0 %v2087
      %v2089 = vpop.f32.mrf.mxu0
      %v2090 = vadd.f32 %v2036, %v2089
      %2091 = vdwg.mxu0
      %v2092 = vand.u32 %v1874, 4294901760
      %2093 = vmatpush.msra.mxu0 %v2092
      %v2094 = vand.u32 %v1873, 4294901760
      %2095 = vmatpush.msra.mxu0 %v2094
      %v2096 = vand.u32 %v1872, 4294901760
      %2097 = vmatpush.msra.mxu0 %v2096
      %v2098 = vand.u32 %v1871, 4294901760
      %2099 = vmatpush.msra.mxu0 %v2098
      %v2100 = vand.u32 %v1870, 4294901760
      %2101 = vmatpush.msra.mxu0 %v2100
      %v2102 = vand.u32 %v1869, 4294901760
      %2103 = vmatpush.msra.mxu0 %v2102
      %v2104 = vand.u32 %v1868, 4294901760
      %2105 = vmatpush.msra.mxu0 %v2104
      %v2106 = vand.u32 %v1867, 4294901760
      %2107 = vmatpush.msra.mxu0 %v2106
      %v2108 = vand.u32 %v1866, 4294901760
      %2109 = vmatpush.msra.mxu0 %v2108
      %v2110 = vand.u32 %v1865, 4294901760
      %2111 = vmatpush.msra.mxu0 %v2110
      %v2112 = vand.u32 %v1864, 4294901760
      %2113 = vmatpush.msra.mxu0 %v2112
      %v2114 = vand.u32 %v1863, 4294901760
      %2115 = vmatpush.msra.mxu0 %v2114
      %v2116 = vand.u32 %v1862, 4294901760
      %2117 = vmatpush.msra.mxu0 %v2116
      %v2118 = vand.u32 %v1861, 4294901760
      %2119 = vmatpush.msra.mxu0 %v2118
      %v2120 = vand.u32 %v1860, 4294901760
      %2121 = vmatpush.msra.mxu0 %v2120
      %v2122 = vand.u32 %v1859, 4294901760
      %2123 = vmatpush.msra.mxu0 %v2122
      %v2124 = vand.u32 %v1856, 4294901760
      %v2125 = vsub.f32 %v1856, %v2124
      %v2126 = vand.u32 %v2125, 4294901760
      %2127 = vmatmul.f32.gmra.mxu0 %v2126
      %v2128 = vpop.f32.mrf.mxu0
      %v2129 = vadd.f32 %v2090, %v2128
      %2130 = vdwg.mxu0
      %v2131 = vand.u32 %v1874, 4294901760
      %v2132 = vsub.f32 %v1874, %v2131
      %v2133 = vand.u32 %v2132, 4294901760
      %2134 = vmatpush.msra.mxu0 %v2133
      %v2135 = vand.u32 %v1873, 4294901760
      %v2136 = vsub.f32 %v1873, %v2135
      %v2137 = vand.u32 %v2136, 4294901760
      %2138 = vmatpush.msra.mxu0 %v2137
      %v2139 = vand.u32 %v1872, 4294901760
      %v2140 = vsub.f32 %v1872, %v2139
      %v2141 = vand.u32 %v2140, 4294901760
      %2142 = vmatpush.msra.mxu0 %v2141
      %v2143 = vand.u32 %v1871, 4294901760
      %v2144 = vsub.f32 %v1871, %v2143
      %v2145 = vand.u32 %v2144, 4294901760
      %2146 = vmatpush.msra.mxu0 %v2145
      %v2147 = vand.u32 %v1870, 4294901760
      %v2148 = vsub.f32 %v1870, %v2147
      %v2149 = vand.u32 %v2148, 4294901760
      %2150 = vmatpush.msra.mxu0 %v2149
      %v2151 = vand.u32 %v1869, 4294901760
      %v2152 = vsub.f32 %v1869, %v2151
      %v2153 = vand.u32 %v2152, 4294901760
      %2154 = vmatpush.msra.mxu0 %v2153
      %v2155 = vand.u32 %v1868, 4294901760
      %v2156 = vsub.f32 %v1868, %v2155
      %v2157 = vand.u32 %v2156, 4294901760
      %2158 = vmatpush.msra.mxu0 %v2157
      %v2159 = vand.u32 %v1867, 4294901760
      %v2160 = vsub.f32 %v1867, %v2159
      %v2161 = vand.u32 %v2160, 4294901760
      %2162 = vmatpush.msra.mxu0 %v2161
      %v2163 = vand.u32 %v1866, 4294901760
      %v2164 = vsub.f32 %v1866, %v2163
      %v2165 = vand.u32 %v2164, 4294901760
      %2166 = vmatpush.msra.mxu0 %v2165
      %v2167 = vand.u32 %v1865, 4294901760
      %v2168 = vsub.f32 %v1865, %v2167
      %v2169 = vand.u32 %v2168, 4294901760
      %2170 = vmatpush.msra.mxu0 %v2169
      %v2171 = vand.u32 %v1864, 4294901760
      %v2172 = vsub.f32 %v1864, %v2171
      %v2173 = vand.u32 %v2172, 4294901760
      %2174 = vmatpush.msra.mxu0 %v2173
      %v2175 = vand.u32 %v1863, 4294901760
      %v2176 = vsub.f32 %v1863, %v2175
      %v2177 = vand.u32 %v2176, 4294901760
      %2178 = vmatpush.msra.mxu0 %v2177
      %v2179 = vand.u32 %v1862, 4294901760
      %v2180 = vsub.f32 %v1862, %v2179
      %v2181 = vand.u32 %v2180, 4294901760
      %2182 = vmatpush.msra.mxu0 %v2181
      %v2183 = vand.u32 %v1861, 4294901760
      %v2184 = vsub.f32 %v1861, %v2183
      %v2185 = vand.u32 %v2184, 4294901760
      %2186 = vmatpush.msra.mxu0 %v2185
      %v2187 = vand.u32 %v1860, 4294901760
      %v2188 = vsub.f32 %v1860, %v2187
      %v2189 = vand.u32 %v2188, 4294901760
      %2190 = vmatpush.msra.mxu0 %v2189
      %v2191 = vand.u32 %v1859, 4294901760
      %v2192 = vsub.f32 %v1859, %v2191
      %v2193 = vand.u32 %v2192, 4294901760
      %2194 = vmatpush.msra.mxu0 %v2193
      %v2195 = vand.u32 %v1856, 4294901760
      %2196 = vmatmul.f32.gmra.mxu0 %v2195
      %v2197 = vpop.f32.mrf.mxu0
      %v2198 = vadd.f32 %v2129, %v2197
      %2199 = vdwg.mxu0
      %v2200 = vand.u32 %v1874, 4294901760
      %2201 = vmatpush.msra.mxu0 %v2200
      %v2202 = vand.u32 %v1873, 4294901760
      %2203 = vmatpush.msra.mxu0 %v2202
      %v2204 = vand.u32 %v1872, 4294901760
      %2205 = vmatpush.msra.mxu0 %v2204
      %v2206 = vand.u32 %v1871, 4294901760
      %2207 = vmatpush.msra.mxu0 %v2206
      %v2208 = vand.u32 %v1870, 4294901760
      %2209 = vmatpush.msra.mxu0 %v2208
      %v2210 = vand.u32 %v1869, 4294901760
      %2211 = vmatpush.msra.mxu0 %v2210
      %v2212 = vand.u32 %v1868, 4294901760
      %2213 = vmatpush.msra.mxu0 %v2212
      %v2214 = vand.u32 %v1867, 4294901760
      %2215 = vmatpush.msra.mxu0 %v2214
      %v2216 = vand.u32 %v1866, 4294901760
      %2217 = vmatpush.msra.mxu0 %v2216
      %v2218 = vand.u32 %v1865, 4294901760
      %2219 = vmatpush.msra.mxu0 %v2218
      %v2220 = vand.u32 %v1864, 4294901760
      %2221 = vmatpush.msra.mxu0 %v2220
      %v2222 = vand.u32 %v1863, 4294901760
      %2223 = vmatpush.msra.mxu0 %v2222
      %v2224 = vand.u32 %v1862, 4294901760
      %2225 = vmatpush.msra.mxu0 %v2224
      %v2226 = vand.u32 %v1861, 4294901760
      %2227 = vmatpush.msra.mxu0 %v2226
      %v2228 = vand.u32 %v1860, 4294901760
      %2229 = vmatpush.msra.mxu0 %v2228
      %v2230 = vand.u32 %v1859, 4294901760
      %2231 = vmatpush.msra.mxu0 %v2230
      %v2232 = vand.u32 %v1856, 4294901760
      %2233 = vmatmul.f32.gmra.mxu0 %v2232
      %v2234 = vpop.f32.mrf.mxu0
      %v2235 = vadd.f32 %v2198, %v2234
      %2236 = vdwg.mxu0
      %v2237 = vand.u32 %v1890, 4294901760
      %2238 = vmatpush.msra.mxu0 %v2237
      %v2239 = vand.u32 %v1889, 4294901760
      %2240 = vmatpush.msra.mxu0 %v2239
      %v2241 = vand.u32 %v1888, 4294901760
      %2242 = vmatpush.msra.mxu0 %v2241
      %v2243 = vand.u32 %v1887, 4294901760
      %2244 = vmatpush.msra.mxu0 %v2243
      %v2245 = vand.u32 %v1886, 4294901760
      %2246 = vmatpush.msra.mxu0 %v2245
      %v2247 = vand.u32 %v1885, 4294901760
      %2248 = vmatpush.msra.mxu0 %v2247
      %v2249 = vand.u32 %v1884, 4294901760
      %2250 = vmatpush.msra.mxu0 %v2249
      %v2251 = vand.u32 %v1883, 4294901760
      %2252 = vmatpush.msra.mxu0 %v2251
      %v2253 = vand.u32 %v1882, 4294901760
      %2254 = vmatpush.msra.mxu0 %v2253
      %v2255 = vand.u32 %v1881, 4294901760
      %2256 = vmatpush.msra.mxu0 %v2255
      %v2257 = vand.u32 %v1880, 4294901760
      %2258 = vmatpush.msra.mxu0 %v2257
      %v2259 = vand.u32 %v1879, 4294901760
      %2260 = vmatpush.msra.mxu0 %v2259
      %v2261 = vand.u32 %v1878, 4294901760
      %2262 = vmatpush.msra.mxu0 %v2261
      %v2263 = vand.u32 %v1877, 4294901760
      %2264 = vmatpush.msra.mxu0 %v2263
      %v2265 = vand.u32 %v1876, 4294901760
      %2266 = vmatpush.msra.mxu0 %v2265
      %v2267 = vand.u32 %v1875, 4294901760
      %2268 = vmatpush.msra.mxu0 %v2267
      %v2269 = vand.u32 %v1857, 4294901760
      %v2270 = vsub.f32 %v1857, %v2269
      %v2271 = vand.u32 %v2270, 4294901760
      %v2272 = vsub.f32 %v2270, %v2271
      %v2273 = vand.u32 %v2272, 4294901760
      %2274 = vmatmul.f32.gmra.mxu0 %v2273
      %v2275 = vpop.f32.mrf.mxu0
      %v2276 = vadd.f32 %v2235, %v2275
      %2277 = vdwg.mxu0
      %v2278 = vand.u32 %v1890, 4294901760
      %v2279 = vsub.f32 %v1890, %v2278
      %v2280 = vand.u32 %v2279, 4294901760
      %v2281 = vsub.f32 %v2279, %v2280
      %v2282 = vand.u32 %v2281, 4294901760
      %2283 = vmatpush.msra.mxu0 %v2282
      %v2284 = vand.u32 %v1889, 4294901760
      %v2285 = vsub.f32 %v1889, %v2284
      %v2286 = vand.u32 %v2285, 4294901760
      %v2287 = vsub.f32 %v2285, %v2286
      %v2288 = vand.u32 %v2287, 4294901760
      %2289 = vmatpush.msra.mxu0 %v2288
      %v2290 = vand.u32 %v1888, 4294901760
      %v2291 = vsub.f32 %v1888, %v2290
      %v2292 = vand.u32 %v2291, 4294901760
      %v2293 = vsub.f32 %v2291, %v2292
      %v2294 = vand.u32 %v2293, 4294901760
      %2295 = vmatpush.msra.mxu0 %v2294
      %v2296 = vand.u32 %v1887, 4294901760
      %v2297 = vsub.f32 %v1887, %v2296
      %v2298 = vand.u32 %v2297, 4294901760
      %v2299 = vsub.f32 %v2297, %v2298
      %v2300 = vand.u32 %v2299, 4294901760
      %2301 = vmatpush.msra.mxu0 %v2300
      %v2302 = vand.u32 %v1886, 4294901760
      %v2303 = vsub.f32 %v1886, %v2302
      %v2304 = vand.u32 %v2303, 4294901760
      %v2305 = vsub.f32 %v2303, %v2304
      %v2306 = vand.u32 %v2305, 4294901760
      %2307 = vmatpush.msra.mxu0 %v2306
      %v2308 = vand.u32 %v1885, 4294901760
      %v2309 = vsub.f32 %v1885, %v2308
      %v2310 = vand.u32 %v2309, 4294901760
      %v2311 = vsub.f32 %v2309, %v2310
      %v2312 = vand.u32 %v2311, 4294901760
      %2313 = vmatpush.msra.mxu0 %v2312
      %v2314 = vand.u32 %v1884, 4294901760
      %v2315 = vsub.f32 %v1884, %v2314
      %v2316 = vand.u32 %v2315, 4294901760
      %v2317 = vsub.f32 %v2315, %v2316
      %v2318 = vand.u32 %v2317, 4294901760
      %2319 = vmatpush.msra.mxu0 %v2318
      %v2320 = vand.u32 %v1883, 4294901760
      %v2321 = vsub.f32 %v1883, %v2320
      %v2322 = vand.u32 %v2321, 4294901760
      %v2323 = vsub.f32 %v2321, %v2322
      %v2324 = vand.u32 %v2323, 4294901760
      %2325 = vmatpush.msra.mxu0 %v2324
      %v2326 = vand.u32 %v1882, 4294901760
      %v2327 = vsub.f32 %v1882, %v2326
      %v2328 = vand.u32 %v2327, 4294901760
      %v2329 = vsub.f32 %v2327, %v2328
      %v2330 = vand.u32 %v2329, 4294901760
      %2331 = vmatpush.msra.mxu0 %v2330
      %v2332 = vand.u32 %v1881, 4294901760
      %v2333 = vsub.f32 %v1881, %v2332
      %v2334 = vand.u32 %v2333, 4294901760
      %v2335 = vsub.f32 %v2333, %v2334
      %v2336 = vand.u32 %v2335, 4294901760
      %2337 = vmatpush.msra.mxu0 %v2336
      %v2338 = vand.u32 %v1880, 4294901760
      %v2339 = vsub.f32 %v1880, %v2338
      %v2340 = vand.u32 %v2339, 4294901760
      %v2341 = vsub.f32 %v2339, %v2340
      %v2342 = vand.u32 %v2341, 4294901760
      %2343 = vmatpush.msra.mxu0 %v2342
      %v2344 = vand.u32 %v1879, 4294901760
      %v2345 = vsub.f32 %v1879, %v2344
      %v2346 = vand.u32 %v2345, 4294901760
      %v2347 = vsub.f32 %v2345, %v2346
      %v2348 = vand.u32 %v2347, 4294901760
      %2349 = vmatpush.msra.mxu0 %v2348
      %v2350 = vand.u32 %v1878, 4294901760
      %v2351 = vsub.f32 %v1878, %v2350
      %v2352 = vand.u32 %v2351, 4294901760
      %v2353 = vsub.f32 %v2351, %v2352
      %v2354 = vand.u32 %v2353, 4294901760
      %2355 = vmatpush.msra.mxu0 %v2354
      %v2356 = vand.u32 %v1877, 4294901760
      %v2357 = vsub.f32 %v1877, %v2356
      %v2358 = vand.u32 %v2357, 4294901760
      %v2359 = vsub.f32 %v2357, %v2358
      %v2360 = vand.u32 %v2359, 4294901760
      %2361 = vmatpush.msra.mxu0 %v2360
      %v2362 = vand.u32 %v1876, 4294901760
      %v2363 = vsub.f32 %v1876, %v2362
      %v2364 = vand.u32 %v2363, 4294901760
      %v2365 = vsub.f32 %v2363, %v2364
      %v2366 = vand.u32 %v2365, 4294901760
      %2367 = vmatpush.msra.mxu0 %v2366
      %v2368 = vand.u32 %v1875, 4294901760
      %v2369 = vsub.f32 %v1875, %v2368
      %v2370 = vand.u32 %v2369, 4294901760
      %v2371 = vsub.f32 %v2369, %v2370
      %v2372 = vand.u32 %v2371, 4294901760
      %2373 = vmatpush.msra.mxu0 %v2372
      %v2374 = vand.u32 %v1857, 4294901760
      %2375 = vmatmul.f32.gmra.mxu0 %v2374
      %v2376 = vpop.f32.mrf.mxu0
      %v2377 = vadd.f32 %v2276, %v2376
      %2378 = vdwg.mxu0
      %v2379 = vand.u32 %v1890, 4294901760
      %v2380 = vsub.f32 %v1890, %v2379
      %2381 = vmatpush.msra.mxu0 %v2380
      %v2382 = vand.u32 %v1889, 4294901760
      %v2383 = vsub.f32 %v1889, %v2382
      %2384 = vmatpush.msra.mxu0 %v2383
      %v2385 = vand.u32 %v1888, 4294901760
      %v2386 = vsub.f32 %v1888, %v2385
      %2387 = vmatpush.msra.mxu0 %v2386
      %v2388 = vand.u32 %v1887, 4294901760
      %v2389 = vsub.f32 %v1887, %v2388
      %2390 = vmatpush.msra.mxu0 %v2389
      %v2391 = vand.u32 %v1886, 4294901760
      %v2392 = vsub.f32 %v1886, %v2391
      %2393 = vmatpush.msra.mxu0 %v2392
      %v2394 = vand.u32 %v1885, 4294901760
      %v2395 = vsub.f32 %v1885, %v2394
      %2396 = vmatpush.msra.mxu0 %v2395
      %v2397 = vand.u32 %v1884, 4294901760
      %v2398 = vsub.f32 %v1884, %v2397
      %2399 = vmatpush.msra.mxu0 %v2398
      %v2400 = vand.u32 %v1883, 4294901760
      %v2401 = vsub.f32 %v1883, %v2400
      %2402 = vmatpush.msra.mxu0 %v2401
      %v2403 = vand.u32 %v1882, 4294901760
      %v2404 = vsub.f32 %v1882, %v2403
      %2405 = vmatpush.msra.mxu0 %v2404
      %v2406 = vand.u32 %v1881, 4294901760
      %v2407 = vsub.f32 %v1881, %v2406
      %2408 = vmatpush.msra.mxu0 %v2407
      %v2409 = vand.u32 %v1880, 4294901760
      %v2410 = vsub.f32 %v1880, %v2409
      %2411 = vmatpush.msra.mxu0 %v2410
      %v2412 = vand.u32 %v1879, 4294901760
      %v2413 = vsub.f32 %v1879, %v2412
      %2414 = vmatpush.msra.mxu0 %v2413
      %v2415 = vand.u32 %v1878, 4294901760
      %v2416 = vsub.f32 %v1878, %v2415
      %2417 = vmatpush.msra.mxu0 %v2416
      %v2418 = vand.u32 %v1877, 4294901760
      %v2419 = vsub.f32 %v1877, %v2418
      %2420 = vmatpush.msra.mxu0 %v2419
      %v2421 = vand.u32 %v1876, 4294901760
      %v2422 = vsub.f32 %v1876, %v2421
      %2423 = vmatpush.msra.mxu0 %v2422
      %v2424 = vand.u32 %v1875, 4294901760
      %v2425 = vsub.f32 %v1875, %v2424
      %2426 = vmatpush.msra.mxu0 %v2425
      %v2427 = vand.u32 %v1857, 4294901760
      %v2428 = vsub.f32 %v1857, %v2427
      %2429 = vmatmul.f32.gmra.mxu0 %v2428
      %v2430 = vpop.f32.mrf.mxu0
      %v2431 = vadd.f32 %v2377, %v2430
      %2432 = vdwg.mxu0
      %v2433 = vand.u32 %v1890, 4294901760
      %2434 = vmatpush.msra.mxu0 %v2433
      %v2435 = vand.u32 %v1889, 4294901760
      %2436 = vmatpush.msra.mxu0 %v2435
      %v2437 = vand.u32 %v1888, 4294901760
      %2438 = vmatpush.msra.mxu0 %v2437
      %v2439 = vand.u32 %v1887, 4294901760
      %2440 = vmatpush.msra.mxu0 %v2439
      %v2441 = vand.u32 %v1886, 4294901760
      %2442 = vmatpush.msra.mxu0 %v2441
      %v2443 = vand.u32 %v1885, 4294901760
      %2444 = vmatpush.msra.mxu0 %v2443
      %v2445 = vand.u32 %v1884, 4294901760
      %2446 = vmatpush.msra.mxu0 %v2445
      %v2447 = vand.u32 %v1883, 4294901760
      %2448 = vmatpush.msra.mxu0 %v2447
      %v2449 = vand.u32 %v1882, 4294901760
      %2450 = vmatpush.msra.mxu0 %v2449
      %v2451 = vand.u32 %v1881, 4294901760
      %2452 = vmatpush.msra.mxu0 %v2451
      %v2453 = vand.u32 %v1880, 4294901760
      %2454 = vmatpush.msra.mxu0 %v2453
      %v2455 = vand.u32 %v1879, 4294901760
      %2456 = vmatpush.msra.mxu0 %v2455
      %v2457 = vand.u32 %v1878, 4294901760
      %2458 = vmatpush.msra.mxu0 %v2457
      %v2459 = vand.u32 %v1877, 4294901760
      %2460 = vmatpush.msra.mxu0 %v2459
      %v2461 = vand.u32 %v1876, 4294901760
      %2462 = vmatpush.msra.mxu0 %v2461
      %v2463 = vand.u32 %v1875, 4294901760
      %2464 = vmatpush.msra.mxu0 %v2463
      %v2465 = vand.u32 %v1857, 4294901760
      %v2466 = vsub.f32 %v1857, %v2465
      %v2467 = vand.u32 %v2466, 4294901760
      %2468 = vmatmul.f32.gmra.mxu0 %v2467
      %v2469 = vpop.f32.mrf.mxu0
      %v2470 = vadd.f32 %v2431, %v2469
      %2471 = vdwg.mxu0
      %v2472 = vand.u32 %v1890, 4294901760
      %v2473 = vsub.f32 %v1890, %v2472
      %v2474 = vand.u32 %v2473, 4294901760
      %2475 = vmatpush.msra.mxu0 %v2474
      %v2476 = vand.u32 %v1889, 4294901760
      %v2477 = vsub.f32 %v1889, %v2476
      %v2478 = vand.u32 %v2477, 4294901760
      %2479 = vmatpush.msra.mxu0 %v2478
      %v2480 = vand.u32 %v1888, 4294901760
      %v2481 = vsub.f32 %v1888, %v2480
      %v2482 = vand.u32 %v2481, 4294901760
      %2483 = vmatpush.msra.mxu0 %v2482
      %v2484 = vand.u32 %v1887, 4294901760
      %v2485 = vsub.f32 %v1887, %v2484
      %v2486 = vand.u32 %v2485, 4294901760
      %2487 = vmatpush.msra.mxu0 %v2486
      %v2488 = vand.u32 %v1886, 4294901760
      %v2489 = vsub.f32 %v1886, %v2488
      %v2490 = vand.u32 %v2489, 4294901760
      %2491 = vmatpush.msra.mxu0 %v2490
      %v2492 = vand.u32 %v1885, 4294901760
      %v2493 = vsub.f32 %v1885, %v2492
      %v2494 = vand.u32 %v2493, 4294901760
      %2495 = vmatpush.msra.mxu0 %v2494
      %v2496 = vand.u32 %v1884, 4294901760
      %v2497 = vsub.f32 %v1884, %v2496
      %v2498 = vand.u32 %v2497, 4294901760
      %2499 = vmatpush.msra.mxu0 %v2498
      %v2500 = vand.u32 %v1883, 4294901760
      %v2501 = vsub.f32 %v1883, %v2500
      %v2502 = vand.u32 %v2501, 4294901760
      %2503 = vmatpush.msra.mxu0 %v2502
      %v2504 = vand.u32 %v1882, 4294901760
      %v2505 = vsub.f32 %v1882, %v2504
      %v2506 = vand.u32 %v2505, 4294901760
      %2507 = vmatpush.msra.mxu0 %v2506
      %v2508 = vand.u32 %v1881, 4294901760
      %v2509 = vsub.f32 %v1881, %v2508
      %v2510 = vand.u32 %v2509, 4294901760
      %2511 = vmatpush.msra.mxu0 %v2510
      %v2512 = vand.u32 %v1880, 4294901760
      %v2513 = vsub.f32 %v1880, %v2512
      %v2514 = vand.u32 %v2513, 4294901760
      %2515 = vmatpush.msra.mxu0 %v2514
      %v2516 = vand.u32 %v1879, 4294901760
      %v2517 = vsub.f32 %v1879, %v2516
      %v2518 = vand.u32 %v2517, 4294901760
      %2519 = vmatpush.msra.mxu0 %v2518
      %v2520 = vand.u32 %v1878, 4294901760
      %v2521 = vsub.f32 %v1878, %v2520
      %v2522 = vand.u32 %v2521, 4294901760
      %2523 = vmatpush.msra.mxu0 %v2522
      %v2524 = vand.u32 %v1877, 4294901760
      %v2525 = vsub.f32 %v1877, %v2524
      %v2526 = vand.u32 %v2525, 4294901760
      %2527 = vmatpush.msra.mxu0 %v2526
      %v2528 = vand.u32 %v1876, 4294901760
      %v2529 = vsub.f32 %v1876, %v2528
      %v2530 = vand.u32 %v2529, 4294901760
      %2531 = vmatpush.msra.mxu0 %v2530
      %v2532 = vand.u32 %v1875, 4294901760
      %v2533 = vsub.f32 %v1875, %v2532
      %v2534 = vand.u32 %v2533, 4294901760
      %2535 = vmatpush.msra.mxu0 %v2534
      %v2536 = vand.u32 %v1857, 4294901760
      %2537 = vmatmul.f32.gmra.mxu0 %v2536
      %v2538 = vpop.f32.mrf.mxu0
      %v2539 = vadd.f32 %v2470, %v2538
      %2540 = vdwg.mxu0
      %v2541 = vand.u32 %v1890, 4294901760
      %2542 = vmatpush.msra.mxu0 %v2541
      %v2543 = vand.u32 %v1889, 4294901760
      %2544 = vmatpush.msra.mxu0 %v2543
      %v2545 = vand.u32 %v1888, 4294901760
      %2546 = vmatpush.msra.mxu0 %v2545
      %v2547 = vand.u32 %v1887, 4294901760
      %2548 = vmatpush.msra.mxu0 %v2547
      %v2549 = vand.u32 %v1886, 4294901760
      %2550 = vmatpush.msra.mxu0 %v2549
      %v2551 = vand.u32 %v1885, 4294901760
      %2552 = vmatpush.msra.mxu0 %v2551
      %v2553 = vand.u32 %v1884, 4294901760
      %2554 = vmatpush.msra.mxu0 %v2553
      %v2555 = vand.u32 %v1883, 4294901760
      %2556 = vmatpush.msra.mxu0 %v2555
      %v2557 = vand.u32 %v1882, 4294901760
      %2558 = vmatpush.msra.mxu0 %v2557
      %v2559 = vand.u32 %v1881, 4294901760
      %2560 = vmatpush.msra.mxu0 %v2559
      %v2561 = vand.u32 %v1880, 4294901760
      %2562 = vmatpush.msra.mxu0 %v2561
      %v2563 = vand.u32 %v1879, 4294901760
      %2564 = vmatpush.msra.mxu0 %v2563
      %v2565 = vand.u32 %v1878, 4294901760
      %2566 = vmatpush.msra.mxu0 %v2565
      %v2567 = vand.u32 %v1877, 4294901760
      %2568 = vmatpush.msra.mxu0 %v2567
      %v2569 = vand.u32 %v1876, 4294901760
      %2570 = vmatpush.msra.mxu0 %v2569
      %v2571 = vand.u32 %v1875, 4294901760
      %2572 = vmatpush.msra.mxu0 %v2571
      %v2573 = vand.u32 %v1857, 4294901760
      %2574 = vmatmul.f32.gmra.mxu0 %v2573
      %v2575 = vpop.f32.mrf.mxu0
      %v2576 = vadd.f32 %v2539, %v2575
      %2577 = vdwg.mxu0
      %2578 = vmatpush.msra.mxu0 0.0
      %2579 = vmatpush.msra.mxu0 0.0
      %2580 = vmatpush.msra.mxu0 0.0
      %2581 = vmatpush.msra.mxu0 0.0
      %2582 = vmatpush.msra.mxu0 0.0
      %2583 = vmatpush.msra.mxu0 0.0
      %2584 = vmatpush.msra.mxu0 0.0
      %2585 = vmatpush.msra.mxu0 0.0
      %2586 = vmatpush.msra.mxu0 0.0
      %2587 = vmatpush.msra.mxu0 0.0
      %2588 = vmatpush.msra.mxu0 0.0
      %2589 = vmatpush.msra.mxu0 0.0
      %2590 = vmatpush.msra.mxu0 0.0
      %2591 = vmatpush.msra.mxu0 0.0
      %v2592 = vand.u32 %v1892, 4294901760
      %2593 = vmatpush.msra.mxu0 %v2592
      %v2594 = vand.u32 %v1891, 4294901760
      %2595 = vmatpush.msra.mxu0 %v2594
      %v2596 = vand.u32 %v1894, 4294901760
      %v2597 = vsub.f32 %v1894, %v2596
      %v2598 = vand.u32 %v2597, 4294901760
      %v2599 = vsub.f32 %v2597, %v2598
      %v2600 = vand.u32 %v2599, 4294901760
      %2601 = vmatmul.f32.gmra.mxu0 %v2600
      %v2602 = vpop.f32.mrf.mxu0
      %v2603 = vadd.f32 %v2576, %v2602
      %2604 = vdwg.mxu0
      %2605 = vmatpush.msra.mxu0 0.0
      %2606 = vmatpush.msra.mxu0 0.0
      %2607 = vmatpush.msra.mxu0 0.0
      %2608 = vmatpush.msra.mxu0 0.0
      %2609 = vmatpush.msra.mxu0 0.0
      %2610 = vmatpush.msra.mxu0 0.0
      %2611 = vmatpush.msra.mxu0 0.0
      %2612 = vmatpush.msra.mxu0 0.0
      %2613 = vmatpush.msra.mxu0 0.0
      %2614 = vmatpush.msra.mxu0 0.0
      %2615 = vmatpush.msra.mxu0 0.0
      %2616 = vmatpush.msra.mxu0 0.0
      %2617 = vmatpush.msra.mxu0 0.0
      %2618 = vmatpush.msra.mxu0 0.0
      %v2619 = vand.u32 %v1892, 4294901760
      %v2620 = vsub.f32 %v1892, %v2619
      %v2621 = vand.u32 %v2620, 4294901760
      %v2622 = vsub.f32 %v2620, %v2621
      %v2623 = vand.u32 %v2622, 4294901760
      %2624 = vmatpush.msra.mxu0 %v2623
      %v2625 = vand.u32 %v1891, 4294901760
      %v2626 = vsub.f32 %v1891, %v2625
      %v2627 = vand.u32 %v2626, 4294901760
      %v2628 = vsub.f32 %v2626, %v2627
      %v2629 = vand.u32 %v2628, 4294901760
      %2630 = vmatpush.msra.mxu0 %v2629
      %v2631 = vand.u32 %v1894, 4294901760
      %2632 = vmatmul.f32.gmra.mxu0 %v2631
      %v2633 = vpop.f32.mrf.mxu0
      %v2634 = vadd.f32 %v2603, %v2633
      %2635 = vdwg.mxu0
      %2636 = vmatpush.msra.mxu0 0.0
      %2637 = vmatpush.msra.mxu0 0.0
      %2638 = vmatpush.msra.mxu0 0.0
      %2639 = vmatpush.msra.mxu0 0.0
      %2640 = vmatpush.msra.mxu0 0.0
      %2641 = vmatpush.msra.mxu0 0.0
      %2642 = vmatpush.msra.mxu0 0.0
      %2643 = vmatpush.msra.mxu0 0.0
      %2644 = vmatpush.msra.mxu0 0.0
      %2645 = vmatpush.msra.mxu0 0.0
      %2646 = vmatpush.msra.mxu0 0.0
      %2647 = vmatpush.msra.mxu0 0.0
      %2648 = vmatpush.msra.mxu0 0.0
      %2649 = vmatpush.msra.mxu0 0.0
      %v2650 = vand.u32 %v1892, 4294901760
      %v2651 = vsub.f32 %v1892, %v2650
      %2652 = vmatpush.msra.mxu0 %v2651
      %v2653 = vand.u32 %v1891, 4294901760
      %v2654 = vsub.f32 %v1891, %v2653
      %2655 = vmatpush.msra.mxu0 %v2654
      %v2656 = vand.u32 %v1894, 4294901760
      %v2657 = vsub.f32 %v1894, %v2656
      %2658 = vmatmul.f32.gmra.mxu0 %v2657
      %v2659 = vpop.f32.mrf.mxu0
      %v2660 = vadd.f32 %v2634, %v2659
      %2661 = vdwg.mxu0
      %2662 = vmatpush.msra.mxu0 0.0
      %2663 = vmatpush.msra.mxu0 0.0
      %2664 = vmatpush.msra.mxu0 0.0
      %2665 = vmatpush.msra.mxu0 0.0
      %2666 = vmatpush.msra.mxu0 0.0
      %2667 = vmatpush.msra.mxu0 0.0
      %2668 = vmatpush.msra.mxu0 0.0
      %2669 = vmatpush.msra.mxu0 0.0
      %2670 = vmatpush.msra.mxu0 0.0
      %2671 = vmatpush.msra.mxu0 0.0
      %2672 = vmatpush.msra.mxu0 0.0
      %2673 = vmatpush.msra.mxu0 0.0
      %2674 = vmatpush.msra.mxu0 0.0
      %2675 = vmatpush.msra.mxu0 0.0
      %v2676 = vand.u32 %v1892, 4294901760
      %2677 = vmatpush.msra.mxu0 %v2676
      %v2678 = vand.u32 %v1891, 4294901760
      %2679 = vmatpush.msra.mxu0 %v2678
      %v2680 = vand.u32 %v1894, 4294901760
      %v2681 = vsub.f32 %v1894, %v2680
      %v2682 = vand.u32 %v2681, 4294901760
      %2683 = vmatmul.f32.gmra.mxu0 %v2682
      %v2684 = vpop.f32.mrf.mxu0
      %v2685 = vadd.f32 %v2660, %v2684
      %2686 = vdwg.mxu0
      %2687 = vmatpush.msra.mxu0 0.0
      %2688 = vmatpush.msra.mxu0 0.0
      %2689 = vmatpush.msra.mxu0 0.0
      %2690 = vmatpush.msra.mxu0 0.0
      %2691 = vmatpush.msra.mxu0 0.0
      %2692 = vmatpush.msra.mxu0 0.0
      %2693 = vmatpush.msra.mxu0 0.0
      %2694 = vmatpush.msra.mxu0 0.0
      %2695 = vmatpush.msra.mxu0 0.0
      %2696 = vmatpush.msra.mxu0 0.0
      %2697 = vmatpush.msra.mxu0 0.0
      %2698 = vmatpush.msra.mxu0 0.0
      %2699 = vmatpush.msra.mxu0 0.0
      %2700 = vmatpush.msra.mxu0 0.0
      %v2701 = vand.u32 %v1892, 4294901760
      %v2702 = vsub.f32 %v1892, %v2701
      %v2703 = vand.u32 %v2702, 4294901760
      %2704 = vmatpush.msra.mxu0 %v2703
      %v2705 = vand.u32 %v1891, 4294901760
      %v2706 = vsub.f32 %v1891, %v2705
      %v2707 = vand.u32 %v2706, 4294901760
      %2708 = vmatpush.msra.mxu0 %v2707
      %v2709 = vand.u32 %v1894, 4294901760
      %2710 = vmatmul.f32.gmra.mxu0 %v2709
      %v2711 = vpop.f32.mrf.mxu0
      %v2712 = vadd.f32 %v2685, %v2711
      %2713 = vdwg.mxu0
      %2714 = vmatpush.msra.mxu0 0.0
      %2715 = vmatpush.msra.mxu0 0.0
      %2716 = vmatpush.msra.mxu0 0.0
      %2717 = vmatpush.msra.mxu0 0.0
      %2718 = vmatpush.msra.mxu0 0.0
      %2719 = vmatpush.msra.mxu0 0.0
      %2720 = vmatpush.msra.mxu0 0.0
      %2721 = vmatpush.msra.mxu0 0.0
      %2722 = vmatpush.msra.mxu0 0.0
      %2723 = vmatpush.msra.mxu0 0.0
      %2724 = vmatpush.msra.mxu0 0.0
      %2725 = vmatpush.msra.mxu0 0.0
      %2726 = vmatpush.msra.mxu0 0.0
      %2727 = vmatpush.msra.mxu0 0.0
      %v2728 = vand.u32 %v1892, 4294901760
      %2729 = vmatpush.msra.mxu0 %v2728
      %v2730 = vand.u32 %v1891, 4294901760
      %2731 = vmatpush.msra.mxu0 %v2730
      %v2732 = vand.u32 %v1894, 4294901760
      %2733 = vmatmul.f32.gmra.mxu0 %v2732
      %v2734 = vpop.f32.mrf.mxu0
      %v2735 = vadd.f32 %v2712, %v2734
      %2736 = vdwg.mxu0
      %vm2737 = vcmask 15360
      %2738 = vst.msk [vmem:[%s262] sm:$0xff] %vm2737, %v2735
      %v2739 = vpack.c.bf16 %v1583, %v1583
      %v2740 = vpack.c.bf16 %v1584, %v1584
      %v2741 = vpack.c.bf16 %v1585, %v1585
      %v2742 = vpack.c.bf16 %v1586, %v1586
      %v2743 = vpack.c.bf16 %v1587, %v1587
      %v2744 = vpack.c.bf16 %v1588, %v1588
      %v2745 = vpack.c.bf16 %v1589, %v1589
      %v2746 = vpack.c.bf16 %v1590, %v1590
      %v2747 = vpack.c.bf16 %v1591, %v1591
      %v2748 = vpack.c.bf16 %v1592, %v1592
      %v2749 = vpack.c.bf16 %v1593, %v1593
      %v2750 = vpack.c.bf16 %v1594, %v1594
      %v2751 = vpack.c.bf16 %v1595, %v1595
      %v2752 = vpack.c.bf16 %v1596, %v1596
      %v2753 = vpack.c.bf16 %v1597, %v1597
      %v2754 = vpack.c.bf16 %v1598, %v1598
      %v2755 = vpack.c.bf16 %v1599, %v1599
      %v2756 = vpack.c.bf16 %v1600, %v1600
      %v2757 = vpack.c.bf16 %v1601, %v1601
      %v2758 = vpack.c.bf16 %v1602, %v1602
      %v2759 = vpack.c.bf16 %v1603, %v1603
      %v2760 = vpack.c.bf16 %v1604, %v1604
      %v2761 = vpack.c.bf16 %v1605, %v1605
      %v2762 = vpack.c.bf16 %v1606, %v1606
      %v2763 = vpack.c.bf16 %v1607, %v1607
      %v2764 = vpack.c.bf16 %v1608, %v1608
      %v2765 = vpack.c.bf16 %v1609, %v1609
      %v2766 = vpack.c.bf16 %v1610, %v1610
      %v2767 = vpack.c.bf16 %v1611, %v1611
      %v2768 = vpack.c.bf16 %v1612, %v1612
      %v2769 = vpack.c.bf16 %v1613, %v1613
      %v2770 = vpack.c.bf16 %v1614, %v1614
      %v2771 = vpack.c.bf16 %v1615, %v1615
      %v2772 = vpack.c.bf16 %v1616, %v1616
      %vm2773 = vcmask 273408
      %2774 = vst.msk [vmem:[%s258] sm:$0xf] %vm2773, %v2739
      %2775 = vst.msk [vmem:[%s258 + $0x4] sm:$0xf] %vm2773, %v2740
      %2776 = vst.msk [vmem:[%s258 + $0x8] sm:$0xf] %vm2773, %v2741
      %2777 = vst.msk [vmem:[%s258 + $0xc] sm:$0xf] %vm2773, %v2742
      %2778 = vst.msk [vmem:[%s258 + $0x10] sm:$0xf] %vm2773, %v2743
      %2779 = vst.msk [vmem:[%s258 + $0x14] sm:$0xf] %vm2773, %v2744
      %2780 = vst.msk [vmem:[%s258 + $0x18] sm:$0xf] %vm2773, %v2745
      %2781 = vst.msk [vmem:[%s258 + $0x1c] sm:$0xf] %vm2773, %v2746
      %2782 = vst.msk [vmem:[%s258 + $0x20] sm:$0xf] %vm2773, %v2747
      %2783 = vst.msk [vmem:[%s258 + $0x24] sm:$0xf] %vm2773, %v2748
      %2784 = vst.msk [vmem:[%s258 + $0x28] sm:$0xf] %vm2773, %v2749
      %2785 = vst.msk [vmem:[%s258 + $0x2c] sm:$0xf] %vm2773, %v2750
      %2786 = vst.msk [vmem:[%s258 + $0x30] sm:$0xf] %vm2773, %v2751
      %2787 = vst.msk [vmem:[%s258 + $0x34] sm:$0xf] %vm2773, %v2752
      %2788 = vst.msk [vmem:[%s258 + $0x38] sm:$0xf] %vm2773, %v2753
      %2789 = vst.msk [vmem:[%s258 + $0x3c] sm:$0xf] %vm2773, %v2754
      %2790 = vst.msk [vmem:[%s258 + $0x40] sm:$0xf] %vm2773, %v2755
      %2791 = vst.msk [vmem:[%s258 + $0x44] sm:$0xf] %vm2773, %v2756
      %2792 = vst.msk [vmem:[%s258 + $0x48] sm:$0xf] %vm2773, %v2757
      %2793 = vst.msk [vmem:[%s258 + $0x4c] sm:$0xf] %vm2773, %v2758
      %2794 = vst.msk [vmem:[%s258 + $0x50] sm:$0xf] %vm2773, %v2759
      %2795 = vst.msk [vmem:[%s258 + $0x54] sm:$0xf] %vm2773, %v2760
      %2796 = vst.msk [vmem:[%s258 + $0x58] sm:$0xf] %vm2773, %v2761
      %2797 = vst.msk [vmem:[%s258 + $0x5c] sm:$0xf] %vm2773, %v2762
      %2798 = vst.msk [vmem:[%s258 + $0x60] sm:$0xf] %vm2773, %v2763
      %2799 = vst.msk [vmem:[%s258 + $0x64] sm:$0xf] %vm2773, %v2764
      %2800 = vst.msk [vmem:[%s258 + $0x68] sm:$0xf] %vm2773, %v2765
      %2801 = vst.msk [vmem:[%s258 + $0x6c] sm:$0xf] %vm2773, %v2766
      %2802 = vst.msk [vmem:[%s258 + $0x70] sm:$0xf] %vm2773, %v2767
      %2803 = vst.msk [vmem:[%s258 + $0x74] sm:$0xf] %vm2773, %v2768
      %2804 = vst.msk [vmem:[%s258 + $0x78] sm:$0xf] %vm2773, %v2769
      %2805 = vst.msk [vmem:[%s258 + $0x7c] sm:$0xf] %vm2773, %v2770
      %2806 = vst.msk [vmem:[%s258 + $0x80] sm:$0xf] %vm2773, %v2771
      %2807 = vst.msk [vmem:[%s258 + $0x84] sm:$0xf] %vm2773, %v2772
      %p2808 = scmp.lt.s32.totalorder %s18, 1
      %s2809 = scalar_select %p2808, %s18, 1
      %s2810 = smul.addr %s2809, 34
      %s2811 = smul.addr %s2810, 4
      %s2812 = scalar_lea.vmem %s5, %s2811
      %p2813 = scmp.lt.s32.totalorder %s18, 1
      %s2814 = scalar_select %p2813, %s18, 1
      %s2815 = smul.addr %s2814, 8
      %s2816 = scalar_lea.vmem %s6, %s2815
      // Predicated region
      $region41: #{up_forward.3} parent=39 // pred_check
        %p2817 = pneg %p146
      $region42: #{up_forward.3} parent=39 // pred_check_branch
        %2819 = sbr.rel (%p2817) target = $region44
      $region43: #{up_forward.3} parent=39 // pred_region
        _
      $region44: #{up_forward.3} parent=39 // pred_fallthru
        _
      // Predicated region
      $region45: #{up_forward.3} parent=39 // pred_check
        %p2820 = pneg %p172
      $region46: #{up_forward.3} parent=39 // pred_check_branch
        %2822 = sbr.rel (%p2820) target = $region48
      $region47: #{up_forward.3} parent=39 // pred_region
        _
      $region48: #{up_forward.3} parent=39 // pred_fallthru
        _
    $region40: #{up_forward.3} parent=5 // pred_fallthru
      _
    %p2823 = scmp.le.s32.totalorder 2, %s13
    // Predicated region
    $region49: #{up_forward.3} parent=5 // pred_check
      %p2824 = pneg %p2823
    $region50: #{up_forward.3} parent=5 // pred_check_branch
      %2826 = sbr.rel (%p2824) target = $region52
    $region51: #{up_forward.3} parent=5 // pred_region
      %s2827 = ssub.s32 %s13, 2
      // Predicated region
      $region53: #{up_forward.3} parent=51 // pred_check
        %p2828 = pneg %p152
      $region54: #{up_forward.3} parent=51 // pred_check_branch
        %2830 = sbr.rel (%p2828) target = $region56
      $region55: #{up_forward.3} parent=51 // pred_region
        %p2831 = scmp.lt.s32.totalorder %s19, 1
        %s2832 = scalar_select %p2831, %s19, 1
        %s2833 = smul.addr %s2832, 34
        %s2834 = smul.addr %s2833, 4
        %s2835 = scalar_lea.vmem %s5, %s2834
      $region56: #{up_forward.3} parent=51 // pred_fallthru
        _
      // Predicated region
      $region57: #{up_forward.3} parent=51 // pred_check
        %p2836 = pneg %p178
      $region58: #{up_forward.3} parent=51 // pred_check_branch
        %2838 = sbr.rel (%p2836) target = $region60
      $region59: #{up_forward.3} parent=51 // pred_region
        %p2839 = scmp.lt.s32.totalorder %s19, 1
        %s2840 = scalar_select %p2839, %s19, 1
        %s2841 = smul.addr %s2840, 8
        %s2842 = scalar_lea.vmem %s6, %s2841
      $region60: #{up_forward.3} parent=51 // pred_fallthru
        _
    $region52: #{up_forward.3} parent=5 // pred_fallthru
      _
  $region6: #{up_forward.3} parent=0 // loop_footer
    %s17 = sadd.s32 1, %s13
  $region7: #{up_forward.3} parent=0 // loop_footer_branch
    %12 = sbr.rel target = $region3
  $region8: #{up_forward.3} parent=0 // loop_exit
    _

// kernel: up_forward.5
$region0: #{up_forward.5}
  #allocation0 [shape = 'u32[]', space=smem, size = 0x4, offset = 0x4, fixed_abs, tag = 'smem constant byte address 0x4 - core index']
  #allocation1 [shape = 'u32[72,128]{1,0:T(1,128)}', space=vmem, size = 0x9000, scoped, tag = 'internal scratch']
  %s0 = inlined_call_operand.vmem [shape: bf16[2,256,34], index: 0, kind: input, shape index: {}]
  %s1 = inlined_call_operand.vmem [shape: f32[256,1], index: 1, kind: input, shape index: {}]
  %s2 = inlined_call_operand.vmem [shape: f32[256,1], index: 2, kind: input, shape index: {}]
  %s3 = inlined_call_operand.hbm [shape: f32[2,256,32], index: 3, kind: output, shape index: {}]
  %s4 = sld [smem:[#allocation0]]
  $region45: #{up_forward.5} parent=0
    _
  %s6 = ssub.s32 1, %s4
  %s7 = scalar_select 0, %s6, %s4
  $region1: #{up_forward.5} parent=0
    #allocation2 [shape = 'u8[262144]{0}', space=vmem, size = 0x40000, scoped, tag = 'output window, operand 0']
    #allocation3 [shape = 's32[2]{0}', space=sflag, size = 0x8, scoped, tag = 'scoped memory for up_forward.5']
    %8 = vsyncpa [#allocation3], 0
    %s9 = scalar_lea.sflag [#allocation3], 1
    %10 = vsyncpa %s9, 0
    loop: start=0, step=1, limit=4
    $region2: #{up_forward.5} parent=1 // loop_pre_header
      _
    $region3: #{up_forward.5} parent=1 // loop_header
      %s12 = sphi 0, %s16
      %p13 = scmp.ge.s32.totalorder %s12, 4
      %s22 = sphi 0, %s24
      %s25 = sphi 0, %s22
      %s26 = sphi 0, %s25
      %s42 = sphi 0, %s26
      %s46 = sphi 0, %s46
      %s48 = sphi 0, %s46
      %s49 = sphi 0, %s48
      %s63 = sphi 0, %s49
      %s67 = sphi 0, %s67
      %s69 = sphi 0, %s67
      %s70 = sphi 0, %s69
      %s84 = sphi 0, %s70
      %s90 = sphi 0, %s92
      %s93 = sphi 0, %s90
      %s94 = sphi 0, %s93
      %s110 = sphi 0, %s94
    $region4: #{up_forward.5} parent=1 // loop_header_branch
      %15 = sbr.rel (%p13) target = $region8
    $region5: #{up_forward.5} parent=1 // loop_body
      %s17 = ssub.s32 %s12, 1
      %s18 = ssub.s32 %s12, 2
      %s19 = sadd.s32 %s12, 1
      %s20 = ssub.s32 %s12, %s19
      %p21 = scmp.eq.s32.totalorder %s20, 0
      %s23 = sadd.s32 %s22, 1
      %s24 = scalar_select %p21, %s22, %s23
      %p27 = pneg %p21
      %p28 = scmp.eq.s32.totalorder %s12, 1
      %p29 = por %p27, %p28
      %p30 = scmp.ne.s32.totalorder %s22, %s25
      %p31 = scmp.eq.s32.totalorder %s12, 0
      %p32 = por %p30, %p31
      %p33 = scmp.ne.s32.totalorder %s22, %s25
      %p34 = scmp.eq.s32.totalorder %s17, 1
      %p35 = por %p33, %p34
      %p36 = scmp.ne.s32.totalorder %s25, %s26
      %p37 = scmp.eq.s32.totalorder %s17, 0
      %p38 = por %p36, %p37
      %p39 = scmp.ne.s32.totalorder %s25, %s26
      %p40 = scmp.eq.s32.totalorder %s18, 1
      %p41 = por %p39, %p40
      %p43 = scmp.ne.s32.totalorder %s26, %s42
      %p44 = scmp.eq.s32.totalorder %s18, 0
      %p45 = por %p43, %p44
      %s47 = sadd.s32 %s46, 1
      %p50 = scmp.eq.s32.totalorder %s12, 1
      %p51 = scmp.ne.s32.totalorder %s46, %s48
      %p52 = scmp.eq.s32.totalorder %s12, 0
      %p53 = por %p51, %p52
      %p54 = scmp.ne.s32.totalorder %s46, %s48
      %p55 = scmp.eq.s32.totalorder %s17, 1
      %p56 = por %p54, %p55
      %p57 = scmp.ne.s32.totalorder %s48, %s49
      %p58 = scmp.eq.s32.totalorder %s17, 0
      %p59 = por %p57, %p58
      %p60 = scmp.ne.s32.totalorder %s48, %s49
      %p61 = scmp.eq.s32.totalorder %s18, 1
      %p62 = por %p60, %p61
      %p64 = scmp.ne.s32.totalorder %s49, %s63
      %p65 = scmp.eq.s32.totalorder %s18, 0
      %p66 = por %p64, %p65
      %s68 = sadd.s32 %s67, 1
      %p71 = scmp.eq.s32.totalorder %s12, 1
      %p72 = scmp.ne.s32.totalorder %s67, %s69
      %p73 = scmp.eq.s32.totalorder %s12, 0
      %p74 = por %p72, %p73
      %p75 = scmp.ne.s32.totalorder %s67, %s69
      %p76 = scmp.eq.s32.totalorder %s17, 1
      %p77 = por %p75, %p76
      %p78 = scmp.ne.s32.totalorder %s69, %s70
      %p79 = scmp.eq.s32.totalorder %s17, 0
      %p80 = por %p78, %p79
      %p81 = scmp.ne.s32.totalorder %s69, %s70
      %p82 = scmp.eq.s32.totalorder %s18, 1
      %p83 = por %p81, %p82
      %p85 = scmp.ne.s32.totalorder %s70, %s84
      %p86 = scmp.eq.s32.totalorder %s18, 0
      %p87 = por %p85, %p86
      %s88 = ssub.s32 %s12, %s19
      %p89 = scmp.eq.s32.totalorder %s88, 0
      %s91 = sadd.s32 %s90, 1
      %s92 = scalar_select %p89, %s90, %s91
      %p95 = pneg %p89
      %p96 = scmp.eq.s32.totalorder %s12, 1
      %p97 = por %p95, %p96
      %p98 = scmp.ne.s32.totalorder %s90, %s93
      %p99 = scmp.eq.s32.totalorder %s12, 0
      %p100 = por %p98, %p99
      %p101 = scmp.ne.s32.totalorder %s90, %s93
      %p102 = scmp.eq.s32.totalorder %s17, 1
      %p103 = por %p101, %p102
      %p104 = scmp.ne.s32.totalorder %s93, %s94
      %p105 = scmp.eq.s32.totalorder %s17, 0
      %p106 = por %p104, %p105
      %p107 = scmp.ne.s32.totalorder %s93, %s94
      %p108 = scmp.eq.s32.totalorder %s18, 1
      %p109 = por %p107, %p108
      %p111 = scmp.ne.s32.totalorder %s94, %s110
      %p112 = scmp.eq.s32.totalorder %s18, 0
      %p113 = por %p111, %p112
      %p114 = scmp.le.s32.totalorder 1, %s12
      %p115 = scmp.lt.s32.totalorder %s12, 3
      %p116 = pnand %p114, %p115
      %p117 = pneg %p116
      // Predicated region
      $region9: #{up_forward.5} parent=5 // pred_check
        _
      $region10: #{up_forward.5} parent=5 // pred_check_branch
        %119 = sbr.rel (%p116) target = $region12
      $region11: #{up_forward.5} parent=5 // pred_region
        %s120 = ssub.s32 %s12, 1
        // Predicated region
        $region13: #{up_forward.5} parent=11 // pred_check
          %p121 = pneg %p59
        $region14: #{up_forward.5} parent=11 // pred_check_branch
          %123 = sbr.rel (%p121) target = $region16
        $region15: #{up_forward.5} parent=11 // pred_region
          _
        $region16: #{up_forward.5} parent=11 // pred_fallthru
          _
        // Predicated region
        $region17: #{up_forward.5} parent=11 // pred_check
          %p124 = pneg %p80
        $region18: #{up_forward.5} parent=11 // pred_check_branch
          %126 = sbr.rel (%p124) target = $region20
        $region19: #{up_forward.5} parent=11 // pred_region
          _
        $region20: #{up_forward.5} parent=11 // pred_fallthru
          _
      $region12: #{up_forward.5} parent=5 // pred_fallthru
        _
      %p127 = scmp.lt.s32.totalorder %s12, 2
      // Predicated region
      $region21: #{up_forward.5} parent=5 // pred_check
        %p128 = pneg %p127
      $region22: #{up_forward.5} parent=5 // pred_check_branch
        %130 = sbr.rel (%p128) target = $region24
      $region23: #{up_forward.5} parent=5 // pred_region
        // Predicated region
        $region25: #{up_forward.5} parent=23 // pred_check
          %p131 = pneg %p32
        $region26: #{up_forward.5} parent=23 // pred_check_branch
          %133 = sbr.rel (%p131) target = $region28
        $region27: #{up_forward.5} parent=23 // pred_region
          %p134 = scmp.lt.s32.totalorder %s12, 1
          %s135 = scalar_select %p134, %s12, 1
          %s136 = smul.addr %s135, 32
          %s137 = smul.addr %s136, 4
          %s138 = scalar_lea.vmem %s0, %s137
        $region28: #{up_forward.5} parent=23 // pred_fallthru
          _
      $region24: #{up_forward.5} parent=5 // pred_fallthru
        _
      %p139 = scmp.le.s32.totalorder 1, %s12
      %p140 = scmp.lt.s32.totalorder %s12, 3
      %p141 = pnand %p139, %p140
      %p142 = pneg %p141
      // Predicated region
      $region29: #{up_forward.5} parent=5 // pred_check
        _
      $region30: #{up_forward.5} parent=5 // pred_check_branch
        %144 = sbr.rel (%p141) target = $region32
      $region31: #{up_forward.5} parent=5 // pred_region
        %s145 = ssub.s32 %s12, 1
        %p146 = scmp.lt.s32.totalorder %s17, 1
        %s147 = scalar_select %p146, %s17, 1
        %s148 = smul.addr %s147, 32
        %s149 = smul.addr %s148, 4
        %s150 = scalar_lea.vmem %s0, %s149
        %p151 = pneg %p38
        %p152 = pneg %p35
        %p153 = pneg %p59
        %p154 = pneg %p56
        %p155 = pneg %p80
        %p156 = pneg %p77
        %p157 = pneg %p106
        %p158 = pneg %p103
        %s159 = sand.u32 %s93, 1
        %s160 = scalar_lea.sflag [#allocation3], %s159
        %s161 = sand.u32 %s93, 1
        %s162 = smul.addr %s161, 256
        %s163 = scalar_lea.vmem [#allocation2], %s162
        %p164 = scmp.lt.s32.totalorder %s17, 1
        %s165 = scalar_select %p164, %s17, 1
        %s166 = smul.addr %s165, 32
        %s167 = smul.addr %s166, 4
        %s168 = scalar_lea.vmem %s0, %s167
        %v169 = vld [vmem:[%s168] sm:$0xf]
        %v170 = vld [vmem:[%s168 + $0x4] sm:$0xf]
        %v171 = vld [vmem:[%s168 + $0x8] sm:$0xf]
        %v172 = vld [vmem:[%s168 + $0xc] sm:$0xf]
        %v173 = vld [vmem:[%s168 + $0x10] sm:$0xf]
        %v174 = vld [vmem:[%s168 + $0x14] sm:$0xf]
        %v175 = vld [vmem:[%s168 + $0x18] sm:$0xf]
        %v176 = vld [vmem:[%s168 + $0x1c] sm:$0xf]
        %v177 = vld [vmem:[%s168 + $0x20] sm:$0xf]
        %v178 = vld [vmem:[%s168 + $0x24] sm:$0xf]
        %v179 = vld [vmem:[%s168 + $0x28] sm:$0xf]
        %v180 = vld [vmem:[%s168 + $0x2c] sm:$0xf]
        %v181 = vld [vmem:[%s168 + $0x30] sm:$0xf]
        %v182 = vld [vmem:[%s168 + $0x34] sm:$0xf]
        %v183 = vld [vmem:[%s168 + $0x38] sm:$0xf]
        %v184 = vld [vmem:[%s168 + $0x3c] sm:$0xf]
        %v185 = vld [vmem:[%s168 + $0x40] sm:$0xf]
        %v186 = vld [vmem:[%s168 + $0x44] sm:$0xf]
        %v187 = vld [vmem:[%s168 + $0x48] sm:$0xf]
        %v188 = vld [vmem:[%s168 + $0x4c] sm:$0xf]
        %v189 = vld [vmem:[%s168 + $0x50] sm:$0xf]
        %v190 = vld [vmem:[%s168 + $0x54] sm:$0xf]
        %v191 = vld [vmem:[%s168 + $0x58] sm:$0xf]
        %v192 = vld [vmem:[%s168 + $0x5c] sm:$0xf]
        %v193 = vld [vmem:[%s168 + $0x60] sm:$0xf]
        %v194 = vld [vmem:[%s168 + $0x64] sm:$0xf]
        %v195 = vld [vmem:[%s168 + $0x68] sm:$0xf]
        %v196 = vld [vmem:[%s168 + $0x6c] sm:$0xf]
        %v197 = vld [vmem:[%s168 + $0x70] sm:$0xf]
        %v198 = vld [vmem:[%s168 + $0x74] sm:$0xf]
        %v199 = vld [vmem:[%s168 + $0x78] sm:$0xf]
        %v200 = vld [vmem:[%s168 + $0x7c] sm:$0xf]
        %v201 = vunpack.c.l.bf16 %v169
        %v202 = vunpack.c.l.bf16 %v170
        %v203 = vunpack.c.l.bf16 %v171
        %v204 = vunpack.c.l.bf16 %v172
        %v205 = vunpack.c.l.bf16 %v173
        %v206 = vunpack.c.l.bf16 %v174
        %v207 = vunpack.c.l.bf16 %v175
        %v208 = vunpack.c.l.bf16 %v176
        %v209 = vunpack.c.l.bf16 %v177
        %v210 = vunpack.c.l.bf16 %v178
        %v211 = vunpack.c.l.bf16 %v179
        %v212 = vunpack.c.l.bf16 %v180
        %v213 = vunpack.c.l.bf16 %v181
        %v214 = vunpack.c.l.bf16 %v182
        %v215 = vunpack.c.l.bf16 %v183
        %v216 = vunpack.c.l.bf16 %v184
        %v217 = vunpack.c.l.bf16 %v185
        %v218 = vunpack.c.l.bf16 %v186
        %v219 = vunpack.c.l.bf16 %v187
        %v220 = vunpack.c.l.bf16 %v188
        %v221 = vunpack.c.l.bf16 %v189
        %v222 = vunpack.c.l.bf16 %v190
        %v223 = vunpack.c.l.bf16 %v191
        %v224 = vunpack.c.l.bf16 %v192
        %v225 = vunpack.c.l.bf16 %v193
        %v226 = vunpack.c.l.bf16 %v194
        %v227 = vunpack.c.l.bf16 %v195
        %v228 = vunpack.c.l.bf16 %v196
        %v229 = vunpack.c.l.bf16 %v197
        %v230 = vunpack.c.l.bf16 %v198
        %v231 = vunpack.c.l.bf16 %v199
        %v232 = vunpack.c.l.bf16 %v200
        %v233 = vld [vmem:[%s1] sm:$0xff]
        %v234 = vld [vmem:[%s1 + $0x8] sm:$0xff]
        %v235 = vld [vmem:[%s1 + $0x10] sm:$0xff]
        %v236 = vld [vmem:[%s1 + $0x18] sm:$0xff]
        %v237 = vld [vmem:[%s1 + $0x20] sm:$0xff]
        %v238 = vld [vmem:[%s1 + $0x28] sm:$0xff]
        %v239 = vld [vmem:[%s1 + $0x30] sm:$0xff]
        %v240 = vld [vmem:[%s1 + $0x38] sm:$0xff]
        %v241 = vld [vmem:[%s1 + $0x40] sm:$0xff]
        %v242 = vld [vmem:[%s1 + $0x48] sm:$0xff]
        %v243 = vld [vmem:[%s1 + $0x50] sm:$0xff]
        %v244 = vld [vmem:[%s1 + $0x58] sm:$0xff]
        %v245 = vld [vmem:[%s1 + $0x60] sm:$0xff]
        %v246 = vld [vmem:[%s1 + $0x68] sm:$0xff]
        %v247 = vld [vmem:[%s1 + $0x70] sm:$0xff]
        %v248 = vld [vmem:[%s1 + $0x78] sm:$0xff]
        %v249 = vld [vmem:[%s1 + $0x80] sm:$0xff]
        %v250 = vld [vmem:[%s1 + $0x88] sm:$0xff]
        %v251 = vld [vmem:[%s1 + $0x90] sm:$0xff]
        %v252 = vld [vmem:[%s1 + $0x98] sm:$0xff]
        %v253 = vld [vmem:[%s1 + $0xa0] sm:$0xff]
        %v254 = vld [vmem:[%s1 + $0xa8] sm:$0xff]
        %v255 = vld [vmem:[%s1 + $0xb0] sm:$0xff]
        %v256 = vld [vmem:[%s1 + $0xb8] sm:$0xff]
        %v257 = vld [vmem:[%s1 + $0xc0] sm:$0xff]
        %v258 = vld [vmem:[%s1 + $0xc8] sm:$0xff]
        %v259 = vld [vmem:[%s1 + $0xd0] sm:$0xff]
        %v260 = vld [vmem:[%s1 + $0xd8] sm:$0xff]
        %v261 = vld [vmem:[%s1 + $0xe0] sm:$0xff]
        %v262 = vld [vmem:[%s1 + $0xe8] sm:$0xff]
        %v263 = vld [vmem:[%s1 + $0xf0] sm:$0xff]
        %v264 = vld [vmem:[%s1 + $0xf8] sm:$0xff]
        %266 = vset.pattern.permute.xlu0 0
        %267 = vperm.xlu0 %266, %v233
        %v268 = vpop.permute.xlu0 %267
        %271 = vset.pattern.permute.xlu0 0
        %272 = vperm.xlu0 %271, %v234
        %v273 = vpop.permute.xlu0 %272
        %276 = vset.pattern.permute.xlu0 0
        %277 = vperm.xlu0 %276, %v235
        %v278 = vpop.permute.xlu0 %277
        %281 = vset.pattern.permute.xlu0 0
        %282 = vperm.xlu0 %281, %v236
        %v283 = vpop.permute.xlu0 %282
        %286 = vset.pattern.permute.xlu0 0
        %287 = vperm.xlu0 %286, %v237
        %v288 = vpop.permute.xlu0 %287
        %291 = vset.pattern.permute.xlu0 0
        %292 = vperm.xlu0 %291, %v238
        %v293 = vpop.permute.xlu0 %292
        %296 = vset.pattern.permute.xlu0 0
        %297 = vperm.xlu0 %296, %v239
        %v298 = vpop.permute.xlu0 %297
        %301 = vset.pattern.permute.xlu0 0
        %302 = vperm.xlu0 %301, %v240
        %v303 = vpop.permute.xlu0 %302
        %306 = vset.pattern.permute.xlu0 0
        %307 = vperm.xlu0 %306, %v241
        %v308 = vpop.permute.xlu0 %307
        %311 = vset.pattern.permute.xlu0 0
        %312 = vperm.xlu0 %311, %v242
        %v313 = vpop.permute.xlu0 %312
        %316 = vset.pattern.permute.xlu0 0
        %317 = vperm.xlu0 %316, %v243
        %v318 = vpop.permute.xlu0 %317
        %321 = vset.pattern.permute.xlu0 0
        %322 = vperm.xlu0 %321, %v244
        %v323 = vpop.permute.xlu0 %322
        %326 = vset.pattern.permute.xlu0 0
        %327 = vperm.xlu0 %326, %v245
        %v328 = vpop.permute.xlu0 %327
        %331 = vset.pattern.permute.xlu0 0
        %332 = vperm.xlu0 %331, %v246
        %v333 = vpop.permute.xlu0 %332
        %336 = vset.pattern.permute.xlu0 0
        %337 = vperm.xlu0 %336, %v247
        %v338 = vpop.permute.xlu0 %337
        %341 = vset.pattern.permute.xlu0 0
        %342 = vperm.xlu0 %341, %v248
        %v343 = vpop.permute.xlu0 %342
        %346 = vset.pattern.permute.xlu0 0
        %347 = vperm.xlu0 %346, %v249
        %v348 = vpop.permute.xlu0 %347
        %351 = vset.pattern.permute.xlu0 0
        %352 = vperm.xlu0 %351, %v250
        %v353 = vpop.permute.xlu0 %352
        %356 = vset.pattern.permute.xlu0 0
        %357 = vperm.xlu0 %356, %v251
        %v358 = vpop.permute.xlu0 %357
        %361 = vset.pattern.permute.xlu0 0
        %362 = vperm.xlu0 %361, %v252
        %v363 = vpop.permute.xlu0 %362
        %366 = vset.pattern.permute.xlu0 0
        %367 = vperm.xlu0 %366, %v253
        %v368 = vpop.permute.xlu0 %367
        %371 = vset.pattern.permute.xlu0 0
        %372 = vperm.xlu0 %371, %v254
        %v373 = vpop.permute.xlu0 %372
        %376 = vset.pattern.permute.xlu0 0
        %377 = vperm.xlu0 %376, %v255
        %v378 = vpop.permute.xlu0 %377
        %381 = vset.pattern.permute.xlu0 0
        %382 = vperm.xlu0 %381, %v256
        %v383 = vpop.permute.xlu0 %382
        %386 = vset.pattern.permute.xlu0 0
        %387 = vperm.xlu0 %386, %v257
        %v388 = vpop.permute.xlu0 %387
        %391 = vset.pattern.permute.xlu0 0
        %392 = vperm.xlu0 %391, %v258
        %v393 = vpop.permute.xlu0 %392
        %396 = vset.pattern.permute.xlu0 0
        %397 = vperm.xlu0 %396, %v259
        %v398 = vpop.permute.xlu0 %397
        %401 = vset.pattern.permute.xlu0 0
        %402 = vperm.xlu0 %401, %v260
        %v403 = vpop.permute.xlu0 %402
        %406 = vset.pattern.permute.xlu0 0
        %407 = vperm.xlu0 %406, %v261
        %v408 = vpop.permute.xlu0 %407
        %411 = vset.pattern.permute.xlu0 0
        %412 = vperm.xlu0 %411, %v262
        %v413 = vpop.permute.xlu0 %412
        %416 = vset.pattern.permute.xlu0 0
        %417 = vperm.xlu0 %416, %v263
        %v418 = vpop.permute.xlu0 %417
        %421 = vset.pattern.permute.xlu0 0
        %422 = vperm.xlu0 %421, %v264
        %v423 = vpop.permute.xlu0 %422
        %v425 = vmul.f32 %v201, %v268
        %v426 = vmul.f32 %v202, %v273
        %v427 = vmul.f32 %v203, %v278
        %v428 = vmul.f32 %v204, %v283
        %v429 = vmul.f32 %v205, %v288
        %v430 = vmul.f32 %v206, %v293
        %v431 = vmul.f32 %v207, %v298
        %v432 = vmul.f32 %v208, %v303
        %v433 = vmul.f32 %v209, %v308
        %v434 = vmul.f32 %v210, %v313
        %v435 = vmul.f32 %v211, %v318
        %v436 = vmul.f32 %v212, %v323
        %v437 = vmul.f32 %v213, %v328
        %v438 = vmul.f32 %v214, %v333
        %v439 = vmul.f32 %v215, %v338
        %v440 = vmul.f32 %v216, %v343
        %v441 = vmul.f32 %v217, %v348
        %v442 = vmul.f32 %v218, %v353
        %v443 = vmul.f32 %v219, %v358
        %v444 = vmul.f32 %v220, %v363
        %v445 = vmul.f32 %v221, %v368
        %v446 = vmul.f32 %v222, %v373
        %v447 = vmul.f32 %v223, %v378
        %v448 = vmul.f32 %v224, %v383
        %v449 = vmul.f32 %v225, %v388
        %v450 = vmul.f32 %v226, %v393
        %v451 = vmul.f32 %v227, %v398
        %v452 = vmul.f32 %v228, %v403
        %v453 = vmul.f32 %v229, %v408
        %v454 = vmul.f32 %v230, %v413
        %v455 = vmul.f32 %v231, %v418
        %v456 = vmul.f32 %v232, %v423
        %v457 = vld [vmem:[%s2] sm:$0xff]
        %v458 = vld [vmem:[%s2 + $0x8] sm:$0xff]
        %v459 = vld [vmem:[%s2 + $0x10] sm:$0xff]
        %v460 = vld [vmem:[%s2 + $0x18] sm:$0xff]
        %v461 = vld [vmem:[%s2 + $0x20] sm:$0xff]
        %v462 = vld [vmem:[%s2 + $0x28] sm:$0xff]
        %v463 = vld [vmem:[%s2 + $0x30] sm:$0xff]
        %v464 = vld [vmem:[%s2 + $0x38] sm:$0xff]
        %v465 = vld [vmem:[%s2 + $0x40] sm:$0xff]
        %v466 = vld [vmem:[%s2 + $0x48] sm:$0xff]
        %v467 = vld [vmem:[%s2 + $0x50] sm:$0xff]
        %v468 = vld [vmem:[%s2 + $0x58] sm:$0xff]
        %v469 = vld [vmem:[%s2 + $0x60] sm:$0xff]
        %v470 = vld [vmem:[%s2 + $0x68] sm:$0xff]
        %v471 = vld [vmem:[%s2 + $0x70] sm:$0xff]
        %v472 = vld [vmem:[%s2 + $0x78] sm:$0xff]
        %v473 = vld [vmem:[%s2 + $0x80] sm:$0xff]
        %v474 = vld [vmem:[%s2 + $0x88] sm:$0xff]
        %v475 = vld [vmem:[%s2 + $0x90] sm:$0xff]
        %v476 = vld [vmem:[%s2 + $0x98] sm:$0xff]
        %v477 = vld [vmem:[%s2 + $0xa0] sm:$0xff]
        %v478 = vld [vmem:[%s2 + $0xa8] sm:$0xff]
        %v479 = vld [vmem:[%s2 + $0xb0] sm:$0xff]
        %v480 = vld [vmem:[%s2 + $0xb8] sm:$0xff]
        %v481 = vld [vmem:[%s2 + $0xc0] sm:$0xff]
        %v482 = vld [vmem:[%s2 + $0xc8] sm:$0xff]
        %v483 = vld [vmem:[%s2 + $0xd0] sm:$0xff]
        %v484 = vld [vmem:[%s2 + $0xd8] sm:$0xff]
        %v485 = vld [vmem:[%s2 + $0xe0] sm:$0xff]
        %v486 = vld [vmem:[%s2 + $0xe8] sm:$0xff]
        %v487 = vld [vmem:[%s2 + $0xf0] sm:$0xff]
        %v488 = vld [vmem:[%s2 + $0xf8] sm:$0xff]
        %490 = vset.pattern.permute.xlu0 0
        %491 = vperm.xlu0 %490, %v457
        %v492 = vpop.permute.xlu0 %491
        %495 = vset.pattern.permute.xlu0 0
        %496 = vperm.xlu0 %495, %v458
        %v497 = vpop.permute.xlu0 %496
        %500 = vset.pattern.permute.xlu0 0
        %501 = vperm.xlu0 %500, %v459
        %v502 = vpop.permute.xlu0 %501
        %505 = vset.pattern.permute.xlu0 0
        %506 = vperm.xlu0 %505, %v460
        %v507 = vpop.permute.xlu0 %506
        %510 = vset.pattern.permute.xlu0 0
        %511 = vperm.xlu0 %510, %v461
        %v512 = vpop.permute.xlu0 %511
        %515 = vset.pattern.permute.xlu0 0
        %516 = vperm.xlu0 %515, %v462
        %v517 = vpop.permute.xlu0 %516
        %520 = vset.pattern.permute.xlu0 0
        %521 = vperm.xlu0 %520, %v463
        %v522 = vpop.permute.xlu0 %521
        %525 = vset.pattern.permute.xlu0 0
        %526 = vperm.xlu0 %525, %v464
        %v527 = vpop.permute.xlu0 %526
        %530 = vset.pattern.permute.xlu0 0
        %531 = vperm.xlu0 %530, %v465
        %v532 = vpop.permute.xlu0 %531
        %535 = vset.pattern.permute.xlu0 0
        %536 = vperm.xlu0 %535, %v466
        %v537 = vpop.permute.xlu0 %536
        %540 = vset.pattern.permute.xlu0 0
        %541 = vperm.xlu0 %540, %v467
        %v542 = vpop.permute.xlu0 %541
        %545 = vset.pattern.permute.xlu0 0
        %546 = vperm.xlu0 %545, %v468
        %v547 = vpop.permute.xlu0 %546
        %550 = vset.pattern.permute.xlu0 0
        %551 = vperm.xlu0 %550, %v469
        %v552 = vpop.permute.xlu0 %551
        %555 = vset.pattern.permute.xlu0 0
        %556 = vperm.xlu0 %555, %v470
        %v557 = vpop.permute.xlu0 %556
        %560 = vset.pattern.permute.xlu0 0
        %561 = vperm.xlu0 %560, %v471
        %v562 = vpop.permute.xlu0 %561
        %565 = vset.pattern.permute.xlu0 0
        %566 = vperm.xlu0 %565, %v472
        %v567 = vpop.permute.xlu0 %566
        %570 = vset.pattern.permute.xlu0 0
        %571 = vperm.xlu0 %570, %v473
        %v572 = vpop.permute.xlu0 %571
        %575 = vset.pattern.permute.xlu0 0
        %576 = vperm.xlu0 %575, %v474
        %v577 = vpop.permute.xlu0 %576
        %580 = vset.pattern.permute.xlu0 0
        %581 = vperm.xlu0 %580, %v475
        %v582 = vpop.permute.xlu0 %581
        %585 = vset.pattern.permute.xlu0 0
        %586 = vperm.xlu0 %585, %v476
        %v587 = vpop.permute.xlu0 %586
        %590 = vset.pattern.permute.xlu0 0
        %591 = vperm.xlu0 %590, %v477
        %v592 = vpop.permute.xlu0 %591
        %595 = vset.pattern.permute.xlu0 0
        %596 = vperm.xlu0 %595, %v478
        %v597 = vpop.permute.xlu0 %596
        %600 = vset.pattern.permute.xlu0 0
        %601 = vperm.xlu0 %600, %v479
        %v602 = vpop.permute.xlu0 %601
        %605 = vset.pattern.permute.xlu0 0
        %606 = vperm.xlu0 %605, %v480
        %v607 = vpop.permute.xlu0 %606
        %610 = vset.pattern.permute.xlu0 0
        %611 = vperm.xlu0 %610, %v481
        %v612 = vpop.permute.xlu0 %611
        %615 = vset.pattern.permute.xlu0 0
        %616 = vperm.xlu0 %615, %v482
        %v617 = vpop.permute.xlu0 %616
        %620 = vset.pattern.permute.xlu0 0
        %621 = vperm.xlu0 %620, %v483
        %v622 = vpop.permute.xlu0 %621
        %625 = vset.pattern.permute.xlu0 0
        %626 = vperm.xlu0 %625, %v484
        %v627 = vpop.permute.xlu0 %626
        %630 = vset.pattern.permute.xlu0 0
        %631 = vperm.xlu0 %630, %v485
        %v632 = vpop.permute.xlu0 %631
        %635 = vset.pattern.permute.xlu0 0
        %636 = vperm.xlu0 %635, %v486
        %v637 = vpop.permute.xlu0 %636
        %640 = vset.pattern.permute.xlu0 0
        %641 = vperm.xlu0 %640, %v487
        %v642 = vpop.permute.xlu0 %641
        %645 = vset.pattern.permute.xlu0 0
        %646 = vperm.xlu0 %645, %v488
        %v647 = vpop.permute.xlu0 %646
        %v649 = vadd.f32 %v425, %v492
        %v650 = vadd.f32 %v426, %v497
        %v651 = vadd.f32 %v427, %v502
        %v652 = vadd.f32 %v428, %v507
        %v653 = vadd.f32 %v429, %v512
        %v654 = vadd.f32 %v430, %v517
        %v655 = vadd.f32 %v431, %v522
        %v656 = vadd.f32 %v432, %v527
        %v657 = vadd.f32 %v433, %v532
        %v658 = vadd.f32 %v434, %v537
        %v659 = vadd.f32 %v435, %v542
        %v660 = vadd.f32 %v436, %v547
        %v661 = vadd.f32 %v437, %v552
        %v662 = vadd.f32 %v438, %v557
        %v663 = vadd.f32 %v439, %v562
        %v664 = vadd.f32 %v440, %v567
        %v665 = vadd.f32 %v441, %v572
        %v666 = vadd.f32 %v442, %v577
        %v667 = vadd.f32 %v443, %v582
        %v668 = vadd.f32 %v444, %v587
        %v669 = vadd.f32 %v445, %v592
        %v670 = vadd.f32 %v446, %v597
        %v671 = vadd.f32 %v447, %v602
        %v672 = vadd.f32 %v448, %v607
        %v673 = vadd.f32 %v449, %v612
        %v674 = vadd.f32 %v450, %v617
        %v675 = vadd.f32 %v451, %v622
        %v676 = vadd.f32 %v452, %v627
        %v677 = vadd.f32 %v453, %v632
        %v678 = vadd.f32 %v454, %v637
        %v679 = vadd.f32 %v455, %v642
        %v680 = vadd.f32 %v456, %v647
        %v681 = vmax.f32 %v649, 0.0
        %v682 = vmax.f32 %v650, 0.0
        %v683 = vmax.f32 %v651, 0.0
        %v684 = vmax.f32 %v652, 0.0
        %v685 = vmax.f32 %v653, 0.0
        %v686 = vmax.f32 %v654, 0.0
        %v687 = vmax.f32 %v655, 0.0
        %v688 = vmax.f32 %v656, 0.0
        %v689 = vmax.f32 %v657, 0.0
        %v690 = vmax.f32 %v658, 0.0
        %v691 = vmax.f32 %v659, 0.0
        %v692 = vmax.f32 %v660, 0.0
        %v693 = vmax.f32 %v661, 0.0
        %v694 = vmax.f32 %v662, 0.0
        %v695 = vmax.f32 %v663, 0.0
        %v696 = vmax.f32 %v664, 0.0
        %v697 = vmax.f32 %v665, 0.0
        %v698 = vmax.f32 %v666, 0.0
        %v699 = vmax.f32 %v667, 0.0
        %v700 = vmax.f32 %v668, 0.0
        %v701 = vmax.f32 %v669, 0.0
        %v702 = vmax.f32 %v670, 0.0
        %v703 = vmax.f32 %v671, 0.0
        %v704 = vmax.f32 %v672, 0.0
        %v705 = vmax.f32 %v673, 0.0
        %v706 = vmax.f32 %v674, 0.0
        %v707 = vmax.f32 %v675, 0.0
        %v708 = vmax.f32 %v676, 0.0
        %v709 = vmax.f32 %v677, 0.0
        %v710 = vmax.f32 %v678, 0.0
        %v711 = vmax.f32 %v679, 0.0
        %v712 = vmax.f32 %v680, 0.0
        %745 = vrot.lane.b32.xlu0 %v681, 127
        %v746 = vpop.permute.xlu0 %745
        %747 = vrot.lane.b32.xlu0 %v682, 127
        %v748 = vpop.permute.xlu0 %747
        %749 = vrot.lane.b32.xlu0 %v683, 127
        %v750 = vpop.permute.xlu0 %749
        %751 = vrot.lane.b32.xlu0 %v684, 127
        %v752 = vpop.permute.xlu0 %751
        %753 = vrot.lane.b32.xlu0 %v685, 127
        %v754 = vpop.permute.xlu0 %753
        %755 = vrot.lane.b32.xlu0 %v686, 127
        %v756 = vpop.permute.xlu0 %755
        %757 = vrot.lane.b32.xlu0 %v687, 127
        %v758 = vpop.permute.xlu0 %757
        %759 = vrot.lane.b32.xlu0 %v688, 127
        %v760 = vpop.permute.xlu0 %759
        %761 = vrot.lane.b32.xlu0 %v689, 127
        %v762 = vpop.permute.xlu0 %761
        %763 = vrot.lane.b32.xlu0 %v690, 127
        %v764 = vpop.permute.xlu0 %763
        %765 = vrot.lane.b32.xlu0 %v691, 127
        %v766 = vpop.permute.xlu0 %765
        %767 = vrot.lane.b32.xlu0 %v692, 127
        %v768 = vpop.permute.xlu0 %767
        %769 = vrot.lane.b32.xlu0 %v693, 127
        %v770 = vpop.permute.xlu0 %769
        %771 = vrot.lane.b32.xlu0 %v694, 127
        %v772 = vpop.permute.xlu0 %771
        %773 = vrot.lane.b32.xlu0 %v695, 127
        %v774 = vpop.permute.xlu0 %773
        %775 = vrot.lane.b32.xlu0 %v696, 127
        %v776 = vpop.permute.xlu0 %775
        %777 = vrot.lane.b32.xlu0 %v697, 127
        %v778 = vpop.permute.xlu0 %777
        %779 = vrot.lane.b32.xlu0 %v698, 127
        %v780 = vpop.permute.xlu0 %779
        %781 = vrot.lane.b32.xlu0 %v699, 127
        %v782 = vpop.permute.xlu0 %781
        %783 = vrot.lane.b32.xlu0 %v700, 127
        %v784 = vpop.permute.xlu0 %783
        %785 = vrot.lane.b32.xlu0 %v701, 127
        %v786 = vpop.permute.xlu0 %785
        %787 = vrot.lane.b32.xlu0 %v702, 127
        %v788 = vpop.permute.xlu0 %787
        %789 = vrot.lane.b32.xlu0 %v703, 127
        %v790 = vpop.permute.xlu0 %789
        %791 = vrot.lane.b32.xlu0 %v704, 127
        %v792 = vpop.permute.xlu0 %791
        %793 = vrot.lane.b32.xlu0 %v705, 127
        %v794 = vpop.permute.xlu0 %793
        %795 = vrot.lane.b32.xlu0 %v706, 127
        %v796 = vpop.permute.xlu0 %795
        %797 = vrot.lane.b32.xlu0 %v707, 127
        %v798 = vpop.permute.xlu0 %797
        %799 = vrot.lane.b32.xlu0 %v708, 127
        %v800 = vpop.permute.xlu0 %799
        %801 = vrot.lane.b32.xlu0 %v709, 127
        %v802 = vpop.permute.xlu0 %801
        %803 = vrot.lane.b32.xlu0 %v710, 127
        %v804 = vpop.permute.xlu0 %803
        %805 = vrot.lane.b32.xlu0 %v711, 127
        %v806 = vpop.permute.xlu0 %805
        %807 = vrot.lane.b32.xlu0 %v712, 127
        %v808 = vpop.permute.xlu0 %807
        %vm841 = vcmask 261120
        %842 = vst.msk [vmem:[%s163] sm:$0xff] %vm841, %v746
        %843 = vst.msk [vmem:[%s163 + $0x8] sm:$0xff] %vm841, %v748
        %844 = vst.msk [vmem:[%s163 + $0x10] sm:$0xff] %vm841, %v750
        %845 = vst.msk [vmem:[%s163 + $0x18] sm:$0xff] %vm841, %v752
        %846 = vst.msk [vmem:[%s163 + $0x20] sm:$0xff] %vm841, %v754
        %847 = vst.msk [vmem:[%s163 + $0x28] sm:$0xff] %vm841, %v756
        %848 = vst.msk [vmem:[%s163 + $0x30] sm:$0xff] %vm841, %v758
        %849 = vst.msk [vmem:[%s163 + $0x38] sm:$0xff] %vm841, %v760
        %850 = vst.msk [vmem:[%s163 + $0x40] sm:$0xff] %vm841, %v762
        %851 = vst.msk [vmem:[%s163 + $0x48] sm:$0xff] %vm841, %v764
        %852 = vst.msk [vmem:[%s163 + $0x50] sm:$0xff] %vm841, %v766
        %853 = vst.msk [vmem:[%s163 + $0x58] sm:$0xff] %vm841, %v768
        %854 = vst.msk [vmem:[%s163 + $0x60] sm:$0xff] %vm841, %v770
        %855 = vst.msk [vmem:[%s163 + $0x68] sm:$0xff] %vm841, %v772
        %856 = vst.msk [vmem:[%s163 + $0x70] sm:$0xff] %vm841, %v774
        %857 = vst.msk [vmem:[%s163 + $0x78] sm:$0xff] %vm841, %v776
        %858 = vst.msk [vmem:[%s163 + $0x80] sm:$0xff] %vm841, %v778
        %859 = vst.msk [vmem:[%s163 + $0x88] sm:$0xff] %vm841, %v780
        %860 = vst.msk [vmem:[%s163 + $0x90] sm:$0xff] %vm841, %v782
        %861 = vst.msk [vmem:[%s163 + $0x98] sm:$0xff] %vm841, %v784
        %862 = vst.msk [vmem:[%s163 + $0xa0] sm:$0xff] %vm841, %v786
        %863 = vst.msk [vmem:[%s163 + $0xa8] sm:$0xff] %vm841, %v788
        %864 = vst.msk [vmem:[%s163 + $0xb0] sm:$0xff] %vm841, %v790
        %865 = vst.msk [vmem:[%s163 + $0xb8] sm:$0xff] %vm841, %v792
        %866 = vst.msk [vmem:[%s163 + $0xc0] sm:$0xff] %vm841, %v794
        %867 = vst.msk [vmem:[%s163 + $0xc8] sm:$0xff] %vm841, %v796
        %868 = vst.msk [vmem:[%s163 + $0xd0] sm:$0xff] %vm841, %v798
        %869 = vst.msk [vmem:[%s163 + $0xd8] sm:$0xff] %vm841, %v800
        %870 = vst.msk [vmem:[%s163 + $0xe0] sm:$0xff] %vm841, %v802
        %871 = vst.msk [vmem:[%s163 + $0xe8] sm:$0xff] %vm841, %v804
        %872 = vst.msk [vmem:[%s163 + $0xf0] sm:$0xff] %vm841, %v806
        %873 = vst.msk [vmem:[%s163 + $0xf8] sm:$0xff] %vm841, %v808
        %s874 = sand.u32 %s93, 1
        %s875 = scalar_lea.sflag [#allocation3], %s874
        %s876 = sand.u32 %s93, 1
        %s877 = smul.addr %s876, 256
        %s878 = scalar_lea.vmem [#allocation2], %s877
        // Predicated region
        $region33: #{up_forward.5} parent=31 // pred_check
          %p879 = pneg %p103
        $region34: #{up_forward.5} parent=31 // pred_check_branch
          %881 = sbr.rel (%p879) target = $region36
        $region35: #{up_forward.5} parent=31 // pred_region
          %883 = vsyncadd %s875, 0
          %s884 = smul.addr %s17, 32
          %s885 = smul.addr %s884, 8
          %s886 = scalar_lea.hbm %s3, %s885
          %s887 = sshll.u32 %s878, 4
          %s888 = int_to_ptr.vmem [resolvable:$true] %s887
          %s889 = sshll.u32 %s886, 4
          %s890 = int_to_ptr.hbm [resolvable:$true] %s889
          %895 = dma.vmem_to_hbm [thread:$0]  %s888, 4096, %s890, %s875, 128, 128, 8
        $region36: #{up_forward.5} parent=31 // pred_fallthru
          _
      $region32: #{up_forward.5} parent=5 // pred_fallthru
        _
      %p896 = scmp.le.s32.totalorder 2, %s12
      // Predicated region
      $region37: #{up_forward.5} parent=5 // pred_check
        %p897 = pneg %p896
      $region38: #{up_forward.5} parent=5 // pred_check_branch
        %899 = sbr.rel (%p897) target = $region40
      $region39: #{up_forward.5} parent=5 // pred_region
        %s900 = ssub.s32 %s12, 2
        // Predicated region
        $region41: #{up_forward.5} parent=39 // pred_check
          %p901 = pneg %p109
        $region42: #{up_forward.5} parent=39 // pred_check_branch
          %903 = sbr.rel (%p901) target = $region44
        $region43: #{up_forward.5} parent=39 // pred_region
          %s904 = sand.u32 %s94, 1
          %s905 = scalar_lea.sflag [#allocation3], %s904
          %s906 = sand.u32 %s94, 1
          %s907 = smul.addr %s906, 256
          %s908 = scalar_lea.vmem [#allocation2], %s907
          %910 = dma.done %s905, 4096
        $region44: #{up_forward.5} parent=39 // pred_fallthru
          _
      $region40: #{up_forward.5} parent=5 // pred_fallthru
        _
    $region6: #{up_forward.5} parent=1 // loop_footer
      %s16 = sadd.s32 1, %s12
    $region7: #{up_forward.5} parent=1 // loop_footer_branch
      %11 = sbr.rel target = $region3
    $region8: #{up_forward.5} parent=1 // loop_exit
      _
    %911 = vsyncpa [#allocation3], 1
    %s912 = scalar_lea.sflag [#allocation3], 1
    %913 = vsyncpa %s912, 1

// kernel: up_forward.4
$region0: #{up_forward.4}
  #allocation0 [shape = 'u32[]', space=smem, size = 0x4, offset = 0x4, fixed_abs, tag = 'smem constant byte address 0x4 - core index']
  #allocation1 [shape = 'u32[72,128]{1,0:T(1,128)}', space=vmem, size = 0x9000, scoped, tag = 'internal scratch']
  %s0 = inlined_call_operand.vmem [shape: bf16[2,272,34], index: 0, kind: input, shape index: {}]
  %s1 = inlined_call_operand.vmem [shape: f32[272,1], index: 1, kind: input, shape index: {}]
  %s2 = inlined_call_operand.vmem [shape: f32[272,1], index: 2, kind: input, shape index: {}]
  %s3 = inlined_call_operand.vmem [shape: bf16[3,256,272], index: 3, kind: input, shape index: {}]
  %s4 = inlined_call_operand.vmem [shape: f32[8,256], index: 4, kind: input, shape index: {}]
  %s5 = inlined_call_operand.vmem [shape: f32[1,34], index: 5, kind: input, shape index: {}]
  %s6 = inlined_call_operand.vmem [shape: bf16[2,256,34], index: 6, kind: output, shape index: {0}]
  %s7 = inlined_call_operand.vmem [shape: f32[2,8,2], index: 7, kind: output, shape index: {1}]
  %8 = xla_tuple %s6, %s7
  %s9 = sld [smem:[#allocation0]]
  $region65: #{up_forward.4} parent=0
    _
  %s11 = ssub.s32 1, %s9
  %s12 = scalar_select 0, %s11, %s9
  loop: start=0, step=1, limit=4
  $region2: #{up_forward.4} parent=0 // loop_pre_header
    _
  $region3: #{up_forward.4} parent=0 // loop_header
    %s14 = sphi 0, %s18
    %p15 = scmp.ge.s32.totalorder %s14, 4
    %s24 = sphi 0, %s26
    %s27 = sphi 0, %s24
    %s28 = sphi 0, %s27
    %s44 = sphi 0, %s28
    %s48 = sphi 0, %s48
    %s50 = sphi 0, %s48
    %s51 = sphi 0, %s50
    %s65 = sphi 0, %s51
    %s69 = sphi 0, %s69
    %s71 = sphi 0, %s69
    %s72 = sphi 0, %s71
    %s86 = sphi 0, %s72
    %s90 = sphi 0, %s90
    %s92 = sphi 0, %s90
    %s93 = sphi 0, %s92
    %s107 = sphi 0, %s93
    %s111 = sphi 0, %s111
    %s113 = sphi 0, %s111
    %s114 = sphi 0, %s113
    %s128 = sphi 0, %s114
    %s132 = sphi 0, %s132
    %s134 = sphi 0, %s132
    %s135 = sphi 0, %s134
    %s149 = sphi 0, %s135
    %s155 = sphi 0, %s157
    %s158 = sphi 0, %s155
    %s159 = sphi 0, %s158
    %s175 = sphi 0, %s159
    %s181 = sphi 0, %s183
    %s184 = sphi 0, %s181
    %s185 = sphi 0, %s184
    %s201 = sphi 0, %s185
  $region4: #{up_forward.4} parent=0 // loop_header_branch
    %17 = sbr.rel (%p15) target = $region8
  $region5: #{up_forward.4} parent=0 // loop_body
    %s19 = ssub.s32 %s14, 1
    %s20 = ssub.s32 %s14, 2
    %s21 = sadd.s32 %s14, 1
    %s22 = ssub.s32 %s14, %s21
    %p23 = scmp.eq.s32.totalorder %s22, 0
    %s25 = sadd.s32 %s24, 1
    %s26 = scalar_select %p23, %s24, %s25
    %p29 = pneg %p23
    %p30 = scmp.eq.s32.totalorder %s14, 1
    %p31 = por %p29, %p30
    %p32 = scmp.ne.s32.totalorder %s24, %s27
    %p33 = scmp.eq.s32.totalorder %s14, 0
    %p34 = por %p32, %p33
    %p35 = scmp.ne.s32.totalorder %s24, %s27
    %p36 = scmp.eq.s32.totalorder %s19, 1
    %p37 = por %p35, %p36
    %p38 = scmp.ne.s32.totalorder %s27, %s28
    %p39 = scmp.eq.s32.totalorder %s19, 0
    %p40 = por %p38, %p39
    %p41 = scmp.ne.s32.totalorder %s27, %s28
    %p42 = scmp.eq.s32.totalorder %s20, 1
    %p43 = por %p41, %p42
    %p45 = scmp.ne.s32.totalorder %s28, %s44
    %p46 = scmp.eq.s32.totalorder %s20, 0
    %p47 = por %p45, %p46
    %s49 = sadd.s32 %s48, 1
    %p52 = scmp.eq.s32.totalorder %s14, 1
    %p53 = scmp.ne.s32.totalorder %s48, %s50
    %p54 = scmp.eq.s32.totalorder %s14, 0
    %p55 = por %p53, %p54
    %p56 = scmp.ne.s32.totalorder %s48, %s50
    %p57 = scmp.eq.s32.totalorder %s19, 1
    %p58 = por %p56, %p57
    %p59 = scmp.ne.s32.totalorder %s50, %s51
    %p60 = scmp.eq.s32.totalorder %s19, 0
    %p61 = por %p59, %p60
    %p62 = scmp.ne.s32.totalorder %s50, %s51
    %p63 = scmp.eq.s32.totalorder %s20, 1
    %p64 = por %p62, %p63
    %p66 = scmp.ne.s32.totalorder %s51, %s65
    %p67 = scmp.eq.s32.totalorder %s20, 0
    %p68 = por %p66, %p67
    %s70 = sadd.s32 %s69, 1
    %p73 = scmp.eq.s32.totalorder %s14, 1
    %p74 = scmp.ne.s32.totalorder %s69, %s71
    %p75 = scmp.eq.s32.totalorder %s14, 0
    %p76 = por %p74, %p75
    %p77 = scmp.ne.s32.totalorder %s69, %s71
    %p78 = scmp.eq.s32.totalorder %s19, 1
    %p79 = por %p77, %p78
    %p80 = scmp.ne.s32.totalorder %s71, %s72
    %p81 = scmp.eq.s32.totalorder %s19, 0
    %p82 = por %p80, %p81
    %p83 = scmp.ne.s32.totalorder %s71, %s72
    %p84 = scmp.eq.s32.totalorder %s20, 1
    %p85 = por %p83, %p84
    %p87 = scmp.ne.s32.totalorder %s72, %s86
    %p88 = scmp.eq.s32.totalorder %s20, 0
    %p89 = por %p87, %p88
    %s91 = sadd.s32 %s90, 1
    %p94 = scmp.eq.s32.totalorder %s14, 1
    %p95 = scmp.ne.s32.totalorder %s90, %s92
    %p96 = scmp.eq.s32.totalorder %s14, 0
    %p97 = por %p95, %p96
    %p98 = scmp.ne.s32.totalorder %s90, %s92
    %p99 = scmp.eq.s32.totalorder %s19, 1
    %p100 = por %p98, %p99
    %p101 = scmp.ne.s32.totalorder %s92, %s93
    %p102 = scmp.eq.s32.totalorder %s19, 0
    %p103 = por %p101, %p102
    %p104 = scmp.ne.s32.totalorder %s92, %s93
    %p105 = scmp.eq.s32.totalorder %s20, 1
    %p106 = por %p104, %p105
    %p108 = scmp.ne.s32.totalorder %s93, %s107
    %p109 = scmp.eq.s32.totalorder %s20, 0
    %p110 = por %p108, %p109
    %s112 = sadd.s32 %s111, 1
    %p115 = scmp.eq.s32.totalorder %s14, 1
    %p116 = scmp.ne.s32.totalorder %s111, %s113
    %p117 = scmp.eq.s32.totalorder %s14, 0
    %p118 = por %p116, %p117
    %p119 = scmp.ne.s32.totalorder %s111, %s113
    %p120 = scmp.eq.s32.totalorder %s19, 1
    %p121 = por %p119, %p120
    %p122 = scmp.ne.s32.totalorder %s113, %s114
    %p123 = scmp.eq.s32.totalorder %s19, 0
    %p124 = por %p122, %p123
    %p125 = scmp.ne.s32.totalorder %s113, %s114
    %p126 = scmp.eq.s32.totalorder %s20, 1
    %p127 = por %p125, %p126
    %p129 = scmp.ne.s32.totalorder %s114, %s128
    %p130 = scmp.eq.s32.totalorder %s20, 0
    %p131 = por %p129, %p130
    %s133 = sadd.s32 %s132, 1
    %p136 = scmp.eq.s32.totalorder %s14, 1
    %p137 = scmp.ne.s32.totalorder %s132, %s134
    %p138 = scmp.eq.s32.totalorder %s14, 0
    %p139 = por %p137, %p138
    %p140 = scmp.ne.s32.totalorder %s132, %s134
    %p141 = scmp.eq.s32.totalorder %s19, 1
    %p142 = por %p140, %p141
    %p143 = scmp.ne.s32.totalorder %s134, %s135
    %p144 = scmp.eq.s32.totalorder %s19, 0
    %p145 = por %p143, %p144
    %p146 = scmp.ne.s32.totalorder %s134, %s135
    %p147 = scmp.eq.s32.totalorder %s20, 1
    %p148 = por %p146, %p147
    %p150 = scmp.ne.s32.totalorder %s135, %s149
    %p151 = scmp.eq.s32.totalorder %s20, 0
    %p152 = por %p150, %p151
    %s153 = ssub.s32 %s14, %s21
    %p154 = scmp.eq.s32.totalorder %s153, 0
    %s156 = sadd.s32 %s155, 1
    %s157 = scalar_select %p154, %s155, %s156
    %p160 = pneg %p154
    %p161 = scmp.eq.s32.totalorder %s14, 1
    %p162 = por %p160, %p161
    %p163 = scmp.ne.s32.totalorder %s155, %s158
    %p164 = scmp.eq.s32.totalorder %s14, 0
    %p165 = por %p163, %p164
    %p166 = scmp.ne.s32.totalorder %s155, %s158
    %p167 = scmp.eq.s32.totalorder %s19, 1
    %p168 = por %p166, %p167
    %p169 = scmp.ne.s32.totalorder %s158, %s159
    %p170 = scmp.eq.s32.totalorder %s19, 0
    %p171 = por %p169, %p170
    %p172 = scmp.ne.s32.totalorder %s158, %s159
    %p173 = scmp.eq.s32.totalorder %s20, 1
    %p174 = por %p172, %p173
    %p176 = scmp.ne.s32.totalorder %s159, %s175
    %p177 = scmp.eq.s32.totalorder %s20, 0
    %p178 = por %p176, %p177
    %s179 = ssub.s32 %s14, %s21
    %p180 = scmp.eq.s32.totalorder %s179, 0
    %s182 = sadd.s32 %s181, 1
    %s183 = scalar_select %p180, %s181, %s182
    %p186 = pneg %p180
    %p187 = scmp.eq.s32.totalorder %s14, 1
    %p188 = por %p186, %p187
    %p189 = scmp.ne.s32.totalorder %s181, %s184
    %p190 = scmp.eq.s32.totalorder %s14, 0
    %p191 = por %p189, %p190
    %p192 = scmp.ne.s32.totalorder %s181, %s184
    %p193 = scmp.eq.s32.totalorder %s19, 1
    %p194 = por %p192, %p193
    %p195 = scmp.ne.s32.totalorder %s184, %s185
    %p196 = scmp.eq.s32.totalorder %s19, 0
    %p197 = por %p195, %p196
    %p198 = scmp.ne.s32.totalorder %s184, %s185
    %p199 = scmp.eq.s32.totalorder %s20, 1
    %p200 = por %p198, %p199
    %p202 = scmp.ne.s32.totalorder %s185, %s201
    %p203 = scmp.eq.s32.totalorder %s20, 0
    %p204 = por %p202, %p203
    %p205 = scmp.le.s32.totalorder 1, %s14
    %p206 = scmp.lt.s32.totalorder %s14, 3
    %p207 = pnand %p205, %p206
    %p208 = pneg %p207
    // Predicated region
    $region9: #{up_forward.4} parent=5 // pred_check
      _
    $region10: #{up_forward.4} parent=5 // pred_check_branch
      %210 = sbr.rel (%p207) target = $region12
    $region11: #{up_forward.4} parent=5 // pred_region
      %s211 = ssub.s32 %s14, 1
      // Predicated region
      $region13: #{up_forward.4} parent=11 // pred_check
        %p212 = pneg %p61
      $region14: #{up_forward.4} parent=11 // pred_check_branch
        %214 = sbr.rel (%p212) target = $region16
      $region15: #{up_forward.4} parent=11 // pred_region
        _
      $region16: #{up_forward.4} parent=11 // pred_fallthru
        _
      // Predicated region
      $region17: #{up_forward.4} parent=11 // pred_check
        %p215 = pneg %p82
      $region18: #{up_forward.4} parent=11 // pred_check_branch
        %217 = sbr.rel (%p215) target = $region20
      $region19: #{up_forward.4} parent=11 // pred_region
        _
      $region20: #{up_forward.4} parent=11 // pred_fallthru
        _
      // Predicated region
      $region21: #{up_forward.4} parent=11 // pred_check
        %p218 = pneg %p103
      $region22: #{up_forward.4} parent=11 // pred_check_branch
        %220 = sbr.rel (%p218) target = $region24
      $region23: #{up_forward.4} parent=11 // pred_region
        _
      $region24: #{up_forward.4} parent=11 // pred_fallthru
        _
      // Predicated region
      $region25: #{up_forward.4} parent=11 // pred_check
        %p221 = pneg %p124
      $region26: #{up_forward.4} parent=11 // pred_check_branch
        %223 = sbr.rel (%p221) target = $region28
      $region27: #{up_forward.4} parent=11 // pred_region
        _
      $region28: #{up_forward.4} parent=11 // pred_fallthru
        _
      // Predicated region
      $region29: #{up_forward.4} parent=11 // pred_check
        %p224 = pneg %p145
      $region30: #{up_forward.4} parent=11 // pred_check_branch
        %226 = sbr.rel (%p224) target = $region32
      $region31: #{up_forward.4} parent=11 // pred_region
        _
      $region32: #{up_forward.4} parent=11 // pred_fallthru
        _
    $region12: #{up_forward.4} parent=5 // pred_fallthru
      _
    %p227 = scmp.lt.s32.totalorder %s14, 2
    // Predicated region
    $region33: #{up_forward.4} parent=5 // pred_check
      %p228 = pneg %p227
    $region34: #{up_forward.4} parent=5 // pred_check_branch
      %230 = sbr.rel (%p228) target = $region36
    $region35: #{up_forward.4} parent=5 // pred_region
      // Predicated region
      $region37: #{up_forward.4} parent=35 // pred_check
        %p231 = pneg %p34
      $region38: #{up_forward.4} parent=35 // pred_check_branch
        %233 = sbr.rel (%p231) target = $region40
      $region39: #{up_forward.4} parent=35 // pred_region
        %p234 = scmp.lt.s32.totalorder %s14, 1
        %s235 = scalar_select %p234, %s14, 1
        %s236 = smul.addr %s235, 34
        %s237 = smul.addr %s236, 4
        %s238 = scalar_lea.vmem %s0, %s237
      $region40: #{up_forward.4} parent=35 // pred_fallthru
        _
    $region36: #{up_forward.4} parent=5 // pred_fallthru
      _
    %p239 = scmp.le.s32.totalorder 1, %s14
    %p240 = scmp.lt.s32.totalorder %s14, 3
    %p241 = pnand %p239, %p240
    %p242 = pneg %p241
    // Predicated region
    $region41: #{up_forward.4} parent=5 // pred_check
      _
    $region42: #{up_forward.4} parent=5 // pred_check_branch
      %244 = sbr.rel (%p241) target = $region44
    $region43: #{up_forward.4} parent=5 // pred_region
      %s245 = ssub.s32 %s14, 1
      %p246 = scmp.lt.s32.totalorder %s19, 1
      %s247 = scalar_select %p246, %s19, 1
      %s248 = smul.addr %s247, 34
      %s249 = smul.addr %s248, 4
      %s250 = scalar_lea.vmem %s0, %s249
      %p251 = pneg %p40
      %p252 = pneg %p37
      %p253 = pneg %p61
      %p254 = pneg %p58
      %p255 = pneg %p82
      %p256 = pneg %p79
      %p257 = pneg %p103
      %p258 = pneg %p100
      %p259 = pneg %p124
      %p260 = pneg %p121
      %p261 = pneg %p145
      %p262 = pneg %p142
      %p263 = pneg %p171
      %p264 = pneg %p168
      %p265 = scmp.lt.s32.totalorder %s19, 1
      %s266 = scalar_select %p265, %s19, 1
      %s267 = smul.addr %s266, 32
      %s268 = smul.addr %s267, 4
      %s269 = scalar_lea.vmem %s6, %s268
      %p270 = pneg %p197
      %p271 = pneg %p194
      %p272 = scmp.lt.s32.totalorder %s19, 1
      %s273 = scalar_select %p272, %s19, 1
      %s274 = smul.addr %s273, 8
      %s275 = scalar_lea.vmem %s7, %s274
      %p276 = scmp.lt.s32.totalorder %s19, 1
      %s277 = scalar_select %p276, %s19, 1
      %s278 = smul.addr %s277, 34
      %s279 = smul.addr %s278, 4
      %s280 = scalar_lea.vmem %s0, %s279
      %p281 = scmp.lt.s32.totalorder %s19, 1
      %s282 = scalar_select %p281, %s19, 1
      %s283 = smul.addr %s282, 32
      %s284 = smul.addr %s283, 4
      %s285 = scalar_lea.vmem %s6, %s284
      %p286 = scmp.lt.s32.totalorder %s19, 1
      %s287 = scalar_select %p286, %s19, 1
      %s288 = smul.addr %s287, 8
      %s289 = scalar_lea.vmem %s7, %s288
      %v291 = vld [vmem:[%s280] sm:$0xf]
      %v292 = vld [vmem:[%s280 + $0x4] sm:$0xf]
      %v293 = vld [vmem:[%s280 + $0x8] sm:$0xf]
      %v294 = vld [vmem:[%s280 + $0xc] sm:$0xf]
      %v295 = vld [vmem:[%s280 + $0x10] sm:$0xf]
      %v296 = vld [vmem:[%s280 + $0x14] sm:$0xf]
      %v297 = vld [vmem:[%s280 + $0x18] sm:$0xf]
      %v298 = vld [vmem:[%s280 + $0x1c] sm:$0xf]
      %v299 = vld [vmem:[%s280 + $0x20] sm:$0xf]
      %v300 = vld [vmem:[%s280 + $0x24] sm:$0xf]
      %v301 = vld [vmem:[%s280 + $0x28] sm:$0xf]
      %v302 = vld [vmem:[%s280 + $0x2c] sm:$0xf]
      %v303 = vld [vmem:[%s280 + $0x30] sm:$0xf]
      %v304 = vld [vmem:[%s280 + $0x34] sm:$0xf]
      %v305 = vld [vmem:[%s280 + $0x38] sm:$0xf]
      %v306 = vld [vmem:[%s280 + $0x3c] sm:$0xf]
      %v307 = vld [vmem:[%s280 + $0x40] sm:$0xf]
      %v308 = vld [vmem:[%s280 + $0x44] sm:$0xf]
      %v309 = vld [vmem:[%s280 + $0x48] sm:$0xf]
      %v310 = vld [vmem:[%s280 + $0x4c] sm:$0xf]
      %v311 = vld [vmem:[%s280 + $0x50] sm:$0xf]
      %v312 = vld [vmem:[%s280 + $0x54] sm:$0xf]
      %v313 = vld [vmem:[%s280 + $0x58] sm:$0xf]
      %v314 = vld [vmem:[%s280 + $0x5c] sm:$0xf]
      %v315 = vld [vmem:[%s280 + $0x60] sm:$0xf]
      %v316 = vld [vmem:[%s280 + $0x64] sm:$0xf]
      %v317 = vld [vmem:[%s280 + $0x68] sm:$0xf]
      %v318 = vld [vmem:[%s280 + $0x6c] sm:$0xf]
      %v319 = vld [vmem:[%s280 + $0x70] sm:$0xf]
      %v320 = vld [vmem:[%s280 + $0x74] sm:$0xf]
      %v321 = vld [vmem:[%s280 + $0x78] sm:$0xf]
      %v322 = vld [vmem:[%s280 + $0x7c] sm:$0xf]
      %v323 = vld [vmem:[%s280 + $0x80] sm:$0xf]
      %v324 = vld [vmem:[%s280 + $0x84] sm:$0xf]
      %v325 = vunpack.c.l.bf16 %v291
      %v326 = vunpack.c.l.bf16 %v292
      %v327 = vunpack.c.l.bf16 %v293
      %v328 = vunpack.c.l.bf16 %v294
      %v329 = vunpack.c.l.bf16 %v295
      %v330 = vunpack.c.l.bf16 %v296
      %v331 = vunpack.c.l.bf16 %v297
      %v332 = vunpack.c.l.bf16 %v298
      %v333 = vunpack.c.l.bf16 %v299
      %v334 = vunpack.c.l.bf16 %v300
      %v335 = vunpack.c.l.bf16 %v301
      %v336 = vunpack.c.l.bf16 %v302
      %v337 = vunpack.c.l.bf16 %v303
      %v338 = vunpack.c.l.bf16 %v304
      %v339 = vunpack.c.l.bf16 %v305
      %v340 = vunpack.c.l.bf16 %v306
      %v341 = vunpack.c.l.bf16 %v307
      %v342 = vunpack.c.l.bf16 %v308
      %v343 = vunpack.c.l.bf16 %v309
      %v344 = vunpack.c.l.bf16 %v310
      %v345 = vunpack.c.l.bf16 %v311
      %v346 = vunpack.c.l.bf16 %v312
      %v347 = vunpack.c.l.bf16 %v313
      %v348 = vunpack.c.l.bf16 %v314
      %v349 = vunpack.c.l.bf16 %v315
      %v350 = vunpack.c.l.bf16 %v316
      %v351 = vunpack.c.l.bf16 %v317
      %v352 = vunpack.c.l.bf16 %v318
      %v353 = vunpack.c.l.bf16 %v319
      %v354 = vunpack.c.l.bf16 %v320
      %v355 = vunpack.c.l.bf16 %v321
      %v356 = vunpack.c.l.bf16 %v322
      %v357 = vunpack.c.l.bf16 %v323
      %v358 = vunpack.c.l.bf16 %v324
      %v359 = vld [vmem:[%s1] sm:$0xff]
      %v360 = vld [vmem:[%s1 + $0x8] sm:$0xff]
      %v361 = vld [vmem:[%s1 + $0x10] sm:$0xff]
      %v362 = vld [vmem:[%s1 + $0x18] sm:$0xff]
      %v363 = vld [vmem:[%s1 + $0x20] sm:$0xff]
      %v364 = vld [vmem:[%s1 + $0x28] sm:$0xff]
      %v365 = vld [vmem:[%s1 + $0x30] sm:$0xff]
      %v366 = vld [vmem:[%s1 + $0x38] sm:$0xff]
      %v367 = vld [vmem:[%s1 + $0x40] sm:$0xff]
      %v368 = vld [vmem:[%s1 + $0x48] sm:$0xff]
      %v369 = vld [vmem:[%s1 + $0x50] sm:$0xff]
      %v370 = vld [vmem:[%s1 + $0x58] sm:$0xff]
      %v371 = vld [vmem:[%s1 + $0x60] sm:$0xff]
      %v372 = vld [vmem:[%s1 + $0x68] sm:$0xff]
      %v373 = vld [vmem:[%s1 + $0x70] sm:$0xff]
      %v374 = vld [vmem:[%s1 + $0x78] sm:$0xff]
      %v375 = vld [vmem:[%s1 + $0x80] sm:$0xff]
      %v376 = vld [vmem:[%s1 + $0x88] sm:$0xff]
      %v377 = vld [vmem:[%s1 + $0x90] sm:$0xff]
      %v378 = vld [vmem:[%s1 + $0x98] sm:$0xff]
      %v379 = vld [vmem:[%s1 + $0xa0] sm:$0xff]
      %v380 = vld [vmem:[%s1 + $0xa8] sm:$0xff]
      %v381 = vld [vmem:[%s1 + $0xb0] sm:$0xff]
      %v382 = vld [vmem:[%s1 + $0xb8] sm:$0xff]
      %v383 = vld [vmem:[%s1 + $0xc0] sm:$0xff]
      %v384 = vld [vmem:[%s1 + $0xc8] sm:$0xff]
      %v385 = vld [vmem:[%s1 + $0xd0] sm:$0xff]
      %v386 = vld [vmem:[%s1 + $0xd8] sm:$0xff]
      %v387 = vld [vmem:[%s1 + $0xe0] sm:$0xff]
      %v388 = vld [vmem:[%s1 + $0xe8] sm:$0xff]
      %v389 = vld [vmem:[%s1 + $0xf0] sm:$0xff]
      %v390 = vld [vmem:[%s1 + $0xf8] sm:$0xff]
      %v391 = vld [vmem:[%s1 + $0x100] sm:$0xff]
      %v392 = vld [vmem:[%s1 + $0x108] sm:$0xff]
      %394 = vset.pattern.permute.xlu0 0
      %395 = vperm.xlu0 %394, %v359
      %v396 = vpop.permute.xlu0 %395
      %399 = vset.pattern.permute.xlu0 0
      %400 = vperm.xlu0 %399, %v360
      %v401 = vpop.permute.xlu0 %400
      %404 = vset.pattern.permute.xlu0 0
      %405 = vperm.xlu0 %404, %v361
      %v406 = vpop.permute.xlu0 %405
      %409 = vset.pattern.permute.xlu0 0
      %410 = vperm.xlu0 %409, %v362
      %v411 = vpop.permute.xlu0 %410
      %414 = vset.pattern.permute.xlu0 0
      %415 = vperm.xlu0 %414, %v363
      %v416 = vpop.permute.xlu0 %415
      %419 = vset.pattern.permute.xlu0 0
      %420 = vperm.xlu0 %419, %v364
      %v421 = vpop.permute.xlu0 %420
      %424 = vset.pattern.permute.xlu0 0
      %425 = vperm.xlu0 %424, %v365
      %v426 = vpop.permute.xlu0 %425
      %429 = vset.pattern.permute.xlu0 0
      %430 = vperm.xlu0 %429, %v366
      %v431 = vpop.permute.xlu0 %430
      %434 = vset.pattern.permute.xlu0 0
      %435 = vperm.xlu0 %434, %v367
      %v436 = vpop.permute.xlu0 %435
      %439 = vset.pattern.permute.xlu0 0
      %440 = vperm.xlu0 %439, %v368
      %v441 = vpop.permute.xlu0 %440
      %444 = vset.pattern.permute.xlu0 0
      %445 = vperm.xlu0 %444, %v369
      %v446 = vpop.permute.xlu0 %445
      %449 = vset.pattern.permute.xlu0 0
      %450 = vperm.xlu0 %449, %v370
      %v451 = vpop.permute.xlu0 %450
      %454 = vset.pattern.permute.xlu0 0
      %455 = vperm.xlu0 %454, %v371
      %v456 = vpop.permute.xlu0 %455
      %459 = vset.pattern.permute.xlu0 0
      %460 = vperm.xlu0 %459, %v372
      %v461 = vpop.permute.xlu0 %460
      %464 = vset.pattern.permute.xlu0 0
      %465 = vperm.xlu0 %464, %v373
      %v466 = vpop.permute.xlu0 %465
      %469 = vset.pattern.permute.xlu0 0
      %470 = vperm.xlu0 %469, %v374
      %v471 = vpop.permute.xlu0 %470
      %474 = vset.pattern.permute.xlu0 0
      %475 = vperm.xlu0 %474, %v375
      %v476 = vpop.permute.xlu0 %475
      %479 = vset.pattern.permute.xlu0 0
      %480 = vperm.xlu0 %479, %v376
      %v481 = vpop.permute.xlu0 %480
      %484 = vset.pattern.permute.xlu0 0
      %485 = vperm.xlu0 %484, %v377
      %v486 = vpop.permute.xlu0 %485
      %489 = vset.pattern.permute.xlu0 0
      %490 = vperm.xlu0 %489, %v378
      %v491 = vpop.permute.xlu0 %490
      %494 = vset.pattern.permute.xlu0 0
      %495 = vperm.xlu0 %494, %v379
      %v496 = vpop.permute.xlu0 %495
      %499 = vset.pattern.permute.xlu0 0
      %500 = vperm.xlu0 %499, %v380
      %v501 = vpop.permute.xlu0 %500
      %504 = vset.pattern.permute.xlu0 0
      %505 = vperm.xlu0 %504, %v381
      %v506 = vpop.permute.xlu0 %505
      %509 = vset.pattern.permute.xlu0 0
      %510 = vperm.xlu0 %509, %v382
      %v511 = vpop.permute.xlu0 %510
      %514 = vset.pattern.permute.xlu0 0
      %515 = vperm.xlu0 %514, %v383
      %v516 = vpop.permute.xlu0 %515
      %519 = vset.pattern.permute.xlu0 0
      %520 = vperm.xlu0 %519, %v384
      %v521 = vpop.permute.xlu0 %520
      %524 = vset.pattern.permute.xlu0 0
      %525 = vperm.xlu0 %524, %v385
      %v526 = vpop.permute.xlu0 %525
      %529 = vset.pattern.permute.xlu0 0
      %530 = vperm.xlu0 %529, %v386
      %v531 = vpop.permute.xlu0 %530
      %534 = vset.pattern.permute.xlu0 0
      %535 = vperm.xlu0 %534, %v387
      %v536 = vpop.permute.xlu0 %535
      %539 = vset.pattern.permute.xlu0 0
      %540 = vperm.xlu0 %539, %v388
      %v541 = vpop.permute.xlu0 %540
      %544 = vset.pattern.permute.xlu0 0
      %545 = vperm.xlu0 %544, %v389
      %v546 = vpop.permute.xlu0 %545
      %549 = vset.pattern.permute.xlu0 0
      %550 = vperm.xlu0 %549, %v390
      %v551 = vpop.permute.xlu0 %550
      %554 = vset.pattern.permute.xlu0 0
      %555 = vperm.xlu0 %554, %v391
      %v556 = vpop.permute.xlu0 %555
      %559 = vset.pattern.permute.xlu0 0
      %560 = vperm.xlu0 %559, %v392
      %v561 = vpop.permute.xlu0 %560
      %v563 = vmul.f32 %v325, %v396
      %v564 = vmul.f32 %v326, %v401
      %v565 = vmul.f32 %v327, %v406
      %v566 = vmul.f32 %v328, %v411
      %v567 = vmul.f32 %v329, %v416
      %v568 = vmul.f32 %v330, %v421
      %v569 = vmul.f32 %v331, %v426
      %v570 = vmul.f32 %v332, %v431
      %v571 = vmul.f32 %v333, %v436
      %v572 = vmul.f32 %v334, %v441
      %v573 = vmul.f32 %v335, %v446
      %v574 = vmul.f32 %v336, %v451
      %v575 = vmul.f32 %v337, %v456
      %v576 = vmul.f32 %v338, %v461
      %v577 = vmul.f32 %v339, %v466
      %v578 = vmul.f32 %v340, %v471
      %v579 = vmul.f32 %v341, %v476
      %v580 = vmul.f32 %v342, %v481
      %v581 = vmul.f32 %v343, %v486
      %v582 = vmul.f32 %v344, %v491
      %v583 = vmul.f32 %v345, %v496
      %v584 = vmul.f32 %v346, %v501
      %v585 = vmul.f32 %v347, %v506
      %v586 = vmul.f32 %v348, %v511
      %v587 = vmul.f32 %v349, %v516
      %v588 = vmul.f32 %v350, %v521
      %v589 = vmul.f32 %v351, %v526
      %v590 = vmul.f32 %v352, %v531
      %v591 = vmul.f32 %v353, %v536
      %v592 = vmul.f32 %v354, %v541
      %v593 = vmul.f32 %v355, %v546
      %v594 = vmul.f32 %v356, %v551
      %v595 = vmul.f32 %v357, %v556
      %v596 = vmul.f32 %v358, %v561
      %v597 = vld [vmem:[%s2] sm:$0xff]
      %v598 = vld [vmem:[%s2 + $0x8] sm:$0xff]
      %v599 = vld [vmem:[%s2 + $0x10] sm:$0xff]
      %v600 = vld [vmem:[%s2 + $0x18] sm:$0xff]
      %v601 = vld [vmem:[%s2 + $0x20] sm:$0xff]
      %v602 = vld [vmem:[%s2 + $0x28] sm:$0xff]
      %v603 = vld [vmem:[%s2 + $0x30] sm:$0xff]
      %v604 = vld [vmem:[%s2 + $0x38] sm:$0xff]
      %v605 = vld [vmem:[%s2 + $0x40] sm:$0xff]
      %v606 = vld [vmem:[%s2 + $0x48] sm:$0xff]
      %v607 = vld [vmem:[%s2 + $0x50] sm:$0xff]
      %v608 = vld [vmem:[%s2 + $0x58] sm:$0xff]
      %v609 = vld [vmem:[%s2 + $0x60] sm:$0xff]
      %v610 = vld [vmem:[%s2 + $0x68] sm:$0xff]
      %v611 = vld [vmem:[%s2 + $0x70] sm:$0xff]
      %v612 = vld [vmem:[%s2 + $0x78] sm:$0xff]
      %v613 = vld [vmem:[%s2 + $0x80] sm:$0xff]
      %v614 = vld [vmem:[%s2 + $0x88] sm:$0xff]
      %v615 = vld [vmem:[%s2 + $0x90] sm:$0xff]
      %v616 = vld [vmem:[%s2 + $0x98] sm:$0xff]
      %v617 = vld [vmem:[%s2 + $0xa0] sm:$0xff]
      %v618 = vld [vmem:[%s2 + $0xa8] sm:$0xff]
      %v619 = vld [vmem:[%s2 + $0xb0] sm:$0xff]
      %v620 = vld [vmem:[%s2 + $0xb8] sm:$0xff]
      %v621 = vld [vmem:[%s2 + $0xc0] sm:$0xff]
      %v622 = vld [vmem:[%s2 + $0xc8] sm:$0xff]
      %v623 = vld [vmem:[%s2 + $0xd0] sm:$0xff]
      %v624 = vld [vmem:[%s2 + $0xd8] sm:$0xff]
      %v625 = vld [vmem:[%s2 + $0xe0] sm:$0xff]
      %v626 = vld [vmem:[%s2 + $0xe8] sm:$0xff]
      %v627 = vld [vmem:[%s2 + $0xf0] sm:$0xff]
      %v628 = vld [vmem:[%s2 + $0xf8] sm:$0xff]
      %v629 = vld [vmem:[%s2 + $0x100] sm:$0xff]
      %v630 = vld [vmem:[%s2 + $0x108] sm:$0xff]
      %632 = vset.pattern.permute.xlu0 0
      %633 = vperm.xlu0 %632, %v597
      %v634 = vpop.permute.xlu0 %633
      %637 = vset.pattern.permute.xlu0 0
      %638 = vperm.xlu0 %637, %v598
      %v639 = vpop.permute.xlu0 %638
      %642 = vset.pattern.permute.xlu0 0
      %643 = vperm.xlu0 %642, %v599
      %v644 = vpop.permute.xlu0 %643
      %647 = vset.pattern.permute.xlu0 0
      %648 = vperm.xlu0 %647, %v600
      %v649 = vpop.permute.xlu0 %648
      %652 = vset.pattern.permute.xlu0 0
      %653 = vperm.xlu0 %652, %v601
      %v654 = vpop.permute.xlu0 %653
      %657 = vset.pattern.permute.xlu0 0
      %658 = vperm.xlu0 %657, %v602
      %v659 = vpop.permute.xlu0 %658
      %662 = vset.pattern.permute.xlu0 0
      %663 = vperm.xlu0 %662, %v603
      %v664 = vpop.permute.xlu0 %663
      %667 = vset.pattern.permute.xlu0 0
      %668 = vperm.xlu0 %667, %v604
      %v669 = vpop.permute.xlu0 %668
      %672 = vset.pattern.permute.xlu0 0
      %673 = vperm.xlu0 %672, %v605
      %v674 = vpop.permute.xlu0 %673
      %677 = vset.pattern.permute.xlu0 0
      %678 = vperm.xlu0 %677, %v606
      %v679 = vpop.permute.xlu0 %678
      %682 = vset.pattern.permute.xlu0 0
      %683 = vperm.xlu0 %682, %v607
      %v684 = vpop.permute.xlu0 %683
      %687 = vset.pattern.permute.xlu0 0
      %688 = vperm.xlu0 %687, %v608
      %v689 = vpop.permute.xlu0 %688
      %692 = vset.pattern.permute.xlu0 0
      %693 = vperm.xlu0 %692, %v609
      %v694 = vpop.permute.xlu0 %693
      %697 = vset.pattern.permute.xlu0 0
      %698 = vperm.xlu0 %697, %v610
      %v699 = vpop.permute.xlu0 %698
      %702 = vset.pattern.permute.xlu0 0
      %703 = vperm.xlu0 %702, %v611
      %v704 = vpop.permute.xlu0 %703
      %707 = vset.pattern.permute.xlu0 0
      %708 = vperm.xlu0 %707, %v612
      %v709 = vpop.permute.xlu0 %708
      %712 = vset.pattern.permute.xlu0 0
      %713 = vperm.xlu0 %712, %v613
      %v714 = vpop.permute.xlu0 %713
      %717 = vset.pattern.permute.xlu0 0
      %718 = vperm.xlu0 %717, %v614
      %v719 = vpop.permute.xlu0 %718
      %722 = vset.pattern.permute.xlu0 0
      %723 = vperm.xlu0 %722, %v615
      %v724 = vpop.permute.xlu0 %723
      %727 = vset.pattern.permute.xlu0 0
      %728 = vperm.xlu0 %727, %v616
      %v729 = vpop.permute.xlu0 %728
      %732 = vset.pattern.permute.xlu0 0
      %733 = vperm.xlu0 %732, %v617
      %v734 = vpop.permute.xlu0 %733
      %737 = vset.pattern.permute.xlu0 0
      %738 = vperm.xlu0 %737, %v618
      %v739 = vpop.permute.xlu0 %738
      %742 = vset.pattern.permute.xlu0 0
      %743 = vperm.xlu0 %742, %v619
      %v744 = vpop.permute.xlu0 %743
      %747 = vset.pattern.permute.xlu0 0
      %748 = vperm.xlu0 %747, %v620
      %v749 = vpop.permute.xlu0 %748
      %752 = vset.pattern.permute.xlu0 0
      %753 = vperm.xlu0 %752, %v621
      %v754 = vpop.permute.xlu0 %753
      %757 = vset.pattern.permute.xlu0 0
      %758 = vperm.xlu0 %757, %v622
      %v759 = vpop.permute.xlu0 %758
      %762 = vset.pattern.permute.xlu0 0
      %763 = vperm.xlu0 %762, %v623
      %v764 = vpop.permute.xlu0 %763
      %767 = vset.pattern.permute.xlu0 0
      %768 = vperm.xlu0 %767, %v624
      %v769 = vpop.permute.xlu0 %768
      %772 = vset.pattern.permute.xlu0 0
      %773 = vperm.xlu0 %772, %v625
      %v774 = vpop.permute.xlu0 %773
      %777 = vset.pattern.permute.xlu0 0
      %778 = vperm.xlu0 %777, %v626
      %v779 = vpop.permute.xlu0 %778
      %782 = vset.pattern.permute.xlu0 0
      %783 = vperm.xlu0 %782, %v627
      %v784 = vpop.permute.xlu0 %783
      %787 = vset.pattern.permute.xlu0 0
      %788 = vperm.xlu0 %787, %v628
      %v789 = vpop.permute.xlu0 %788
      %792 = vset.pattern.permute.xlu0 0
      %793 = vperm.xlu0 %792, %v629
      %v794 = vpop.permute.xlu0 %793
      %797 = vset.pattern.permute.xlu0 0
      %798 = vperm.xlu0 %797, %v630
      %v799 = vpop.permute.xlu0 %798
      %v801 = vadd.f32 %v563, %v634
      %v802 = vadd.f32 %v564, %v639
      %v803 = vadd.f32 %v565, %v644
      %v804 = vadd.f32 %v566, %v649
      %v805 = vadd.f32 %v567, %v654
      %v806 = vadd.f32 %v568, %v659
      %v807 = vadd.f32 %v569, %v664
      %v808 = vadd.f32 %v570, %v669
      %v809 = vadd.f32 %v571, %v674
      %v810 = vadd.f32 %v572, %v679
      %v811 = vadd.f32 %v573, %v684
      %v812 = vadd.f32 %v574, %v689
      %v813 = vadd.f32 %v575, %v694
      %v814 = vadd.f32 %v576, %v699
      %v815 = vadd.f32 %v577, %v704
      %v816 = vadd.f32 %v578, %v709
      %v817 = vadd.f32 %v579, %v714
      %v818 = vadd.f32 %v580, %v719
      %v819 = vadd.f32 %v581, %v724
      %v820 = vadd.f32 %v582, %v729
      %v821 = vadd.f32 %v583, %v734
      %v822 = vadd.f32 %v584, %v739
      %v823 = vadd.f32 %v585, %v744
      %v824 = vadd.f32 %v586, %v749
      %v825 = vadd.f32 %v587, %v754
      %v826 = vadd.f32 %v588, %v759
      %v827 = vadd.f32 %v589, %v764
      %v828 = vadd.f32 %v590, %v769
      %v829 = vadd.f32 %v591, %v774
      %v830 = vadd.f32 %v592, %v779
      %v831 = vadd.f32 %v593, %v784
      %v832 = vadd.f32 %v594, %v789
      %v833 = vadd.f32 %v595, %v794
      %v834 = vadd.f32 %v596, %v799
      %v835 = vmax.f32 %v801, 0.0
      %v836 = vmax.f32 %v802, 0.0
      %v837 = vmax.f32 %v803, 0.0
      %v838 = vmax.f32 %v804, 0.0
      %v839 = vmax.f32 %v805, 0.0
      %v840 = vmax.f32 %v806, 0.0
      %v841 = vmax.f32 %v807, 0.0
      %v842 = vmax.f32 %v808, 0.0
      %v843 = vmax.f32 %v809, 0.0
      %v844 = vmax.f32 %v810, 0.0
      %v845 = vmax.f32 %v811, 0.0
      %v846 = vmax.f32 %v812, 0.0
      %v847 = vmax.f32 %v813, 0.0
      %v848 = vmax.f32 %v814, 0.0
      %v849 = vmax.f32 %v815, 0.0
      %v850 = vmax.f32 %v816, 0.0
      %v851 = vmax.f32 %v817, 0.0
      %v852 = vmax.f32 %v818, 0.0
      %v853 = vmax.f32 %v819, 0.0
      %v854 = vmax.f32 %v820, 0.0
      %v855 = vmax.f32 %v821, 0.0
      %v856 = vmax.f32 %v822, 0.0
      %v857 = vmax.f32 %v823, 0.0
      %v858 = vmax.f32 %v824, 0.0
      %v859 = vmax.f32 %v825, 0.0
      %v860 = vmax.f32 %v826, 0.0
      %v861 = vmax.f32 %v827, 0.0
      %v862 = vmax.f32 %v828, 0.0
      %v863 = vmax.f32 %v829, 0.0
      %v864 = vmax.f32 %v830, 0.0
      %v865 = vmax.f32 %v831, 0.0
      %v866 = vmax.f32 %v832, 0.0
      %v867 = vmax.f32 %v833, 0.0
      %v868 = vmax.f32 %v834, 0.0
      %v869 = vld [vmem:[%s5] sm:$0x1]
      %v871 = vperm.slane %v869, 0
      %v873 = vmul.f32 %v835, %v871
      %v874 = vmul.f32 %v836, %v871
      %v875 = vmul.f32 %v837, %v871
      %v876 = vmul.f32 %v838, %v871
      %v877 = vmul.f32 %v839, %v871
      %v878 = vmul.f32 %v840, %v871
      %v879 = vmul.f32 %v841, %v871
      %v880 = vmul.f32 %v842, %v871
      %v881 = vmul.f32 %v843, %v871
      %v882 = vmul.f32 %v844, %v871
      %v883 = vmul.f32 %v845, %v871
      %v884 = vmul.f32 %v846, %v871
      %v885 = vmul.f32 %v847, %v871
      %v886 = vmul.f32 %v848, %v871
      %v887 = vmul.f32 %v849, %v871
      %v888 = vmul.f32 %v850, %v871
      %v889 = vmul.f32 %v851, %v871
      %v890 = vmul.f32 %v852, %v871
      %v891 = vmul.f32 %v853, %v871
      %v892 = vmul.f32 %v854, %v871
      %v893 = vmul.f32 %v855, %v871
      %v894 = vmul.f32 %v856, %v871
      %v895 = vmul.f32 %v857, %v871
      %v896 = vmul.f32 %v858, %v871
      %v897 = vmul.f32 %v859, %v871
      %v898 = vmul.f32 %v860, %v871
      %v899 = vmul.f32 %v861, %v871
      %v900 = vmul.f32 %v862, %v871
      %v901 = vmul.f32 %v863, %v871
      %v902 = vmul.f32 %v864, %v871
      %v903 = vmul.f32 %v865, %v871
      %v904 = vmul.f32 %v866, %v871
      %v905 = vmul.f32 %v867, %v871
      %v906 = vmul.f32 %v868, %v871
      %v907 = vpack.c.bf16 %v873, %v873
      %v908 = vpack.c.bf16 %v874, %v874
      %v909 = vpack.c.bf16 %v875, %v875
      %v910 = vpack.c.bf16 %v876, %v876
      %v911 = vpack.c.bf16 %v877, %v877
      %v912 = vpack.c.bf16 %v878, %v878
      %v913 = vpack.c.bf16 %v879, %v879
      %v914 = vpack.c.bf16 %v880, %v880
      %v915 = vpack.c.bf16 %v881, %v881
      %v916 = vpack.c.bf16 %v882, %v882
      %v917 = vpack.c.bf16 %v883, %v883
      %v918 = vpack.c.bf16 %v884, %v884
      %v919 = vpack.c.bf16 %v885, %v885
      %v920 = vpack.c.bf16 %v886, %v886
      %v921 = vpack.c.bf16 %v887, %v887
      %v922 = vpack.c.bf16 %v888, %v888
      %v923 = vpack.c.bf16 %v889, %v889
      %v924 = vpack.c.bf16 %v890, %v890
      %v925 = vpack.c.bf16 %v891, %v891
      %v926 = vpack.c.bf16 %v892, %v892
      %v927 = vpack.c.bf16 %v893, %v893
      %v928 = vpack.c.bf16 %v894, %v894
      %v929 = vpack.c.bf16 %v895, %v895
      %v930 = vpack.c.bf16 %v896, %v896
      %v931 = vpack.c.bf16 %v897, %v897
      %v932 = vpack.c.bf16 %v898, %v898
      %v933 = vpack.c.bf16 %v899, %v899
      %v934 = vpack.c.bf16 %v900, %v900
      %v935 = vpack.c.bf16 %v901, %v901
      %v936 = vpack.c.bf16 %v902, %v902
      %v937 = vpack.c.bf16 %v903, %v903
      %v938 = vpack.c.bf16 %v904, %v904
      %v939 = vpack.c.bf16 %v905, %v905
      %v940 = vpack.c.bf16 %v906, %v906
      %v941 = vld [vmem:[%s3] sm:$0xff]
      %v942 = vld [vmem:[%s3 + $0x8] sm:$0xf]
      %v943 = vld [vmem:[%s3 + $0xc] sm:$0xff]
      %v944 = vld [vmem:[%s3 + $0x14] sm:$0xf]
      %v945 = vld [vmem:[%s3 + $0x18] sm:$0xff]
      %v946 = vld [vmem:[%s3 + $0x20] sm:$0xf]
      %v947 = vld [vmem:[%s3 + $0x24] sm:$0xff]
      %v948 = vld [vmem:[%s3 + $0x2c] sm:$0xf]
      %v949 = vld [vmem:[%s3 + $0x30] sm:$0xff]
      %v950 = vld [vmem:[%s3 + $0x38] sm:$0xf]
      %v951 = vld [vmem:[%s3 + $0x3c] sm:$0xff]
      %v952 = vld [vmem:[%s3 + $0x44] sm:$0xf]
      %v953 = vld [vmem:[%s3 + $0x48] sm:$0xff]
      %v954 = vld [vmem:[%s3 + $0x50] sm:$0xf]
      %v955 = vld [vmem:[%s3 + $0x54] sm:$0xff]
      %v956 = vld [vmem:[%s3 + $0x5c] sm:$0xf]
      %v957 = vld [vmem:[%s3 + $0x60] sm:$0xff]
      %v958 = vld [vmem:[%s3 + $0x68] sm:$0xf]
      %v959 = vld [vmem:[%s3 + $0x6c] sm:$0xff]
      %v960 = vld [vmem:[%s3 + $0x74] sm:$0xf]
      %v961 = vld [vmem:[%s3 + $0x78] sm:$0xff]
      %v962 = vld [vmem:[%s3 + $0x80] sm:$0xf]
      %v963 = vld [vmem:[%s3 + $0x84] sm:$0xff]
      %v964 = vld [vmem:[%s3 + $0x8c] sm:$0xf]
      %v965 = vld [vmem:[%s3 + $0x90] sm:$0xff]
      %v966 = vld [vmem:[%s3 + $0x98] sm:$0xf]
      %v967 = vld [vmem:[%s3 + $0x9c] sm:$0xff]
      %v968 = vld [vmem:[%s3 + $0xa4] sm:$0xf]
      %v969 = vld [vmem:[%s3 + $0xa8] sm:$0xff]
      %v970 = vld [vmem:[%s3 + $0xb0] sm:$0xf]
      %v971 = vld [vmem:[%s3 + $0xb4] sm:$0xff]
      %v972 = vld [vmem:[%s3 + $0xbc] sm:$0xf]
      %v973 = vld [vmem:[%s3 + $0xc0] sm:$0xff]
      %v974 = vld [vmem:[%s3 + $0xc8] sm:$0xf]
      %v975 = vld [vmem:[%s3 + $0xcc] sm:$0xff]
      %v976 = vld [vmem:[%s3 + $0xd4] sm:$0xf]
      %v977 = vld [vmem:[%s3 + $0xd8] sm:$0xff]
      %v978 = vld [vmem:[%s3 + $0xe0] sm:$0xf]
      %v979 = vld [vmem:[%s3 + $0xe4] sm:$0xff]
      %v980 = vld [vmem:[%s3 + $0xec] sm:$0xf]
      %v981 = vld [vmem:[%s3 + $0xf0] sm:$0xff]
      %v982 = vld [vmem:[%s3 + $0xf8] sm:$0xf]
      %v983 = vld [vmem:[%s3 + $0xfc] sm:$0xff]
      %v984 = vld [vmem:[%s3 + $0x104] sm:$0xf]
      %v985 = vld [vmem:[%s3 + $0x108] sm:$0xff]
      %v986 = vld [vmem:[%s3 + $0x110] sm:$0xf]
      %v987 = vld [vmem:[%s3 + $0x114] sm:$0xff]
      %v988 = vld [vmem:[%s3 + $0x11c] sm:$0xf]
      %v989 = vld [vmem:[%s3 + $0x120] sm:$0xff]
      %v990 = vld [vmem:[%s3 + $0x128] sm:$0xf]
      %v991 = vld [vmem:[%s3 + $0x12c] sm:$0xff]
      %v992 = vld [vmem:[%s3 + $0x134] sm:$0xf]
      %v993 = vld [vmem:[%s3 + $0x138] sm:$0xff]
      %v994 = vld [vmem:[%s3 + $0x140] sm:$0xf]
      %v995 = vld [vmem:[%s3 + $0x144] sm:$0xff]
      %v996 = vld [vmem:[%s3 + $0x14c] sm:$0xf]
      %v997 = vld [vmem:[%s3 + $0x150] sm:$0xff]
      %v998 = vld [vmem:[%s3 + $0x158] sm:$0xf]
      %v999 = vld [vmem:[%s3 + $0x15c] sm:$0xff]
      %v1000 = vld [vmem:[%s3 + $0x164] sm:$0xf]
      %v1001 = vld [vmem:[%s3 + $0x168] sm:$0xff]
      %v1002 = vld [vmem:[%s3 + $0x170] sm:$0xf]
      %v1003 = vld [vmem:[%s3 + $0x174] sm:$0xff]
      %v1004 = vld [vmem:[%s3 + $0x17c] sm:$0xf]
      %v1039 = vunpack.c.l.b16 %v907
      %v1040 = vunpack.c.l.b16 %v908
      %v1041 = vunpack.c.l.b16 %v909
      %v1042 = vunpack.c.l.b16 %v910
      %v1043 = vunpack.c.l.b16 %v911
      %v1044 = vunpack.c.l.b16 %v912
      %v1045 = vunpack.c.l.b16 %v913
      %v1046 = vunpack.c.l.b16 %v914
      %v1047 = vunpack.c.l.b16 %v915
      %v1048 = vunpack.c.l.b16 %v916
      %v1049 = vunpack.c.l.b16 %v917
      %v1050 = vunpack.c.l.b16 %v918
      %v1051 = vunpack.c.l.b16 %v919
      %v1052 = vunpack.c.l.b16 %v920
      %v1053 = vunpack.c.l.b16 %v921
      %v1054 = vunpack.c.l.b16 %v922
      %v1055 = vunpack.c.l.b16 %v923
      %v1056 = vunpack.c.l.b16 %v924
      %v1057 = vunpack.c.l.b16 %v925
      %v1058 = vunpack.c.l.b16 %v926
      %v1059 = vunpack.c.l.b16 %v927
      %v1060 = vunpack.c.l.b16 %v928
      %v1061 = vunpack.c.l.b16 %v929
      %v1062 = vunpack.c.l.b16 %v930
      %v1063 = vunpack.c.l.b16 %v931
      %v1064 = vunpack.c.l.b16 %v932
      %v1065 = vunpack.c.l.b16 %v933
      %v1066 = vunpack.c.l.b16 %v934
      %v1067 = vunpack.c.l.b16 %v935
      %v1068 = vunpack.c.l.b16 %v936
      %v1069 = vunpack.c.l.b16 %v937
      %v1070 = vunpack.c.l.b16 %v938
      %v1071 = vunpack.c.l.b16 %v939
      %v1072 = vunpack.c.l.b16 %v940
      %v1073 = vpack.c.b16 %v1040, %v1039
      %v1074 = vpack.c.b16 %v1042, %v1041
      %v1075 = vpack.c.b16 %v1044, %v1043
      %v1076 = vpack.c.b16 %v1046, %v1045
      %v1077 = vpack.c.b16 %v1048, %v1047
      %v1078 = vpack.c.b16 %v1050, %v1049
      %v1079 = vpack.c.b16 %v1052, %v1051
      %v1080 = vpack.c.b16 %v1054, %v1053
      %v1081 = vpack.c.b16 %v1056, %v1055
      %v1082 = vpack.c.b16 %v1058, %v1057
      %v1083 = vpack.c.b16 %v1060, %v1059
      %v1084 = vpack.c.b16 %v1062, %v1061
      %v1085 = vpack.c.b16 %v1064, %v1063
      %v1086 = vpack.c.b16 %v1066, %v1065
      %v1087 = vpack.c.b16 %v1068, %v1067
      %v1088 = vpack.c.b16 %v1070, %v1069
      %v1089 = vpack.c.b16 %v1072, %v1071
      %1090 = vrot.lane.b32.xlu0 %v1073, 1
      %v1091 = vpop.permute.xlu0 %1090
      %1092 = vrot.lane.b32.xlu0 %v1074, 1
      %v1093 = vpop.permute.xlu0 %1092
      %1094 = vrot.lane.b32.xlu0 %v1075, 1
      %v1095 = vpop.permute.xlu0 %1094
      %1096 = vrot.lane.b32.xlu0 %v1076, 1
      %v1097 = vpop.permute.xlu0 %1096
      %1098 = vrot.lane.b32.xlu0 %v1077, 1
      %v1099 = vpop.permute.xlu0 %1098
      %1100 = vrot.lane.b32.xlu0 %v1078, 1
      %v1101 = vpop.permute.xlu0 %1100
      %1102 = vrot.lane.b32.xlu0 %v1079, 1
      %v1103 = vpop.permute.xlu0 %1102
      %1104 = vrot.lane.b32.xlu0 %v1080, 1
      %v1105 = vpop.permute.xlu0 %1104
      %1106 = vrot.lane.b32.xlu0 %v1081, 1
      %v1107 = vpop.permute.xlu0 %1106
      %1108 = vrot.lane.b32.xlu0 %v1082, 1
      %v1109 = vpop.permute.xlu0 %1108
      %1110 = vrot.lane.b32.xlu0 %v1083, 1
      %v1111 = vpop.permute.xlu0 %1110
      %1112 = vrot.lane.b32.xlu0 %v1084, 1
      %v1113 = vpop.permute.xlu0 %1112
      %1114 = vrot.lane.b32.xlu0 %v1085, 1
      %v1115 = vpop.permute.xlu0 %1114
      %1116 = vrot.lane.b32.xlu0 %v1086, 1
      %v1117 = vpop.permute.xlu0 %1116
      %1118 = vrot.lane.b32.xlu0 %v1087, 1
      %v1119 = vpop.permute.xlu0 %1118
      %1120 = vrot.lane.b32.xlu0 %v1088, 1
      %v1121 = vpop.permute.xlu0 %1120
      %1122 = vrot.lane.b32.xlu0 %v1089, 1
      %v1123 = vpop.permute.xlu0 %1122
      %vm1124 = vcmask 7168
      %v1127 = vsel %vm1124, 0, %v1091
      %v1130 = vsel %vm1124, 0, %v1093
      %v1133 = vsel %vm1124, 0, %v1095
      %v1136 = vsel %vm1124, 0, %v1097
      %v1139 = vsel %vm1124, 0, %v1099
      %v1142 = vsel %vm1124, 0, %v1101
      %v1145 = vsel %vm1124, 0, %v1103
      %v1148 = vsel %vm1124, 0, %v1105
      %v1151 = vsel %vm1124, 0, %v1107
      %v1154 = vsel %vm1124, 0, %v1109
      %v1157 = vsel %vm1124, 0, %v1111
      %v1160 = vsel %vm1124, 0, %v1113
      %v1163 = vsel %vm1124, 0, %v1115
      %v1166 = vsel %vm1124, 0, %v1117
      %v1169 = vsel %vm1124, 0, %v1119
      %v1172 = vsel %vm1124, 0, %v1121
      %v1175 = vsel %vm1124, 0, %v1123
      %s1177 = scalar_lea.vmem %s3, 384
      %v1178 = vld [vmem:[%s1177] sm:$0xff]
      %v1179 = vld [vmem:[%s1177 + $0x8] sm:$0xf]
      %v1180 = vld [vmem:[%s1177 + $0xc] sm:$0xff]
      %v1181 = vld [vmem:[%s1177 + $0x14] sm:$0xf]
      %v1182 = vld [vmem:[%s1177 + $0x18] sm:$0xff]
      %v1183 = vld [vmem:[%s1177 + $0x20] sm:$0xf]
      %v1184 = vld [vmem:[%s1177 + $0x24] sm:$0xff]
      %v1185 = vld [vmem:[%s1177 + $0x2c] sm:$0xf]
      %v1186 = vld [vmem:[%s1177 + $0x30] sm:$0xff]
      %v1187 = vld [vmem:[%s1177 + $0x38] sm:$0xf]
      %v1188 = vld [vmem:[%s1177 + $0x3c] sm:$0xff]
      %v1189 = vld [vmem:[%s1177 + $0x44] sm:$0xf]
      %v1190 = vld [vmem:[%s1177 + $0x48] sm:$0xff]
      %v1191 = vld [vmem:[%s1177 + $0x50] sm:$0xf]
      %v1192 = vld [vmem:[%s1177 + $0x54] sm:$0xff]
      %v1193 = vld [vmem:[%s1177 + $0x5c] sm:$0xf]
      %v1194 = vld [vmem:[%s1177 + $0x60] sm:$0xff]
      %v1195 = vld [vmem:[%s1177 + $0x68] sm:$0xf]
      %v1196 = vld [vmem:[%s1177 + $0x6c] sm:$0xff]
      %v1197 = vld [vmem:[%s1177 + $0x74] sm:$0xf]
      %v1198 = vld [vmem:[%s1177 + $0x78] sm:$0xff]
      %v1199 = vld [vmem:[%s1177 + $0x80] sm:$0xf]
      %v1200 = vld [vmem:[%s1177 + $0x84] sm:$0xff]
      %v1201 = vld [vmem:[%s1177 + $0x8c] sm:$0xf]
      %v1202 = vld [vmem:[%s1177 + $0x90] sm:$0xff]
      %v1203 = vld [vmem:[%s1177 + $0x98] sm:$0xf]
      %v1204 = vld [vmem:[%s1177 + $0x9c] sm:$0xff]
      %v1205 = vld [vmem:[%s1177 + $0xa4] sm:$0xf]
      %v1206 = vld [vmem:[%s1177 + $0xa8] sm:$0xff]
      %v1207 = vld [vmem:[%s1177 + $0xb0] sm:$0xf]
      %v1208 = vld [vmem:[%s1177 + $0xb4] sm:$0xff]
      %v1209 = vld [vmem:[%s1177 + $0xbc] sm:$0xf]
      %v1210 = vld [vmem:[%s1177 + $0xc0] sm:$0xff]
      %v1211 = vld [vmem:[%s1177 + $0xc8] sm:$0xf]
      %v1212 = vld [vmem:[%s1177 + $0xcc] sm:$0xff]
      %v1213 = vld [vmem:[%s1177 + $0xd4] sm:$0xf]
      %v1214 = vld [vmem:[%s1177 + $0xd8] sm:$0xff]
      %v1215 = vld [vmem:[%s1177 + $0xe0] sm:$0xf]
      %v1216 = vld [vmem:[%s1177 + $0xe4] sm:$0xff]
      %v1217 = vld [vmem:[%s1177 + $0xec] sm:$0xf]
      %v1218 = vld [vmem:[%s1177 + $0xf0] sm:$0xff]
      %v1219 = vld [vmem:[%s1177 + $0xf8] sm:$0xf]
      %v1220 = vld [vmem:[%s1177 + $0xfc] sm:$0xff]
      %v1221 = vld [vmem:[%s1177 + $0x104] sm:$0xf]
      %v1222 = vld [vmem:[%s1177 + $0x108] sm:$0xff]
      %v1223 = vld [vmem:[%s1177 + $0x110] sm:$0xf]
      %v1224 = vld [vmem:[%s1177 + $0x114] sm:$0xff]
      %v1225 = vld [vmem:[%s1177 + $0x11c] sm:$0xf]
      %v1226 = vld [vmem:[%s1177 + $0x120] sm:$0xff]
      %v1227 = vld [vmem:[%s1177 + $0x128] sm:$0xf]
      %v1228 = vld [vmem:[%s1177 + $0x12c] sm:$0xff]
      %v1229 = vld [vmem:[%s1177 + $0x134] sm:$0xf]
      %v1230 = vld [vmem:[%s1177 + $0x138] sm:$0xff]
      %v1231 = vld [vmem:[%s1177 + $0x140] sm:$0xf]
      %v1232 = vld [vmem:[%s1177 + $0x144] sm:$0xff]
      %v1233 = vld [vmem:[%s1177 + $0x14c] sm:$0xf]
      %v1234 = vld [vmem:[%s1177 + $0x150] sm:$0xff]
      %v1235 = vld [vmem:[%s1177 + $0x158] sm:$0xf]
      %v1236 = vld [vmem:[%s1177 + $0x15c] sm:$0xff]
      %v1237 = vld [vmem:[%s1177 + $0x164] sm:$0xf]
      %v1238 = vld [vmem:[%s1177 + $0x168] sm:$0xff]
      %v1239 = vld [vmem:[%s1177 + $0x170] sm:$0xf]
      %v1240 = vld [vmem:[%s1177 + $0x174] sm:$0xff]
      %v1241 = vld [vmem:[%s1177 + $0x17c] sm:$0xf]
      %v1306 = vunpack.c.l.b16 %v1178
      %v1307 = vunpack.c.h.b16 %v1178
      %v1308 = vunpack.c.l.b16 %v1179
      %v1309 = vunpack.c.l.b16 %v1180
      %v1310 = vunpack.c.h.b16 %v1180
      %v1311 = vunpack.c.l.b16 %v1181
      %v1312 = vunpack.c.l.b16 %v1182
      %v1313 = vunpack.c.h.b16 %v1182
      %v1314 = vunpack.c.l.b16 %v1183
      %v1315 = vunpack.c.l.b16 %v1184
      %v1316 = vunpack.c.h.b16 %v1184
      %v1317 = vunpack.c.l.b16 %v1185
      %v1318 = vunpack.c.l.b16 %v1186
      %v1319 = vunpack.c.h.b16 %v1186
      %v1320 = vunpack.c.l.b16 %v1187
      %v1321 = vunpack.c.l.b16 %v1188
      %v1322 = vunpack.c.h.b16 %v1188
      %v1323 = vunpack.c.l.b16 %v1189
      %v1324 = vunpack.c.l.b16 %v1190
      %v1325 = vunpack.c.h.b16 %v1190
      %v1326 = vunpack.c.l.b16 %v1191
      %v1327 = vunpack.c.l.b16 %v1192
      %v1328 = vunpack.c.h.b16 %v1192
      %v1329 = vunpack.c.l.b16 %v1193
      %v1330 = vunpack.c.l.b16 %v1194
      %v1331 = vunpack.c.h.b16 %v1194
      %v1332 = vunpack.c.l.b16 %v1195
      %v1333 = vunpack.c.l.b16 %v1196
      %v1334 = vunpack.c.h.b16 %v1196
      %v1335 = vunpack.c.l.b16 %v1197
      %v1336 = vunpack.c.l.b16 %v1198
      %v1337 = vunpack.c.h.b16 %v1198
      %v1338 = vunpack.c.l.b16 %v1199
      %v1339 = vunpack.c.l.b16 %v1200
      %v1340 = vunpack.c.h.b16 %v1200
      %v1341 = vunpack.c.l.b16 %v1201
      %v1342 = vunpack.c.l.b16 %v1202
      %v1343 = vunpack.c.h.b16 %v1202
      %v1344 = vunpack.c.l.b16 %v1203
      %v1345 = vunpack.c.l.b16 %v1204
      %v1346 = vunpack.c.h.b16 %v1204
      %v1347 = vunpack.c.l.b16 %v1205
      %v1348 = vunpack.c.l.b16 %v1206
      %v1349 = vunpack.c.h.b16 %v1206
      %v1350 = vunpack.c.l.b16 %v1207
      %v1351 = vunpack.c.l.b16 %v1208
      %v1352 = vunpack.c.h.b16 %v1208
      %v1353 = vunpack.c.l.b16 %v1209
      %v1354 = vunpack.c.l.b16 %v1210
      %v1355 = vunpack.c.h.b16 %v1210
      %v1356 = vunpack.c.l.b16 %v1211
      %v1357 = vunpack.c.l.b16 %v1212
      %v1358 = vunpack.c.h.b16 %v1212
      %v1359 = vunpack.c.l.b16 %v1213
      %v1360 = vunpack.c.l.b16 %v1214
      %v1361 = vunpack.c.h.b16 %v1214
      %v1362 = vunpack.c.l.b16 %v1215
      %v1363 = vunpack.c.l.b16 %v1216
      %v1364 = vunpack.c.h.b16 %v1216
      %v1365 = vunpack.c.l.b16 %v1217
      %v1366 = vunpack.c.l.b16 %v1218
      %v1367 = vunpack.c.h.b16 %v1218
      %v1368 = vunpack.c.l.b16 %v1219
      %v1369 = vunpack.c.l.b16 %v1220
      %v1370 = vunpack.c.h.b16 %v1220
      %v1371 = vunpack.c.l.b16 %v1221
      %v1372 = vunpack.c.l.b16 %v1222
      %v1373 = vunpack.c.h.b16 %v1222
      %v1374 = vunpack.c.l.b16 %v1223
      %v1375 = vunpack.c.l.b16 %v1224
      %v1376 = vunpack.c.h.b16 %v1224
      %v1377 = vunpack.c.l.b16 %v1225
      %v1378 = vunpack.c.l.b16 %v1226
      %v1379 = vunpack.c.h.b16 %v1226
      %v1380 = vunpack.c.l.b16 %v1227
      %v1381 = vunpack.c.l.b16 %v1228
      %v1382 = vunpack.c.h.b16 %v1228
      %v1383 = vunpack.c.l.b16 %v1229
      %v1384 = vunpack.c.l.b16 %v1230
      %v1385 = vunpack.c.h.b16 %v1230
      %v1386 = vunpack.c.l.b16 %v1231
      %v1387 = vunpack.c.l.b16 %v1232
      %v1388 = vunpack.c.h.b16 %v1232
      %v1389 = vunpack.c.l.b16 %v1233
      %v1390 = vunpack.c.l.b16 %v1234
      %v1391 = vunpack.c.h.b16 %v1234
      %v1392 = vunpack.c.l.b16 %v1235
      %v1393 = vunpack.c.l.b16 %v1236
      %v1394 = vunpack.c.h.b16 %v1236
      %v1395 = vunpack.c.l.b16 %v1237
      %v1396 = vunpack.c.l.b16 %v1238
      %v1397 = vunpack.c.h.b16 %v1238
      %v1398 = vunpack.c.l.b16 %v1239
      %v1399 = vunpack.c.l.b16 %v1240
      %v1400 = vunpack.c.h.b16 %v1240
      %v1401 = vunpack.c.l.b16 %v1241
      %v1402 = vpack.c.b16 %v1309, %v1306
      %v1403 = vpack.c.b16 %v1310, %v1307
      %v1404 = vpack.c.b16 %v1311, %v1308
      %v1405 = vpack.c.b16 %v1315, %v1312
      %v1406 = vpack.c.b16 %v1316, %v1313
      %v1407 = vpack.c.b16 %v1317, %v1314
      %v1408 = vpack.c.b16 %v1321, %v1318
      %v1409 = vpack.c.b16 %v1322, %v1319
      %v1410 = vpack.c.b16 %v1323, %v1320
      %v1411 = vpack.c.b16 %v1327, %v1324
      %v1412 = vpack.c.b16 %v1328, %v1325
      %v1413 = vpack.c.b16 %v1329, %v1326
      %v1414 = vpack.c.b16 %v1333, %v1330
      %v1415 = vpack.c.b16 %v1334, %v1331
      %v1416 = vpack.c.b16 %v1335, %v1332
      %v1417 = vpack.c.b16 %v1339, %v1336
      %v1418 = vpack.c.b16 %v1340, %v1337
      %v1419 = vpack.c.b16 %v1341, %v1338
      %v1420 = vpack.c.b16 %v1345, %v1342
      %v1421 = vpack.c.b16 %v1346, %v1343
      %v1422 = vpack.c.b16 %v1347, %v1344
      %v1423 = vpack.c.b16 %v1351, %v1348
      %v1424 = vpack.c.b16 %v1352, %v1349
      %v1425 = vpack.c.b16 %v1353, %v1350
      %v1426 = vpack.c.b16 %v1357, %v1354
      %v1427 = vpack.c.b16 %v1358, %v1355
      %v1428 = vpack.c.b16 %v1359, %v1356
      %v1429 = vpack.c.b16 %v1363, %v1360
      %v1430 = vpack.c.b16 %v1364, %v1361
      %v1431 = vpack.c.b16 %v1365, %v1362
      %v1432 = vpack.c.b16 %v1369, %v1366
      %v1433 = vpack.c.b16 %v1370, %v1367
      %v1434 = vpack.c.b16 %v1371, %v1368
      %v1435 = vpack.c.b16 %v1375, %v1372
      %v1436 = vpack.c.b16 %v1376, %v1373
      %v1437 = vpack.c.b16 %v1377, %v1374
      %v1438 = vpack.c.b16 %v1381, %v1378
      %v1439 = vpack.c.b16 %v1382, %v1379
      %v1440 = vpack.c.b16 %v1383, %v1380
      %v1441 = vpack.c.b16 %v1387, %v1384
      %v1442 = vpack.c.b16 %v1388, %v1385
      %v1443 = vpack.c.b16 %v1389, %v1386
      %v1444 = vpack.c.b16 %v1393, %v1390
      %v1445 = vpack.c.b16 %v1394, %v1391
      %v1446 = vpack.c.b16 %v1395, %v1392
      %v1447 = vpack.c.b16 %v1399, %v1396
      %v1448 = vpack.c.b16 %v1400, %v1397
      %v1449 = vpack.c.b16 %v1401, %v1398
      %vm1499 = vcmask 130048
      %v1501 = vsel %vm1499, %v1404, 0
      %v1504 = vsel %vm1499, %v1407, 0
      %v1507 = vsel %vm1499, %v1410, 0
      %v1510 = vsel %vm1499, %v1413, 0
      %v1513 = vsel %vm1499, %v1416, 0
      %v1516 = vsel %vm1499, %v1419, 0
      %v1519 = vsel %vm1499, %v1422, 0
      %v1522 = vsel %vm1499, %v1425, 0
      %v1525 = vsel %vm1499, %v1428, 0
      %v1528 = vsel %vm1499, %v1431, 0
      %v1531 = vsel %vm1499, %v1434, 0
      %v1534 = vsel %vm1499, %v1437, 0
      %v1537 = vsel %vm1499, %v1440, 0
      %v1540 = vsel %vm1499, %v1443, 0
      %v1543 = vsel %vm1499, %v1446, 0
      %v1546 = vsel %vm1499, %v1449, 0
      %1548 = vmatpush.bf16.msra.mxu0 %v1080
      %1549 = vmatpush.bf16.msra.mxu0 %v1079
      %1550 = vmatpush.bf16.msra.mxu0 %v1078
      %1551 = vmatpush.bf16.msra.mxu0 %v1077
      %1552 = vmatpush.bf16.msra.mxu0 %v1076
      %1553 = vmatpush.bf16.msra.mxu0 %v1075
      %1554 = vmatpush.bf16.msra.mxu0 %v1074
      %1555 = vmatpush.bf16.msra.mxu0 %v1073
      %1556 = vmatmul.bf16.gmra.mxu0 %v1402
      %v1557 = vpop.f32.mrf.mxu0
      %v1558 = vadd.f32 0.0, %v1557
      %v1559 = vpop.f32.mrf.mxu0
      %v1560 = vadd.f32 0.0, %v1559
      %1561 = vmatmul.bf16.gmra.mxu0 %v1405
      %v1562 = vpop.f32.mrf.mxu0
      %v1563 = vadd.f32 0.0, %v1562
      %v1564 = vpop.f32.mrf.mxu0
      %v1565 = vadd.f32 0.0, %v1564
      %1566 = vmatmul.bf16.gmra.mxu0 %v1408
      %v1567 = vpop.f32.mrf.mxu0
      %v1568 = vadd.f32 0.0, %v1567
      %v1569 = vpop.f32.mrf.mxu0
      %v1570 = vadd.f32 0.0, %v1569
      %1571 = vmatmul.bf16.gmra.mxu0 %v1411
      %v1572 = vpop.f32.mrf.mxu0
      %v1573 = vadd.f32 0.0, %v1572
      %v1574 = vpop.f32.mrf.mxu0
      %v1575 = vadd.f32 0.0, %v1574
      %1576 = vmatmul.bf16.gmra.mxu0 %v1414
      %v1577 = vpop.f32.mrf.mxu0
      %v1578 = vadd.f32 0.0, %v1577
      %v1579 = vpop.f32.mrf.mxu0
      %v1580 = vadd.f32 0.0, %v1579
      %1581 = vmatmul.bf16.gmra.mxu0 %v1417
      %v1582 = vpop.f32.mrf.mxu0
      %v1583 = vadd.f32 0.0, %v1582
      %v1584 = vpop.f32.mrf.mxu0
      %v1585 = vadd.f32 0.0, %v1584
      %1586 = vmatmul.bf16.gmra.mxu0 %v1420
      %v1587 = vpop.f32.mrf.mxu0
      %v1588 = vadd.f32 0.0, %v1587
      %v1589 = vpop.f32.mrf.mxu0
      %v1590 = vadd.f32 0.0, %v1589
      %1591 = vmatmul.bf16.gmra.mxu0 %v1423
      %v1592 = vpop.f32.mrf.mxu0
      %v1593 = vadd.f32 0.0, %v1592
      %v1594 = vpop.f32.mrf.mxu0
      %v1595 = vadd.f32 0.0, %v1594
      %1596 = vmatmul.bf16.gmra.mxu0 %v1426
      %v1597 = vpop.f32.mrf.mxu0
      %v1598 = vadd.f32 0.0, %v1597
      %v1599 = vpop.f32.mrf.mxu0
      %v1600 = vadd.f32 0.0, %v1599
      %1601 = vmatmul.bf16.gmra.mxu0 %v1429
      %v1602 = vpop.f32.mrf.mxu0
      %v1603 = vadd.f32 0.0, %v1602
      %v1604 = vpop.f32.mrf.mxu0
      %v1605 = vadd.f32 0.0, %v1604
      %1606 = vmatmul.bf16.gmra.mxu0 %v1432
      %v1607 = vpop.f32.mrf.mxu0
      %v1608 = vadd.f32 0.0, %v1607
      %v1609 = vpop.f32.mrf.mxu0
      %v1610 = vadd.f32 0.0, %v1609
      %1611 = vmatmul.bf16.gmra.mxu0 %v1435
      %v1612 = vpop.f32.mrf.mxu0
      %v1613 = vadd.f32 0.0, %v1612
      %v1614 = vpop.f32.mrf.mxu0
      %v1615 = vadd.f32 0.0, %v1614
      %1616 = vmatmul.bf16.gmra.mxu0 %v1438
      %v1617 = vpop.f32.mrf.mxu0
      %v1618 = vadd.f32 0.0, %v1617
      %v1619 = vpop.f32.mrf.mxu0
      %v1620 = vadd.f32 0.0, %v1619
      %1621 = vmatmul.bf16.gmra.mxu0 %v1441
      %v1622 = vpop.f32.mrf.mxu0
      %v1623 = vadd.f32 0.0, %v1622
      %v1624 = vpop.f32.mrf.mxu0
      %v1625 = vadd.f32 0.0, %v1624
      %1626 = vmatmul.bf16.gmra.mxu0 %v1444
      %v1627 = vpop.f32.mrf.mxu0
      %v1628 = vadd.f32 0.0, %v1627
      %v1629 = vpop.f32.mrf.mxu0
      %v1630 = vadd.f32 0.0, %v1629
      %1631 = vmatmul.bf16.gmra.mxu0 %v1447
      %v1632 = vpop.f32.mrf.mxu0
      %v1633 = vadd.f32 0.0, %v1632
      %v1634 = vpop.f32.mrf.mxu0
      %v1635 = vadd.f32 0.0, %v1634
      %1636 = vdwg.mxu0
      %1637 = vmatpush.bf16.msra.mxu0 %v1088
      %1638 = vmatpush.bf16.msra.mxu0 %v1087
      %1639 = vmatpush.bf16.msra.mxu0 %v1086
      %1640 = vmatpush.bf16.msra.mxu0 %v1085
      %1641 = vmatpush.bf16.msra.mxu0 %v1084
      %1642 = vmatpush.bf16.msra.mxu0 %v1083
      %1643 = vmatpush.bf16.msra.mxu0 %v1082
      %1644 = vmatpush.bf16.msra.mxu0 %v1081
      %1645 = vmatmul.bf16.gmra.mxu0 %v1403
      %v1646 = vpop.f32.mrf.mxu0
      %v1647 = vadd.f32 %v1558, %v1646
      %v1648 = vpop.f32.mrf.mxu0
      %v1649 = vadd.f32 %v1560, %v1648
      %1650 = vmatmul.bf16.gmra.mxu0 %v1406
      %v1651 = vpop.f32.mrf.mxu0
      %v1652 = vadd.f32 %v1563, %v1651
      %v1653 = vpop.f32.mrf.mxu0
      %v1654 = vadd.f32 %v1565, %v1653
      %1655 = vmatmul.bf16.gmra.mxu0 %v1409
      %v1656 = vpop.f32.mrf.mxu0
      %v1657 = vadd.f32 %v1568, %v1656
      %v1658 = vpop.f32.mrf.mxu0
      %v1659 = vadd.f32 %v1570, %v1658
      %1660 = vmatmul.bf16.gmra.mxu0 %v1412
      %v1661 = vpop.f32.mrf.mxu0
      %v1662 = vadd.f32 %v1573, %v1661
      %v1663 = vpop.f32.mrf.mxu0
      %v1664 = vadd.f32 %v1575, %v1663
      %1665 = vmatmul.bf16.gmra.mxu0 %v1415
      %v1666 = vpop.f32.mrf.mxu0
      %v1667 = vadd.f32 %v1578, %v1666
      %v1668 = vpop.f32.mrf.mxu0
      %v1669 = vadd.f32 %v1580, %v1668
      %1670 = vmatmul.bf16.gmra.mxu0 %v1418
      %v1671 = vpop.f32.mrf.mxu0
      %v1672 = vadd.f32 %v1583, %v1671
      %v1673 = vpop.f32.mrf.mxu0
      %v1674 = vadd.f32 %v1585, %v1673
      %1675 = vmatmul.bf16.gmra.mxu0 %v1421
      %v1676 = vpop.f32.mrf.mxu0
      %v1677 = vadd.f32 %v1588, %v1676
      %v1678 = vpop.f32.mrf.mxu0
      %v1679 = vadd.f32 %v1590, %v1678
      %1680 = vmatmul.bf16.gmra.mxu0 %v1424
      %v1681 = vpop.f32.mrf.mxu0
      %v1682 = vadd.f32 %v1593, %v1681
      %v1683 = vpop.f32.mrf.mxu0
      %v1684 = vadd.f32 %v1595, %v1683
      %1685 = vmatmul.bf16.gmra.mxu0 %v1427
      %v1686 = vpop.f32.mrf.mxu0
      %v1687 = vadd.f32 %v1598, %v1686
      %v1688 = vpop.f32.mrf.mxu0
      %v1689 = vadd.f32 %v1600, %v1688
      %1690 = vmatmul.bf16.gmra.mxu0 %v1430
      %v1691 = vpop.f32.mrf.mxu0
      %v1692 = vadd.f32 %v1603, %v1691
      %v1693 = vpop.f32.mrf.mxu0
      %v1694 = vadd.f32 %v1605, %v1693
      %1695 = vmatmul.bf16.gmra.mxu0 %v1433
      %v1696 = vpop.f32.mrf.mxu0
      %v1697 = vadd.f32 %v1608, %v1696
      %v1698 = vpop.f32.mrf.mxu0
      %v1699 = vadd.f32 %v1610, %v1698
      %1700 = vmatmul.bf16.gmra.mxu0 %v1436
      %v1701 = vpop.f32.mrf.mxu0
      %v1702 = vadd.f32 %v1613, %v1701
      %v1703 = vpop.f32.mrf.mxu0
      %v1704 = vadd.f32 %v1615, %v1703
      %1705 = vmatmul.bf16.gmra.mxu0 %v1439
      %v1706 = vpop.f32.mrf.mxu0
      %v1707 = vadd.f32 %v1618, %v1706
      %v1708 = vpop.f32.mrf.mxu0
      %v1709 = vadd.f32 %v1620, %v1708
      %1710 = vmatmul.bf16.gmra.mxu0 %v1442
      %v1711 = vpop.f32.mrf.mxu0
      %v1712 = vadd.f32 %v1623, %v1711
      %v1713 = vpop.f32.mrf.mxu0
      %v1714 = vadd.f32 %v1625, %v1713
      %1715 = vmatmul.bf16.gmra.mxu0 %v1445
      %v1716 = vpop.f32.mrf.mxu0
      %v1717 = vadd.f32 %v1628, %v1716
      %v1718 = vpop.f32.mrf.mxu0
      %v1719 = vadd.f32 %v1630, %v1718
      %1720 = vmatmul.bf16.gmra.mxu0 %v1448
      %v1721 = vpop.f32.mrf.mxu0
      %v1722 = vadd.f32 %v1633, %v1721
      %v1723 = vpop.f32.mrf.mxu0
      %v1724 = vadd.f32 %v1635, %v1723
      %1725 = vdwg.mxu0
      %1726 = vmatpush.bf16.msra.mxu0 0
      %1727 = vmatpush.bf16.msra.mxu0 0
      %1728 = vmatpush.bf16.msra.mxu0 0
      %1729 = vmatpush.bf16.msra.mxu0 0
      %1730 = vmatpush.bf16.msra.mxu0 0
      %1731 = vmatpush.bf16.msra.mxu0 0
      %1732 = vmatpush.bf16.msra.mxu0 0
      %1733 = vmatpush.bf16.msra.mxu0 %v1089
      %1734 = vmatmul.bf16.gmra.mxu0 %v1501
      %v1735 = vpop.f32.mrf.mxu0
      %v1736 = vadd.f32 %v1647, %v1735
      %v1737 = vpop.f32.mrf.mxu0
      %v1738 = vadd.f32 %v1649, %v1737
      %1739 = vmatmul.bf16.gmra.mxu0 %v1504
      %v1740 = vpop.f32.mrf.mxu0
      %v1741 = vadd.f32 %v1652, %v1740
      %v1742 = vpop.f32.mrf.mxu0
      %v1743 = vadd.f32 %v1654, %v1742
      %1744 = vmatmul.bf16.gmra.mxu0 %v1507
      %v1745 = vpop.f32.mrf.mxu0
      %v1746 = vadd.f32 %v1657, %v1745
      %v1747 = vpop.f32.mrf.mxu0
      %v1748 = vadd.f32 %v1659, %v1747
      %1749 = vmatmul.bf16.gmra.mxu0 %v1510
      %v1750 = vpop.f32.mrf.mxu0
      %v1751 = vadd.f32 %v1662, %v1750
      %v1752 = vpop.f32.mrf.mxu0
      %v1753 = vadd.f32 %v1664, %v1752
      %1754 = vmatmul.bf16.gmra.mxu0 %v1513
      %v1755 = vpop.f32.mrf.mxu0
      %v1756 = vadd.f32 %v1667, %v1755
      %v1757 = vpop.f32.mrf.mxu0
      %v1758 = vadd.f32 %v1669, %v1757
      %1759 = vmatmul.bf16.gmra.mxu0 %v1516
      %v1760 = vpop.f32.mrf.mxu0
      %v1761 = vadd.f32 %v1672, %v1760
      %v1762 = vpop.f32.mrf.mxu0
      %v1763 = vadd.f32 %v1674, %v1762
      %1764 = vmatmul.bf16.gmra.mxu0 %v1519
      %v1765 = vpop.f32.mrf.mxu0
      %v1766 = vadd.f32 %v1677, %v1765
      %v1767 = vpop.f32.mrf.mxu0
      %v1768 = vadd.f32 %v1679, %v1767
      %1769 = vmatmul.bf16.gmra.mxu0 %v1522
      %v1770 = vpop.f32.mrf.mxu0
      %v1771 = vadd.f32 %v1682, %v1770
      %v1772 = vpop.f32.mrf.mxu0
      %v1773 = vadd.f32 %v1684, %v1772
      %1774 = vmatmul.bf16.gmra.mxu0 %v1525
      %v1775 = vpop.f32.mrf.mxu0
      %v1776 = vadd.f32 %v1687, %v1775
      %v1777 = vpop.f32.mrf.mxu0
      %v1778 = vadd.f32 %v1689, %v1777
      %1779 = vmatmul.bf16.gmra.mxu0 %v1528
      %v1780 = vpop.f32.mrf.mxu0
      %v1781 = vadd.f32 %v1692, %v1780
      %v1782 = vpop.f32.mrf.mxu0
      %v1783 = vadd.f32 %v1694, %v1782
      %1784 = vmatmul.bf16.gmra.mxu0 %v1531
      %v1785 = vpop.f32.mrf.mxu0
      %v1786 = vadd.f32 %v1697, %v1785
      %v1787 = vpop.f32.mrf.mxu0
      %v1788 = vadd.f32 %v1699, %v1787
      %1789 = vmatmul.bf16.gmra.mxu0 %v1534
      %v1790 = vpop.f32.mrf.mxu0
      %v1791 = vadd.f32 %v1702, %v1790
      %v1792 = vpop.f32.mrf.mxu0
      %v1793 = vadd.f32 %v1704, %v1792
      %1794 = vmatmul.bf16.gmra.mxu0 %v1537
      %v1795 = vpop.f32.mrf.mxu0
      %v1796 = vadd.f32 %v1707, %v1795
      %v1797 = vpop.f32.mrf.mxu0
      %v1798 = vadd.f32 %v1709, %v1797
      %1799 = vmatmul.bf16.gmra.mxu0 %v1540
      %v1800 = vpop.f32.mrf.mxu0
      %v1801 = vadd.f32 %v1712, %v1800
      %v1802 = vpop.f32.mrf.mxu0
      %v1803 = vadd.f32 %v1714, %v1802
      %1804 = vmatmul.bf16.gmra.mxu0 %v1543
      %v1805 = vpop.f32.mrf.mxu0
      %v1806 = vadd.f32 %v1717, %v1805
      %v1807 = vpop.f32.mrf.mxu0
      %v1808 = vadd.f32 %v1719, %v1807
      %1809 = vmatmul.bf16.gmra.mxu0 %v1546
      %v1810 = vpop.f32.mrf.mxu0
      %v1811 = vadd.f32 %v1722, %v1810
      %v1812 = vpop.f32.mrf.mxu0
      %v1813 = vadd.f32 %v1724, %v1812
      %1814 = vdwg.mxu0
      %v1879 = vunpack.c.l.b16 %v941
      %v1880 = vunpack.c.h.b16 %v941
      %v1881 = vunpack.c.l.b16 %v942
      %v1882 = vunpack.c.l.b16 %v943
      %v1883 = vunpack.c.h.b16 %v943
      %v1884 = vunpack.c.l.b16 %v944
      %v1885 = vunpack.c.l.b16 %v945
      %v1886 = vunpack.c.h.b16 %v945
      %v1887 = vunpack.c.l.b16 %v946
      %v1888 = vunpack.c.l.b16 %v947
      %v1889 = vunpack.c.h.b16 %v947
      %v1890 = vunpack.c.l.b16 %v948
      %v1891 = vunpack.c.l.b16 %v949
      %v1892 = vunpack.c.h.b16 %v949
      %v1893 = vunpack.c.l.b16 %v950
      %v1894 = vunpack.c.l.b16 %v951
      %v1895 = vunpack.c.h.b16 %v951
      %v1896 = vunpack.c.l.b16 %v952
      %v1897 = vunpack.c.l.b16 %v953
      %v1898 = vunpack.c.h.b16 %v953
      %v1899 = vunpack.c.l.b16 %v954
      %v1900 = vunpack.c.l.b16 %v955
      %v1901 = vunpack.c.h.b16 %v955
      %v1902 = vunpack.c.l.b16 %v956
      %v1903 = vunpack.c.l.b16 %v957
      %v1904 = vunpack.c.h.b16 %v957
      %v1905 = vunpack.c.l.b16 %v958
      %v1906 = vunpack.c.l.b16 %v959
      %v1907 = vunpack.c.h.b16 %v959
      %v1908 = vunpack.c.l.b16 %v960
      %v1909 = vunpack.c.l.b16 %v961
      %v1910 = vunpack.c.h.b16 %v961
      %v1911 = vunpack.c.l.b16 %v962
      %v1912 = vunpack.c.l.b16 %v963
      %v1913 = vunpack.c.h.b16 %v963
      %v1914 = vunpack.c.l.b16 %v964
      %v1915 = vunpack.c.l.b16 %v965
      %v1916 = vunpack.c.h.b16 %v965
      %v1917 = vunpack.c.l.b16 %v966
      %v1918 = vunpack.c.l.b16 %v967
      %v1919 = vunpack.c.h.b16 %v967
      %v1920 = vunpack.c.l.b16 %v968
      %v1921 = vunpack.c.l.b16 %v969
      %v1922 = vunpack.c.h.b16 %v969
      %v1923 = vunpack.c.l.b16 %v970
      %v1924 = vunpack.c.l.b16 %v971
      %v1925 = vunpack.c.h.b16 %v971
      %v1926 = vunpack.c.l.b16 %v972
      %v1927 = vunpack.c.l.b16 %v973
      %v1928 = vunpack.c.h.b16 %v973
      %v1929 = vunpack.c.l.b16 %v974
      %v1930 = vunpack.c.l.b16 %v975
      %v1931 = vunpack.c.h.b16 %v975
      %v1932 = vunpack.c.l.b16 %v976
      %v1933 = vunpack.c.l.b16 %v977
      %v1934 = vunpack.c.h.b16 %v977
      %v1935 = vunpack.c.l.b16 %v978
      %v1936 = vunpack.c.l.b16 %v979
      %v1937 = vunpack.c.h.b16 %v979
      %v1938 = vunpack.c.l.b16 %v980
      %v1939 = vunpack.c.l.b16 %v981
      %v1940 = vunpack.c.h.b16 %v981
      %v1941 = vunpack.c.l.b16 %v982
      %v1942 = vunpack.c.l.b16 %v983
      %v1943 = vunpack.c.h.b16 %v983
      %v1944 = vunpack.c.l.b16 %v984
      %v1945 = vunpack.c.l.b16 %v985
      %v1946 = vunpack.c.h.b16 %v985
      %v1947 = vunpack.c.l.b16 %v986
      %v1948 = vunpack.c.l.b16 %v987
      %v1949 = vunpack.c.h.b16 %v987
      %v1950 = vunpack.c.l.b16 %v988
      %v1951 = vunpack.c.l.b16 %v989
      %v1952 = vunpack.c.h.b16 %v989
      %v1953 = vunpack.c.l.b16 %v990
      %v1954 = vunpack.c.l.b16 %v991
      %v1955 = vunpack.c.h.b16 %v991
      %v1956 = vunpack.c.l.b16 %v992
      %v1957 = vunpack.c.l.b16 %v993
      %v1958 = vunpack.c.h.b16 %v993
      %v1959 = vunpack.c.l.b16 %v994
      %v1960 = vunpack.c.l.b16 %v995
      %v1961 = vunpack.c.h.b16 %v995
      %v1962 = vunpack.c.l.b16 %v996
      %v1963 = vunpack.c.l.b16 %v997
      %v1964 = vunpack.c.h.b16 %v997
      %v1965 = vunpack.c.l.b16 %v998
      %v1966 = vunpack.c.l.b16 %v999
      %v1967 = vunpack.c.h.b16 %v999
      %v1968 = vunpack.c.l.b16 %v1000
      %v1969 = vunpack.c.l.b16 %v1001
      %v1970 = vunpack.c.h.b16 %v1001
      %v1971 = vunpack.c.l.b16 %v1002
      %v1972 = vunpack.c.l.b16 %v1003
      %v1973 = vunpack.c.h.b16 %v1003
      %v1974 = vunpack.c.l.b16 %v1004
      %v1975 = vpack.c.b16 %v1882, %v1879
      %v1976 = vpack.c.b16 %v1883, %v1880
      %v1977 = vpack.c.b16 %v1884, %v1881
      %v1978 = vpack.c.b16 %v1888, %v1885
      %v1979 = vpack.c.b16 %v1889, %v1886
      %v1980 = vpack.c.b16 %v1890, %v1887
      %v1981 = vpack.c.b16 %v1894, %v1891
      %v1982 = vpack.c.b16 %v1895, %v1892
      %v1983 = vpack.c.b16 %v1896, %v1893
      %v1984 = vpack.c.b16 %v1900, %v1897
      %v1985 = vpack.c.b16 %v1901, %v1898
      %v1986 = vpack.c.b16 %v1902, %v1899
      %v1987 = vpack.c.b16 %v1906, %v1903
      %v1988 = vpack.c.b16 %v1907, %v1904
      %v1989 = vpack.c.b16 %v1908, %v1905
      %v1990 = vpack.c.b16 %v1912, %v1909
      %v1991 = vpack.c.b16 %v1913, %v1910
      %v1992 = vpack.c.b16 %v1914, %v1911
      %v1993 = vpack.c.b16 %v1918, %v1915
      %v1994 = vpack.c.b16 %v1919, %v1916
      %v1995 = vpack.c.b16 %v1920, %v1917
      %v1996 = vpack.c.b16 %v1924, %v1921
      %v1997 = vpack.c.b16 %v1925, %v1922
      %v1998 = vpack.c.b16 %v1926, %v1923
      %v1999 = vpack.c.b16 %v1930, %v1927
      %v2000 = vpack.c.b16 %v1931, %v1928
      %v2001 = vpack.c.b16 %v1932, %v1929
      %v2002 = vpack.c.b16 %v1936, %v1933
      %v2003 = vpack.c.b16 %v1937, %v1934
      %v2004 = vpack.c.b16 %v1938, %v1935
      %v2005 = vpack.c.b16 %v1942, %v1939
      %v2006 = vpack.c.b16 %v1943, %v1940
      %v2007 = vpack.c.b16 %v1944, %v1941
      %v2008 = vpack.c.b16 %v1948, %v1945
      %v2009 = vpack.c.b16 %v1949, %v1946
      %v2010 = vpack.c.b16 %v1950, %v1947
      %v2011 = vpack.c.b16 %v1954, %v1951
      %v2012 = vpack.c.b16 %v1955, %v1952
      %v2013 = vpack.c.b16 %v1956, %v1953
      %v2014 = vpack.c.b16 %v1960, %v1957
      %v2015 = vpack.c.b16 %v1961, %v1958
      %v2016 = vpack.c.b16 %v1962, %v1959
      %v2017 = vpack.c.b16 %v1966, %v1963
      %v2018 = vpack.c.b16 %v1967, %v1964
      %v2019 = vpack.c.b16 %v1968, %v1965
      %v2020 = vpack.c.b16 %v1972, %v1969
      %v2021 = vpack.c.b16 %v1973, %v1970
      %v2022 = vpack.c.b16 %v1974, %v1971
      %v2056 = vsel %vm1499, %v1977, 0
      %v2059 = vsel %vm1499, %v1980, 0
      %v2062 = vsel %vm1499, %v1983, 0
      %v2065 = vsel %vm1499, %v1986, 0
      %v2068 = vsel %vm1499, %v1989, 0
      %v2071 = vsel %vm1499, %v1992, 0
      %v2074 = vsel %vm1499, %v1995, 0
      %v2077 = vsel %vm1499, %v1998, 0
      %v2080 = vsel %vm1499, %v2001, 0
      %v2083 = vsel %vm1499, %v2004, 0
      %v2086 = vsel %vm1499, %v2007, 0
      %v2089 = vsel %vm1499, %v2010, 0
      %v2092 = vsel %vm1499, %v2013, 0
      %v2095 = vsel %vm1499, %v2016, 0
      %v2098 = vsel %vm1499, %v2019, 0
      %v2101 = vsel %vm1499, %v2022, 0
      %2103 = vmatpush.bf16.msra.mxu0 %v1148
      %2104 = vmatpush.bf16.msra.mxu0 %v1145
      %2105 = vmatpush.bf16.msra.mxu0 %v1142
      %2106 = vmatpush.bf16.msra.mxu0 %v1139
      %2107 = vmatpush.bf16.msra.mxu0 %v1136
      %2108 = vmatpush.bf16.msra.mxu0 %v1133
      %2109 = vmatpush.bf16.msra.mxu0 %v1130
      %2110 = vmatpush.bf16.msra.mxu0 %v1127
      %2111 = vmatmul.bf16.gmra.mxu0 %v1975
      %v2112 = vpop.f32.mrf.mxu0
      %v2113 = vadd.f32 %v1736, %v2112
      %v2114 = vpop.f32.mrf.mxu0
      %v2115 = vadd.f32 %v1738, %v2114
      %2116 = vmatmul.bf16.gmra.mxu0 %v1978
      %v2117 = vpop.f32.mrf.mxu0
      %v2118 = vadd.f32 %v1741, %v2117
      %v2119 = vpop.f32.mrf.mxu0
      %v2120 = vadd.f32 %v1743, %v2119
      %2121 = vmatmul.bf16.gmra.mxu0 %v1981
      %v2122 = vpop.f32.mrf.mxu0
      %v2123 = vadd.f32 %v1746, %v2122
      %v2124 = vpop.f32.mrf.mxu0
      %v2125 = vadd.f32 %v1748, %v2124
      %2126 = vmatmul.bf16.gmra.mxu0 %v1984
      %v2127 = vpop.f32.mrf.mxu0
      %v2128 = vadd.f32 %v1751, %v2127
      %v2129 = vpop.f32.mrf.mxu0
      %v2130 = vadd.f32 %v1753, %v2129
      %2131 = vmatmul.bf16.gmra.mxu0 %v1987
      %v2132 = vpop.f32.mrf.mxu0
      %v2133 = vadd.f32 %v1756, %v2132
      %v2134 = vpop.f32.mrf.mxu0
      %v2135 = vadd.f32 %v1758, %v2134
      %2136 = vmatmul.bf16.gmra.mxu0 %v1990
      %v2137 = vpop.f32.mrf.mxu0
      %v2138 = vadd.f32 %v1761, %v2137
      %v2139 = vpop.f32.mrf.mxu0
      %v2140 = vadd.f32 %v1763, %v2139
      %2141 = vmatmul.bf16.gmra.mxu0 %v1993
      %v2142 = vpop.f32.mrf.mxu0
      %v2143 = vadd.f32 %v1766, %v2142
      %v2144 = vpop.f32.mrf.mxu0
      %v2145 = vadd.f32 %v1768, %v2144
      %2146 = vmatmul.bf16.gmra.mxu0 %v1996
      %v2147 = vpop.f32.mrf.mxu0
      %v2148 = vadd.f32 %v1771, %v2147
      %v2149 = vpop.f32.mrf.mxu0
      %v2150 = vadd.f32 %v1773, %v2149
      %2151 = vmatmul.bf16.gmra.mxu0 %v1999
      %v2152 = vpop.f32.mrf.mxu0
      %v2153 = vadd.f32 %v1776, %v2152
      %v2154 = vpop.f32.mrf.mxu0
      %v2155 = vadd.f32 %v1778, %v2154
      %2156 = vmatmul.bf16.gmra.mxu0 %v2002
      %v2157 = vpop.f32.mrf.mxu0
      %v2158 = vadd.f32 %v1781, %v2157
      %v2159 = vpop.f32.mrf.mxu0
      %v2160 = vadd.f32 %v1783, %v2159
      %2161 = vmatmul.bf16.gmra.mxu0 %v2005
      %v2162 = vpop.f32.mrf.mxu0
      %v2163 = vadd.f32 %v1786, %v2162
      %v2164 = vpop.f32.mrf.mxu0
      %v2165 = vadd.f32 %v1788, %v2164
      %2166 = vmatmul.bf16.gmra.mxu0 %v2008
      %v2167 = vpop.f32.mrf.mxu0
      %v2168 = vadd.f32 %v1791, %v2167
      %v2169 = vpop.f32.mrf.mxu0
      %v2170 = vadd.f32 %v1793, %v2169
      %2171 = vmatmul.bf16.gmra.mxu0 %v2011
      %v2172 = vpop.f32.mrf.mxu0
      %v2173 = vadd.f32 %v1796, %v2172
      %v2174 = vpop.f32.mrf.mxu0
      %v2175 = vadd.f32 %v1798, %v2174
      %2176 = vmatmul.bf16.gmra.mxu0 %v2014
      %v2177 = vpop.f32.mrf.mxu0
      %v2178 = vadd.f32 %v1801, %v2177
      %v2179 = vpop.f32.mrf.mxu0
      %v2180 = vadd.f32 %v1803, %v2179
      %2181 = vmatmul.bf16.gmra.mxu0 %v2017
      %v2182 = vpop.f32.mrf.mxu0
      %v2183 = vadd.f32 %v1806, %v2182
      %v2184 = vpop.f32.mrf.mxu0
      %v2185 = vadd.f32 %v1808, %v2184
      %2186 = vmatmul.bf16.gmra.mxu0 %v2020
      %v2187 = vpop.f32.mrf.mxu0
      %v2188 = vadd.f32 %v1811, %v2187
      %v2189 = vpop.f32.mrf.mxu0
      %v2190 = vadd.f32 %v1813, %v2189
      %2191 = vdwg.mxu0
      %2192 = vmatpush.bf16.msra.mxu0 %v1172
      %2193 = vmatpush.bf16.msra.mxu0 %v1169
      %2194 = vmatpush.bf16.msra.mxu0 %v1166
      %2195 = vmatpush.bf16.msra.mxu0 %v1163
      %2196 = vmatpush.bf16.msra.mxu0 %v1160
      %2197 = vmatpush.bf16.msra.mxu0 %v1157
      %2198 = vmatpush.bf16.msra.mxu0 %v1154
      %2199 = vmatpush.bf16.msra.mxu0 %v1151
      %2200 = vmatmul.bf16.gmra.mxu0 %v1976
      %v2201 = vpop.f32.mrf.mxu0
      %v2202 = vadd.f32 %v2113, %v2201
      %v2203 = vpop.f32.mrf.mxu0
      %v2204 = vadd.f32 %v2115, %v2203
      %2205 = vmatmul.bf16.gmra.mxu0 %v1979
      %v2206 = vpop.f32.mrf.mxu0
      %v2207 = vadd.f32 %v2118, %v2206
      %v2208 = vpop.f32.mrf.mxu0
      %v2209 = vadd.f32 %v2120, %v2208
      %2210 = vmatmul.bf16.gmra.mxu0 %v1982
      %v2211 = vpop.f32.mrf.mxu0
      %v2212 = vadd.f32 %v2123, %v2211
      %v2213 = vpop.f32.mrf.mxu0
      %v2214 = vadd.f32 %v2125, %v2213
      %2215 = vmatmul.bf16.gmra.mxu0 %v1985
      %v2216 = vpop.f32.mrf.mxu0
      %v2217 = vadd.f32 %v2128, %v2216
      %v2218 = vpop.f32.mrf.mxu0
      %v2219 = vadd.f32 %v2130, %v2218
      %2220 = vmatmul.bf16.gmra.mxu0 %v1988
      %v2221 = vpop.f32.mrf.mxu0
      %v2222 = vadd.f32 %v2133, %v2221
      %v2223 = vpop.f32.mrf.mxu0
      %v2224 = vadd.f32 %v2135, %v2223
      %2225 = vmatmul.bf16.gmra.mxu0 %v1991
      %v2226 = vpop.f32.mrf.mxu0
      %v2227 = vadd.f32 %v2138, %v2226
      %v2228 = vpop.f32.mrf.mxu0
      %v2229 = vadd.f32 %v2140, %v2228
      %2230 = vmatmul.bf16.gmra.mxu0 %v1994
      %v2231 = vpop.f32.mrf.mxu0
      %v2232 = vadd.f32 %v2143, %v2231
      %v2233 = vpop.f32.mrf.mxu0
      %v2234 = vadd.f32 %v2145, %v2233
      %2235 = vmatmul.bf16.gmra.mxu0 %v1997
      %v2236 = vpop.f32.mrf.mxu0
      %v2237 = vadd.f32 %v2148, %v2236
      %v2238 = vpop.f32.mrf.mxu0
      %v2239 = vadd.f32 %v2150, %v2238
      %2240 = vmatmul.bf16.gmra.mxu0 %v2000
      %v2241 = vpop.f32.mrf.mxu0
      %v2242 = vadd.f32 %v2153, %v2241
      %v2243 = vpop.f32.mrf.mxu0
      %v2244 = vadd.f32 %v2155, %v2243
      %2245 = vmatmul.bf16.gmra.mxu0 %v2003
      %v2246 = vpop.f32.mrf.mxu0
      %v2247 = vadd.f32 %v2158, %v2246
      %v2248 = vpop.f32.mrf.mxu0
      %v2249 = vadd.f32 %v2160, %v2248
      %2250 = vmatmul.bf16.gmra.mxu0 %v2006
      %v2251 = vpop.f32.mrf.mxu0
      %v2252 = vadd.f32 %v2163, %v2251
      %v2253 = vpop.f32.mrf.mxu0
      %v2254 = vadd.f32 %v2165, %v2253
      %2255 = vmatmul.bf16.gmra.mxu0 %v2009
      %v2256 = vpop.f32.mrf.mxu0
      %v2257 = vadd.f32 %v2168, %v2256
      %v2258 = vpop.f32.mrf.mxu0
      %v2259 = vadd.f32 %v2170, %v2258
      %2260 = vmatmul.bf16.gmra.mxu0 %v2012
      %v2261 = vpop.f32.mrf.mxu0
      %v2262 = vadd.f32 %v2173, %v2261
      %v2263 = vpop.f32.mrf.mxu0
      %v2264 = vadd.f32 %v2175, %v2263
      %2265 = vmatmul.bf16.gmra.mxu0 %v2015
      %v2266 = vpop.f32.mrf.mxu0
      %v2267 = vadd.f32 %v2178, %v2266
      %v2268 = vpop.f32.mrf.mxu0
      %v2269 = vadd.f32 %v2180, %v2268
      %2270 = vmatmul.bf16.gmra.mxu0 %v2018
      %v2271 = vpop.f32.mrf.mxu0
      %v2272 = vadd.f32 %v2183, %v2271
      %v2273 = vpop.f32.mrf.mxu0
      %v2274 = vadd.f32 %v2185, %v2273
      %2275 = vmatmul.bf16.gmra.mxu0 %v2021
      %v2276 = vpop.f32.mrf.mxu0
      %v2277 = vadd.f32 %v2188, %v2276
      %v2278 = vpop.f32.mrf.mxu0
      %v2279 = vadd.f32 %v2190, %v2278
      %2280 = vdwg.mxu0
      %2281 = vmatpush.bf16.msra.mxu0 0
      %2282 = vmatpush.bf16.msra.mxu0 0
      %2283 = vmatpush.bf16.msra.mxu0 0
      %2284 = vmatpush.bf16.msra.mxu0 0
      %2285 = vmatpush.bf16.msra.mxu0 0
      %2286 = vmatpush.bf16.msra.mxu0 0
      %2287 = vmatpush.bf16.msra.mxu0 0
      %2288 = vmatpush.bf16.msra.mxu0 %v1175
      %2289 = vmatmul.bf16.gmra.mxu0 %v2056
      %v2290 = vpop.f32.mrf.mxu0
      %v2291 = vadd.f32 %v2202, %v2290
      %v2292 = vpop.f32.mrf.mxu0
      %v2293 = vadd.f32 %v2204, %v2292
      %2294 = vmatmul.bf16.gmra.mxu0 %v2059
      %v2295 = vpop.f32.mrf.mxu0
      %v2296 = vadd.f32 %v2207, %v2295
      %v2297 = vpop.f32.mrf.mxu0
      %v2298 = vadd.f32 %v2209, %v2297
      %2299 = vmatmul.bf16.gmra.mxu0 %v2062
      %v2300 = vpop.f32.mrf.mxu0
      %v2301 = vadd.f32 %v2212, %v2300
      %v2302 = vpop.f32.mrf.mxu0
      %v2303 = vadd.f32 %v2214, %v2302
      %2304 = vmatmul.bf16.gmra.mxu0 %v2065
      %v2305 = vpop.f32.mrf.mxu0
      %v2306 = vadd.f32 %v2217, %v2305
      %v2307 = vpop.f32.mrf.mxu0
      %v2308 = vadd.f32 %v2219, %v2307
      %2309 = vmatmul.bf16.gmra.mxu0 %v2068
      %v2310 = vpop.f32.mrf.mxu0
      %v2311 = vadd.f32 %v2222, %v2310
      %v2312 = vpop.f32.mrf.mxu0
      %v2313 = vadd.f32 %v2224, %v2312
      %2314 = vmatmul.bf16.gmra.mxu0 %v2071
      %v2315 = vpop.f32.mrf.mxu0
      %v2316 = vadd.f32 %v2227, %v2315
      %v2317 = vpop.f32.mrf.mxu0
      %v2318 = vadd.f32 %v2229, %v2317
      %2319 = vmatmul.bf16.gmra.mxu0 %v2074
      %v2320 = vpop.f32.mrf.mxu0
      %v2321 = vadd.f32 %v2232, %v2320
      %v2322 = vpop.f32.mrf.mxu0
      %v2323 = vadd.f32 %v2234, %v2322
      %2324 = vmatmul.bf16.gmra.mxu0 %v2077
      %v2325 = vpop.f32.mrf.mxu0
      %v2326 = vadd.f32 %v2237, %v2325
      %v2327 = vpop.f32.mrf.mxu0
      %v2328 = vadd.f32 %v2239, %v2327
      %2329 = vmatmul.bf16.gmra.mxu0 %v2080
      %v2330 = vpop.f32.mrf.mxu0
      %v2331 = vadd.f32 %v2242, %v2330
      %v2332 = vpop.f32.mrf.mxu0
      %v2333 = vadd.f32 %v2244, %v2332
      %2334 = vmatmul.bf16.gmra.mxu0 %v2083
      %v2335 = vpop.f32.mrf.mxu0
      %v2336 = vadd.f32 %v2247, %v2335
      %v2337 = vpop.f32.mrf.mxu0
      %v2338 = vadd.f32 %v2249, %v2337
      %2339 = vmatmul.bf16.gmra.mxu0 %v2086
      %v2340 = vpop.f32.mrf.mxu0
      %v2341 = vadd.f32 %v2252, %v2340
      %v2342 = vpop.f32.mrf.mxu0
      %v2343 = vadd.f32 %v2254, %v2342
      %2344 = vmatmul.bf16.gmra.mxu0 %v2089
      %v2345 = vpop.f32.mrf.mxu0
      %v2346 = vadd.f32 %v2257, %v2345
      %v2347 = vpop.f32.mrf.mxu0
      %v2348 = vadd.f32 %v2259, %v2347
      %2349 = vmatmul.bf16.gmra.mxu0 %v2092
      %v2350 = vpop.f32.mrf.mxu0
      %v2351 = vadd.f32 %v2262, %v2350
      %v2352 = vpop.f32.mrf.mxu0
      %v2353 = vadd.f32 %v2264, %v2352
      %2354 = vmatmul.bf16.gmra.mxu0 %v2095
      %v2355 = vpop.f32.mrf.mxu0
      %v2356 = vadd.f32 %v2267, %v2355
      %v2357 = vpop.f32.mrf.mxu0
      %v2358 = vadd.f32 %v2269, %v2357
      %2359 = vmatmul.bf16.gmra.mxu0 %v2098
      %v2360 = vpop.f32.mrf.mxu0
      %v2361 = vadd.f32 %v2272, %v2360
      %v2362 = vpop.f32.mrf.mxu0
      %v2363 = vadd.f32 %v2274, %v2362
      %2364 = vmatmul.bf16.gmra.mxu0 %v2101
      %v2365 = vpop.f32.mrf.mxu0
      %v2366 = vadd.f32 %v2277, %v2365
      %v2367 = vpop.f32.mrf.mxu0
      %v2368 = vadd.f32 %v2279, %v2367
      %2369 = vdwg.mxu0
      %s2370 = scalar_lea.vmem %s3, 768
      %v2371 = vld [vmem:[%s2370] sm:$0xff]
      %v2372 = vld [vmem:[%s2370 + $0x8] sm:$0xf]
      %v2373 = vld [vmem:[%s2370 + $0xc] sm:$0xff]
      %v2374 = vld [vmem:[%s2370 + $0x14] sm:$0xf]
      %v2375 = vld [vmem:[%s2370 + $0x18] sm:$0xff]
      %v2376 = vld [vmem:[%s2370 + $0x20] sm:$0xf]
      %v2377 = vld [vmem:[%s2370 + $0x24] sm:$0xff]
      %v2378 = vld [vmem:[%s2370 + $0x2c] sm:$0xf]
      %v2379 = vld [vmem:[%s2370 + $0x30] sm:$0xff]
      %v2380 = vld [vmem:[%s2370 + $0x38] sm:$0xf]
      %v2381 = vld [vmem:[%s2370 + $0x3c] sm:$0xff]
      %v2382 = vld [vmem:[%s2370 + $0x44] sm:$0xf]
      %v2383 = vld [vmem:[%s2370 + $0x48] sm:$0xff]
      %v2384 = vld [vmem:[%s2370 + $0x50] sm:$0xf]
      %v2385 = vld [vmem:[%s2370 + $0x54] sm:$0xff]
      %v2386 = vld [vmem:[%s2370 + $0x5c] sm:$0xf]
      %v2387 = vld [vmem:[%s2370 + $0x60] sm:$0xff]
      %v2388 = vld [vmem:[%s2370 + $0x68] sm:$0xf]
      %v2389 = vld [vmem:[%s2370 + $0x6c] sm:$0xff]
      %v2390 = vld [vmem:[%s2370 + $0x74] sm:$0xf]
      %v2391 = vld [vmem:[%s2370 + $0x78] sm:$0xff]
      %v2392 = vld [vmem:[%s2370 + $0x80] sm:$0xf]
      %v2393 = vld [vmem:[%s2370 + $0x84] sm:$0xff]
      %v2394 = vld [vmem:[%s2370 + $0x8c] sm:$0xf]
      %v2395 = vld [vmem:[%s2370 + $0x90] sm:$0xff]
      %v2396 = vld [vmem:[%s2370 + $0x98] sm:$0xf]
      %v2397 = vld [vmem:[%s2370 + $0x9c] sm:$0xff]
      %v2398 = vld [vmem:[%s2370 + $0xa4] sm:$0xf]
      %v2399 = vld [vmem:[%s2370 + $0xa8] sm:$0xff]
      %v2400 = vld [vmem:[%s2370 + $0xb0] sm:$0xf]
      %v2401 = vld [vmem:[%s2370 + $0xb4] sm:$0xff]
      %v2402 = vld [vmem:[%s2370 + $0xbc] sm:$0xf]
      %v2403 = vld [vmem:[%s2370 + $0xc0] sm:$0xff]
      %v2404 = vld [vmem:[%s2370 + $0xc8] sm:$0xf]
      %v2405 = vld [vmem:[%s2370 + $0xcc] sm:$0xff]
      %v2406 = vld [vmem:[%s2370 + $0xd4] sm:$0xf]
      %v2407 = vld [vmem:[%s2370 + $0xd8] sm:$0xff]
      %v2408 = vld [vmem:[%s2370 + $0xe0] sm:$0xf]
      %v2409 = vld [vmem:[%s2370 + $0xe4] sm:$0xff]
      %v2410 = vld [vmem:[%s2370 + $0xec] sm:$0xf]
      %v2411 = vld [vmem:[%s2370 + $0xf0] sm:$0xff]
      %v2412 = vld [vmem:[%s2370 + $0xf8] sm:$0xf]
      %v2413 = vld [vmem:[%s2370 + $0xfc] sm:$0xff]
      %v2414 = vld [vmem:[%s2370 + $0x104] sm:$0xf]
      %v2415 = vld [vmem:[%s2370 + $0x108] sm:$0xff]
      %v2416 = vld [vmem:[%s2370 + $0x110] sm:$0xf]
      %v2417 = vld [vmem:[%s2370 + $0x114] sm:$0xff]
      %v2418 = vld [vmem:[%s2370 + $0x11c] sm:$0xf]
      %v2419 = vld [vmem:[%s2370 + $0x120] sm:$0xff]
      %v2420 = vld [vmem:[%s2370 + $0x128] sm:$0xf]
      %v2421 = vld [vmem:[%s2370 + $0x12c] sm:$0xff]
      %v2422 = vld [vmem:[%s2370 + $0x134] sm:$0xf]
      %v2423 = vld [vmem:[%s2370 + $0x138] sm:$0xff]
      %v2424 = vld [vmem:[%s2370 + $0x140] sm:$0xf]
      %v2425 = vld [vmem:[%s2370 + $0x144] sm:$0xff]
      %v2426 = vld [vmem:[%s2370 + $0x14c] sm:$0xf]
      %v2427 = vld [vmem:[%s2370 + $0x150] sm:$0xff]
      %v2428 = vld [vmem:[%s2370 + $0x158] sm:$0xf]
      %v2429 = vld [vmem:[%s2370 + $0x15c] sm:$0xff]
      %v2430 = vld [vmem:[%s2370 + $0x164] sm:$0xf]
      %v2431 = vld [vmem:[%s2370 + $0x168] sm:$0xff]
      %v2432 = vld [vmem:[%s2370 + $0x170] sm:$0xf]
      %v2433 = vld [vmem:[%s2370 + $0x174] sm:$0xff]
      %v2434 = vld [vmem:[%s2370 + $0x17c] sm:$0xf]
      %2435 = vrot.lane.b32.xlu0 %v1073, 127
      %v2436 = vpop.permute.xlu0 %2435
      %2437 = vrot.lane.b32.xlu0 %v1074, 127
      %v2438 = vpop.permute.xlu0 %2437
      %2439 = vrot.lane.b32.xlu0 %v1075, 127
      %v2440 = vpop.permute.xlu0 %2439
      %2441 = vrot.lane.b32.xlu0 %v1076, 127
      %v2442 = vpop.permute.xlu0 %2441
      %2443 = vrot.lane.b32.xlu0 %v1077, 127
      %v2444 = vpop.permute.xlu0 %2443
      %2445 = vrot.lane.b32.xlu0 %v1078, 127
      %v2446 = vpop.permute.xlu0 %2445
      %2447 = vrot.lane.b32.xlu0 %v1079, 127
      %v2448 = vpop.permute.xlu0 %2447
      %2449 = vrot.lane.b32.xlu0 %v1080, 127
      %v2450 = vpop.permute.xlu0 %2449
      %2451 = vrot.lane.b32.xlu0 %v1081, 127
      %v2452 = vpop.permute.xlu0 %2451
      %2453 = vrot.lane.b32.xlu0 %v1082, 127
      %v2454 = vpop.permute.xlu0 %2453
      %2455 = vrot.lane.b32.xlu0 %v1083, 127
      %v2456 = vpop.permute.xlu0 %2455
      %2457 = vrot.lane.b32.xlu0 %v1084, 127
      %v2458 = vpop.permute.xlu0 %2457
      %2459 = vrot.lane.b32.xlu0 %v1085, 127
      %v2460 = vpop.permute.xlu0 %2459
      %2461 = vrot.lane.b32.xlu0 %v1086, 127
      %v2462 = vpop.permute.xlu0 %2461
      %2463 = vrot.lane.b32.xlu0 %v1087, 127
      %v2464 = vpop.permute.xlu0 %2463
      %2465 = vrot.lane.b32.xlu0 %v1088, 127
      %v2466 = vpop.permute.xlu0 %2465
      %2467 = vrot.lane.b32.xlu0 %v1089, 127
      %v2468 = vpop.permute.xlu0 %2467
      %vm2469 = vcmask 269312
      %v2471 = vsel %vm2469, %v2436, 0
      %v2474 = vsel %vm2469, %v2438, 0
      %v2477 = vsel %vm2469, %v2440, 0
      %v2480 = vsel %vm2469, %v2442, 0
      %v2483 = vsel %vm2469, %v2444, 0
      %v2486 = vsel %vm2469, %v2446, 0
      %v2489 = vsel %vm2469, %v2448, 0
      %v2492 = vsel %vm2469, %v2450, 0
      %v2495 = vsel %vm2469, %v2452, 0
      %v2498 = vsel %vm2469, %v2454, 0
      %v2501 = vsel %vm2469, %v2456, 0
      %v2504 = vsel %vm2469, %v2458, 0
      %v2507 = vsel %vm2469, %v2460, 0
      %v2510 = vsel %vm2469, %v2462, 0
      %v2513 = vsel %vm2469, %v2464, 0
      %v2516 = vsel %vm2469, %v2466, 0
      %v2519 = vsel %vm2469, %v2468, 0
      %v2585 = vunpack.c.l.b16 %v2371
      %v2586 = vunpack.c.h.b16 %v2371
      %v2587 = vunpack.c.l.b16 %v2372
      %v2588 = vunpack.c.l.b16 %v2373
      %v2589 = vunpack.c.h.b16 %v2373
      %v2590 = vunpack.c.l.b16 %v2374
      %v2591 = vunpack.c.l.b16 %v2375
      %v2592 = vunpack.c.h.b16 %v2375
      %v2593 = vunpack.c.l.b16 %v2376
      %v2594 = vunpack.c.l.b16 %v2377
      %v2595 = vunpack.c.h.b16 %v2377
      %v2596 = vunpack.c.l.b16 %v2378
      %v2597 = vunpack.c.l.b16 %v2379
      %v2598 = vunpack.c.h.b16 %v2379
      %v2599 = vunpack.c.l.b16 %v2380
      %v2600 = vunpack.c.l.b16 %v2381
      %v2601 = vunpack.c.h.b16 %v2381
      %v2602 = vunpack.c.l.b16 %v2382
      %v2603 = vunpack.c.l.b16 %v2383
      %v2604 = vunpack.c.h.b16 %v2383
      %v2605 = vunpack.c.l.b16 %v2384
      %v2606 = vunpack.c.l.b16 %v2385
      %v2607 = vunpack.c.h.b16 %v2385
      %v2608 = vunpack.c.l.b16 %v2386
      %v2609 = vunpack.c.l.b16 %v2387
      %v2610 = vunpack.c.h.b16 %v2387
      %v2611 = vunpack.c.l.b16 %v2388
      %v2612 = vunpack.c.l.b16 %v2389
      %v2613 = vunpack.c.h.b16 %v2389
      %v2614 = vunpack.c.l.b16 %v2390
      %v2615 = vunpack.c.l.b16 %v2391
      %v2616 = vunpack.c.h.b16 %v2391
      %v2617 = vunpack.c.l.b16 %v2392
      %v2618 = vunpack.c.l.b16 %v2393
      %v2619 = vunpack.c.h.b16 %v2393
      %v2620 = vunpack.c.l.b16 %v2394
      %v2621 = vunpack.c.l.b16 %v2395
      %v2622 = vunpack.c.h.b16 %v2395
      %v2623 = vunpack.c.l.b16 %v2396
      %v2624 = vunpack.c.l.b16 %v2397
      %v2625 = vunpack.c.h.b16 %v2397
      %v2626 = vunpack.c.l.b16 %v2398
      %v2627 = vunpack.c.l.b16 %v2399
      %v2628 = vunpack.c.h.b16 %v2399
      %v2629 = vunpack.c.l.b16 %v2400
      %v2630 = vunpack.c.l.b16 %v2401
      %v2631 = vunpack.c.h.b16 %v2401
      %v2632 = vunpack.c.l.b16 %v2402
      %v2633 = vunpack.c.l.b16 %v2403
      %v2634 = vunpack.c.h.b16 %v2403
      %v2635 = vunpack.c.l.b16 %v2404
      %v2636 = vunpack.c.l.b16 %v2405
      %v2637 = vunpack.c.h.b16 %v2405
      %v2638 = vunpack.c.l.b16 %v2406
      %v2639 = vunpack.c.l.b16 %v2407
      %v2640 = vunpack.c.h.b16 %v2407
      %v2641 = vunpack.c.l.b16 %v2408
      %v2642 = vunpack.c.l.b16 %v2409
      %v2643 = vunpack.c.h.b16 %v2409
      %v2644 = vunpack.c.l.b16 %v2410
      %v2645 = vunpack.c.l.b16 %v2411
      %v2646 = vunpack.c.h.b16 %v2411
      %v2647 = vunpack.c.l.b16 %v2412
      %v2648 = vunpack.c.l.b16 %v2413
      %v2649 = vunpack.c.h.b16 %v2413
      %v2650 = vunpack.c.l.b16 %v2414
      %v2651 = vunpack.c.l.b16 %v2415
      %v2652 = vunpack.c.h.b16 %v2415
      %v2653 = vunpack.c.l.b16 %v2416
      %v2654 = vunpack.c.l.b16 %v2417
      %v2655 = vunpack.c.h.b16 %v2417
      %v2656 = vunpack.c.l.b16 %v2418
      %v2657 = vunpack.c.l.b16 %v2419
      %v2658 = vunpack.c.h.b16 %v2419
      %v2659 = vunpack.c.l.b16 %v2420
      %v2660 = vunpack.c.l.b16 %v2421
      %v2661 = vunpack.c.h.b16 %v2421
      %v2662 = vunpack.c.l.b16 %v2422
      %v2663 = vunpack.c.l.b16 %v2423
      %v2664 = vunpack.c.h.b16 %v2423
      %v2665 = vunpack.c.l.b16 %v2424
      %v2666 = vunpack.c.l.b16 %v2425
      %v2667 = vunpack.c.h.b16 %v2425
      %v2668 = vunpack.c.l.b16 %v2426
      %v2669 = vunpack.c.l.b16 %v2427
      %v2670 = vunpack.c.h.b16 %v2427
      %v2671 = vunpack.c.l.b16 %v2428
      %v2672 = vunpack.c.l.b16 %v2429
      %v2673 = vunpack.c.h.b16 %v2429
      %v2674 = vunpack.c.l.b16 %v2430
      %v2675 = vunpack.c.l.b16 %v2431
      %v2676 = vunpack.c.h.b16 %v2431
      %v2677 = vunpack.c.l.b16 %v2432
      %v2678 = vunpack.c.l.b16 %v2433
      %v2679 = vunpack.c.h.b16 %v2433
      %v2680 = vunpack.c.l.b16 %v2434
      %v2681 = vpack.c.b16 %v2588, %v2585
      %v2682 = vpack.c.b16 %v2589, %v2586
      %v2683 = vpack.c.b16 %v2590, %v2587
      %v2684 = vpack.c.b16 %v2594, %v2591
      %v2685 = vpack.c.b16 %v2595, %v2592
      %v2686 = vpack.c.b16 %v2596, %v2593
      %v2687 = vpack.c.b16 %v2600, %v2597
      %v2688 = vpack.c.b16 %v2601, %v2598
      %v2689 = vpack.c.b16 %v2602, %v2599
      %v2690 = vpack.c.b16 %v2606, %v2603
      %v2691 = vpack.c.b16 %v2607, %v2604
      %v2692 = vpack.c.b16 %v2608, %v2605
      %v2693 = vpack.c.b16 %v2612, %v2609
      %v2694 = vpack.c.b16 %v2613, %v2610
      %v2695 = vpack.c.b16 %v2614, %v2611
      %v2696 = vpack.c.b16 %v2618, %v2615
      %v2697 = vpack.c.b16 %v2619, %v2616
      %v2698 = vpack.c.b16 %v2620, %v2617
      %v2699 = vpack.c.b16 %v2624, %v2621
      %v2700 = vpack.c.b16 %v2625, %v2622
      %v2701 = vpack.c.b16 %v2626, %v2623
      %v2702 = vpack.c.b16 %v2630, %v2627
      %v2703 = vpack.c.b16 %v2631, %v2628
      %v2704 = vpack.c.b16 %v2632, %v2629
      %v2705 = vpack.c.b16 %v2636, %v2633
      %v2706 = vpack.c.b16 %v2637, %v2634
      %v2707 = vpack.c.b16 %v2638, %v2635
      %v2708 = vpack.c.b16 %v2642, %v2639
      %v2709 = vpack.c.b16 %v2643, %v2640
      %v2710 = vpack.c.b16 %v2644, %v2641
      %v2711 = vpack.c.b16 %v2648, %v2645
      %v2712 = vpack.c.b16 %v2649, %v2646
      %v2713 = vpack.c.b16 %v2650, %v2647
      %v2714 = vpack.c.b16 %v2654, %v2651
      %v2715 = vpack.c.b16 %v2655, %v2652
      %v2716 = vpack.c.b16 %v2656, %v2653
      %v2717 = vpack.c.b16 %v2660, %v2657
      %v2718 = vpack.c.b16 %v2661, %v2658
      %v2719 = vpack.c.b16 %v2662, %v2659
      %v2720 = vpack.c.b16 %v2666, %v2663
      %v2721 = vpack.c.b16 %v2667, %v2664
      %v2722 = vpack.c.b16 %v2668, %v2665
      %v2723 = vpack.c.b16 %v2672, %v2669
      %v2724 = vpack.c.b16 %v2673, %v2670
      %v2725 = vpack.c.b16 %v2674, %v2671
      %v2726 = vpack.c.b16 %v2678, %v2675
      %v2727 = vpack.c.b16 %v2679, %v2676
      %v2728 = vpack.c.b16 %v2680, %v2677
      %v2762 = vsel %vm1499, %v2683, 0
      %v2765 = vsel %vm1499, %v2686, 0
      %v2768 = vsel %vm1499, %v2689, 0
      %v2771 = vsel %vm1499, %v2692, 0
      %v2774 = vsel %vm1499, %v2695, 0
      %v2777 = vsel %vm1499, %v2698, 0
      %v2780 = vsel %vm1499, %v2701, 0
      %v2783 = vsel %vm1499, %v2704, 0
      %v2786 = vsel %vm1499, %v2707, 0
      %v2789 = vsel %vm1499, %v2710, 0
      %v2792 = vsel %vm1499, %v2713, 0
      %v2795 = vsel %vm1499, %v2716, 0
      %v2798 = vsel %vm1499, %v2719, 0
      %v2801 = vsel %vm1499, %v2722, 0
      %v2804 = vsel %vm1499, %v2725, 0
      %v2807 = vsel %vm1499, %v2728, 0
      %2809 = vmatpush.bf16.msra.mxu0 %v2492
      %2810 = vmatpush.bf16.msra.mxu0 %v2489
      %2811 = vmatpush.bf16.msra.mxu0 %v2486
      %2812 = vmatpush.bf16.msra.mxu0 %v2483
      %2813 = vmatpush.bf16.msra.mxu0 %v2480
      %2814 = vmatpush.bf16.msra.mxu0 %v2477
      %2815 = vmatpush.bf16.msra.mxu0 %v2474
      %2816 = vmatpush.bf16.msra.mxu0 %v2471
      %2817 = vmatmul.bf16.gmra.mxu0 %v2681
      %v2818 = vpop.f32.mrf.mxu0
      %v2819 = vadd.f32 0.0, %v2818
      %v2820 = vpop.f32.mrf.mxu0
      %v2821 = vadd.f32 0.0, %v2820
      %2822 = vmatmul.bf16.gmra.mxu0 %v2684
      %v2823 = vpop.f32.mrf.mxu0
      %v2824 = vadd.f32 0.0, %v2823
      %v2825 = vpop.f32.mrf.mxu0
      %v2826 = vadd.f32 0.0, %v2825
      %2827 = vmatmul.bf16.gmra.mxu0 %v2687
      %v2828 = vpop.f32.mrf.mxu0
      %v2829 = vadd.f32 0.0, %v2828
      %v2830 = vpop.f32.mrf.mxu0
      %v2831 = vadd.f32 0.0, %v2830
      %2832 = vmatmul.bf16.gmra.mxu0 %v2690
      %v2833 = vpop.f32.mrf.mxu0
      %v2834 = vadd.f32 0.0, %v2833
      %v2835 = vpop.f32.mrf.mxu0
      %v2836 = vadd.f32 0.0, %v2835
      %2837 = vmatmul.bf16.gmra.mxu0 %v2693
      %v2838 = vpop.f32.mrf.mxu0
      %v2839 = vadd.f32 0.0, %v2838
      %v2840 = vpop.f32.mrf.mxu0
      %v2841 = vadd.f32 0.0, %v2840
      %2842 = vmatmul.bf16.gmra.mxu0 %v2696
      %v2843 = vpop.f32.mrf.mxu0
      %v2844 = vadd.f32 0.0, %v2843
      %v2845 = vpop.f32.mrf.mxu0
      %v2846 = vadd.f32 0.0, %v2845
      %2847 = vmatmul.bf16.gmra.mxu0 %v2699
      %v2848 = vpop.f32.mrf.mxu0
      %v2849 = vadd.f32 0.0, %v2848
      %v2850 = vpop.f32.mrf.mxu0
      %v2851 = vadd.f32 0.0, %v2850
      %2852 = vmatmul.bf16.gmra.mxu0 %v2702
      %v2853 = vpop.f32.mrf.mxu0
      %v2854 = vadd.f32 0.0, %v2853
      %v2855 = vpop.f32.mrf.mxu0
      %v2856 = vadd.f32 0.0, %v2855
      %2857 = vmatmul.bf16.gmra.mxu0 %v2705
      %v2858 = vpop.f32.mrf.mxu0
      %v2859 = vadd.f32 0.0, %v2858
      %v2860 = vpop.f32.mrf.mxu0
      %v2861 = vadd.f32 0.0, %v2860
      %2862 = vmatmul.bf16.gmra.mxu0 %v2708
      %v2863 = vpop.f32.mrf.mxu0
      %v2864 = vadd.f32 0.0, %v2863
      %v2865 = vpop.f32.mrf.mxu0
      %v2866 = vadd.f32 0.0, %v2865
      %2867 = vmatmul.bf16.gmra.mxu0 %v2711
      %v2868 = vpop.f32.mrf.mxu0
      %v2869 = vadd.f32 0.0, %v2868
      %v2870 = vpop.f32.mrf.mxu0
      %v2871 = vadd.f32 0.0, %v2870
      %2872 = vmatmul.bf16.gmra.mxu0 %v2714
      %v2873 = vpop.f32.mrf.mxu0
      %v2874 = vadd.f32 0.0, %v2873
      %v2875 = vpop.f32.mrf.mxu0
      %v2876 = vadd.f32 0.0, %v2875
      %2877 = vmatmul.bf16.gmra.mxu0 %v2717
      %v2878 = vpop.f32.mrf.mxu0
      %v2879 = vadd.f32 0.0, %v2878
      %v2880 = vpop.f32.mrf.mxu0
      %v2881 = vadd.f32 0.0, %v2880
      %2882 = vmatmul.bf16.gmra.mxu0 %v2720
      %v2883 = vpop.f32.mrf.mxu0
      %v2884 = vadd.f32 0.0, %v2883
      %v2885 = vpop.f32.mrf.mxu0
      %v2886 = vadd.f32 0.0, %v2885
      %2887 = vmatmul.bf16.gmra.mxu0 %v2723
      %v2888 = vpop.f32.mrf.mxu0
      %v2889 = vadd.f32 0.0, %v2888
      %v2890 = vpop.f32.mrf.mxu0
      %v2891 = vadd.f32 0.0, %v2890
      %2892 = vmatmul.bf16.gmra.mxu0 %v2726
      %v2893 = vpop.f32.mrf.mxu0
      %v2894 = vadd.f32 0.0, %v2893
      %v2895 = vpop.f32.mrf.mxu0
      %v2896 = vadd.f32 0.0, %v2895
      %2897 = vdwg.mxu0
      %2898 = vmatpush.bf16.msra.mxu0 %v2516
      %2899 = vmatpush.bf16.msra.mxu0 %v2513
      %2900 = vmatpush.bf16.msra.mxu0 %v2510
      %2901 = vmatpush.bf16.msra.mxu0 %v2507
      %2902 = vmatpush.bf16.msra.mxu0 %v2504
      %2903 = vmatpush.bf16.msra.mxu0 %v2501
      %2904 = vmatpush.bf16.msra.mxu0 %v2498
      %2905 = vmatpush.bf16.msra.mxu0 %v2495
      %2906 = vmatmul.bf16.gmra.mxu0 %v2682
      %v2907 = vpop.f32.mrf.mxu0
      %v2908 = vadd.f32 %v2819, %v2907
      %v2909 = vpop.f32.mrf.mxu0
      %v2910 = vadd.f32 %v2821, %v2909
      %2911 = vmatmul.bf16.gmra.mxu0 %v2685
      %v2912 = vpop.f32.mrf.mxu0
      %v2913 = vadd.f32 %v2824, %v2912
      %v2914 = vpop.f32.mrf.mxu0
      %v2915 = vadd.f32 %v2826, %v2914
      %2916 = vmatmul.bf16.gmra.mxu0 %v2688
      %v2917 = vpop.f32.mrf.mxu0
      %v2918 = vadd.f32 %v2829, %v2917
      %v2919 = vpop.f32.mrf.mxu0
      %v2920 = vadd.f32 %v2831, %v2919
      %2921 = vmatmul.bf16.gmra.mxu0 %v2691
      %v2922 = vpop.f32.mrf.mxu0
      %v2923 = vadd.f32 %v2834, %v2922
      %v2924 = vpop.f32.mrf.mxu0
      %v2925 = vadd.f32 %v2836, %v2924
      %2926 = vmatmul.bf16.gmra.mxu0 %v2694
      %v2927 = vpop.f32.mrf.mxu0
      %v2928 = vadd.f32 %v2839, %v2927
      %v2929 = vpop.f32.mrf.mxu0
      %v2930 = vadd.f32 %v2841, %v2929
      %2931 = vmatmul.bf16.gmra.mxu0 %v2697
      %v2932 = vpop.f32.mrf.mxu0
      %v2933 = vadd.f32 %v2844, %v2932
      %v2934 = vpop.f32.mrf.mxu0
      %v2935 = vadd.f32 %v2846, %v2934
      %2936 = vmatmul.bf16.gmra.mxu0 %v2700
      %v2937 = vpop.f32.mrf.mxu0
      %v2938 = vadd.f32 %v2849, %v2937
      %v2939 = vpop.f32.mrf.mxu0
      %v2940 = vadd.f32 %v2851, %v2939
      %2941 = vmatmul.bf16.gmra.mxu0 %v2703
      %v2942 = vpop.f32.mrf.mxu0
      %v2943 = vadd.f32 %v2854, %v2942
      %v2944 = vpop.f32.mrf.mxu0
      %v2945 = vadd.f32 %v2856, %v2944
      %2946 = vmatmul.bf16.gmra.mxu0 %v2706
      %v2947 = vpop.f32.mrf.mxu0
      %v2948 = vadd.f32 %v2859, %v2947
      %v2949 = vpop.f32.mrf.mxu0
      %v2950 = vadd.f32 %v2861, %v2949
      %2951 = vmatmul.bf16.gmra.mxu0 %v2709
      %v2952 = vpop.f32.mrf.mxu0
      %v2953 = vadd.f32 %v2864, %v2952
      %v2954 = vpop.f32.mrf.mxu0
      %v2955 = vadd.f32 %v2866, %v2954
      %2956 = vmatmul.bf16.gmra.mxu0 %v2712
      %v2957 = vpop.f32.mrf.mxu0
      %v2958 = vadd.f32 %v2869, %v2957
      %v2959 = vpop.f32.mrf.mxu0
      %v2960 = vadd.f32 %v2871, %v2959
      %2961 = vmatmul.bf16.gmra.mxu0 %v2715
      %v2962 = vpop.f32.mrf.mxu0
      %v2963 = vadd.f32 %v2874, %v2962
      %v2964 = vpop.f32.mrf.mxu0
      %v2965 = vadd.f32 %v2876, %v2964
      %2966 = vmatmul.bf16.gmra.mxu0 %v2718
      %v2967 = vpop.f32.mrf.mxu0
      %v2968 = vadd.f32 %v2879, %v2967
      %v2969 = vpop.f32.mrf.mxu0
      %v2970 = vadd.f32 %v2881, %v2969
      %2971 = vmatmul.bf16.gmra.mxu0 %v2721
      %v2972 = vpop.f32.mrf.mxu0
      %v2973 = vadd.f32 %v2884, %v2972
      %v2974 = vpop.f32.mrf.mxu0
      %v2975 = vadd.f32 %v2886, %v2974
      %2976 = vmatmul.bf16.gmra.mxu0 %v2724
      %v2977 = vpop.f32.mrf.mxu0
      %v2978 = vadd.f32 %v2889, %v2977
      %v2979 = vpop.f32.mrf.mxu0
      %v2980 = vadd.f32 %v2891, %v2979
      %2981 = vmatmul.bf16.gmra.mxu0 %v2727
      %v2982 = vpop.f32.mrf.mxu0
      %v2983 = vadd.f32 %v2894, %v2982
      %v2984 = vpop.f32.mrf.mxu0
      %v2985 = vadd.f32 %v2896, %v2984
      %2986 = vdwg.mxu0
      %2987 = vmatpush.bf16.msra.mxu0 0
      %2988 = vmatpush.bf16.msra.mxu0 0
      %2989 = vmatpush.bf16.msra.mxu0 0
      %2990 = vmatpush.bf16.msra.mxu0 0
      %2991 = vmatpush.bf16.msra.mxu0 0
      %2992 = vmatpush.bf16.msra.mxu0 0
      %2993 = vmatpush.bf16.msra.mxu0 0
      %2994 = vmatpush.bf16.msra.mxu0 %v2519
      %2995 = vmatmul.bf16.gmra.mxu0 %v2762
      %v2996 = vpop.f32.mrf.mxu0
      %v2997 = vadd.f32 %v2908, %v2996
      %v2998 = vpop.f32.mrf.mxu0
      %v2999 = vadd.f32 %v2910, %v2998
      %3000 = vmatmul.bf16.gmra.mxu0 %v2765
      %v3001 = vpop.f32.mrf.mxu0
      %v3002 = vadd.f32 %v2913, %v3001
      %v3003 = vpop.f32.mrf.mxu0
      %v3004 = vadd.f32 %v2915, %v3003
      %3005 = vmatmul.bf16.gmra.mxu0 %v2768
      %v3006 = vpop.f32.mrf.mxu0
      %v3007 = vadd.f32 %v2918, %v3006
      %v3008 = vpop.f32.mrf.mxu0
      %v3009 = vadd.f32 %v2920, %v3008
      %3010 = vmatmul.bf16.gmra.mxu0 %v2771
      %v3011 = vpop.f32.mrf.mxu0
      %v3012 = vadd.f32 %v2923, %v3011
      %v3013 = vpop.f32.mrf.mxu0
      %v3014 = vadd.f32 %v2925, %v3013
      %3015 = vmatmul.bf16.gmra.mxu0 %v2774
      %v3016 = vpop.f32.mrf.mxu0
      %v3017 = vadd.f32 %v2928, %v3016
      %v3018 = vpop.f32.mrf.mxu0
      %v3019 = vadd.f32 %v2930, %v3018
      %3020 = vmatmul.bf16.gmra.mxu0 %v2777
      %v3021 = vpop.f32.mrf.mxu0
      %v3022 = vadd.f32 %v2933, %v3021
      %v3023 = vpop.f32.mrf.mxu0
      %v3024 = vadd.f32 %v2935, %v3023
      %3025 = vmatmul.bf16.gmra.mxu0 %v2780
      %v3026 = vpop.f32.mrf.mxu0
      %v3027 = vadd.f32 %v2938, %v3026
      %v3028 = vpop.f32.mrf.mxu0
      %v3029 = vadd.f32 %v2940, %v3028
      %3030 = vmatmul.bf16.gmra.mxu0 %v2783
      %v3031 = vpop.f32.mrf.mxu0
      %v3032 = vadd.f32 %v2943, %v3031
      %v3033 = vpop.f32.mrf.mxu0
      %v3034 = vadd.f32 %v2945, %v3033
      %3035 = vmatmul.bf16.gmra.mxu0 %v2786
      %v3036 = vpop.f32.mrf.mxu0
      %v3037 = vadd.f32 %v2948, %v3036
      %v3038 = vpop.f32.mrf.mxu0
      %v3039 = vadd.f32 %v2950, %v3038
      %3040 = vmatmul.bf16.gmra.mxu0 %v2789
      %v3041 = vpop.f32.mrf.mxu0
      %v3042 = vadd.f32 %v2953, %v3041
      %v3043 = vpop.f32.mrf.mxu0
      %v3044 = vadd.f32 %v2955, %v3043
      %3045 = vmatmul.bf16.gmra.mxu0 %v2792
      %v3046 = vpop.f32.mrf.mxu0
      %v3047 = vadd.f32 %v2958, %v3046
      %v3048 = vpop.f32.mrf.mxu0
      %v3049 = vadd.f32 %v2960, %v3048
      %3050 = vmatmul.bf16.gmra.mxu0 %v2795
      %v3051 = vpop.f32.mrf.mxu0
      %v3052 = vadd.f32 %v2963, %v3051
      %v3053 = vpop.f32.mrf.mxu0
      %v3054 = vadd.f32 %v2965, %v3053
      %3055 = vmatmul.bf16.gmra.mxu0 %v2798
      %v3056 = vpop.f32.mrf.mxu0
      %v3057 = vadd.f32 %v2968, %v3056
      %v3058 = vpop.f32.mrf.mxu0
      %v3059 = vadd.f32 %v2970, %v3058
      %3060 = vmatmul.bf16.gmra.mxu0 %v2801
      %v3061 = vpop.f32.mrf.mxu0
      %v3062 = vadd.f32 %v2973, %v3061
      %v3063 = vpop.f32.mrf.mxu0
      %v3064 = vadd.f32 %v2975, %v3063
      %3065 = vmatmul.bf16.gmra.mxu0 %v2804
      %v3066 = vpop.f32.mrf.mxu0
      %v3067 = vadd.f32 %v2978, %v3066
      %v3068 = vpop.f32.mrf.mxu0
      %v3069 = vadd.f32 %v2980, %v3068
      %3070 = vmatmul.bf16.gmra.mxu0 %v2807
      %v3071 = vpop.f32.mrf.mxu0
      %v3072 = vadd.f32 %v2983, %v3071
      %v3073 = vpop.f32.mrf.mxu0
      %v3074 = vadd.f32 %v2985, %v3073
      %3075 = vdwg.mxu0
      %v3076 = vadd.f32 %v2291, %v2997
      %v3077 = vadd.f32 %v2293, %v2999
      %v3078 = vadd.f32 %v2296, %v3002
      %v3079 = vadd.f32 %v2298, %v3004
      %v3080 = vadd.f32 %v2301, %v3007
      %v3081 = vadd.f32 %v2303, %v3009
      %v3082 = vadd.f32 %v2306, %v3012
      %v3083 = vadd.f32 %v2308, %v3014
      %v3084 = vadd.f32 %v2311, %v3017
      %v3085 = vadd.f32 %v2313, %v3019
      %v3086 = vadd.f32 %v2316, %v3022
      %v3087 = vadd.f32 %v2318, %v3024
      %v3088 = vadd.f32 %v2321, %v3027
      %v3089 = vadd.f32 %v2323, %v3029
      %v3090 = vadd.f32 %v2326, %v3032
      %v3091 = vadd.f32 %v2328, %v3034
      %v3092 = vadd.f32 %v2331, %v3037
      %v3093 = vadd.f32 %v2333, %v3039
      %v3094 = vadd.f32 %v2336, %v3042
      %v3095 = vadd.f32 %v2338, %v3044
      %v3096 = vadd.f32 %v2341, %v3047
      %v3097 = vadd.f32 %v2343, %v3049
      %v3098 = vadd.f32 %v2346, %v3052
      %v3099 = vadd.f32 %v2348, %v3054
      %v3100 = vadd.f32 %v2351, %v3057
      %v3101 = vadd.f32 %v2353, %v3059
      %v3102 = vadd.f32 %v2356, %v3062
      %v3103 = vadd.f32 %v2358, %v3064
      %v3104 = vadd.f32 %v2361, %v3067
      %v3105 = vadd.f32 %v2363, %v3069
      %v3106 = vadd.f32 %v2366, %v3072
      %v3107 = vadd.f32 %v2368, %v3074
      %v3108 = vmul.f32 %v3076, %v871
      %v3109 = vmul.f32 %v3077, %v871
      %v3110 = vmul.f32 %v3078, %v871
      %v3111 = vmul.f32 %v3079, %v871
      %v3112 = vmul.f32 %v3080, %v871
      %v3113 = vmul.f32 %v3081, %v871
      %v3114 = vmul.f32 %v3082, %v871
      %v3115 = vmul.f32 %v3083, %v871
      %v3116 = vmul.f32 %v3084, %v871
      %v3117 = vmul.f32 %v3085, %v871
      %v3118 = vmul.f32 %v3086, %v871
      %v3119 = vmul.f32 %v3087, %v871
      %v3120 = vmul.f32 %v3088, %v871
      %v3121 = vmul.f32 %v3089, %v871
      %v3122 = vmul.f32 %v3090, %v871
      %v3123 = vmul.f32 %v3091, %v871
      %v3124 = vmul.f32 %v3092, %v871
      %v3125 = vmul.f32 %v3093, %v871
      %v3126 = vmul.f32 %v3094, %v871
      %v3127 = vmul.f32 %v3095, %v871
      %v3128 = vmul.f32 %v3096, %v871
      %v3129 = vmul.f32 %v3097, %v871
      %v3130 = vmul.f32 %v3098, %v871
      %v3131 = vmul.f32 %v3099, %v871
      %v3132 = vmul.f32 %v3100, %v871
      %v3133 = vmul.f32 %v3101, %v871
      %v3134 = vmul.f32 %v3102, %v871
      %v3135 = vmul.f32 %v3103, %v871
      %v3136 = vmul.f32 %v3104, %v871
      %v3137 = vmul.f32 %v3105, %v871
      %v3138 = vmul.f32 %v3106, %v871
      %v3139 = vmul.f32 %v3107, %v871
      %vm3140 = vcmask 277504
      %v3141 = vsel %vm3140, %v3108, 0.0
      %3142 = vadd.xlane.f32.xlu0 %v3141
      %v3143 = vpop.xlane.xlu0 %3142
      %v3144 = vsel %vm3140, %v3109, 0.0
      %3145 = vadd.xlane.f32.xlu0 %v3144
      %v3146 = vpop.xlane.xlu0 %3145
      %v3147 = vsel %vm3140, %v3110, 0.0
      %3148 = vadd.xlane.f32.xlu0 %v3147
      %v3149 = vpop.xlane.xlu0 %3148
      %v3150 = vsel %vm3140, %v3111, 0.0
      %3151 = vadd.xlane.f32.xlu0 %v3150
      %v3152 = vpop.xlane.xlu0 %3151
      %v3153 = vsel %vm3140, %v3112, 0.0
      %3154 = vadd.xlane.f32.xlu0 %v3153
      %v3155 = vpop.xlane.xlu0 %3154
      %v3156 = vsel %vm3140, %v3113, 0.0
      %3157 = vadd.xlane.f32.xlu0 %v3156
      %v3158 = vpop.xlane.xlu0 %3157
      %v3159 = vsel %vm3140, %v3114, 0.0
      %3160 = vadd.xlane.f32.xlu0 %v3159
      %v3161 = vpop.xlane.xlu0 %3160
      %v3162 = vsel %vm3140, %v3115, 0.0
      %3163 = vadd.xlane.f32.xlu0 %v3162
      %v3164 = vpop.xlane.xlu0 %3163
      %v3165 = vsel %vm3140, %v3116, 0.0
      %3166 = vadd.xlane.f32.xlu0 %v3165
      %v3167 = vpop.xlane.xlu0 %3166
      %v3168 = vsel %vm3140, %v3117, 0.0
      %3169 = vadd.xlane.f32.xlu0 %v3168
      %v3170 = vpop.xlane.xlu0 %3169
      %v3171 = vsel %vm3140, %v3118, 0.0
      %3172 = vadd.xlane.f32.xlu0 %v3171
      %v3173 = vpop.xlane.xlu0 %3172
      %v3174 = vsel %vm3140, %v3119, 0.0
      %3175 = vadd.xlane.f32.xlu0 %v3174
      %v3176 = vpop.xlane.xlu0 %3175
      %v3177 = vsel %vm3140, %v3120, 0.0
      %3178 = vadd.xlane.f32.xlu0 %v3177
      %v3179 = vpop.xlane.xlu0 %3178
      %v3180 = vsel %vm3140, %v3121, 0.0
      %3181 = vadd.xlane.f32.xlu0 %v3180
      %v3182 = vpop.xlane.xlu0 %3181
      %v3183 = vsel %vm3140, %v3122, 0.0
      %3184 = vadd.xlane.f32.xlu0 %v3183
      %v3185 = vpop.xlane.xlu0 %3184
      %v3186 = vsel %vm3140, %v3123, 0.0
      %3187 = vadd.xlane.f32.xlu0 %v3186
      %v3188 = vpop.xlane.xlu0 %3187
      %v3189 = vsel %vm3140, %v3124, 0.0
      %3190 = vadd.xlane.f32.xlu0 %v3189
      %v3191 = vpop.xlane.xlu0 %3190
      %v3192 = vsel %vm3140, %v3125, 0.0
      %3193 = vadd.xlane.f32.xlu0 %v3192
      %v3194 = vpop.xlane.xlu0 %3193
      %v3195 = vsel %vm3140, %v3126, 0.0
      %3196 = vadd.xlane.f32.xlu0 %v3195
      %v3197 = vpop.xlane.xlu0 %3196
      %v3198 = vsel %vm3140, %v3127, 0.0
      %3199 = vadd.xlane.f32.xlu0 %v3198
      %v3200 = vpop.xlane.xlu0 %3199
      %v3201 = vsel %vm3140, %v3128, 0.0
      %3202 = vadd.xlane.f32.xlu0 %v3201
      %v3203 = vpop.xlane.xlu0 %3202
      %v3204 = vsel %vm3140, %v3129, 0.0
      %3205 = vadd.xlane.f32.xlu0 %v3204
      %v3206 = vpop.xlane.xlu0 %3205
      %v3207 = vsel %vm3140, %v3130, 0.0
      %3208 = vadd.xlane.f32.xlu0 %v3207
      %v3209 = vpop.xlane.xlu0 %3208
      %v3210 = vsel %vm3140, %v3131, 0.0
      %3211 = vadd.xlane.f32.xlu0 %v3210
      %v3212 = vpop.xlane.xlu0 %3211
      %v3213 = vsel %vm3140, %v3132, 0.0
      %3214 = vadd.xlane.f32.xlu0 %v3213
      %v3215 = vpop.xlane.xlu0 %3214
      %v3216 = vsel %vm3140, %v3133, 0.0
      %3217 = vadd.xlane.f32.xlu0 %v3216
      %v3218 = vpop.xlane.xlu0 %3217
      %v3219 = vsel %vm3140, %v3134, 0.0
      %3220 = vadd.xlane.f32.xlu0 %v3219
      %v3221 = vpop.xlane.xlu0 %3220
      %v3222 = vsel %vm3140, %v3135, 0.0
      %3223 = vadd.xlane.f32.xlu0 %v3222
      %v3224 = vpop.xlane.xlu0 %3223
      %v3225 = vsel %vm3140, %v3136, 0.0
      %3226 = vadd.xlane.f32.xlu0 %v3225
      %v3227 = vpop.xlane.xlu0 %3226
      %v3228 = vsel %vm3140, %v3137, 0.0
      %3229 = vadd.xlane.f32.xlu0 %v3228
      %v3230 = vpop.xlane.xlu0 %3229
      %v3231 = vsel %vm3140, %v3138, 0.0
      %3232 = vadd.xlane.f32.xlu0 %v3231
      %v3233 = vpop.xlane.xlu0 %3232
      %v3234 = vsel %vm3140, %v3139, 0.0
      %3235 = vadd.xlane.f32.xlu0 %v3234
      %v3236 = vpop.xlane.xlu0 %3235
      %v3237 = vmul.f32 %v3108, %v3108
      %v3238 = vmul.f32 %v3109, %v3109
      %v3239 = vmul.f32 %v3110, %v3110
      %v3240 = vmul.f32 %v3111, %v3111
      %v3241 = vmul.f32 %v3112, %v3112
      %v3242 = vmul.f32 %v3113, %v3113
      %v3243 = vmul.f32 %v3114, %v3114
      %v3244 = vmul.f32 %v3115, %v3115
      %v3245 = vmul.f32 %v3116, %v3116
      %v3246 = vmul.f32 %v3117, %v3117
      %v3247 = vmul.f32 %v3118, %v3118
      %v3248 = vmul.f32 %v3119, %v3119
      %v3249 = vmul.f32 %v3120, %v3120
      %v3250 = vmul.f32 %v3121, %v3121
      %v3251 = vmul.f32 %v3122, %v3122
      %v3252 = vmul.f32 %v3123, %v3123
      %v3253 = vmul.f32 %v3124, %v3124
      %v3254 = vmul.f32 %v3125, %v3125
      %v3255 = vmul.f32 %v3126, %v3126
      %v3256 = vmul.f32 %v3127, %v3127
      %v3257 = vmul.f32 %v3128, %v3128
      %v3258 = vmul.f32 %v3129, %v3129
      %v3259 = vmul.f32 %v3130, %v3130
      %v3260 = vmul.f32 %v3131, %v3131
      %v3261 = vmul.f32 %v3132, %v3132
      %v3262 = vmul.f32 %v3133, %v3133
      %v3263 = vmul.f32 %v3134, %v3134
      %v3264 = vmul.f32 %v3135, %v3135
      %v3265 = vmul.f32 %v3136, %v3136
      %v3266 = vmul.f32 %v3137, %v3137
      %v3267 = vmul.f32 %v3138, %v3138
      %v3268 = vmul.f32 %v3139, %v3139
      %v3269 = vsel %vm3140, %v3237, 0.0
      %3270 = vadd.xlane.f32.xlu0 %v3269
      %v3271 = vpop.xlane.xlu0 %3270
      %v3272 = vsel %vm3140, %v3238, 0.0
      %3273 = vadd.xlane.f32.xlu0 %v3272
      %v3274 = vpop.xlane.xlu0 %3273
      %v3275 = vsel %vm3140, %v3239, 0.0
      %3276 = vadd.xlane.f32.xlu0 %v3275
      %v3277 = vpop.xlane.xlu0 %3276
      %v3278 = vsel %vm3140, %v3240, 0.0
      %3279 = vadd.xlane.f32.xlu0 %v3278
      %v3280 = vpop.xlane.xlu0 %3279
      %v3281 = vsel %vm3140, %v3241, 0.0
      %3282 = vadd.xlane.f32.xlu0 %v3281
      %v3283 = vpop.xlane.xlu0 %3282
      %v3284 = vsel %vm3140, %v3242, 0.0
      %3285 = vadd.xlane.f32.xlu0 %v3284
      %v3286 = vpop.xlane.xlu0 %3285
      %v3287 = vsel %vm3140, %v3243, 0.0
      %3288 = vadd.xlane.f32.xlu0 %v3287
      %v3289 = vpop.xlane.xlu0 %3288
      %v3290 = vsel %vm3140, %v3244, 0.0
      %3291 = vadd.xlane.f32.xlu0 %v3290
      %v3292 = vpop.xlane.xlu0 %3291
      %v3293 = vsel %vm3140, %v3245, 0.0
      %3294 = vadd.xlane.f32.xlu0 %v3293
      %v3295 = vpop.xlane.xlu0 %3294
      %v3296 = vsel %vm3140, %v3246, 0.0
      %3297 = vadd.xlane.f32.xlu0 %v3296
      %v3298 = vpop.xlane.xlu0 %3297
      %v3299 = vsel %vm3140, %v3247, 0.0
      %3300 = vadd.xlane.f32.xlu0 %v3299
      %v3301 = vpop.xlane.xlu0 %3300
      %v3302 = vsel %vm3140, %v3248, 0.0
      %3303 = vadd.xlane.f32.xlu0 %v3302
      %v3304 = vpop.xlane.xlu0 %3303
      %v3305 = vsel %vm3140, %v3249, 0.0
      %3306 = vadd.xlane.f32.xlu0 %v3305
      %v3307 = vpop.xlane.xlu0 %3306
      %v3308 = vsel %vm3140, %v3250, 0.0
      %3309 = vadd.xlane.f32.xlu0 %v3308
      %v3310 = vpop.xlane.xlu0 %3309
      %v3311 = vsel %vm3140, %v3251, 0.0
      %3312 = vadd.xlane.f32.xlu0 %v3311
      %v3313 = vpop.xlane.xlu0 %3312
      %v3314 = vsel %vm3140, %v3252, 0.0
      %3315 = vadd.xlane.f32.xlu0 %v3314
      %v3316 = vpop.xlane.xlu0 %3315
      %v3317 = vsel %vm3140, %v3253, 0.0
      %3318 = vadd.xlane.f32.xlu0 %v3317
      %v3319 = vpop.xlane.xlu0 %3318
      %v3320 = vsel %vm3140, %v3254, 0.0
      %3321 = vadd.xlane.f32.xlu0 %v3320
      %v3322 = vpop.xlane.xlu0 %3321
      %v3323 = vsel %vm3140, %v3255, 0.0
      %3324 = vadd.xlane.f32.xlu0 %v3323
      %v3325 = vpop.xlane.xlu0 %3324
      %v3326 = vsel %vm3140, %v3256, 0.0
      %3327 = vadd.xlane.f32.xlu0 %v3326
      %v3328 = vpop.xlane.xlu0 %3327
      %v3329 = vsel %vm3140, %v3257, 0.0
      %3330 = vadd.xlane.f32.xlu0 %v3329
      %v3331 = vpop.xlane.xlu0 %3330
      %v3332 = vsel %vm3140, %v3258, 0.0
      %3333 = vadd.xlane.f32.xlu0 %v3332
      %v3334 = vpop.xlane.xlu0 %3333
      %v3335 = vsel %vm3140, %v3259, 0.0
      %3336 = vadd.xlane.f32.xlu0 %v3335
      %v3337 = vpop.xlane.xlu0 %3336
      %v3338 = vsel %vm3140, %v3260, 0.0
      %3339 = vadd.xlane.f32.xlu0 %v3338
      %v3340 = vpop.xlane.xlu0 %3339
      %v3341 = vsel %vm3140, %v3261, 0.0
      %3342 = vadd.xlane.f32.xlu0 %v3341
      %v3343 = vpop.xlane.xlu0 %3342
      %v3344 = vsel %vm3140, %v3262, 0.0
      %3345 = vadd.xlane.f32.xlu0 %v3344
      %v3346 = vpop.xlane.xlu0 %3345
      %v3347 = vsel %vm3140, %v3263, 0.0
      %3348 = vadd.xlane.f32.xlu0 %v3347
      %v3349 = vpop.xlane.xlu0 %3348
      %v3350 = vsel %vm3140, %v3264, 0.0
      %3351 = vadd.xlane.f32.xlu0 %v3350
      %v3352 = vpop.xlane.xlu0 %3351
      %v3353 = vsel %vm3140, %v3265, 0.0
      %3354 = vadd.xlane.f32.xlu0 %v3353
      %v3355 = vpop.xlane.xlu0 %3354
      %v3356 = vsel %vm3140, %v3266, 0.0
      %3357 = vadd.xlane.f32.xlu0 %v3356
      %v3358 = vpop.xlane.xlu0 %3357
      %v3359 = vsel %vm3140, %v3267, 0.0
      %3360 = vadd.xlane.f32.xlu0 %v3359
      %v3361 = vpop.xlane.xlu0 %3360
      %v3362 = vsel %vm3140, %v3268, 0.0
      %3363 = vadd.xlane.f32.xlu0 %v3362
      %v3364 = vpop.xlane.xlu0 %3363
      %v3365 = vld [vmem:[%s4] sm:$0xff]
      %v3366 = vld [vmem:[%s4 + $0x8] sm:$0xff]
      %v3367 = vsel %vm1124, %v3143, %v3271
      %v3368 = vsel %vm1124, %v3146, %v3274
      %v3369 = vsel %vm1124, %v3149, %v3277
      %v3370 = vsel %vm1124, %v3152, %v3280
      %v3371 = vsel %vm1124, %v3155, %v3283
      %v3372 = vsel %vm1124, %v3158, %v3286
      %v3373 = vsel %vm1124, %v3161, %v3289
      %v3374 = vsel %vm1124, %v3164, %v3292
      %v3375 = vsel %vm1124, %v3167, %v3295
      %v3376 = vsel %vm1124, %v3170, %v3298
      %v3377 = vsel %vm1124, %v3173, %v3301
      %v3378 = vsel %vm1124, %v3176, %v3304
      %v3379 = vsel %vm1124, %v3179, %v3307
      %v3380 = vsel %vm1124, %v3182, %v3310
      %v3381 = vsel %vm1124, %v3185, %v3313
      %v3382 = vsel %vm1124, %v3188, %v3316
      %v3383 = vsel %vm1124, %v3191, %v3319
      %v3384 = vsel %vm1124, %v3194, %v3322
      %v3385 = vsel %vm1124, %v3197, %v3325
      %v3386 = vsel %vm1124, %v3200, %v3328
      %v3387 = vsel %vm1124, %v3203, %v3331
      %v3388 = vsel %vm1124, %v3206, %v3334
      %v3389 = vsel %vm1124, %v3209, %v3337
      %v3390 = vsel %vm1124, %v3212, %v3340
      %v3391 = vsel %vm1124, %v3215, %v3343
      %v3392 = vsel %vm1124, %v3218, %v3346
      %v3393 = vsel %vm1124, %v3221, %v3349
      %v3394 = vsel %vm1124, %v3224, %v3352
      %v3395 = vsel %vm1124, %v3227, %v3355
      %v3396 = vsel %vm1124, %v3230, %v3358
      %v3397 = vsel %vm1124, %v3233, %v3361
      %v3398 = vsel %vm1124, %v3236, %v3364
      %v3399 = vand.u32 %v3382, 4294901760
      %3400 = vmatpush.msra.mxu0 %v3399
      %v3401 = vand.u32 %v3381, 4294901760
      %3402 = vmatpush.msra.mxu0 %v3401
      %v3403 = vand.u32 %v3380, 4294901760
      %3404 = vmatpush.msra.mxu0 %v3403
      %v3405 = vand.u32 %v3379, 4294901760
      %3406 = vmatpush.msra.mxu0 %v3405
      %v3407 = vand.u32 %v3378, 4294901760
      %3408 = vmatpush.msra.mxu0 %v3407
      %v3409 = vand.u32 %v3377, 4294901760
      %3410 = vmatpush.msra.mxu0 %v3409
      %v3411 = vand.u32 %v3376, 4294901760
      %3412 = vmatpush.msra.mxu0 %v3411
      %v3413 = vand.u32 %v3375, 4294901760
      %3414 = vmatpush.msra.mxu0 %v3413
      %v3415 = vand.u32 %v3374, 4294901760
      %3416 = vmatpush.msra.mxu0 %v3415
      %v3417 = vand.u32 %v3373, 4294901760
      %3418 = vmatpush.msra.mxu0 %v3417
      %v3419 = vand.u32 %v3372, 4294901760
      %3420 = vmatpush.msra.mxu0 %v3419
      %v3421 = vand.u32 %v3371, 4294901760
      %3422 = vmatpush.msra.mxu0 %v3421
      %v3423 = vand.u32 %v3370, 4294901760
      %3424 = vmatpush.msra.mxu0 %v3423
      %v3425 = vand.u32 %v3369, 4294901760
      %3426 = vmatpush.msra.mxu0 %v3425
      %v3427 = vand.u32 %v3368, 4294901760
      %3428 = vmatpush.msra.mxu0 %v3427
      %v3429 = vand.u32 %v3367, 4294901760
      %3430 = vmatpush.msra.mxu0 %v3429
      %v3431 = vand.u32 %v3365, 4294901760
      %v3432 = vsub.f32 %v3365, %v3431
      %v3433 = vand.u32 %v3432, 4294901760
      %v3434 = vsub.f32 %v3432, %v3433
      %v3435 = vand.u32 %v3434, 4294901760
      %3436 = vmatmul.f32.gmra.mxu0 %v3435
      %v3437 = vpop.f32.mrf.mxu0
      %v3438 = vadd.f32 0.0, %v3437
      %3439 = vdwg.mxu0
      %v3440 = vand.u32 %v3382, 4294901760
      %v3441 = vsub.f32 %v3382, %v3440
      %v3442 = vand.u32 %v3441, 4294901760
      %v3443 = vsub.f32 %v3441, %v3442
      %v3444 = vand.u32 %v3443, 4294901760
      %3445 = vmatpush.msra.mxu0 %v3444
      %v3446 = vand.u32 %v3381, 4294901760
      %v3447 = vsub.f32 %v3381, %v3446
      %v3448 = vand.u32 %v3447, 4294901760
      %v3449 = vsub.f32 %v3447, %v3448
      %v3450 = vand.u32 %v3449, 4294901760
      %3451 = vmatpush.msra.mxu0 %v3450
      %v3452 = vand.u32 %v3380, 4294901760
      %v3453 = vsub.f32 %v3380, %v3452
      %v3454 = vand.u32 %v3453, 4294901760
      %v3455 = vsub.f32 %v3453, %v3454
      %v3456 = vand.u32 %v3455, 4294901760
      %3457 = vmatpush.msra.mxu0 %v3456
      %v3458 = vand.u32 %v3379, 4294901760
      %v3459 = vsub.f32 %v3379, %v3458
      %v3460 = vand.u32 %v3459, 4294901760
      %v3461 = vsub.f32 %v3459, %v3460
      %v3462 = vand.u32 %v3461, 4294901760
      %3463 = vmatpush.msra.mxu0 %v3462
      %v3464 = vand.u32 %v3378, 4294901760
      %v3465 = vsub.f32 %v3378, %v3464
      %v3466 = vand.u32 %v3465, 4294901760
      %v3467 = vsub.f32 %v3465, %v3466
      %v3468 = vand.u32 %v3467, 4294901760
      %3469 = vmatpush.msra.mxu0 %v3468
      %v3470 = vand.u32 %v3377, 4294901760
      %v3471 = vsub.f32 %v3377, %v3470
      %v3472 = vand.u32 %v3471, 4294901760
      %v3473 = vsub.f32 %v3471, %v3472
      %v3474 = vand.u32 %v3473, 4294901760
      %3475 = vmatpush.msra.mxu0 %v3474
      %v3476 = vand.u32 %v3376, 4294901760
      %v3477 = vsub.f32 %v3376, %v3476
      %v3478 = vand.u32 %v3477, 4294901760
      %v3479 = vsub.f32 %v3477, %v3478
      %v3480 = vand.u32 %v3479, 4294901760
      %3481 = vmatpush.msra.mxu0 %v3480
      %v3482 = vand.u32 %v3375, 4294901760
      %v3483 = vsub.f32 %v3375, %v3482
      %v3484 = vand.u32 %v3483, 4294901760
      %v3485 = vsub.f32 %v3483, %v3484
      %v3486 = vand.u32 %v3485, 4294901760
      %3487 = vmatpush.msra.mxu0 %v3486
      %v3488 = vand.u32 %v3374, 4294901760
      %v3489 = vsub.f32 %v3374, %v3488
      %v3490 = vand.u32 %v3489, 4294901760
      %v3491 = vsub.f32 %v3489, %v3490
      %v3492 = vand.u32 %v3491, 4294901760
      %3493 = vmatpush.msra.mxu0 %v3492
      %v3494 = vand.u32 %v3373, 4294901760
      %v3495 = vsub.f32 %v3373, %v3494
      %v3496 = vand.u32 %v3495, 4294901760
      %v3497 = vsub.f32 %v3495, %v3496
      %v3498 = vand.u32 %v3497, 4294901760
      %3499 = vmatpush.msra.mxu0 %v3498
      %v3500 = vand.u32 %v3372, 4294901760
      %v3501 = vsub.f32 %v3372, %v3500
      %v3502 = vand.u32 %v3501, 4294901760
      %v3503 = vsub.f32 %v3501, %v3502
      %v3504 = vand.u32 %v3503, 4294901760
      %3505 = vmatpush.msra.mxu0 %v3504
      %v3506 = vand.u32 %v3371, 4294901760
      %v3507 = vsub.f32 %v3371, %v3506
      %v3508 = vand.u32 %v3507, 4294901760
      %v3509 = vsub.f32 %v3507, %v3508
      %v3510 = vand.u32 %v3509, 4294901760
      %3511 = vmatpush.msra.mxu0 %v3510
      %v3512 = vand.u32 %v3370, 4294901760
      %v3513 = vsub.f32 %v3370, %v3512
      %v3514 = vand.u32 %v3513, 4294901760
      %v3515 = vsub.f32 %v3513, %v3514
      %v3516 = vand.u32 %v3515, 4294901760
      %3517 = vmatpush.msra.mxu0 %v3516
      %v3518 = vand.u32 %v3369, 4294901760
      %v3519 = vsub.f32 %v3369, %v3518
      %v3520 = vand.u32 %v3519, 4294901760
      %v3521 = vsub.f32 %v3519, %v3520
      %v3522 = vand.u32 %v3521, 4294901760
      %3523 = vmatpush.msra.mxu0 %v3522
      %v3524 = vand.u32 %v3368, 4294901760
      %v3525 = vsub.f32 %v3368, %v3524
      %v3526 = vand.u32 %v3525, 4294901760
      %v3527 = vsub.f32 %v3525, %v3526
      %v3528 = vand.u32 %v3527, 4294901760
      %3529 = vmatpush.msra.mxu0 %v3528
      %v3530 = vand.u32 %v3367, 4294901760
      %v3531 = vsub.f32 %v3367, %v3530
      %v3532 = vand.u32 %v3531, 4294901760
      %v3533 = vsub.f32 %v3531, %v3532
      %v3534 = vand.u32 %v3533, 4294901760
      %3535 = vmatpush.msra.mxu0 %v3534
      %v3536 = vand.u32 %v3365, 4294901760
      %3537 = vmatmul.f32.gmra.mxu0 %v3536
      %v3538 = vpop.f32.mrf.mxu0
      %v3539 = vadd.f32 %v3438, %v3538
      %3540 = vdwg.mxu0
      %v3541 = vand.u32 %v3382, 4294901760
      %v3542 = vsub.f32 %v3382, %v3541
      %3543 = vmatpush.msra.mxu0 %v3542
      %v3544 = vand.u32 %v3381, 4294901760
      %v3545 = vsub.f32 %v3381, %v3544
      %3546 = vmatpush.msra.mxu0 %v3545
      %v3547 = vand.u32 %v3380, 4294901760
      %v3548 = vsub.f32 %v3380, %v3547
      %3549 = vmatpush.msra.mxu0 %v3548
      %v3550 = vand.u32 %v3379, 4294901760
      %v3551 = vsub.f32 %v3379, %v3550
      %3552 = vmatpush.msra.mxu0 %v3551
      %v3553 = vand.u32 %v3378, 4294901760
      %v3554 = vsub.f32 %v3378, %v3553
      %3555 = vmatpush.msra.mxu0 %v3554
      %v3556 = vand.u32 %v3377, 4294901760
      %v3557 = vsub.f32 %v3377, %v3556
      %3558 = vmatpush.msra.mxu0 %v3557
      %v3559 = vand.u32 %v3376, 4294901760
      %v3560 = vsub.f32 %v3376, %v3559
      %3561 = vmatpush.msra.mxu0 %v3560
      %v3562 = vand.u32 %v3375, 4294901760
      %v3563 = vsub.f32 %v3375, %v3562
      %3564 = vmatpush.msra.mxu0 %v3563
      %v3565 = vand.u32 %v3374, 4294901760
      %v3566 = vsub.f32 %v3374, %v3565
      %3567 = vmatpush.msra.mxu0 %v3566
      %v3568 = vand.u32 %v3373, 4294901760
      %v3569 = vsub.f32 %v3373, %v3568
      %3570 = vmatpush.msra.mxu0 %v3569
      %v3571 = vand.u32 %v3372, 4294901760
      %v3572 = vsub.f32 %v3372, %v3571
      %3573 = vmatpush.msra.mxu0 %v3572
      %v3574 = vand.u32 %v3371, 4294901760
      %v3575 = vsub.f32 %v3371, %v3574
      %3576 = vmatpush.msra.mxu0 %v3575
      %v3577 = vand.u32 %v3370, 4294901760
      %v3578 = vsub.f32 %v3370, %v3577
      %3579 = vmatpush.msra.mxu0 %v3578
      %v3580 = vand.u32 %v3369, 4294901760
      %v3581 = vsub.f32 %v3369, %v3580
      %3582 = vmatpush.msra.mxu0 %v3581
      %v3583 = vand.u32 %v3368, 4294901760
      %v3584 = vsub.f32 %v3368, %v3583
      %3585 = vmatpush.msra.mxu0 %v3584
      %v3586 = vand.u32 %v3367, 4294901760
      %v3587 = vsub.f32 %v3367, %v3586
      %3588 = vmatpush.msra.mxu0 %v3587
      %v3589 = vand.u32 %v3365, 4294901760
      %v3590 = vsub.f32 %v3365, %v3589
      %3591 = vmatmul.f32.gmra.mxu0 %v3590
      %v3592 = vpop.f32.mrf.mxu0
      %v3593 = vadd.f32 %v3539, %v3592
      %3594 = vdwg.mxu0
      %v3595 = vand.u32 %v3382, 4294901760
      %3596 = vmatpush.msra.mxu0 %v3595
      %v3597 = vand.u32 %v3381, 4294901760
      %3598 = vmatpush.msra.mxu0 %v3597
      %v3599 = vand.u32 %v3380, 4294901760
      %3600 = vmatpush.msra.mxu0 %v3599
      %v3601 = vand.u32 %v3379, 4294901760
      %3602 = vmatpush.msra.mxu0 %v3601
      %v3603 = vand.u32 %v3378, 4294901760
      %3604 = vmatpush.msra.mxu0 %v3603
      %v3605 = vand.u32 %v3377, 4294901760
      %3606 = vmatpush.msra.mxu0 %v3605
      %v3607 = vand.u32 %v3376, 4294901760
      %3608 = vmatpush.msra.mxu0 %v3607
      %v3609 = vand.u32 %v3375, 4294901760
      %3610 = vmatpush.msra.mxu0 %v3609
      %v3611 = vand.u32 %v3374, 4294901760
      %3612 = vmatpush.msra.mxu0 %v3611
      %v3613 = vand.u32 %v3373, 4294901760
      %3614 = vmatpush.msra.mxu0 %v3613
      %v3615 = vand.u32 %v3372, 4294901760
      %3616 = vmatpush.msra.mxu0 %v3615
      %v3617 = vand.u32 %v3371, 4294901760
      %3618 = vmatpush.msra.mxu0 %v3617
      %v3619 = vand.u32 %v3370, 4294901760
      %3620 = vmatpush.msra.mxu0 %v3619
      %v3621 = vand.u32 %v3369, 4294901760
      %3622 = vmatpush.msra.mxu0 %v3621
      %v3623 = vand.u32 %v3368, 4294901760
      %3624 = vmatpush.msra.mxu0 %v3623
      %v3625 = vand.u32 %v3367, 4294901760
      %3626 = vmatpush.msra.mxu0 %v3625
      %v3627 = vand.u32 %v3365, 4294901760
      %v3628 = vsub.f32 %v3365, %v3627
      %v3629 = vand.u32 %v3628, 4294901760
      %3630 = vmatmul.f32.gmra.mxu0 %v3629
      %v3631 = vpop.f32.mrf.mxu0
      %v3632 = vadd.f32 %v3593, %v3631
      %3633 = vdwg.mxu0
      %v3634 = vand.u32 %v3382, 4294901760
      %v3635 = vsub.f32 %v3382, %v3634
      %v3636 = vand.u32 %v3635, 4294901760
      %3637 = vmatpush.msra.mxu0 %v3636
      %v3638 = vand.u32 %v3381, 4294901760
      %v3639 = vsub.f32 %v3381, %v3638
      %v3640 = vand.u32 %v3639, 4294901760
      %3641 = vmatpush.msra.mxu0 %v3640
      %v3642 = vand.u32 %v3380, 4294901760
      %v3643 = vsub.f32 %v3380, %v3642
      %v3644 = vand.u32 %v3643, 4294901760
      %3645 = vmatpush.msra.mxu0 %v3644
      %v3646 = vand.u32 %v3379, 4294901760
      %v3647 = vsub.f32 %v3379, %v3646
      %v3648 = vand.u32 %v3647, 4294901760
      %3649 = vmatpush.msra.mxu0 %v3648
      %v3650 = vand.u32 %v3378, 4294901760
      %v3651 = vsub.f32 %v3378, %v3650
      %v3652 = vand.u32 %v3651, 4294901760
      %3653 = vmatpush.msra.mxu0 %v3652
      %v3654 = vand.u32 %v3377, 4294901760
      %v3655 = vsub.f32 %v3377, %v3654
      %v3656 = vand.u32 %v3655, 4294901760
      %3657 = vmatpush.msra.mxu0 %v3656
      %v3658 = vand.u32 %v3376, 4294901760
      %v3659 = vsub.f32 %v3376, %v3658
      %v3660 = vand.u32 %v3659, 4294901760
      %3661 = vmatpush.msra.mxu0 %v3660
      %v3662 = vand.u32 %v3375, 4294901760
      %v3663 = vsub.f32 %v3375, %v3662
      %v3664 = vand.u32 %v3663, 4294901760
      %3665 = vmatpush.msra.mxu0 %v3664
      %v3666 = vand.u32 %v3374, 4294901760
      %v3667 = vsub.f32 %v3374, %v3666
      %v3668 = vand.u32 %v3667, 4294901760
      %3669 = vmatpush.msra.mxu0 %v3668
      %v3670 = vand.u32 %v3373, 4294901760
      %v3671 = vsub.f32 %v3373, %v3670
      %v3672 = vand.u32 %v3671, 4294901760
      %3673 = vmatpush.msra.mxu0 %v3672
      %v3674 = vand.u32 %v3372, 4294901760
      %v3675 = vsub.f32 %v3372, %v3674
      %v3676 = vand.u32 %v3675, 4294901760
      %3677 = vmatpush.msra.mxu0 %v3676
      %v3678 = vand.u32 %v3371, 4294901760
      %v3679 = vsub.f32 %v3371, %v3678
      %v3680 = vand.u32 %v3679, 4294901760
      %3681 = vmatpush.msra.mxu0 %v3680
      %v3682 = vand.u32 %v3370, 4294901760
      %v3683 = vsub.f32 %v3370, %v3682
      %v3684 = vand.u32 %v3683, 4294901760
      %3685 = vmatpush.msra.mxu0 %v3684
      %v3686 = vand.u32 %v3369, 4294901760
      %v3687 = vsub.f32 %v3369, %v3686
      %v3688 = vand.u32 %v3687, 4294901760
      %3689 = vmatpush.msra.mxu0 %v3688
      %v3690 = vand.u32 %v3368, 4294901760
      %v3691 = vsub.f32 %v3368, %v3690
      %v3692 = vand.u32 %v3691, 4294901760
      %3693 = vmatpush.msra.mxu0 %v3692
      %v3694 = vand.u32 %v3367, 4294901760
      %v3695 = vsub.f32 %v3367, %v3694
      %v3696 = vand.u32 %v3695, 4294901760
      %3697 = vmatpush.msra.mxu0 %v3696
      %v3698 = vand.u32 %v3365, 4294901760
      %3699 = vmatmul.f32.gmra.mxu0 %v3698
      %v3700 = vpop.f32.mrf.mxu0
      %v3701 = vadd.f32 %v3632, %v3700
      %3702 = vdwg.mxu0
      %v3703 = vand.u32 %v3382, 4294901760
      %3704 = vmatpush.msra.mxu0 %v3703
      %v3705 = vand.u32 %v3381, 4294901760
      %3706 = vmatpush.msra.mxu0 %v3705
      %v3707 = vand.u32 %v3380, 4294901760
      %3708 = vmatpush.msra.mxu0 %v3707
      %v3709 = vand.u32 %v3379, 4294901760
      %3710 = vmatpush.msra.mxu0 %v3709
      %v3711 = vand.u32 %v3378, 4294901760
      %3712 = vmatpush.msra.mxu0 %v3711
      %v3713 = vand.u32 %v3377, 4294901760
      %3714 = vmatpush.msra.mxu0 %v3713
      %v3715 = vand.u32 %v3376, 4294901760
      %3716 = vmatpush.msra.mxu0 %v3715
      %v3717 = vand.u32 %v3375, 4294901760
      %3718 = vmatpush.msra.mxu0 %v3717
      %v3719 = vand.u32 %v3374, 4294901760
      %3720 = vmatpush.msra.mxu0 %v3719
      %v3721 = vand.u32 %v3373, 4294901760
      %3722 = vmatpush.msra.mxu0 %v3721
      %v3723 = vand.u32 %v3372, 4294901760
      %3724 = vmatpush.msra.mxu0 %v3723
      %v3725 = vand.u32 %v3371, 4294901760
      %3726 = vmatpush.msra.mxu0 %v3725
      %v3727 = vand.u32 %v3370, 4294901760
      %3728 = vmatpush.msra.mxu0 %v3727
      %v3729 = vand.u32 %v3369, 4294901760
      %3730 = vmatpush.msra.mxu0 %v3729
      %v3731 = vand.u32 %v3368, 4294901760
      %3732 = vmatpush.msra.mxu0 %v3731
      %v3733 = vand.u32 %v3367, 4294901760
      %3734 = vmatpush.msra.mxu0 %v3733
      %v3735 = vand.u32 %v3365, 4294901760
      %3736 = vmatmul.f32.gmra.mxu0 %v3735
      %v3737 = vpop.f32.mrf.mxu0
      %v3738 = vadd.f32 %v3701, %v3737
      %3739 = vdwg.mxu0
      %v3740 = vand.u32 %v3398, 4294901760
      %3741 = vmatpush.msra.mxu0 %v3740
      %v3742 = vand.u32 %v3397, 4294901760
      %3743 = vmatpush.msra.mxu0 %v3742
      %v3744 = vand.u32 %v3396, 4294901760
      %3745 = vmatpush.msra.mxu0 %v3744
      %v3746 = vand.u32 %v3395, 4294901760
      %3747 = vmatpush.msra.mxu0 %v3746
      %v3748 = vand.u32 %v3394, 4294901760
      %3749 = vmatpush.msra.mxu0 %v3748
      %v3750 = vand.u32 %v3393, 4294901760
      %3751 = vmatpush.msra.mxu0 %v3750
      %v3752 = vand.u32 %v3392, 4294901760
      %3753 = vmatpush.msra.mxu0 %v3752
      %v3754 = vand.u32 %v3391, 4294901760
      %3755 = vmatpush.msra.mxu0 %v3754
      %v3756 = vand.u32 %v3390, 4294901760
      %3757 = vmatpush.msra.mxu0 %v3756
      %v3758 = vand.u32 %v3389, 4294901760
      %3759 = vmatpush.msra.mxu0 %v3758
      %v3760 = vand.u32 %v3388, 4294901760
      %3761 = vmatpush.msra.mxu0 %v3760
      %v3762 = vand.u32 %v3387, 4294901760
      %3763 = vmatpush.msra.mxu0 %v3762
      %v3764 = vand.u32 %v3386, 4294901760
      %3765 = vmatpush.msra.mxu0 %v3764
      %v3766 = vand.u32 %v3385, 4294901760
      %3767 = vmatpush.msra.mxu0 %v3766
      %v3768 = vand.u32 %v3384, 4294901760
      %3769 = vmatpush.msra.mxu0 %v3768
      %v3770 = vand.u32 %v3383, 4294901760
      %3771 = vmatpush.msra.mxu0 %v3770
      %v3772 = vand.u32 %v3366, 4294901760
      %v3773 = vsub.f32 %v3366, %v3772
      %v3774 = vand.u32 %v3773, 4294901760
      %v3775 = vsub.f32 %v3773, %v3774
      %v3776 = vand.u32 %v3775, 4294901760
      %3777 = vmatmul.f32.gmra.mxu0 %v3776
      %v3778 = vpop.f32.mrf.mxu0
      %v3779 = vadd.f32 %v3738, %v3778
      %3780 = vdwg.mxu0
      %v3781 = vand.u32 %v3398, 4294901760
      %v3782 = vsub.f32 %v3398, %v3781
      %v3783 = vand.u32 %v3782, 4294901760
      %v3784 = vsub.f32 %v3782, %v3783
      %v3785 = vand.u32 %v3784, 4294901760
      %3786 = vmatpush.msra.mxu0 %v3785
      %v3787 = vand.u32 %v3397, 4294901760
      %v3788 = vsub.f32 %v3397, %v3787
      %v3789 = vand.u32 %v3788, 4294901760
      %v3790 = vsub.f32 %v3788, %v3789
      %v3791 = vand.u32 %v3790, 4294901760
      %3792 = vmatpush.msra.mxu0 %v3791
      %v3793 = vand.u32 %v3396, 4294901760
      %v3794 = vsub.f32 %v3396, %v3793
      %v3795 = vand.u32 %v3794, 4294901760
      %v3796 = vsub.f32 %v3794, %v3795
      %v3797 = vand.u32 %v3796, 4294901760
      %3798 = vmatpush.msra.mxu0 %v3797
      %v3799 = vand.u32 %v3395, 4294901760
      %v3800 = vsub.f32 %v3395, %v3799
      %v3801 = vand.u32 %v3800, 4294901760
      %v3802 = vsub.f32 %v3800, %v3801
      %v3803 = vand.u32 %v3802, 4294901760
      %3804 = vmatpush.msra.mxu0 %v3803
      %v3805 = vand.u32 %v3394, 4294901760
      %v3806 = vsub.f32 %v3394, %v3805
      %v3807 = vand.u32 %v3806, 4294901760
      %v3808 = vsub.f32 %v3806, %v3807
      %v3809 = vand.u32 %v3808, 4294901760
      %3810 = vmatpush.msra.mxu0 %v3809
      %v3811 = vand.u32 %v3393, 4294901760
      %v3812 = vsub.f32 %v3393, %v3811
      %v3813 = vand.u32 %v3812, 4294901760
      %v3814 = vsub.f32 %v3812, %v3813
      %v3815 = vand.u32 %v3814, 4294901760
      %3816 = vmatpush.msra.mxu0 %v3815
      %v3817 = vand.u32 %v3392, 4294901760
      %v3818 = vsub.f32 %v3392, %v3817
      %v3819 = vand.u32 %v3818, 4294901760
      %v3820 = vsub.f32 %v3818, %v3819
      %v3821 = vand.u32 %v3820, 4294901760
      %3822 = vmatpush.msra.mxu0 %v3821
      %v3823 = vand.u32 %v3391, 4294901760
      %v3824 = vsub.f32 %v3391, %v3823
      %v3825 = vand.u32 %v3824, 4294901760
      %v3826 = vsub.f32 %v3824, %v3825
      %v3827 = vand.u32 %v3826, 4294901760
      %3828 = vmatpush.msra.mxu0 %v3827
      %v3829 = vand.u32 %v3390, 4294901760
      %v3830 = vsub.f32 %v3390, %v3829
      %v3831 = vand.u32 %v3830, 4294901760
      %v3832 = vsub.f32 %v3830, %v3831
      %v3833 = vand.u32 %v3832, 4294901760
      %3834 = vmatpush.msra.mxu0 %v3833
      %v3835 = vand.u32 %v3389, 4294901760
      %v3836 = vsub.f32 %v3389, %v3835
      %v3837 = vand.u32 %v3836, 4294901760
      %v3838 = vsub.f32 %v3836, %v3837
      %v3839 = vand.u32 %v3838, 4294901760
      %3840 = vmatpush.msra.mxu0 %v3839
      %v3841 = vand.u32 %v3388, 4294901760
      %v3842 = vsub.f32 %v3388, %v3841
      %v3843 = vand.u32 %v3842, 4294901760
      %v3844 = vsub.f32 %v3842, %v3843
      %v3845 = vand.u32 %v3844, 4294901760
      %3846 = vmatpush.msra.mxu0 %v3845
      %v3847 = vand.u32 %v3387, 4294901760
      %v3848 = vsub.f32 %v3387, %v3847
      %v3849 = vand.u32 %v3848, 4294901760
      %v3850 = vsub.f32 %v3848, %v3849
      %v3851 = vand.u32 %v3850, 4294901760
      %3852 = vmatpush.msra.mxu0 %v3851
      %v3853 = vand.u32 %v3386, 4294901760
      %v3854 = vsub.f32 %v3386, %v3853
      %v3855 = vand.u32 %v3854, 4294901760
      %v3856 = vsub.f32 %v3854, %v3855
      %v3857 = vand.u32 %v3856, 4294901760
      %3858 = vmatpush.msra.mxu0 %v3857
      %v3859 = vand.u32 %v3385, 4294901760
      %v3860 = vsub.f32 %v3385, %v3859
      %v3861 = vand.u32 %v3860, 4294901760
      %v3862 = vsub.f32 %v3860, %v3861
      %v3863 = vand.u32 %v3862, 4294901760
      %3864 = vmatpush.msra.mxu0 %v3863
      %v3865 = vand.u32 %v3384, 4294901760
      %v3866 = vsub.f32 %v3384, %v3865
      %v3867 = vand.u32 %v3866, 4294901760
      %v3868 = vsub.f32 %v3866, %v3867
      %v3869 = vand.u32 %v3868, 4294901760
      %3870 = vmatpush.msra.mxu0 %v3869
      %v3871 = vand.u32 %v3383, 4294901760
      %v3872 = vsub.f32 %v3383, %v3871
      %v3873 = vand.u32 %v3872, 4294901760
      %v3874 = vsub.f32 %v3872, %v3873
      %v3875 = vand.u32 %v3874, 4294901760
      %3876 = vmatpush.msra.mxu0 %v3875
      %v3877 = vand.u32 %v3366, 4294901760
      %3878 = vmatmul.f32.gmra.mxu0 %v3877
      %v3879 = vpop.f32.mrf.mxu0
      %v3880 = vadd.f32 %v3779, %v3879
      %3881 = vdwg.mxu0
      %v3882 = vand.u32 %v3398, 4294901760
      %v3883 = vsub.f32 %v3398, %v3882
      %3884 = vmatpush.msra.mxu0 %v3883
      %v3885 = vand.u32 %v3397, 4294901760
      %v3886 = vsub.f32 %v3397, %v3885
      %3887 = vmatpush.msra.mxu0 %v3886
      %v3888 = vand.u32 %v3396, 4294901760
      %v3889 = vsub.f32 %v3396, %v3888
      %3890 = vmatpush.msra.mxu0 %v3889
      %v3891 = vand.u32 %v3395, 4294901760
      %v3892 = vsub.f32 %v3395, %v3891
      %3893 = vmatpush.msra.mxu0 %v3892
      %v3894 = vand.u32 %v3394, 4294901760
      %v3895 = vsub.f32 %v3394, %v3894
      %3896 = vmatpush.msra.mxu0 %v3895
      %v3897 = vand.u32 %v3393, 4294901760
      %v3898 = vsub.f32 %v3393, %v3897
      %3899 = vmatpush.msra.mxu0 %v3898
      %v3900 = vand.u32 %v3392, 4294901760
      %v3901 = vsub.f32 %v3392, %v3900
      %3902 = vmatpush.msra.mxu0 %v3901
      %v3903 = vand.u32 %v3391, 4294901760
      %v3904 = vsub.f32 %v3391, %v3903
      %3905 = vmatpush.msra.mxu0 %v3904
      %v3906 = vand.u32 %v3390, 4294901760
      %v3907 = vsub.f32 %v3390, %v3906
      %3908 = vmatpush.msra.mxu0 %v3907
      %v3909 = vand.u32 %v3389, 4294901760
      %v3910 = vsub.f32 %v3389, %v3909
      %3911 = vmatpush.msra.mxu0 %v3910
      %v3912 = vand.u32 %v3388, 4294901760
      %v3913 = vsub.f32 %v3388, %v3912
      %3914 = vmatpush.msra.mxu0 %v3913
      %v3915 = vand.u32 %v3387, 4294901760
      %v3916 = vsub.f32 %v3387, %v3915
      %3917 = vmatpush.msra.mxu0 %v3916
      %v3918 = vand.u32 %v3386, 4294901760
      %v3919 = vsub.f32 %v3386, %v3918
      %3920 = vmatpush.msra.mxu0 %v3919
      %v3921 = vand.u32 %v3385, 4294901760
      %v3922 = vsub.f32 %v3385, %v3921
      %3923 = vmatpush.msra.mxu0 %v3922
      %v3924 = vand.u32 %v3384, 4294901760
      %v3925 = vsub.f32 %v3384, %v3924
      %3926 = vmatpush.msra.mxu0 %v3925
      %v3927 = vand.u32 %v3383, 4294901760
      %v3928 = vsub.f32 %v3383, %v3927
      %3929 = vmatpush.msra.mxu0 %v3928
      %v3930 = vand.u32 %v3366, 4294901760
      %v3931 = vsub.f32 %v3366, %v3930
      %3932 = vmatmul.f32.gmra.mxu0 %v3931
      %v3933 = vpop.f32.mrf.mxu0
      %v3934 = vadd.f32 %v3880, %v3933
      %3935 = vdwg.mxu0
      %v3936 = vand.u32 %v3398, 4294901760
      %3937 = vmatpush.msra.mxu0 %v3936
      %v3938 = vand.u32 %v3397, 4294901760
      %3939 = vmatpush.msra.mxu0 %v3938
      %v3940 = vand.u32 %v3396, 4294901760
      %3941 = vmatpush.msra.mxu0 %v3940
      %v3942 = vand.u32 %v3395, 4294901760
      %3943 = vmatpush.msra.mxu0 %v3942
      %v3944 = vand.u32 %v3394, 4294901760
      %3945 = vmatpush.msra.mxu0 %v3944
      %v3946 = vand.u32 %v3393, 4294901760
      %3947 = vmatpush.msra.mxu0 %v3946
      %v3948 = vand.u32 %v3392, 4294901760
      %3949 = vmatpush.msra.mxu0 %v3948
      %v3950 = vand.u32 %v3391, 4294901760
      %3951 = vmatpush.msra.mxu0 %v3950
      %v3952 = vand.u32 %v3390, 4294901760
      %3953 = vmatpush.msra.mxu0 %v3952
      %v3954 = vand.u32 %v3389, 4294901760
      %3955 = vmatpush.msra.mxu0 %v3954
      %v3956 = vand.u32 %v3388, 4294901760
      %3957 = vmatpush.msra.mxu0 %v3956
      %v3958 = vand.u32 %v3387, 4294901760
      %3959 = vmatpush.msra.mxu0 %v3958
      %v3960 = vand.u32 %v3386, 4294901760
      %3961 = vmatpush.msra.mxu0 %v3960
      %v3962 = vand.u32 %v3385, 4294901760
      %3963 = vmatpush.msra.mxu0 %v3962
      %v3964 = vand.u32 %v3384, 4294901760
      %3965 = vmatpush.msra.mxu0 %v3964
      %v3966 = vand.u32 %v3383, 4294901760
      %3967 = vmatpush.msra.mxu0 %v3966
      %v3968 = vand.u32 %v3366, 4294901760
      %v3969 = vsub.f32 %v3366, %v3968
      %v3970 = vand.u32 %v3969, 4294901760
      %3971 = vmatmul.f32.gmra.mxu0 %v3970
      %v3972 = vpop.f32.mrf.mxu0
      %v3973 = vadd.f32 %v3934, %v3972
      %3974 = vdwg.mxu0
      %v3975 = vand.u32 %v3398, 4294901760
      %v3976 = vsub.f32 %v3398, %v3975
      %v3977 = vand.u32 %v3976, 4294901760
      %3978 = vmatpush.msra.mxu0 %v3977
      %v3979 = vand.u32 %v3397, 4294901760
      %v3980 = vsub.f32 %v3397, %v3979
      %v3981 = vand.u32 %v3980, 4294901760
      %3982 = vmatpush.msra.mxu0 %v3981
      %v3983 = vand.u32 %v3396, 4294901760
      %v3984 = vsub.f32 %v3396, %v3983
      %v3985 = vand.u32 %v3984, 4294901760
      %3986 = vmatpush.msra.mxu0 %v3985
      %v3987 = vand.u32 %v3395, 4294901760
      %v3988 = vsub.f32 %v3395, %v3987
      %v3989 = vand.u32 %v3988, 4294901760
      %3990 = vmatpush.msra.mxu0 %v3989
      %v3991 = vand.u32 %v3394, 4294901760
      %v3992 = vsub.f32 %v3394, %v3991
      %v3993 = vand.u32 %v3992, 4294901760
      %3994 = vmatpush.msra.mxu0 %v3993
      %v3995 = vand.u32 %v3393, 4294901760
      %v3996 = vsub.f32 %v3393, %v3995
      %v3997 = vand.u32 %v3996, 4294901760
      %3998 = vmatpush.msra.mxu0 %v3997
      %v3999 = vand.u32 %v3392, 4294901760
      %v4000 = vsub.f32 %v3392, %v3999
      %v4001 = vand.u32 %v4000, 4294901760
      %4002 = vmatpush.msra.mxu0 %v4001
      %v4003 = vand.u32 %v3391, 4294901760
      %v4004 = vsub.f32 %v3391, %v4003
      %v4005 = vand.u32 %v4004, 4294901760
      %4006 = vmatpush.msra.mxu0 %v4005
      %v4007 = vand.u32 %v3390, 4294901760
      %v4008 = vsub.f32 %v3390, %v4007
      %v4009 = vand.u32 %v4008, 4294901760
      %4010 = vmatpush.msra.mxu0 %v4009
      %v4011 = vand.u32 %v3389, 4294901760
      %v4012 = vsub.f32 %v3389, %v4011
      %v4013 = vand.u32 %v4012, 4294901760
      %4014 = vmatpush.msra.mxu0 %v4013
      %v4015 = vand.u32 %v3388, 4294901760
      %v4016 = vsub.f32 %v3388, %v4015
      %v4017 = vand.u32 %v4016, 4294901760
      %4018 = vmatpush.msra.mxu0 %v4017
      %v4019 = vand.u32 %v3387, 4294901760
      %v4020 = vsub.f32 %v3387, %v4019
      %v4021 = vand.u32 %v4020, 4294901760
      %4022 = vmatpush.msra.mxu0 %v4021
      %v4023 = vand.u32 %v3386, 4294901760
      %v4024 = vsub.f32 %v3386, %v4023
      %v4025 = vand.u32 %v4024, 4294901760
      %4026 = vmatpush.msra.mxu0 %v4025
      %v4027 = vand.u32 %v3385, 4294901760
      %v4028 = vsub.f32 %v3385, %v4027
      %v4029 = vand.u32 %v4028, 4294901760
      %4030 = vmatpush.msra.mxu0 %v4029
      %v4031 = vand.u32 %v3384, 4294901760
      %v4032 = vsub.f32 %v3384, %v4031
      %v4033 = vand.u32 %v4032, 4294901760
      %4034 = vmatpush.msra.mxu0 %v4033
      %v4035 = vand.u32 %v3383, 4294901760
      %v4036 = vsub.f32 %v3383, %v4035
      %v4037 = vand.u32 %v4036, 4294901760
      %4038 = vmatpush.msra.mxu0 %v4037
      %v4039 = vand.u32 %v3366, 4294901760
      %4040 = vmatmul.f32.gmra.mxu0 %v4039
      %v4041 = vpop.f32.mrf.mxu0
      %v4042 = vadd.f32 %v3973, %v4041
      %4043 = vdwg.mxu0
      %v4044 = vand.u32 %v3398, 4294901760
      %4045 = vmatpush.msra.mxu0 %v4044
      %v4046 = vand.u32 %v3397, 4294901760
      %4047 = vmatpush.msra.mxu0 %v4046
      %v4048 = vand.u32 %v3396, 4294901760
      %4049 = vmatpush.msra.mxu0 %v4048
      %v4050 = vand.u32 %v3395, 4294901760
      %4051 = vmatpush.msra.mxu0 %v4050
      %v4052 = vand.u32 %v3394, 4294901760
      %4053 = vmatpush.msra.mxu0 %v4052
      %v4054 = vand.u32 %v3393, 4294901760
      %4055 = vmatpush.msra.mxu0 %v4054
      %v4056 = vand.u32 %v3392, 4294901760
      %4057 = vmatpush.msra.mxu0 %v4056
      %v4058 = vand.u32 %v3391, 4294901760
      %4059 = vmatpush.msra.mxu0 %v4058
      %v4060 = vand.u32 %v3390, 4294901760
      %4061 = vmatpush.msra.mxu0 %v4060
      %v4062 = vand.u32 %v3389, 4294901760
      %4063 = vmatpush.msra.mxu0 %v4062
      %v4064 = vand.u32 %v3388, 4294901760
      %4065 = vmatpush.msra.mxu0 %v4064
      %v4066 = vand.u32 %v3387, 4294901760
      %4067 = vmatpush.msra.mxu0 %v4066
      %v4068 = vand.u32 %v3386, 4294901760
      %4069 = vmatpush.msra.mxu0 %v4068
      %v4070 = vand.u32 %v3385, 4294901760
      %4071 = vmatpush.msra.mxu0 %v4070
      %v4072 = vand.u32 %v3384, 4294901760
      %4073 = vmatpush.msra.mxu0 %v4072
      %v4074 = vand.u32 %v3383, 4294901760
      %4075 = vmatpush.msra.mxu0 %v4074
      %v4076 = vand.u32 %v3366, 4294901760
      %4077 = vmatmul.f32.gmra.mxu0 %v4076
      %v4078 = vpop.f32.mrf.mxu0
      %v4079 = vadd.f32 %v4042, %v4078
      %4080 = vdwg.mxu0
      %vm4081 = vcmask 15360
      %4082 = vst.msk [vmem:[%s289] sm:$0xff] %vm4081, %v4079
      %v4083 = vpack.c.bf16 %v3108, %v3108
      %v4084 = vpack.c.bf16 %v3109, %v3109
      %v4085 = vpack.c.bf16 %v3110, %v3110
      %v4086 = vpack.c.bf16 %v3111, %v3111
      %v4087 = vpack.c.bf16 %v3112, %v3112
      %v4088 = vpack.c.bf16 %v3113, %v3113
      %v4089 = vpack.c.bf16 %v3114, %v3114
      %v4090 = vpack.c.bf16 %v3115, %v3115
      %v4091 = vpack.c.bf16 %v3116, %v3116
      %v4092 = vpack.c.bf16 %v3117, %v3117
      %v4093 = vpack.c.bf16 %v3118, %v3118
      %v4094 = vpack.c.bf16 %v3119, %v3119
      %v4095 = vpack.c.bf16 %v3120, %v3120
      %v4096 = vpack.c.bf16 %v3121, %v3121
      %v4097 = vpack.c.bf16 %v3122, %v3122
      %v4098 = vpack.c.bf16 %v3123, %v3123
      %v4099 = vpack.c.bf16 %v3124, %v3124
      %v4100 = vpack.c.bf16 %v3125, %v3125
      %v4101 = vpack.c.bf16 %v3126, %v3126
      %v4102 = vpack.c.bf16 %v3127, %v3127
      %v4103 = vpack.c.bf16 %v3128, %v3128
      %v4104 = vpack.c.bf16 %v3129, %v3129
      %v4105 = vpack.c.bf16 %v3130, %v3130
      %v4106 = vpack.c.bf16 %v3131, %v3131
      %v4107 = vpack.c.bf16 %v3132, %v3132
      %v4108 = vpack.c.bf16 %v3133, %v3133
      %v4109 = vpack.c.bf16 %v3134, %v3134
      %v4110 = vpack.c.bf16 %v3135, %v3135
      %v4111 = vpack.c.bf16 %v3136, %v3136
      %v4112 = vpack.c.bf16 %v3137, %v3137
      %v4113 = vpack.c.bf16 %v3138, %v3138
      %v4114 = vpack.c.bf16 %v3139, %v3139
      %vm4115 = vcmask 273408
      %4116 = vst.msk [vmem:[%s285] sm:$0xf] %vm4115, %v4083
      %4117 = vst.msk [vmem:[%s285 + $0x4] sm:$0xf] %vm4115, %v4084
      %4118 = vst.msk [vmem:[%s285 + $0x8] sm:$0xf] %vm4115, %v4085
      %4119 = vst.msk [vmem:[%s285 + $0xc] sm:$0xf] %vm4115, %v4086
      %4120 = vst.msk [vmem:[%s285 + $0x10] sm:$0xf] %vm4115, %v4087
      %4121 = vst.msk [vmem:[%s285 + $0x14] sm:$0xf] %vm4115, %v4088
      %4122 = vst.msk [vmem:[%s285 + $0x18] sm:$0xf] %vm4115, %v4089
      %4123 = vst.msk [vmem:[%s285 + $0x1c] sm:$0xf] %vm4115, %v4090
      %4124 = vst.msk [vmem:[%s285 + $0x20] sm:$0xf] %vm4115, %v4091
      %4125 = vst.msk [vmem:[%s285 + $0x24] sm:$0xf] %vm4115, %v4092
      %4126 = vst.msk [vmem:[%s285 + $0x28] sm:$0xf] %vm4115, %v4093
      %4127 = vst.msk [vmem:[%s285 + $0x2c] sm:$0xf] %vm4115, %v4094
      %4128 = vst.msk [vmem:[%s285 + $0x30] sm:$0xf] %vm4115, %v4095
      %4129 = vst.msk [vmem:[%s285 + $0x34] sm:$0xf] %vm4115, %v4096
      %4130 = vst.msk [vmem:[%s285 + $0x38] sm:$0xf] %vm4115, %v4097
      %4131 = vst.msk [vmem:[%s285 + $0x3c] sm:$0xf] %vm4115, %v4098
      %4132 = vst.msk [vmem:[%s285 + $0x40] sm:$0xf] %vm4115, %v4099
      %4133 = vst.msk [vmem:[%s285 + $0x44] sm:$0xf] %vm4115, %v4100
      %4134 = vst.msk [vmem:[%s285 + $0x48] sm:$0xf] %vm4115, %v4101
      %4135 = vst.msk [vmem:[%s285 + $0x4c] sm:$0xf] %vm4115, %v4102
      %4136 = vst.msk [vmem:[%s285 + $0x50] sm:$0xf] %vm4115, %v4103
      %4137 = vst.msk [vmem:[%s285 + $0x54] sm:$0xf] %vm4115, %v4104
      %4138 = vst.msk [vmem:[%s285 + $0x58] sm:$0xf] %vm4115, %v4105
      %4139 = vst.msk [vmem:[%s285 + $0x5c] sm:$0xf] %vm4115, %v4106
      %4140 = vst.msk [vmem:[%s285 + $0x60] sm:$0xf] %vm4115, %v4107
      %4141 = vst.msk [vmem:[%s285 + $0x64] sm:$0xf] %vm4115, %v4108
      %4142 = vst.msk [vmem:[%s285 + $0x68] sm:$0xf] %vm4115, %v4109
      %4143 = vst.msk [vmem:[%s285 + $0x6c] sm:$0xf] %vm4115, %v4110
      %4144 = vst.msk [vmem:[%s285 + $0x70] sm:$0xf] %vm4115, %v4111
      %4145 = vst.msk [vmem:[%s285 + $0x74] sm:$0xf] %vm4115, %v4112
      %4146 = vst.msk [vmem:[%s285 + $0x78] sm:$0xf] %vm4115, %v4113
      %4147 = vst.msk [vmem:[%s285 + $0x7c] sm:$0xf] %vm4115, %v4114
      %p4148 = scmp.lt.s32.totalorder %s19, 1
      %s4149 = scalar_select %p4148, %s19, 1
      %s4150 = smul.addr %s4149, 32
      %s4151 = smul.addr %s4150, 4
      %s4152 = scalar_lea.vmem %s6, %s4151
      %p4153 = scmp.lt.s32.totalorder %s19, 1
      %s4154 = scalar_select %p4153, %s19, 1
      %s4155 = smul.addr %s4154, 8
      %s4156 = scalar_lea.vmem %s7, %s4155
      // Predicated region
      $region45: #{up_forward.4} parent=43 // pred_check
        %p4157 = pneg %p168
      $region46: #{up_forward.4} parent=43 // pred_check_branch
        %4159 = sbr.rel (%p4157) target = $region48
      $region47: #{up_forward.4} parent=43 // pred_region
        _
      $region48: #{up_forward.4} parent=43 // pred_fallthru
        _
      // Predicated region
      $region49: #{up_forward.4} parent=43 // pred_check
        %p4160 = pneg %p194
      $region50: #{up_forward.4} parent=43 // pred_check_branch
        %4162 = sbr.rel (%p4160) target = $region52
      $region51: #{up_forward.4} parent=43 // pred_region
        _
      $region52: #{up_forward.4} parent=43 // pred_fallthru
        _
    $region44: #{up_forward.4} parent=5 // pred_fallthru
      _
    %p4163 = scmp.le.s32.totalorder 2, %s14
    // Predicated region
    $region53: #{up_forward.4} parent=5 // pred_check
      %p4164 = pneg %p4163
    $region54: #{up_forward.4} parent=5 // pred_check_branch
      %4166 = sbr.rel (%p4164) target = $region56
    $region55: #{up_forward.4} parent=5 // pred_region
      %s4167 = ssub.s32 %s14, 2
      // Predicated region
      $region57: #{up_forward.4} parent=55 // pred_check
        %p4168 = pneg %p174
      $region58: #{up_forward.4} parent=55 // pred_check_branch
        %4170 = sbr.rel (%p4168) target = $region60
      $region59: #{up_forward.4} parent=55 // pred_region
        %p4171 = scmp.lt.s32.totalorder %s20, 1
        %s4172 = scalar_select %p4171, %s20, 1
        %s4173 = smul.addr %s4172, 32
        %s4174 = smul.addr %s4173, 4
        %s4175 = scalar_lea.vmem %s6, %s4174
      $region60: #{up_forward.4} parent=55 // pred_fallthru
        _
      // Predicated region
      $region61: #{up_forward.4} parent=55 // pred_check
        %p4176 = pneg %p200
      $region62: #{up_forward.4} parent=55 // pred_check_branch
        %4178 = sbr.rel (%p4176) target = $region64
      $region63: #{up_forward.4} parent=55 // pred_region
        %p4179 = scmp.lt.s32.totalorder %s20, 1
        %s4180 = scalar_select %p4179, %s20, 1
        %s4181 = smul.addr %s4180, 8
        %s4182 = scalar_lea.vmem %s7, %s4181
      $region64: #{up_forward.4} parent=55 // pred_fallthru
        _
    $region56: #{up_forward.4} parent=5 // pred_fallthru
      _
  $region6: #{up_forward.4} parent=0 // loop_footer
    %s18 = sadd.s32 1, %s14
  $region7: #{up_forward.4} parent=0 // loop_footer_branch
    %13 = sbr.rel target = $region3
  $region8: #{up_forward.4} parent=0 // loop_exit
    _

</llo_original>
